<compile_context>
chip_gen: v5e
topology: v5e:2x2
jax: 0.10.0
libtpu: 0.0.40
codegen_flags: <defaults>
</compile_context>

<pallas_src>
import math
from functools import partial

import jax
import jax.numpy as jnp
from jax.experimental import pallas as pl
from jax.experimental.pallas import tpu as pltpu


NEG_SLOPE = 0.01  # nn.LeakyReLU default negative_slope

# (Cin, Cout, kernel, stride) -- static python config, never in the pytree.
CONV_CFG = (
    (4, 32, 8, 4),
    (32, 64, 4, 2),
    (64, 64, 3, 1),
)


# ----------------------------------------------------------------------------
# Pallas kernel 1: o = act(a @ b + bias)   (used by all three convs)
# ----------------------------------------------------------------------------
def _matmul_bias_act_kernel(a_ref, b_ref, bias_ref, o_ref, *, negative_slope):
    acc = jnp.dot(a_ref[...], b_ref[...], preferred_element_type=jnp.float32)
    out = acc + bias_ref[...]            # (1, N) bias broadcasts over (tm, N)
    if negative_slope is not None:
        out = jnp.where(out > 0, out, negative_slope * out)
    o_ref[...] = out.astype(o_ref.dtype)


def _pick_tm(m):
    # Prefer a clean 2-way split (both v7x TensorCores) when the halves stay
    # sublane-aligned; otherwise take the whole M as one block (always legal
    # because a block dim equal to the full array dim is allowed).
    if m >= 256 and m % 2 == 0 and (m // 2) % 16 == 0:
        return m // 2
    return m


def matmul_bias_act(a, b, bias2d, *, negative_slope=None,
                    out_dtype=jnp.bfloat16, tm=None):
    """act(a @ b + bias): a (M,K) bf16, b (K,N) bf16, bias2d (1,N) f32.

    Full-K blocks, no padding / slicing: M is tiled with a divisor of M and
    N is kept at its true size (block dim == full dim is always legal)."""
    m, k = a.shape
    k2, n = b.shape
    assert k == k2 and bias2d.shape == (1, n)
    if tm is None:
        tm = _pick_tm(m)
    assert m % tm == 0

    return pl.pallas_call(
        partial(_matmul_bias_act_kernel, negative_slope=negative_slope),
        out_shape=jax.ShapeDtypeStruct((m, n), out_dtype),
        grid=(m // tm,),
        in_specs=[
            pl.BlockSpec((tm, k), lambda i: (i, 0)),   # A tile (full K)
            pl.BlockSpec((k, n), lambda i: (0, 0)),    # whole weight
            pl.BlockSpec((1, n), lambda i: (0, 0)),    # bias row
        ],
        out_specs=pl.BlockSpec((tm, n), lambda i: (i, 0)),
        compiler_params=pltpu.CompilerParams(dimension_semantics=("parallel",)),
    )(a, b, bias2d)


# ----------------------------------------------------------------------------
# Pallas kernel 2: fused FC + LeakyReLU + actor head + critic head
#   h = leakyrelu(x @ fc_w + fc_b)   (kept in VMEM / registers)
#   policy = h @ actor_w + actor_b ; value = h @ critic_w + critic_b
# ----------------------------------------------------------------------------
def _fc_head_kernel(x_ref, fw_ref, fb_ref, aw_ref, ab_ref, cw_ref, cb_ref,
                    pol_ref, val_ref, *, negative_slope):
    h = jnp.dot(x_ref[...], fw_ref[...], preferred_element_type=jnp.float32)
    h = h + fb_ref[...]
    h = jnp.where(h > 0, h, negative_slope * h)
    hb = h.astype(jnp.bfloat16)
    pol_ref[...] = (jnp.dot(hb, aw_ref[...], preferred_element_type=jnp.float32)
                    + ab_ref[...])
    val_ref[...] = (jnp.dot(hb, cw_ref[...], preferred_element_type=jnp.float32)
                    + cb_ref[...])


def fc_head(x, fc_w, fc_b, a_w, a_b, c_w, c_b, *, negative_slope):
    m, k = x.shape
    _, hdim = fc_w.shape
    n_act = a_w.shape[1]
    full = lambda shape: pl.BlockSpec(shape, lambda i: (0, 0))
    return pl.pallas_call(
        partial(_fc_head_kernel, negative_slope=negative_slope),
        out_shape=(jax.ShapeDtypeStruct((m, n_act), jnp.float32),
                   jax.ShapeDtypeStruct((m, 1), jnp.float32)),
        grid=(1,),
        in_specs=[full((m, k)), full((k, hdim)), full((1, hdim)),
                  full((hdim, n_act)), full((1, n_act)),
                  full((hdim, 1)), full((1, 1))],
        out_specs=(full((m, n_act)), full((m, 1))),
        compiler_params=pltpu.CompilerParams(dimension_semantics=("arbitrary",)),
    )(x, fc_w, fc_b, a_w, a_b, c_w, c_b)


# ----------------------------------------------------------------------------
# im2col glue (plain XLA, tiny): space-to-depth + window concat.
# Column order is (di, dj, p, q, c) with kernel offsets dh = stride*di + p,
# dw = stride*dj + q; _conv_w_to_cols produces the matching weight layout.
# ----------------------------------------------------------------------------
def _s2d_patches(x, stride, win):
    # x: (B, H, W, C) NHWC, conv kernel k = win*stride, VALID padding.
    b, h, w, c = x.shape
    assert h % stride == 0 and w % stride == 0, "spatial size must divide stride"
    hs, ws = h // stride, w // stride
    xs = x.reshape(b, hs, stride, ws, stride, c)
    xs = xs.transpose(0, 1, 3, 2, 4, 5).reshape(b, hs, ws, stride * stride * c)
    ho, wo = hs - win + 1, ws - win + 1
    cols = [xs[:, di:di + ho, dj:dj + wo, :]
            for di in range(win) for dj in range(win)]
    patches = jnp.concatenate(cols, axis=-1)          # (B, Ho, Wo, win^2*s^2*C)
    return patches.reshape(b * ho * wo, win * win * stride * stride * c), ho, wo


def _conv_w_to_cols(w, stride):
    # PyTorch (Cout, Cin, k, k) -> (win*win*s*s*Cin, Cout), matching
    # _s2d_patches column order.  Done once at init.
    cout, cin, k, _ = w.shape
    win = k // stride
    w = w.reshape(cout, cin, win, stride, win, stride)   # n c di p dj q
    w = w.transpose(2, 4, 3, 5, 1, 0)                    # di dj p q c n
    return w.reshape(win * win * stride * stride * cin, cout)


# ----------------------------------------------------------------------------
# Parameter init (mirrors the module's explicit re-init: kaiming_uniform_
# a=0 for convs, a=1 for linears, zero biases).  All kernel-side weights are
# permuted / transposed / cast to bf16 here, never per forward.
# ----------------------------------------------------------------------------
def _kaiming_uniform(key, shape, fan_in, a=0.0):
    gain = math.sqrt(2.0 / (1.0 + a * a))
    bound = gain * math.sqrt(3.0 / fan_in)
    return jax.random.uniform(key, shape, jnp.float32, -bound, bound)


def init_params(key, output_size):
    ks = jax.random.split(key, 6)
    params = {"conv": []}
    raw = {"conv": []}     # f32 PyTorch-layout copies for the reference check
    for i, (cin, cout, k, s) in enumerate(CONV_CFG):
        w = _kaiming_uniform(ks[i], (cout, cin, k, k), fan_in=cin * k * k, a=0.0)
        raw["conv"].append(w)
        params["conv"].append((_conv_w_to_cols(w, s).astype(jnp.bfloat16),
                               jnp.zeros((1, cout), jnp.float32)))

    # fc: PyTorch (512, 3136) with columns in NCHW (c, h, w) flatten order.
    fc = _kaiming_uniform(ks[3], (512, 7 * 7 * 64), fan_in=7 * 7 * 64, a=1.0)
    raw["fc"] = fc
    params["fc_w"] = (fc.reshape(512, 64, 7, 7).transpose(2, 3, 1, 0)
                        .reshape(7 * 7 * 64, 512).astype(jnp.bfloat16))
    params["fc_b"] = jnp.zeros((1, 512), jnp.float32)

    actor = _kaiming_uniform(ks[4], (output_size, 512), fan_in=512, a=1.0)
    critic = _kaiming_uniform(ks[5], (1, 512), fan_in=512, a=1.0)
    raw["actor"], raw["critic"] = actor, critic
    params["actor_w"] = actor.T.astype(jnp.bfloat16)
    params["actor_b"] = jnp.zeros((1, output_size), jnp.float32)
    params["critic_w"] = critic.T.astype(jnp.bfloat16)
    params["critic_b"] = jnp.zeros((1, 1), jnp.float32)
    return params, raw


# ----------------------------------------------------------------------------
# Forward pass (matches CnnActorCriticNetwork.forward)
# ----------------------------------------------------------------------------
@jax.jit
def forward(params, state):
    # state: (B, 4, 84, 84) NCHW f32.  One tiny permute + cast, then NHWC bf16.
    x = jnp.transpose(state, (0, 2, 3, 1)).astype(jnp.bfloat16)
    b = x.shape[0]

    for (_cin, cout, k, s), (w_cols, bias) in zip(CONV_CFG, params["conv"]):
        patches, ho, wo = _s2d_patches(x, s, k // s)
        y = matmul_bias_act(patches, w_cols, bias,
                            negative_slope=NEG_SLOPE, out_dtype=jnp.bfloat16)
        x = y.reshape(b, ho, wo, cout)                 # NHWC, no transpose

    xf = x.reshape(b, -1)                              # (B, 7*7*64), (h,w,c) order
    policy, value = fc_head(xf, params["fc_w"], params["fc_b"],
                            params["actor_w"], params["actor_b"],
                            params["critic_w"], params["critic_b"],
                            negative_slope=NEG_SLOPE)
    return policy, value


# ----------------------------------------------------------------------------
# Pure-JAX reference (XLA convs, same bf16 quantization points) for a sanity
# check of the im2col / weight-permutation logic.
# ----------------------------------------------------------------------------
def reference_forward(raw, state):
    x = jnp.transpose(state, (0, 2, 3, 1)).astype(jnp.bfloat16)
    for (_cin, _cout, _k, s), w in zip(CONV_CFG, raw["conv"]):
        w_hwio = jnp.transpose(w, (2, 3, 1, 0)).astype(jnp.bfloat16)
        y = jax.lax.conv_general_dilated(
            x, w_hwio, window_strides=(s, s), padding="VALID",
            dimension_numbers=("NHWC", "HWIO", "NHWC"),
            preferred_element_type=jnp.float32)
        y = jnp.where(y > 0, y, NEG_SLOPE * y)         # biases are zero
        x = y.astype(jnp.bfloat16)
    xc = jnp.transpose(x, (0, 3, 1, 2)).reshape(x.shape[0], -1)   # NCHW flatten
    h = jnp.dot(xc, raw["fc"].astype(jnp.bfloat16).T,
                preferred_element_type=jnp.float32)
    h = jnp.where(h > 0, h, NEG_SLOPE * h).astype(jnp.bfloat16)
    pol = jnp.dot(h, raw["actor"].astype(jnp.bfloat16).T,
                  preferred_element_type=jnp.float32)
    val = jnp.dot(h, raw["critic"].astype(jnp.bfloat16).T,
                  preferred_element_type=jnp.float32)
    return pol, val


if __name__ == "__main__":
    # Spatial size 84x84 is forced by Linear(7*7*64, 512); batch kept small.
    key = jax.random.PRNGKey(0)
    k_params, k_x = jax.random.split(key)
    output_size = 6

    params, raw = init_params(k_params, output_size)
    x = jax.random.uniform(k_x, (2, 4, 84, 84), jnp.float32)

    policy, value = forward(params, x)
    jax.block_until_ready((policy, value))

    assert policy.shape == (2, output_size) and policy.dtype == jnp.float32
    assert value.shape == (2, 1) and value.dtype == jnp.float32

    # Loose-tolerance sanity check against the XLA reference (same bf16
    # quantization points, so only accumulation-order noise remains).
    pol_ref, val_ref = reference_forward(raw, x)
    tol_p = 0.05 * (float(jnp.max(jnp.abs(pol_ref))) + 1.0)
    tol_v = 0.05 * (float(jnp.max(jnp.abs(val_ref))) + 1.0)
    assert float(jnp.max(jnp.abs(policy - pol_ref))) < tol_p
    assert float(jnp.max(jnp.abs(value - val_ref))) < tol_v

    print("KERNEL_OK")
</pallas_src>

<mosaic_0001>
module attributes {stable_mosaic.version = 11 : i64} {
  func.func @_matmul_bias_act_kernel(%arg0: i32, %arg1: memref<400x256xbf16, #tpu.memory_space<vmem>>, %arg2: memref<256x32xbf16, #tpu.memory_space<vmem>>, %arg3: memref<1x32xf32, #tpu.memory_space<vmem>>, %arg4: memref<400x32xbf16, #tpu.memory_space<vmem>>) attributes {dimension_semantics = [#tpu.dimension_semantics<parallel>], iteration_bounds = array<i64: 2>, scalar_prefetch = 0 : i64, scratch_operands = 0 : i64, tpu.core_type = #tpu.core_type<tc>, window_params = [{transform_indices = @transform_0, window_bounds = array<i64: 400, 256>}, {pipeline_mode = #tpu.pipeline_mode<synchronous>, transform_indices = @transform_1, window_bounds = array<i64: 256, 32>}, {pipeline_mode = #tpu.pipeline_mode<synchronous>, transform_indices = @transform_2, window_bounds = array<i64: 1, 32>}, {transform_indices = @transform_3, window_bounds = array<i64: 400, 32>}]} {
    %c0 = arith.constant 0 : index
    %c0_0 = arith.constant 0 : index
    %0 = vector.load %arg1[%c0, %c0_0] : memref<400x256xbf16, #tpu.memory_space<vmem>>, vector<400x256xbf16>
    %c0_1 = arith.constant 0 : index
    %c0_2 = arith.constant 0 : index
    %1 = vector.load %arg2[%c0_1, %c0_2] : memref<256x32xbf16, #tpu.memory_space<vmem>>, vector<256x32xbf16>
    %cst = arith.constant dense<0.000000e+00> : vector<400x32xf32>
    %2 = tpu.matmul %0, %1, %cst {dimension_numbers = #tpu.dot_dimension_numbers<[1], [0], [0], [1], [0, 0, 1, 1], [], []>} : vector<400x256xbf16>, vector<256x32xbf16>, vector<400x32xf32> -> vector<400x32xf32>
    %c0_3 = arith.constant 0 : index
    %c0_4 = arith.constant 0 : index
    %3 = vector.load %arg3[%c0_3, %c0_4] : memref<1x32xf32, #tpu.memory_space<vmem>>, vector<1x32xf32>
    %4 = vector.broadcast %3 : vector<1x32xf32> to vector<400x32xf32>
    %5 = arith.addf %2, %4 : vector<400x32xf32>
    %cst_5 = arith.constant 0.000000e+00 : f32
    %6 = vector.broadcast %cst_5 : f32 to vector<400x32xf32>
    %7 = arith.cmpf ogt, %5, %6 : vector<400x32xf32>
    %cst_6 = arith.constant 0.00999999977 : f32
    %8 = vector.broadcast %cst_6 : f32 to vector<400x32xf32>
    %9 = arith.mulf %8, %5 : vector<400x32xf32>
    %10 = arith.select %7, %5, %9 : vector<400x32xi1>, vector<400x32xf32>
    %11 = arith.truncf %10 : vector<400x32xf32> to vector<400x32xbf16>
    %c0_7 = arith.constant 0 : index
    %c0_8 = arith.constant 0 : index
    %12 = vector.load %arg4[%c0_7, %c0_8] : memref<400x32xbf16, #tpu.memory_space<vmem>>, vector<400x32xbf16>
    tpu.vector_store %arg4[%c0_7, %c0_8], %11 {strides = array<i32>} : memref<400x32xbf16, #tpu.memory_space<vmem>>, vector<400x32xbf16>,
    return
  }
  func.func @transform_0(%arg0: i32) -> (i32, i32) {
    %c0_i32 = arith.constant 0 : i32
    %c0_i32_0 = arith.constant 0 : i32
    return %arg0, %c0_i32 : i32, i32
  }
  func.func @transform_1(%arg0: i32) -> (i32, i32) {
    %c0_i32 = arith.constant 0 : i32
    %c0_i32_0 = arith.constant 0 : i32
    %c0_i32_1 = arith.constant 0 : i32
    return %c0_i32, %c0_i32_0 : i32, i32
  }
  func.func @transform_2(%arg0: i32) -> (i32, i32) {
    %c0_i32 = arith.constant 0 : i32
    %c0_i32_0 = arith.constant 0 : i32
    %c0_i32_1 = arith.constant 0 : i32
    return %c0_i32, %c0_i32_0 : i32, i32
  }
  func.func @transform_3(%arg0: i32) -> (i32, i32) {
    %c0_i32 = arith.constant 0 : i32
    %c0_i32_0 = arith.constant 0 : i32
    return %arg0, %c0_i32 : i32, i32
  }
}

module attributes {stable_mosaic.version = 11 : i64} {
  func.func @_matmul_bias_act_kernel(%arg0: i32, %arg1: memref<162x512xbf16, #tpu.memory_space<vmem>>, %arg2: memref<512x64xbf16, #tpu.memory_space<vmem>>, %arg3: memref<1x64xf32, #tpu.memory_space<vmem>>, %arg4: memref<162x64xbf16, #tpu.memory_space<vmem>>) attributes {dimension_semantics = [#tpu.dimension_semantics<parallel>], iteration_bounds = array<i64: 1>, scalar_prefetch = 0 : i64, scratch_operands = 0 : i64, tpu.core_type = #tpu.core_type<tc>, window_params = [{transform_indices = @transform_0, window_bounds = array<i64: 162, 512>}, {pipeline_mode = #tpu.pipeline_mode<synchronous>, transform_indices = @transform_1, window_bounds = array<i64: 512, 64>}, {pipeline_mode = #tpu.pipeline_mode<synchronous>, transform_indices = @transform_2, window_bounds = array<i64: 1, 64>}, {transform_indices = @transform_3, window_bounds = array<i64: 162, 64>}]} {
    %c0 = arith.constant 0 : index
    %c0_0 = arith.constant 0 : index
    %0 = vector.load %arg1[%c0, %c0_0] : memref<162x512xbf16, #tpu.memory_space<vmem>>, vector<162x512xbf16>
    %c0_1 = arith.constant 0 : index
    %c0_2 = arith.constant 0 : index
    %1 = vector.load %arg2[%c0_1, %c0_2] : memref<512x64xbf16, #tpu.memory_space<vmem>>, vector<512x64xbf16>
    %cst = arith.constant dense<0.000000e+00> : vector<162x64xf32>
    %2 = tpu.matmul %0, %1, %cst {dimension_numbers = #tpu.dot_dimension_numbers<[1], [0], [0], [1], [0, 0, 1, 1], [], []>} : vector<162x512xbf16>, vector<512x64xbf16>, vector<162x64xf32> -> vector<162x64xf32>
    %c0_3 = arith.constant 0 : index
    %c0_4 = arith.constant 0 : index
    %3 = vector.load %arg3[%c0_3, %c0_4] : memref<1x64xf32, #tpu.memory_space<vmem>>, vector<1x64xf32>
    %4 = vector.broadcast %3 : vector<1x64xf32> to vector<162x64xf32>
    %5 = arith.addf %2, %4 : vector<162x64xf32>
    %cst_5 = arith.constant 0.000000e+00 : f32
    %6 = vector.broadcast %cst_5 : f32 to vector<162x64xf32>
    %7 = arith.cmpf ogt, %5, %6 : vector<162x64xf32>
    %cst_6 = arith.constant 0.00999999977 : f32
    %8 = vector.broadcast %cst_6 : f32 to vector<162x64xf32>
    %9 = arith.mulf %8, %5 : vector<162x64xf32>
    %10 = arith.select %7, %5, %9 : vector<162x64xi1>, vector<162x64xf32>
    %11 = arith.truncf %10 : vector<162x64xf32> to vector<162x64xbf16>
    %c0_7 = arith.constant 0 : index
    %c0_8 = arith.constant 0 : index
    %12 = vector.load %arg4[%c0_7, %c0_8] : memref<162x64xbf16, #tpu.memory_space<vmem>>, vector<162x64xbf16>
    tpu.vector_store %arg4[%c0_7, %c0_8], %11 {strides = array<i32>} : memref<162x64xbf16, #tpu.memory_space<vmem>>, vector<162x64xbf16>,
    return
  }
  func.func @transform_0(%arg0: i32) -> (i32, i32) {
    %c0_i32 = arith.constant 0 : i32
    %c0_i32_0 = arith.constant 0 : i32
    return %arg0, %c0_i32 : i32, i32
  }
  func.func @transform_1(%arg0: i32) -> (i32, i32) {
    %c0_i32 = arith.constant 0 : i32
    %c0_i32_0 = arith.constant 0 : i32
    %c0_i32_1 = arith.constant 0 : i32
    return %c0_i32, %c0_i32_0 : i32, i32
  }
  func.func @transform_2(%arg0: i32) -> (i32, i32) {
    %c0_i32 = arith.constant 0 : i32
    %c0_i32_0 = arith.constant 0 : i32
    %c0_i32_1 = arith.constant 0 : i32
    return %c0_i32, %c0_i32_0 : i32, i32
  }
  func.func @transform_3(%arg0: i32) -> (i32, i32) {
    %c0_i32 = arith.constant 0 : i32
    %c0_i32_0 = arith.constant 0 : i32
    return %arg0, %c0_i32 : i32, i32
  }
}

module attributes {stable_mosaic.version = 11 : i64} {
  func.func @_matmul_bias_act_kernel(%arg0: i32, %arg1: memref<98x576xbf16, #tpu.memory_space<vmem>>, %arg2: memref<576x64xbf16, #tpu.memory_space<vmem>>, %arg3: memref<1x64xf32, #tpu.memory_space<vmem>>, %arg4: memref<98x64xbf16, #tpu.memory_space<vmem>>) attributes {dimension_semantics = [#tpu.dimension_semantics<parallel>], iteration_bounds = array<i64: 1>, scalar_prefetch = 0 : i64, scratch_operands = 0 : i64, tpu.core_type = #tpu.core_type<tc>, window_params = [{transform_indices = @transform_0, window_bounds = array<i64: 98, 576>}, {pipeline_mode = #tpu.pipeline_mode<synchronous>, transform_indices = @transform_1, window_bounds = array<i64: 576, 64>}, {pipeline_mode = #tpu.pipeline_mode<synchronous>, transform_indices = @transform_2, window_bounds = array<i64: 1, 64>}, {transform_indices = @transform_3, window_bounds = array<i64: 98, 64>}]} {
    %c0 = arith.constant 0 : index
    %c0_0 = arith.constant 0 : index
    %0 = vector.load %arg1[%c0, %c0_0] : memref<98x576xbf16, #tpu.memory_space<vmem>>, vector<98x576xbf16>
    %c0_1 = arith.constant 0 : index
    %c0_2 = arith.constant 0 : index
    %1 = vector.load %arg2[%c0_1, %c0_2] : memref<576x64xbf16, #tpu.memory_space<vmem>>, vector<576x64xbf16>
    %cst = arith.constant dense<0.000000e+00> : vector<98x64xf32>
    %2 = tpu.matmul %0, %1, %cst {dimension_numbers = #tpu.dot_dimension_numbers<[1], [0], [0], [1], [0, 0, 1, 1], [], []>} : vector<98x576xbf16>, vector<576x64xbf16>, vector<98x64xf32> -> vector<98x64xf32>
    %c0_3 = arith.constant 0 : index
    %c0_4 = arith.constant 0 : index
    %3 = vector.load %arg3[%c0_3, %c0_4] : memref<1x64xf32, #tpu.memory_space<vmem>>, vector<1x64xf32>
    %4 = vector.broadcast %3 : vector<1x64xf32> to vector<98x64xf32>
    %5 = arith.addf %2, %4 : vector<98x64xf32>
    %cst_5 = arith.constant 0.000000e+00 : f32
    %6 = vector.broadcast %cst_5 : f32 to vector<98x64xf32>
    %7 = arith.cmpf ogt, %5, %6 : vector<98x64xf32>
    %cst_6 = arith.constant 0.00999999977 : f32
    %8 = vector.broadcast %cst_6 : f32 to vector<98x64xf32>
    %9 = arith.mulf %8, %5 : vector<98x64xf32>
    %10 = arith.select %7, %5, %9 : vector<98x64xi1>, vector<98x64xf32>
    %11 = arith.truncf %10 : vector<98x64xf32> to vector<98x64xbf16>
    %c0_7 = arith.constant 0 : index
    %c0_8 = arith.constant 0 : index
    %12 = vector.load %arg4[%c0_7, %c0_8] : memref<98x64xbf16, #tpu.memory_space<vmem>>, vector<98x64xbf16>
    tpu.vector_store %arg4[%c0_7, %c0_8], %11 {strides = array<i32>} : memref<98x64xbf16, #tpu.memory_space<vmem>>, vector<98x64xbf16>,
    return
  }
  func.func @transform_0(%arg0: i32) -> (i32, i32) {
    %c0_i32 = arith.constant 0 : i32
    %c0_i32_0 = arith.constant 0 : i32
    return %arg0, %c0_i32 : i32, i32
  }
  func.func @transform_1(%arg0: i32) -> (i32, i32) {
    %c0_i32 = arith.constant 0 : i32
    %c0_i32_0 = arith.constant 0 : i32
    %c0_i32_1 = arith.constant 0 : i32
    return %c0_i32, %c0_i32_0 : i32, i32
  }
  func.func @transform_2(%arg0: i32) -> (i32, i32) {
    %c0_i32 = arith.constant 0 : i32
    %c0_i32_0 = arith.constant 0 : i32
    %c0_i32_1 = arith.constant 0 : i32
    return %c0_i32, %c0_i32_0 : i32, i32
  }
  func.func @transform_3(%arg0: i32) -> (i32, i32) {
    %c0_i32 = arith.constant 0 : i32
    %c0_i32_0 = arith.constant 0 : i32
    return %arg0, %c0_i32 : i32, i32
  }
}

module attributes {stable_mosaic.version = 11 : i64} {
  func.func @_fc_head_kernel(%arg0: i32, %arg1: memref<2x3136xbf16, #tpu.memory_space<vmem>>, %arg2: memref<3136x512xbf16, #tpu.memory_space<vmem>>, %arg3: memref<1x512xf32, #tpu.memory_space<vmem>>, %arg4: memref<512x6xbf16, #tpu.memory_space<vmem>>, %arg5: memref<1x6xf32, #tpu.memory_space<vmem>>, %arg6: memref<512x1xbf16, #tpu.memory_space<vmem>>, %arg7: memref<1x1xf32, #tpu.memory_space<vmem>>, %arg8: memref<2x6xf32, #tpu.memory_space<vmem>>, %arg9: memref<2x1xf32, #tpu.memory_space<vmem>>) attributes {dimension_semantics = [#tpu.dimension_semantics<arbitrary>], iteration_bounds = array<i64: 1>, scalar_prefetch = 0 : i64, scratch_operands = 0 : i64, tpu.core_type = #tpu.core_type<tc>, window_params = [{pipeline_mode = #tpu.pipeline_mode<synchronous>, transform_indices = @transform_0, window_bounds = array<i64: 2, 3136>}, {pipeline_mode = #tpu.pipeline_mode<synchronous>, transform_indices = @transform_1, window_bounds = array<i64: 3136, 512>}, {pipeline_mode = #tpu.pipeline_mode<synchronous>, transform_indices = @transform_2, window_bounds = array<i64: 1, 512>}, {pipeline_mode = #tpu.pipeline_mode<synchronous>, transform_indices = @transform_3, window_bounds = array<i64: 512, 6>}, {pipeline_mode = #tpu.pipeline_mode<synchronous>, transform_indices = @transform_4, window_bounds = array<i64: 1, 6>}, {pipeline_mode = #tpu.pipeline_mode<synchronous>, transform_indices = @transform_5, window_bounds = array<i64: 512, 1>}, {pipeline_mode = #tpu.pipeline_mode<synchronous>, transform_indices = @transform_6, window_bounds = array<i64: 1, 1>}, {pipeline_mode = #tpu.pipeline_mode<synchronous>, transform_indices = @transform_7, window_bounds = array<i64: 2, 6>}, {pipeline_mode = #tpu.pipeline_mode<synchronous>, transform_indices = @transform_8, window_bounds = array<i64: 2, 1>}]} {
    %c0 = arith.constant 0 : index
    %c0_0 = arith.constant 0 : index
    %0 = vector.load %arg1[%c0, %c0_0] : memref<2x3136xbf16, #tpu.memory_space<vmem>>, vector<2x3136xbf16>
    %c0_1 = arith.constant 0 : index
    %c0_2 = arith.constant 0 : index
    %1 = vector.load %arg2[%c0_1, %c0_2] : memref<3136x512xbf16, #tpu.memory_space<vmem>>, vector<3136x512xbf16>
    %cst = arith.constant dense<0.000000e+00> : vector<2x512xf32>
    %2 = tpu.matmul %0, %1, %cst {dimension_numbers = #tpu.dot_dimension_numbers<[1], [0], [0], [1], [0, 0, 1, 1], [], []>} : vector<2x3136xbf16>, vector<3136x512xbf16>, vector<2x512xf32> -> vector<2x512xf32>
    %c0_3 = arith.constant 0 : index
    %c0_4 = arith.constant 0 : index
    %3 = vector.load %arg3[%c0_3, %c0_4] : memref<1x512xf32, #tpu.memory_space<vmem>>, vector<1x512xf32>
    %4 = vector.broadcast %3 : vector<1x512xf32> to vector<2x512xf32>
    %5 = arith.addf %2, %4 : vector<2x512xf32>
    %cst_5 = arith.constant 0.000000e+00 : f32
    %6 = vector.broadcast %cst_5 : f32 to vector<2x512xf32>
    %7 = arith.cmpf ogt, %5, %6 : vector<2x512xf32>
    %cst_6 = arith.constant 0.00999999977 : f32
    %8 = vector.broadcast %cst_6 : f32 to vector<2x512xf32>
    %9 = arith.mulf %8, %5 : vector<2x512xf32>
    %10 = arith.select %7, %5, %9 : vector<2x512xi1>, vector<2x512xf32>
    %11 = arith.truncf %10 : vector<2x512xf32> to vector<2x512xbf16>
    %c0_7 = arith.constant 0 : index
    %c0_8 = arith.constant 0 : index
    %12 = vector.load %arg4[%c0_7, %c0_8] : memref<512x6xbf16, #tpu.memory_space<vmem>>, vector<512x6xbf16>
    %cst_9 = arith.constant dense<0.000000e+00> : vector<2x6xf32>
    %13 = tpu.matmul %11, %12, %cst_9 {dimension_numbers = #tpu.dot_dimension_numbers<[1], [0], [0], [1], [0, 0, 1, 1], [], []>} : vector<2x512xbf16>, vector<512x6xbf16>, vector<2x6xf32> -> vector<2x6xf32>
    %c0_10 = arith.constant 0 : index
    %c0_11 = arith.constant 0 : index
    %14 = vector.load %arg5[%c0_10, %c0_11] : memref<1x6xf32, #tpu.memory_space<vmem>>, vector<1x6xf32>
    %15 = vector.broadcast %14 : vector<1x6xf32> to vector<2x6xf32>
    %16 = arith.addf %13, %15 : vector<2x6xf32>
    %c0_12 = arith.constant 0 : index
    %c0_13 = arith.constant 0 : index
    %17 = vector.load %arg8[%c0_12, %c0_13] : memref<2x6xf32, #tpu.memory_space<vmem>>, vector<2x6xf32>
    tpu.vector_store %arg8[%c0_12, %c0_13], %16 {strides = array<i32>} : memref<2x6xf32, #tpu.memory_space<vmem>>, vector<2x6xf32>,
    %c0_14 = arith.constant 0 : index
    %c0_15 = arith.constant 0 : index
    %18 = vector.load %arg6[%c0_14, %c0_15] : memref<512x1xbf16, #tpu.memory_space<vmem>>, vector<512x1xbf16>
    %cst_16 = arith.constant dense<0.000000e+00> : vector<2x1xf32>
    %19 = tpu.matmul %11, %18, %cst_16 {dimension_numbers = #tpu.dot_dimension_numbers<[1], [0], [0], [1], [0, 0, 1, 1], [], []>} : vector<2x512xbf16>, vector<512x1xbf16>, vector<2x1xf32> -> vector<2x1xf32>
    %c0_17 = arith.constant 0 : index
    %c0_18 = arith.constant 0 : index
    %20 = vector.load %arg7[%c0_17, %c0_18] : memref<1x1xf32, #tpu.memory_space<vmem>>, vector<1x1xf32>
    %21 = vector.broadcast %20 : vector<1x1xf32> to vector<2x1xf32>
    %22 = arith.addf %19, %21 : vector<2x1xf32>
    %c0_19 = arith.constant 0 : index
    %c0_20 = arith.constant 0 : index
    %23 = vector.load %arg9[%c0_19, %c0_20] : memref<2x1xf32, #tpu.memory_space<vmem>>, vector<2x1xf32>
    tpu.vector_store %arg9[%c0_19, %c0_20], %22 {strides = array<i32>} : memref<2x1xf32, #tpu.memory_space<vmem>>, vector<2x1xf32>,
    return
  }
  func.func @transform_0(%arg0: i32) -> (i32, i32) {
    %c0_i32 = arith.constant 0 : i32
    %c0_i32_0 = arith.constant 0 : i32
    %c0_i32_1 = arith.constant 0 : i32
    return %c0_i32, %c0_i32_0 : i32, i32
  }
  func.func @transform_1(%arg0: i32) -> (i32, i32) {
    %c0_i32 = arith.constant 0 : i32
    %c0_i32_0 = arith.constant 0 : i32
    %c0_i32_1 = arith.constant 0 : i32
    return %c0_i32, %c0_i32_0 : i32, i32
  }
  func.func @transform_2(%arg0: i32) -> (i32, i32) {
    %c0_i32 = arith.constant 0 : i32
    %c0_i32_0 = arith.constant 0 : i32
    %c0_i32_1 = arith.constant 0 : i32
    return %c0_i32, %c0_i32_0 : i32, i32
  }
  func.func @transform_3(%arg0: i32) -> (i32, i32) {
    %c0_i32 = arith.constant 0 : i32
    %c0_i32_0 = arith.constant 0 : i32
    %c0_i32_1 = arith.constant 0 : i32
    return %c0_i32, %c0_i32_0 : i32, i32
  }
  func.func @transform_4(%arg0: i32) -> (i32, i32) {
    %c0_i32 = arith.constant 0 : i32
    %c0_i32_0 = arith.constant 0 : i32
    %c0_i32_1 = arith.constant 0 : i32
    return %c0_i32, %c0_i32_0 : i32, i32
  }
  func.func @transform_5(%arg0: i32) -> (i32, i32) {
    %c0_i32 = arith.constant 0 : i32
    %c0_i32_0 = arith.constant 0 : i32
    %c0_i32_1 = arith.constant 0 : i32
    return %c0_i32, %c0_i32_0 : i32, i32
  }
  func.func @transform_6(%arg0: i32) -> (i32, i32) {
    %c0_i32 = arith.constant 0 : i32
    %c0_i32_0 = arith.constant 0 : i32
    %c0_i32_1 = arith.constant 0 : i32
    return %c0_i32, %c0_i32_0 : i32, i32
  }
  func.func @transform_7(%arg0: i32) -> (i32, i32) {
    %c0_i32 = arith.constant 0 : i32
    %c0_i32_0 = arith.constant 0 : i32
    %c0_i32_1 = arith.constant 0 : i32
    return %c0_i32, %c0_i32_0 : i32, i32
  }
  func.func @transform_8(%arg0: i32) -> (i32, i32) {
    %c0_i32 = arith.constant 0 : i32
    %c0_i32_0 = arith.constant 0 : i32
    %c0_i32_1 = arith.constant 0 : i32
    return %c0_i32, %c0_i32_0 : i32, i32
  }
}

</mosaic_0001>

<llo_original>
// kernel: forward.4
$region0: #{forward.4}
  #allocation0 [shape = 'u32[]', space=smem, size = 0x4, offset = 0x4, fixed_abs, tag = 'smem constant byte address 0x4 - core index']
  #allocation1 [shape = 'u32[72,128]{1,0:T(1,128)}', space=vmem, size = 0x9000, scoped, tag = 'internal scratch']
  %s0 = inlined_call_operand.vmem [shape: bf16[800,256], index: 0, kind: input, shape index: {}]
  %s1 = inlined_call_operand.vmem [shape: bf16[256,32], index: 1, kind: input, shape index: {}]
  %s2 = inlined_call_operand.vmem [shape: f32[1,32], index: 2, kind: input, shape index: {}]
  %s3 = inlined_call_operand.vmem [shape: bf16[800,32], index: 3, kind: output, shape index: {}]
  %s4 = sld [smem:[#allocation0]]
  $region45: #{forward.4} parent=0
    _
  %s6 = ssub.s32 1, %s4
  %s7 = scalar_select 0, %s6, %s4
  loop: start=0, step=1, limit=4
  $region2: #{forward.4} parent=0 // loop_pre_header
    _
  $region3: #{forward.4} parent=0 // loop_header
    %s9 = sphi 0, %s13
    %p10 = scmp.ge.s32.totalorder %s9, 4
    %s19 = sphi 0, %s21
    %s22 = sphi 0, %s19
    %s23 = sphi 0, %s22
    %s39 = sphi 0, %s23
    %s43 = sphi 0, %s43
    %s45 = sphi 0, %s43
    %s46 = sphi 0, %s45
    %s60 = sphi 0, %s46
    %s64 = sphi 0, %s64
    %s66 = sphi 0, %s64
    %s67 = sphi 0, %s66
    %s81 = sphi 0, %s67
    %s87 = sphi 0, %s89
    %s90 = sphi 0, %s87
    %s91 = sphi 0, %s90
    %s107 = sphi 0, %s91
  $region4: #{forward.4} parent=0 // loop_header_branch
    %12 = sbr.rel (%p10) target = $region8
  $region5: #{forward.4} parent=0 // loop_body
    %s14 = ssub.s32 %s9, 1
    %s15 = ssub.s32 %s9, 2
    %s16 = sadd.s32 %s9, 1
    %s17 = ssub.s32 %s9, %s16
    %p18 = scmp.eq.s32.totalorder %s17, 0
    %s20 = sadd.s32 %s19, 1
    %s21 = scalar_select %p18, %s19, %s20
    %p24 = pneg %p18
    %p25 = scmp.eq.s32.totalorder %s9, 1
    %p26 = por %p24, %p25
    %p27 = scmp.ne.s32.totalorder %s19, %s22
    %p28 = scmp.eq.s32.totalorder %s9, 0
    %p29 = por %p27, %p28
    %p30 = scmp.ne.s32.totalorder %s19, %s22
    %p31 = scmp.eq.s32.totalorder %s14, 1
    %p32 = por %p30, %p31
    %p33 = scmp.ne.s32.totalorder %s22, %s23
    %p34 = scmp.eq.s32.totalorder %s14, 0
    %p35 = por %p33, %p34
    %p36 = scmp.ne.s32.totalorder %s22, %s23
    %p37 = scmp.eq.s32.totalorder %s15, 1
    %p38 = por %p36, %p37
    %p40 = scmp.ne.s32.totalorder %s23, %s39
    %p41 = scmp.eq.s32.totalorder %s15, 0
    %p42 = por %p40, %p41
    %s44 = sadd.s32 %s43, 1
    %p47 = scmp.eq.s32.totalorder %s9, 1
    %p48 = scmp.ne.s32.totalorder %s43, %s45
    %p49 = scmp.eq.s32.totalorder %s9, 0
    %p50 = por %p48, %p49
    %p51 = scmp.ne.s32.totalorder %s43, %s45
    %p52 = scmp.eq.s32.totalorder %s14, 1
    %p53 = por %p51, %p52
    %p54 = scmp.ne.s32.totalorder %s45, %s46
    %p55 = scmp.eq.s32.totalorder %s14, 0
    %p56 = por %p54, %p55
    %p57 = scmp.ne.s32.totalorder %s45, %s46
    %p58 = scmp.eq.s32.totalorder %s15, 1
    %p59 = por %p57, %p58
    %p61 = scmp.ne.s32.totalorder %s46, %s60
    %p62 = scmp.eq.s32.totalorder %s15, 0
    %p63 = por %p61, %p62
    %s65 = sadd.s32 %s64, 1
    %p68 = scmp.eq.s32.totalorder %s9, 1
    %p69 = scmp.ne.s32.totalorder %s64, %s66
    %p70 = scmp.eq.s32.totalorder %s9, 0
    %p71 = por %p69, %p70
    %p72 = scmp.ne.s32.totalorder %s64, %s66
    %p73 = scmp.eq.s32.totalorder %s14, 1
    %p74 = por %p72, %p73
    %p75 = scmp.ne.s32.totalorder %s66, %s67
    %p76 = scmp.eq.s32.totalorder %s14, 0
    %p77 = por %p75, %p76
    %p78 = scmp.ne.s32.totalorder %s66, %s67
    %p79 = scmp.eq.s32.totalorder %s15, 1
    %p80 = por %p78, %p79
    %p82 = scmp.ne.s32.totalorder %s67, %s81
    %p83 = scmp.eq.s32.totalorder %s15, 0
    %p84 = por %p82, %p83
    %s85 = ssub.s32 %s9, %s16
    %p86 = scmp.eq.s32.totalorder %s85, 0
    %s88 = sadd.s32 %s87, 1
    %s89 = scalar_select %p86, %s87, %s88
    %p92 = pneg %p86
    %p93 = scmp.eq.s32.totalorder %s9, 1
    %p94 = por %p92, %p93
    %p95 = scmp.ne.s32.totalorder %s87, %s90
    %p96 = scmp.eq.s32.totalorder %s9, 0
    %p97 = por %p95, %p96
    %p98 = scmp.ne.s32.totalorder %s87, %s90
    %p99 = scmp.eq.s32.totalorder %s14, 1
    %p100 = por %p98, %p99
    %p101 = scmp.ne.s32.totalorder %s90, %s91
    %p102 = scmp.eq.s32.totalorder %s14, 0
    %p103 = por %p101, %p102
    %p104 = scmp.ne.s32.totalorder %s90, %s91
    %p105 = scmp.eq.s32.totalorder %s15, 1
    %p106 = por %p104, %p105
    %p108 = scmp.ne.s32.totalorder %s91, %s107
    %p109 = scmp.eq.s32.totalorder %s15, 0
    %p110 = por %p108, %p109
    %p111 = scmp.le.s32.totalorder 1, %s9
    %p112 = scmp.lt.s32.totalorder %s9, 3
    %p113 = pnand %p111, %p112
    %p114 = pneg %p113
    // Predicated region
    $region9: #{forward.4} parent=5 // pred_check
      _
    $region10: #{forward.4} parent=5 // pred_check_branch
      %116 = sbr.rel (%p113) target = $region12
    $region11: #{forward.4} parent=5 // pred_region
      %s117 = ssub.s32 %s9, 1
      // Predicated region
      $region13: #{forward.4} parent=11 // pred_check
        %p118 = pneg %p56
      $region14: #{forward.4} parent=11 // pred_check_branch
        %120 = sbr.rel (%p118) target = $region16
      $region15: #{forward.4} parent=11 // pred_region
        _
      $region16: #{forward.4} parent=11 // pred_fallthru
        _
      // Predicated region
      $region17: #{forward.4} parent=11 // pred_check
        %p121 = pneg %p77
      $region18: #{forward.4} parent=11 // pred_check_branch
        %123 = sbr.rel (%p121) target = $region20
      $region19: #{forward.4} parent=11 // pred_region
        _
      $region20: #{forward.4} parent=11 // pred_fallthru
        _
    $region12: #{forward.4} parent=5 // pred_fallthru
      _
    %p124 = scmp.lt.s32.totalorder %s9, 2
    // Predicated region
    $region21: #{forward.4} parent=5 // pred_check
      %p125 = pneg %p124
    $region22: #{forward.4} parent=5 // pred_check_branch
      %127 = sbr.rel (%p125) target = $region24
    $region23: #{forward.4} parent=5 // pred_region
      // Predicated region
      $region25: #{forward.4} parent=23 // pred_check
        %p128 = pneg %p29
      $region26: #{forward.4} parent=23 // pred_check_branch
        %130 = sbr.rel (%p128) target = $region28
      $region27: #{forward.4} parent=23 // pred_region
        %s131 = smul.u32 50, %s9
        %p132 = scmp.lt.s32.totalorder %s131, 99
        %s133 = scalar_select %p132, %s131, 99
        %s134 = smul.addr %s133, 2
        %s135 = smul.addr %s134, 4
        %s136 = scalar_lea.vmem %s0, %s135
        %s137 = smul.u32 50, %s9
      $region28: #{forward.4} parent=23 // pred_fallthru
        _
    $region24: #{forward.4} parent=5 // pred_fallthru
      _
    %p138 = scmp.le.s32.totalorder 1, %s9
    %p139 = scmp.lt.s32.totalorder %s9, 3
    %p140 = pnand %p138, %p139
    %p141 = pneg %p140
    // Predicated region
    $region29: #{forward.4} parent=5 // pred_check
      _
    $region30: #{forward.4} parent=5 // pred_check_branch
      %143 = sbr.rel (%p140) target = $region32
    $region31: #{forward.4} parent=5 // pred_region
      %s144 = ssub.s32 %s9, 1
      %s145 = smul.u32 50, %s14
      %p146 = scmp.lt.s32.totalorder %s145, 99
      %s147 = scalar_select %p146, %s145, 99
      %s148 = smul.addr %s147, 2
      %s149 = smul.addr %s148, 4
      %s150 = scalar_lea.vmem %s0, %s149
      %p151 = pneg %p35
      %p152 = pneg %p32
      %p153 = pneg %p56
      %p154 = pneg %p53
      %p155 = pneg %p77
      %p156 = pneg %p74
      %p157 = pneg %p103
      %p158 = pneg %p100
      %s159 = smul.u32 50, %s14
      %p160 = scmp.lt.s32.totalorder %s159, 99
      %s161 = scalar_select %p160, %s159, 99
      %s162 = smul.addr %s161, 4
      %s163 = scalar_lea.vmem %s3, %s162
      %s164 = smul.u32 50, %s14
      %p165 = scmp.lt.s32.totalorder %s164, 99
      %s166 = scalar_select %p165, %s164, 99
      %s167 = smul.addr %s166, 2
      %s168 = smul.addr %s167, 4
      %s169 = scalar_lea.vmem %s0, %s168
      %s170 = smul.u32 50, %s14
      %s171 = smul.u32 50, %s14
      %p172 = scmp.lt.s32.totalorder %s171, 99
      %s173 = scalar_select %p172, %s171, 99
      %s174 = smul.addr %s173, 4
      %s175 = scalar_lea.vmem %s3, %s174
      %s176 = smul.u32 50, %s14
      %v177 = vld [vmem:[%s169] sm:$0xff]
      %v178 = vld [vmem:[%s169 + $0x8] sm:$0xff]
      %v179 = vld [vmem:[%s169 + $0x10] sm:$0xff]
      %v180 = vld [vmem:[%s169 + $0x18] sm:$0xff]
      %v181 = vld [vmem:[%s169 + $0x20] sm:$0xff]
      %v182 = vld [vmem:[%s169 + $0x28] sm:$0xff]
      %v183 = vld [vmem:[%s169 + $0x30] sm:$0xff]
      %v184 = vld [vmem:[%s169 + $0x38] sm:$0xff]
      %v185 = vld [vmem:[%s169 + $0x40] sm:$0xff]
      %v186 = vld [vmem:[%s169 + $0x48] sm:$0xff]
      %v187 = vld [vmem:[%s169 + $0x50] sm:$0xff]
      %v188 = vld [vmem:[%s169 + $0x58] sm:$0xff]
      %v189 = vld [vmem:[%s169 + $0x60] sm:$0xff]
      %v190 = vld [vmem:[%s169 + $0x68] sm:$0xff]
      %v191 = vld [vmem:[%s169 + $0x70] sm:$0xff]
      %v192 = vld [vmem:[%s169 + $0x78] sm:$0xff]
      %v193 = vld [vmem:[%s169 + $0x80] sm:$0xff]
      %v194 = vld [vmem:[%s169 + $0x88] sm:$0xff]
      %v195 = vld [vmem:[%s169 + $0x90] sm:$0xff]
      %v196 = vld [vmem:[%s169 + $0x98] sm:$0xff]
      %v197 = vld [vmem:[%s169 + $0xa0] sm:$0xff]
      %v198 = vld [vmem:[%s169 + $0xa8] sm:$0xff]
      %v199 = vld [vmem:[%s169 + $0xb0] sm:$0xff]
      %v200 = vld [vmem:[%s169 + $0xb8] sm:$0xff]
      %v201 = vld [vmem:[%s169 + $0xc0] sm:$0xff]
      %v202 = vld [vmem:[%s169 + $0xc8] sm:$0xff]
      %v203 = vld [vmem:[%s169 + $0xd0] sm:$0xff]
      %v204 = vld [vmem:[%s169 + $0xd8] sm:$0xff]
      %v205 = vld [vmem:[%s169 + $0xe0] sm:$0xff]
      %v206 = vld [vmem:[%s169 + $0xe8] sm:$0xff]
      %v207 = vld [vmem:[%s169 + $0xf0] sm:$0xff]
      %v208 = vld [vmem:[%s169 + $0xf8] sm:$0xff]
      %v209 = vld [vmem:[%s169 + $0x100] sm:$0xff]
      %v210 = vld [vmem:[%s169 + $0x108] sm:$0xff]
      %v211 = vld [vmem:[%s169 + $0x110] sm:$0xff]
      %v212 = vld [vmem:[%s169 + $0x118] sm:$0xff]
      %v213 = vld [vmem:[%s169 + $0x120] sm:$0xff]
      %v214 = vld [vmem:[%s169 + $0x128] sm:$0xff]
      %v215 = vld [vmem:[%s169 + $0x130] sm:$0xff]
      %v216 = vld [vmem:[%s169 + $0x138] sm:$0xff]
      %v217 = vld [vmem:[%s169 + $0x140] sm:$0xff]
      %v218 = vld [vmem:[%s169 + $0x148] sm:$0xff]
      %v219 = vld [vmem:[%s169 + $0x150] sm:$0xff]
      %v220 = vld [vmem:[%s169 + $0x158] sm:$0xff]
      %v221 = vld [vmem:[%s169 + $0x160] sm:$0xff]
      %v222 = vld [vmem:[%s169 + $0x168] sm:$0xff]
      %v223 = vld [vmem:[%s169 + $0x170] sm:$0xff]
      %v224 = vld [vmem:[%s169 + $0x178] sm:$0xff]
      %v225 = vld [vmem:[%s169 + $0x180] sm:$0xff]
      %v226 = vld [vmem:[%s169 + $0x188] sm:$0xff]
      %v227 = vld [vmem:[%s1] sm:$0xf]
      %v228 = vld [vmem:[%s1 + $0x4] sm:$0xf]
      %v229 = vld [vmem:[%s1 + $0x8] sm:$0xf]
      %v230 = vld [vmem:[%s1 + $0xc] sm:$0xf]
      %v231 = vld [vmem:[%s1 + $0x10] sm:$0xf]
      %v232 = vld [vmem:[%s1 + $0x14] sm:$0xf]
      %v233 = vld [vmem:[%s1 + $0x18] sm:$0xf]
      %v234 = vld [vmem:[%s1 + $0x1c] sm:$0xf]
      %v235 = vld [vmem:[%s1 + $0x20] sm:$0xf]
      %v236 = vld [vmem:[%s1 + $0x24] sm:$0xf]
      %v237 = vld [vmem:[%s1 + $0x28] sm:$0xf]
      %v238 = vld [vmem:[%s1 + $0x2c] sm:$0xf]
      %v239 = vld [vmem:[%s1 + $0x30] sm:$0xf]
      %v240 = vld [vmem:[%s1 + $0x34] sm:$0xf]
      %v241 = vld [vmem:[%s1 + $0x38] sm:$0xf]
      %v242 = vld [vmem:[%s1 + $0x3c] sm:$0xf]
      %v243 = vld [vmem:[%s1 + $0x40] sm:$0xf]
      %v244 = vld [vmem:[%s1 + $0x44] sm:$0xf]
      %v245 = vld [vmem:[%s1 + $0x48] sm:$0xf]
      %v246 = vld [vmem:[%s1 + $0x4c] sm:$0xf]
      %v247 = vld [vmem:[%s1 + $0x50] sm:$0xf]
      %v248 = vld [vmem:[%s1 + $0x54] sm:$0xf]
      %v249 = vld [vmem:[%s1 + $0x58] sm:$0xf]
      %v250 = vld [vmem:[%s1 + $0x5c] sm:$0xf]
      %v251 = vld [vmem:[%s1 + $0x60] sm:$0xf]
      %v252 = vld [vmem:[%s1 + $0x64] sm:$0xf]
      %v253 = vld [vmem:[%s1 + $0x68] sm:$0xf]
      %v254 = vld [vmem:[%s1 + $0x6c] sm:$0xf]
      %v255 = vld [vmem:[%s1 + $0x70] sm:$0xf]
      %v256 = vld [vmem:[%s1 + $0x74] sm:$0xf]
      %v257 = vld [vmem:[%s1 + $0x78] sm:$0xf]
      %v258 = vld [vmem:[%s1 + $0x7c] sm:$0xf]
      %v259 = vld [vmem:[%s2] sm:$0x1]
      %v261 = vperm.slane %v259, 0
      %v313 = vunpack.c.l.b16 %v177
      %v314 = vunpack.c.h.b16 %v177
      %v315 = vunpack.c.l.b16 %v178
      %v316 = vunpack.c.h.b16 %v178
      %v317 = vunpack.c.l.b16 %v179
      %v318 = vunpack.c.h.b16 %v179
      %v319 = vunpack.c.l.b16 %v180
      %v320 = vunpack.c.h.b16 %v180
      %v321 = vunpack.c.l.b16 %v181
      %v322 = vunpack.c.h.b16 %v181
      %v323 = vunpack.c.l.b16 %v182
      %v324 = vunpack.c.h.b16 %v182
      %v325 = vunpack.c.l.b16 %v183
      %v326 = vunpack.c.h.b16 %v183
      %v327 = vunpack.c.l.b16 %v184
      %v328 = vunpack.c.h.b16 %v184
      %v329 = vunpack.c.l.b16 %v185
      %v330 = vunpack.c.h.b16 %v185
      %v331 = vunpack.c.l.b16 %v186
      %v332 = vunpack.c.h.b16 %v186
      %v333 = vunpack.c.l.b16 %v187
      %v334 = vunpack.c.h.b16 %v187
      %v335 = vunpack.c.l.b16 %v188
      %v336 = vunpack.c.h.b16 %v188
      %v337 = vunpack.c.l.b16 %v189
      %v338 = vunpack.c.h.b16 %v189
      %v339 = vunpack.c.l.b16 %v190
      %v340 = vunpack.c.h.b16 %v190
      %v341 = vunpack.c.l.b16 %v191
      %v342 = vunpack.c.h.b16 %v191
      %v343 = vunpack.c.l.b16 %v192
      %v344 = vunpack.c.h.b16 %v192
      %v345 = vunpack.c.l.b16 %v193
      %v346 = vunpack.c.h.b16 %v193
      %v347 = vunpack.c.l.b16 %v194
      %v348 = vunpack.c.h.b16 %v194
      %v349 = vunpack.c.l.b16 %v195
      %v350 = vunpack.c.h.b16 %v195
      %v351 = vunpack.c.l.b16 %v196
      %v352 = vunpack.c.h.b16 %v196
      %v353 = vunpack.c.l.b16 %v197
      %v354 = vunpack.c.h.b16 %v197
      %v355 = vunpack.c.l.b16 %v198
      %v356 = vunpack.c.h.b16 %v198
      %v357 = vunpack.c.l.b16 %v199
      %v358 = vunpack.c.h.b16 %v199
      %v359 = vunpack.c.l.b16 %v200
      %v360 = vunpack.c.h.b16 %v200
      %v361 = vunpack.c.l.b16 %v201
      %v362 = vunpack.c.h.b16 %v201
      %v363 = vunpack.c.l.b16 %v202
      %v364 = vunpack.c.h.b16 %v202
      %v365 = vunpack.c.l.b16 %v203
      %v366 = vunpack.c.h.b16 %v203
      %v367 = vunpack.c.l.b16 %v204
      %v368 = vunpack.c.h.b16 %v204
      %v369 = vunpack.c.l.b16 %v205
      %v370 = vunpack.c.h.b16 %v205
      %v371 = vunpack.c.l.b16 %v206
      %v372 = vunpack.c.h.b16 %v206
      %v373 = vunpack.c.l.b16 %v207
      %v374 = vunpack.c.h.b16 %v207
      %v375 = vunpack.c.l.b16 %v208
      %v376 = vunpack.c.h.b16 %v208
      %v377 = vunpack.c.l.b16 %v209
      %v378 = vunpack.c.h.b16 %v209
      %v379 = vunpack.c.l.b16 %v210
      %v380 = vunpack.c.h.b16 %v210
      %v381 = vunpack.c.l.b16 %v211
      %v382 = vunpack.c.h.b16 %v211
      %v383 = vunpack.c.l.b16 %v212
      %v384 = vunpack.c.h.b16 %v212
      %v385 = vunpack.c.l.b16 %v213
      %v386 = vunpack.c.h.b16 %v213
      %v387 = vunpack.c.l.b16 %v214
      %v388 = vunpack.c.h.b16 %v214
      %v389 = vunpack.c.l.b16 %v215
      %v390 = vunpack.c.h.b16 %v215
      %v391 = vunpack.c.l.b16 %v216
      %v392 = vunpack.c.h.b16 %v216
      %v393 = vunpack.c.l.b16 %v217
      %v394 = vunpack.c.h.b16 %v217
      %v395 = vunpack.c.l.b16 %v218
      %v396 = vunpack.c.h.b16 %v218
      %v397 = vunpack.c.l.b16 %v219
      %v398 = vunpack.c.h.b16 %v219
      %v399 = vunpack.c.l.b16 %v220
      %v400 = vunpack.c.h.b16 %v220
      %v401 = vunpack.c.l.b16 %v221
      %v402 = vunpack.c.h.b16 %v221
      %v403 = vunpack.c.l.b16 %v222
      %v404 = vunpack.c.h.b16 %v222
      %v405 = vunpack.c.l.b16 %v223
      %v406 = vunpack.c.h.b16 %v223
      %v407 = vunpack.c.l.b16 %v224
      %v408 = vunpack.c.h.b16 %v224
      %v409 = vunpack.c.l.b16 %v225
      %v410 = vunpack.c.h.b16 %v225
      %v411 = vunpack.c.l.b16 %v226
      %v412 = vunpack.c.h.b16 %v226
      %v413 = vpack.c.b16 %v315, %v313
      %v414 = vpack.c.b16 %v316, %v314
      %v415 = vpack.c.b16 %v319, %v317
      %v416 = vpack.c.b16 %v320, %v318
      %v417 = vpack.c.b16 %v323, %v321
      %v418 = vpack.c.b16 %v324, %v322
      %v419 = vpack.c.b16 %v327, %v325
      %v420 = vpack.c.b16 %v328, %v326
      %v421 = vpack.c.b16 %v331, %v329
      %v422 = vpack.c.b16 %v332, %v330
      %v423 = vpack.c.b16 %v335, %v333
      %v424 = vpack.c.b16 %v336, %v334
      %v425 = vpack.c.b16 %v339, %v337
      %v426 = vpack.c.b16 %v340, %v338
      %v427 = vpack.c.b16 %v343, %v341
      %v428 = vpack.c.b16 %v344, %v342
      %v429 = vpack.c.b16 %v347, %v345
      %v430 = vpack.c.b16 %v348, %v346
      %v431 = vpack.c.b16 %v351, %v349
      %v432 = vpack.c.b16 %v352, %v350
      %v433 = vpack.c.b16 %v355, %v353
      %v434 = vpack.c.b16 %v356, %v354
      %v435 = vpack.c.b16 %v359, %v357
      %v436 = vpack.c.b16 %v360, %v358
      %v437 = vpack.c.b16 %v363, %v361
      %v438 = vpack.c.b16 %v364, %v362
      %v439 = vpack.c.b16 %v367, %v365
      %v440 = vpack.c.b16 %v368, %v366
      %v441 = vpack.c.b16 %v371, %v369
      %v442 = vpack.c.b16 %v372, %v370
      %v443 = vpack.c.b16 %v375, %v373
      %v444 = vpack.c.b16 %v376, %v374
      %v445 = vpack.c.b16 %v379, %v377
      %v446 = vpack.c.b16 %v380, %v378
      %v447 = vpack.c.b16 %v383, %v381
      %v448 = vpack.c.b16 %v384, %v382
      %v449 = vpack.c.b16 %v387, %v385
      %v450 = vpack.c.b16 %v388, %v386
      %v451 = vpack.c.b16 %v391, %v389
      %v452 = vpack.c.b16 %v392, %v390
      %v453 = vpack.c.b16 %v395, %v393
      %v454 = vpack.c.b16 %v396, %v394
      %v455 = vpack.c.b16 %v399, %v397
      %v456 = vpack.c.b16 %v400, %v398
      %v457 = vpack.c.b16 %v403, %v401
      %v458 = vpack.c.b16 %v404, %v402
      %v459 = vpack.c.b16 %v407, %v405
      %v460 = vpack.c.b16 %v408, %v406
      %v461 = vpack.c.b16 %v411, %v409
      %v462 = vpack.c.b16 %v412, %v410
      %v545 = vunpack.c.l.b16 %v227
      %v546 = vunpack.c.l.b16 %v228
      %v547 = vunpack.c.l.b16 %v229
      %v548 = vunpack.c.l.b16 %v230
      %v549 = vunpack.c.l.b16 %v231
      %v550 = vunpack.c.l.b16 %v232
      %v551 = vunpack.c.l.b16 %v233
      %v552 = vunpack.c.l.b16 %v234
      %v553 = vunpack.c.l.b16 %v235
      %v554 = vunpack.c.l.b16 %v236
      %v555 = vunpack.c.l.b16 %v237
      %v556 = vunpack.c.l.b16 %v238
      %v557 = vunpack.c.l.b16 %v239
      %v558 = vunpack.c.l.b16 %v240
      %v559 = vunpack.c.l.b16 %v241
      %v560 = vunpack.c.l.b16 %v242
      %v561 = vunpack.c.l.b16 %v243
      %v562 = vunpack.c.l.b16 %v244
      %v563 = vunpack.c.l.b16 %v245
      %v564 = vunpack.c.l.b16 %v246
      %v565 = vunpack.c.l.b16 %v247
      %v566 = vunpack.c.l.b16 %v248
      %v567 = vunpack.c.l.b16 %v249
      %v568 = vunpack.c.l.b16 %v250
      %v569 = vunpack.c.l.b16 %v251
      %v570 = vunpack.c.l.b16 %v252
      %v571 = vunpack.c.l.b16 %v253
      %v572 = vunpack.c.l.b16 %v254
      %v573 = vunpack.c.l.b16 %v255
      %v574 = vunpack.c.l.b16 %v256
      %v575 = vunpack.c.l.b16 %v257
      %v576 = vunpack.c.l.b16 %v258
      %v577 = vpack.c.b16 %v546, %v545
      %v578 = vpack.c.b16 %v548, %v547
      %v579 = vpack.c.b16 %v550, %v549
      %v580 = vpack.c.b16 %v552, %v551
      %v581 = vpack.c.b16 %v554, %v553
      %v582 = vpack.c.b16 %v556, %v555
      %v583 = vpack.c.b16 %v558, %v557
      %v584 = vpack.c.b16 %v560, %v559
      %v585 = vpack.c.b16 %v562, %v561
      %v586 = vpack.c.b16 %v564, %v563
      %v587 = vpack.c.b16 %v566, %v565
      %v588 = vpack.c.b16 %v568, %v567
      %v589 = vpack.c.b16 %v570, %v569
      %v590 = vpack.c.b16 %v572, %v571
      %v591 = vpack.c.b16 %v574, %v573
      %v592 = vpack.c.b16 %v576, %v575
      %609 = vmatpush.bf16.msra.mxu0 %v584
      %610 = vmatpush.bf16.msra.mxu0 %v583
      %611 = vmatpush.bf16.msra.mxu0 %v582
      %612 = vmatpush.bf16.msra.mxu0 %v581
      %613 = vmatpush.bf16.msra.mxu0 %v580
      %614 = vmatpush.bf16.msra.mxu0 %v579
      %615 = vmatpush.bf16.msra.mxu0 %v578
      %616 = vmatpush.bf16.msra.mxu0 %v577
      %617 = vmatmul.bf16.gmra.mxu0 %v413
      %v618 = vpop.f32.mrf.mxu0
      %v619 = vadd.f32 %v261, %v618
      %v620 = vpop.f32.mrf.mxu0
      %v621 = vadd.f32 %v261, %v620
      %622 = vmatmul.bf16.gmra.mxu0 %v415
      %v623 = vpop.f32.mrf.mxu0
      %v624 = vadd.f32 %v261, %v623
      %v625 = vpop.f32.mrf.mxu0
      %v626 = vadd.f32 %v261, %v625
      %627 = vmatmul.bf16.gmra.mxu0 %v417
      %v628 = vpop.f32.mrf.mxu0
      %v629 = vadd.f32 %v261, %v628
      %v630 = vpop.f32.mrf.mxu0
      %v631 = vadd.f32 %v261, %v630
      %632 = vmatmul.bf16.gmra.mxu0 %v419
      %v633 = vpop.f32.mrf.mxu0
      %v634 = vadd.f32 %v261, %v633
      %v635 = vpop.f32.mrf.mxu0
      %v636 = vadd.f32 %v261, %v635
      %637 = vmatmul.bf16.gmra.mxu0 %v421
      %v638 = vpop.f32.mrf.mxu0
      %v639 = vadd.f32 %v261, %v638
      %v640 = vpop.f32.mrf.mxu0
      %v641 = vadd.f32 %v261, %v640
      %642 = vmatmul.bf16.gmra.mxu0 %v423
      %v643 = vpop.f32.mrf.mxu0
      %v644 = vadd.f32 %v261, %v643
      %v645 = vpop.f32.mrf.mxu0
      %v646 = vadd.f32 %v261, %v645
      %647 = vmatmul.bf16.gmra.mxu0 %v425
      %v648 = vpop.f32.mrf.mxu0
      %v649 = vadd.f32 %v261, %v648
      %v650 = vpop.f32.mrf.mxu0
      %v651 = vadd.f32 %v261, %v650
      %652 = vmatmul.bf16.gmra.mxu0 %v427
      %v653 = vpop.f32.mrf.mxu0
      %v654 = vadd.f32 %v261, %v653
      %v655 = vpop.f32.mrf.mxu0
      %v656 = vadd.f32 %v261, %v655
      %657 = vmatmul.bf16.gmra.mxu0 %v429
      %v658 = vpop.f32.mrf.mxu0
      %v659 = vadd.f32 %v261, %v658
      %v660 = vpop.f32.mrf.mxu0
      %v661 = vadd.f32 %v261, %v660
      %662 = vmatmul.bf16.gmra.mxu0 %v431
      %v663 = vpop.f32.mrf.mxu0
      %v664 = vadd.f32 %v261, %v663
      %v665 = vpop.f32.mrf.mxu0
      %v666 = vadd.f32 %v261, %v665
      %667 = vmatmul.bf16.gmra.mxu0 %v433
      %v668 = vpop.f32.mrf.mxu0
      %v669 = vadd.f32 %v261, %v668
      %v670 = vpop.f32.mrf.mxu0
      %v671 = vadd.f32 %v261, %v670
      %672 = vmatmul.bf16.gmra.mxu0 %v435
      %v673 = vpop.f32.mrf.mxu0
      %v674 = vadd.f32 %v261, %v673
      %v675 = vpop.f32.mrf.mxu0
      %v676 = vadd.f32 %v261, %v675
      %677 = vmatmul.bf16.gmra.mxu0 %v437
      %v678 = vpop.f32.mrf.mxu0
      %v679 = vadd.f32 %v261, %v678
      %v680 = vpop.f32.mrf.mxu0
      %v681 = vadd.f32 %v261, %v680
      %682 = vmatmul.bf16.gmra.mxu0 %v439
      %v683 = vpop.f32.mrf.mxu0
      %v684 = vadd.f32 %v261, %v683
      %v685 = vpop.f32.mrf.mxu0
      %v686 = vadd.f32 %v261, %v685
      %687 = vmatmul.bf16.gmra.mxu0 %v441
      %v688 = vpop.f32.mrf.mxu0
      %v689 = vadd.f32 %v261, %v688
      %v690 = vpop.f32.mrf.mxu0
      %v691 = vadd.f32 %v261, %v690
      %692 = vmatmul.bf16.gmra.mxu0 %v443
      %v693 = vpop.f32.mrf.mxu0
      %v694 = vadd.f32 %v261, %v693
      %v695 = vpop.f32.mrf.mxu0
      %v696 = vadd.f32 %v261, %v695
      %697 = vmatmul.bf16.gmra.mxu0 %v445
      %v698 = vpop.f32.mrf.mxu0
      %v699 = vadd.f32 %v261, %v698
      %v700 = vpop.f32.mrf.mxu0
      %v701 = vadd.f32 %v261, %v700
      %702 = vmatmul.bf16.gmra.mxu0 %v447
      %v703 = vpop.f32.mrf.mxu0
      %v704 = vadd.f32 %v261, %v703
      %v705 = vpop.f32.mrf.mxu0
      %v706 = vadd.f32 %v261, %v705
      %707 = vmatmul.bf16.gmra.mxu0 %v449
      %v708 = vpop.f32.mrf.mxu0
      %v709 = vadd.f32 %v261, %v708
      %v710 = vpop.f32.mrf.mxu0
      %v711 = vadd.f32 %v261, %v710
      %712 = vmatmul.bf16.gmra.mxu0 %v451
      %v713 = vpop.f32.mrf.mxu0
      %v714 = vadd.f32 %v261, %v713
      %v715 = vpop.f32.mrf.mxu0
      %v716 = vadd.f32 %v261, %v715
      %717 = vmatmul.bf16.gmra.mxu0 %v453
      %v718 = vpop.f32.mrf.mxu0
      %v719 = vadd.f32 %v261, %v718
      %v720 = vpop.f32.mrf.mxu0
      %v721 = vadd.f32 %v261, %v720
      %722 = vmatmul.bf16.gmra.mxu0 %v455
      %v723 = vpop.f32.mrf.mxu0
      %v724 = vadd.f32 %v261, %v723
      %v725 = vpop.f32.mrf.mxu0
      %v726 = vadd.f32 %v261, %v725
      %727 = vmatmul.bf16.gmra.mxu0 %v457
      %v728 = vpop.f32.mrf.mxu0
      %v729 = vadd.f32 %v261, %v728
      %v730 = vpop.f32.mrf.mxu0
      %v731 = vadd.f32 %v261, %v730
      %732 = vmatmul.bf16.gmra.mxu0 %v459
      %v733 = vpop.f32.mrf.mxu0
      %v734 = vadd.f32 %v261, %v733
      %v735 = vpop.f32.mrf.mxu0
      %v736 = vadd.f32 %v261, %v735
      %737 = vmatmul.bf16.gmra.mxu0 %v461
      %v738 = vpop.f32.mrf.mxu0
      %v739 = vadd.f32 %v261, %v738
      %v740 = vpop.f32.mrf.mxu0
      %v741 = vadd.f32 %v261, %v740
      %742 = vdwg.mxu0
      %743 = vmatpush.bf16.msra.mxu0 %v592
      %744 = vmatpush.bf16.msra.mxu0 %v591
      %745 = vmatpush.bf16.msra.mxu0 %v590
      %746 = vmatpush.bf16.msra.mxu0 %v589
      %747 = vmatpush.bf16.msra.mxu0 %v588
      %748 = vmatpush.bf16.msra.mxu0 %v587
      %749 = vmatpush.bf16.msra.mxu0 %v586
      %750 = vmatpush.bf16.msra.mxu0 %v585
      %751 = vmatmul.bf16.gmra.mxu0 %v414
      %v752 = vpop.f32.mrf.mxu0
      %v753 = vadd.f32 %v619, %v752
      %v754 = vpop.f32.mrf.mxu0
      %v755 = vadd.f32 %v621, %v754
      %756 = vmatmul.bf16.gmra.mxu0 %v416
      %v757 = vpop.f32.mrf.mxu0
      %v758 = vadd.f32 %v624, %v757
      %v759 = vpop.f32.mrf.mxu0
      %v760 = vadd.f32 %v626, %v759
      %761 = vmatmul.bf16.gmra.mxu0 %v418
      %v762 = vpop.f32.mrf.mxu0
      %v763 = vadd.f32 %v629, %v762
      %v764 = vpop.f32.mrf.mxu0
      %v765 = vadd.f32 %v631, %v764
      %766 = vmatmul.bf16.gmra.mxu0 %v420
      %v767 = vpop.f32.mrf.mxu0
      %v768 = vadd.f32 %v634, %v767
      %v769 = vpop.f32.mrf.mxu0
      %v770 = vadd.f32 %v636, %v769
      %771 = vmatmul.bf16.gmra.mxu0 %v422
      %v772 = vpop.f32.mrf.mxu0
      %v773 = vadd.f32 %v639, %v772
      %v774 = vpop.f32.mrf.mxu0
      %v775 = vadd.f32 %v641, %v774
      %776 = vmatmul.bf16.gmra.mxu0 %v424
      %v777 = vpop.f32.mrf.mxu0
      %v778 = vadd.f32 %v644, %v777
      %v779 = vpop.f32.mrf.mxu0
      %v780 = vadd.f32 %v646, %v779
      %781 = vmatmul.bf16.gmra.mxu0 %v426
      %v782 = vpop.f32.mrf.mxu0
      %v783 = vadd.f32 %v649, %v782
      %v784 = vpop.f32.mrf.mxu0
      %v785 = vadd.f32 %v651, %v784
      %786 = vmatmul.bf16.gmra.mxu0 %v428
      %v787 = vpop.f32.mrf.mxu0
      %v788 = vadd.f32 %v654, %v787
      %v789 = vpop.f32.mrf.mxu0
      %v790 = vadd.f32 %v656, %v789
      %791 = vmatmul.bf16.gmra.mxu0 %v430
      %v792 = vpop.f32.mrf.mxu0
      %v793 = vadd.f32 %v659, %v792
      %v794 = vpop.f32.mrf.mxu0
      %v795 = vadd.f32 %v661, %v794
      %796 = vmatmul.bf16.gmra.mxu0 %v432
      %v797 = vpop.f32.mrf.mxu0
      %v798 = vadd.f32 %v664, %v797
      %v799 = vpop.f32.mrf.mxu0
      %v800 = vadd.f32 %v666, %v799
      %801 = vmatmul.bf16.gmra.mxu0 %v434
      %v802 = vpop.f32.mrf.mxu0
      %v803 = vadd.f32 %v669, %v802
      %v804 = vpop.f32.mrf.mxu0
      %v805 = vadd.f32 %v671, %v804
      %806 = vmatmul.bf16.gmra.mxu0 %v436
      %v807 = vpop.f32.mrf.mxu0
      %v808 = vadd.f32 %v674, %v807
      %v809 = vpop.f32.mrf.mxu0
      %v810 = vadd.f32 %v676, %v809
      %811 = vmatmul.bf16.gmra.mxu0 %v438
      %v812 = vpop.f32.mrf.mxu0
      %v813 = vadd.f32 %v679, %v812
      %v814 = vpop.f32.mrf.mxu0
      %v815 = vadd.f32 %v681, %v814
      %816 = vmatmul.bf16.gmra.mxu0 %v440
      %v817 = vpop.f32.mrf.mxu0
      %v818 = vadd.f32 %v684, %v817
      %v819 = vpop.f32.mrf.mxu0
      %v820 = vadd.f32 %v686, %v819
      %821 = vmatmul.bf16.gmra.mxu0 %v442
      %v822 = vpop.f32.mrf.mxu0
      %v823 = vadd.f32 %v689, %v822
      %v824 = vpop.f32.mrf.mxu0
      %v825 = vadd.f32 %v691, %v824
      %826 = vmatmul.bf16.gmra.mxu0 %v444
      %v827 = vpop.f32.mrf.mxu0
      %v828 = vadd.f32 %v694, %v827
      %v829 = vpop.f32.mrf.mxu0
      %v830 = vadd.f32 %v696, %v829
      %831 = vmatmul.bf16.gmra.mxu0 %v446
      %v832 = vpop.f32.mrf.mxu0
      %v833 = vadd.f32 %v699, %v832
      %v834 = vpop.f32.mrf.mxu0
      %v835 = vadd.f32 %v701, %v834
      %836 = vmatmul.bf16.gmra.mxu0 %v448
      %v837 = vpop.f32.mrf.mxu0
      %v838 = vadd.f32 %v704, %v837
      %v839 = vpop.f32.mrf.mxu0
      %v840 = vadd.f32 %v706, %v839
      %841 = vmatmul.bf16.gmra.mxu0 %v450
      %v842 = vpop.f32.mrf.mxu0
      %v843 = vadd.f32 %v709, %v842
      %v844 = vpop.f32.mrf.mxu0
      %v845 = vadd.f32 %v711, %v844
      %846 = vmatmul.bf16.gmra.mxu0 %v452
      %v847 = vpop.f32.mrf.mxu0
      %v848 = vadd.f32 %v714, %v847
      %v849 = vpop.f32.mrf.mxu0
      %v850 = vadd.f32 %v716, %v849
      %851 = vmatmul.bf16.gmra.mxu0 %v454
      %v852 = vpop.f32.mrf.mxu0
      %v853 = vadd.f32 %v719, %v852
      %v854 = vpop.f32.mrf.mxu0
      %v855 = vadd.f32 %v721, %v854
      %856 = vmatmul.bf16.gmra.mxu0 %v456
      %v857 = vpop.f32.mrf.mxu0
      %v858 = vadd.f32 %v724, %v857
      %v859 = vpop.f32.mrf.mxu0
      %v860 = vadd.f32 %v726, %v859
      %861 = vmatmul.bf16.gmra.mxu0 %v458
      %v862 = vpop.f32.mrf.mxu0
      %v863 = vadd.f32 %v729, %v862
      %v864 = vpop.f32.mrf.mxu0
      %v865 = vadd.f32 %v731, %v864
      %866 = vmatmul.bf16.gmra.mxu0 %v460
      %v867 = vpop.f32.mrf.mxu0
      %v868 = vadd.f32 %v734, %v867
      %v869 = vpop.f32.mrf.mxu0
      %v870 = vadd.f32 %v736, %v869
      %871 = vmatmul.bf16.gmra.mxu0 %v462
      %v872 = vpop.f32.mrf.mxu0
      %v873 = vadd.f32 %v739, %v872
      %v874 = vpop.f32.mrf.mxu0
      %v875 = vadd.f32 %v741, %v874
      %876 = vdwg.mxu0
      %vm877 = vcmp.gt.f32.partialorder %v753, 0.0
      %vm878 = vcmp.gt.f32.partialorder %v755, 0.0
      %vm879 = vcmp.gt.f32.partialorder %v758, 0.0
      %vm880 = vcmp.gt.f32.partialorder %v760, 0.0
      %vm881 = vcmp.gt.f32.partialorder %v763, 0.0
      %vm882 = vcmp.gt.f32.partialorder %v765, 0.0
      %vm883 = vcmp.gt.f32.partialorder %v768, 0.0
      %vm884 = vcmp.gt.f32.partialorder %v770, 0.0
      %vm885 = vcmp.gt.f32.partialorder %v773, 0.0
      %vm886 = vcmp.gt.f32.partialorder %v775, 0.0
      %vm887 = vcmp.gt.f32.partialorder %v778, 0.0
      %vm888 = vcmp.gt.f32.partialorder %v780, 0.0
      %vm889 = vcmp.gt.f32.partialorder %v783, 0.0
      %vm890 = vcmp.gt.f32.partialorder %v785, 0.0
      %vm891 = vcmp.gt.f32.partialorder %v788, 0.0
      %vm892 = vcmp.gt.f32.partialorder %v790, 0.0
      %vm893 = vcmp.gt.f32.partialorder %v793, 0.0
      %vm894 = vcmp.gt.f32.partialorder %v795, 0.0
      %vm895 = vcmp.gt.f32.partialorder %v798, 0.0
      %vm896 = vcmp.gt.f32.partialorder %v800, 0.0
      %vm897 = vcmp.gt.f32.partialorder %v803, 0.0
      %vm898 = vcmp.gt.f32.partialorder %v805, 0.0
      %vm899 = vcmp.gt.f32.partialorder %v808, 0.0
      %vm900 = vcmp.gt.f32.partialorder %v810, 0.0
      %vm901 = vcmp.gt.f32.partialorder %v813, 0.0
      %vm902 = vcmp.gt.f32.partialorder %v815, 0.0
      %vm903 = vcmp.gt.f32.partialorder %v818, 0.0
      %vm904 = vcmp.gt.f32.partialorder %v820, 0.0
      %vm905 = vcmp.gt.f32.partialorder %v823, 0.0
      %vm906 = vcmp.gt.f32.partialorder %v825, 0.0
      %vm907 = vcmp.gt.f32.partialorder %v828, 0.0
      %vm908 = vcmp.gt.f32.partialorder %v830, 0.0
      %vm909 = vcmp.gt.f32.partialorder %v833, 0.0
      %vm910 = vcmp.gt.f32.partialorder %v835, 0.0
      %vm911 = vcmp.gt.f32.partialorder %v838, 0.0
      %vm912 = vcmp.gt.f32.partialorder %v840, 0.0
      %vm913 = vcmp.gt.f32.partialorder %v843, 0.0
      %vm914 = vcmp.gt.f32.partialorder %v845, 0.0
      %vm915 = vcmp.gt.f32.partialorder %v848, 0.0
      %vm916 = vcmp.gt.f32.partialorder %v850, 0.0
      %vm917 = vcmp.gt.f32.partialorder %v853, 0.0
      %vm918 = vcmp.gt.f32.partialorder %v855, 0.0
      %vm919 = vcmp.gt.f32.partialorder %v858, 0.0
      %vm920 = vcmp.gt.f32.partialorder %v860, 0.0
      %vm921 = vcmp.gt.f32.partialorder %v863, 0.0
      %vm922 = vcmp.gt.f32.partialorder %v865, 0.0
      %vm923 = vcmp.gt.f32.partialorder %v868, 0.0
      %vm924 = vcmp.gt.f32.partialorder %v870, 0.0
      %vm925 = vcmp.gt.f32.partialorder %v873, 0.0
      %vm926 = vcmp.gt.f32.partialorder %v875, 0.0
      %v927 = vmul.f32 %v753, 0.01
      %v928 = vmul.f32 %v755, 0.01
      %v929 = vmul.f32 %v758, 0.01
      %v930 = vmul.f32 %v760, 0.01
      %v931 = vmul.f32 %v763, 0.01
      %v932 = vmul.f32 %v765, 0.01
      %v933 = vmul.f32 %v768, 0.01
      %v934 = vmul.f32 %v770, 0.01
      %v935 = vmul.f32 %v773, 0.01
      %v936 = vmul.f32 %v775, 0.01
      %v937 = vmul.f32 %v778, 0.01
      %v938 = vmul.f32 %v780, 0.01
      %v939 = vmul.f32 %v783, 0.01
      %v940 = vmul.f32 %v785, 0.01
      %v941 = vmul.f32 %v788, 0.01
      %v942 = vmul.f32 %v790, 0.01
      %v943 = vmul.f32 %v793, 0.01
      %v944 = vmul.f32 %v795, 0.01
      %v945 = vmul.f32 %v798, 0.01
      %v946 = vmul.f32 %v800, 0.01
      %v947 = vmul.f32 %v803, 0.01
      %v948 = vmul.f32 %v805, 0.01
      %v949 = vmul.f32 %v808, 0.01
      %v950 = vmul.f32 %v810, 0.01
      %v951 = vmul.f32 %v813, 0.01
      %v952 = vmul.f32 %v815, 0.01
      %v953 = vmul.f32 %v818, 0.01
      %v954 = vmul.f32 %v820, 0.01
      %v955 = vmul.f32 %v823, 0.01
      %v956 = vmul.f32 %v825, 0.01
      %v957 = vmul.f32 %v828, 0.01
      %v958 = vmul.f32 %v830, 0.01
      %v959 = vmul.f32 %v833, 0.01
      %v960 = vmul.f32 %v835, 0.01
      %v961 = vmul.f32 %v838, 0.01
      %v962 = vmul.f32 %v840, 0.01
      %v963 = vmul.f32 %v843, 0.01
      %v964 = vmul.f32 %v845, 0.01
      %v965 = vmul.f32 %v848, 0.01
      %v966 = vmul.f32 %v850, 0.01
      %v967 = vmul.f32 %v853, 0.01
      %v968 = vmul.f32 %v855, 0.01
      %v969 = vmul.f32 %v858, 0.01
      %v970 = vmul.f32 %v860, 0.01
      %v971 = vmul.f32 %v863, 0.01
      %v972 = vmul.f32 %v865, 0.01
      %v973 = vmul.f32 %v868, 0.01
      %v974 = vmul.f32 %v870, 0.01
      %v975 = vmul.f32 %v873, 0.01
      %v976 = vmul.f32 %v875, 0.01
      %v977 = vsel %vm877, %v753, %v927
      %v978 = vsel %vm878, %v755, %v928
      %v979 = vsel %vm879, %v758, %v929
      %v980 = vsel %vm880, %v760, %v930
      %v981 = vsel %vm881, %v763, %v931
      %v982 = vsel %vm882, %v765, %v932
      %v983 = vsel %vm883, %v768, %v933
      %v984 = vsel %vm884, %v770, %v934
      %v985 = vsel %vm885, %v773, %v935
      %v986 = vsel %vm886, %v775, %v936
      %v987 = vsel %vm887, %v778, %v937
      %v988 = vsel %vm888, %v780, %v938
      %v989 = vsel %vm889, %v783, %v939
      %v990 = vsel %vm890, %v785, %v940
      %v991 = vsel %vm891, %v788, %v941
      %v992 = vsel %vm892, %v790, %v942
      %v993 = vsel %vm893, %v793, %v943
      %v994 = vsel %vm894, %v795, %v944
      %v995 = vsel %vm895, %v798, %v945
      %v996 = vsel %vm896, %v800, %v946
      %v997 = vsel %vm897, %v803, %v947
      %v998 = vsel %vm898, %v805, %v948
      %v999 = vsel %vm899, %v808, %v949
      %v1000 = vsel %vm900, %v810, %v950
      %v1001 = vsel %vm901, %v813, %v951
      %v1002 = vsel %vm902, %v815, %v952
      %v1003 = vsel %vm903, %v818, %v953
      %v1004 = vsel %vm904, %v820, %v954
      %v1005 = vsel %vm905, %v823, %v955
      %v1006 = vsel %vm906, %v825, %v956
      %v1007 = vsel %vm907, %v828, %v957
      %v1008 = vsel %vm908, %v830, %v958
      %v1009 = vsel %vm909, %v833, %v959
      %v1010 = vsel %vm910, %v835, %v960
      %v1011 = vsel %vm911, %v838, %v961
      %v1012 = vsel %vm912, %v840, %v962
      %v1013 = vsel %vm913, %v843, %v963
      %v1014 = vsel %vm914, %v845, %v964
      %v1015 = vsel %vm915, %v848, %v965
      %v1016 = vsel %vm916, %v850, %v966
      %v1017 = vsel %vm917, %v853, %v967
      %v1018 = vsel %vm918, %v855, %v968
      %v1019 = vsel %vm919, %v858, %v969
      %v1020 = vsel %vm920, %v860, %v970
      %v1021 = vsel %vm921, %v863, %v971
      %v1022 = vsel %vm922, %v865, %v972
      %v1023 = vsel %vm923, %v868, %v973
      %v1024 = vsel %vm924, %v870, %v974
      %v1025 = vsel %vm925, %v873, %v975
      %v1026 = vsel %vm926, %v875, %v976
      %v1027 = vpack.c.bf16 %v977, %v977
      %v1028 = vpack.c.bf16 %v978, %v978
      %v1029 = vpack.c.bf16 %v979, %v979
      %v1030 = vpack.c.bf16 %v980, %v980
      %v1031 = vpack.c.bf16 %v981, %v981
      %v1032 = vpack.c.bf16 %v982, %v982
      %v1033 = vpack.c.bf16 %v983, %v983
      %v1034 = vpack.c.bf16 %v984, %v984
      %v1035 = vpack.c.bf16 %v985, %v985
      %v1036 = vpack.c.bf16 %v986, %v986
      %v1037 = vpack.c.bf16 %v987, %v987
      %v1038 = vpack.c.bf16 %v988, %v988
      %v1039 = vpack.c.bf16 %v989, %v989
      %v1040 = vpack.c.bf16 %v990, %v990
      %v1041 = vpack.c.bf16 %v991, %v991
      %v1042 = vpack.c.bf16 %v992, %v992
      %v1043 = vpack.c.bf16 %v993, %v993
      %v1044 = vpack.c.bf16 %v994, %v994
      %v1045 = vpack.c.bf16 %v995, %v995
      %v1046 = vpack.c.bf16 %v996, %v996
      %v1047 = vpack.c.bf16 %v997, %v997
      %v1048 = vpack.c.bf16 %v998, %v998
      %v1049 = vpack.c.bf16 %v999, %v999
      %v1050 = vpack.c.bf16 %v1000, %v1000
      %v1051 = vpack.c.bf16 %v1001, %v1001
      %v1052 = vpack.c.bf16 %v1002, %v1002
      %v1053 = vpack.c.bf16 %v1003, %v1003
      %v1054 = vpack.c.bf16 %v1004, %v1004
      %v1055 = vpack.c.bf16 %v1005, %v1005
      %v1056 = vpack.c.bf16 %v1006, %v1006
      %v1057 = vpack.c.bf16 %v1007, %v1007
      %v1058 = vpack.c.bf16 %v1008, %v1008
      %v1059 = vpack.c.bf16 %v1009, %v1009
      %v1060 = vpack.c.bf16 %v1010, %v1010
      %v1061 = vpack.c.bf16 %v1011, %v1011
      %v1062 = vpack.c.bf16 %v1012, %v1012
      %v1063 = vpack.c.bf16 %v1013, %v1013
      %v1064 = vpack.c.bf16 %v1014, %v1014
      %v1065 = vpack.c.bf16 %v1015, %v1015
      %v1066 = vpack.c.bf16 %v1016, %v1016
      %v1067 = vpack.c.bf16 %v1017, %v1017
      %v1068 = vpack.c.bf16 %v1018, %v1018
      %v1069 = vpack.c.bf16 %v1019, %v1019
      %v1070 = vpack.c.bf16 %v1020, %v1020
      %v1071 = vpack.c.bf16 %v1021, %v1021
      %v1072 = vpack.c.bf16 %v1022, %v1022
      %v1073 = vpack.c.bf16 %v1023, %v1023
      %v1074 = vpack.c.bf16 %v1024, %v1024
      %v1075 = vpack.c.bf16 %v1025, %v1025
      %v1076 = vpack.c.bf16 %v1026, %v1026
      %vm1077 = vcmask 257024
      %1078 = vst.msk [vmem:[%s175] sm:$0xf] %vm1077, %v1027
      %1079 = vst.msk [vmem:[%s175 + $0x4] sm:$0xf] %vm1077, %v1028
      %1080 = vst.msk [vmem:[%s175 + $0x8] sm:$0xf] %vm1077, %v1029
      %1081 = vst.msk [vmem:[%s175 + $0xc] sm:$0xf] %vm1077, %v1030
      %1082 = vst.msk [vmem:[%s175 + $0x10] sm:$0xf] %vm1077, %v1031
      %1083 = vst.msk [vmem:[%s175 + $0x14] sm:$0xf] %vm1077, %v1032
      %1084 = vst.msk [vmem:[%s175 + $0x18] sm:$0xf] %vm1077, %v1033
      %1085 = vst.msk [vmem:[%s175 + $0x1c] sm:$0xf] %vm1077, %v1034
      %1086 = vst.msk [vmem:[%s175 + $0x20] sm:$0xf] %vm1077, %v1035
      %1087 = vst.msk [vmem:[%s175 + $0x24] sm:$0xf] %vm1077, %v1036
      %1088 = vst.msk [vmem:[%s175 + $0x28] sm:$0xf] %vm1077, %v1037
      %1089 = vst.msk [vmem:[%s175 + $0x2c] sm:$0xf] %vm1077, %v1038
      %1090 = vst.msk [vmem:[%s175 + $0x30] sm:$0xf] %vm1077, %v1039
      %1091 = vst.msk [vmem:[%s175 + $0x34] sm:$0xf] %vm1077, %v1040
      %1092 = vst.msk [vmem:[%s175 + $0x38] sm:$0xf] %vm1077, %v1041
      %1093 = vst.msk [vmem:[%s175 + $0x3c] sm:$0xf] %vm1077, %v1042
      %1094 = vst.msk [vmem:[%s175 + $0x40] sm:$0xf] %vm1077, %v1043
      %1095 = vst.msk [vmem:[%s175 + $0x44] sm:$0xf] %vm1077, %v1044
      %1096 = vst.msk [vmem:[%s175 + $0x48] sm:$0xf] %vm1077, %v1045
      %1097 = vst.msk [vmem:[%s175 + $0x4c] sm:$0xf] %vm1077, %v1046
      %1098 = vst.msk [vmem:[%s175 + $0x50] sm:$0xf] %vm1077, %v1047
      %1099 = vst.msk [vmem:[%s175 + $0x54] sm:$0xf] %vm1077, %v1048
      %1100 = vst.msk [vmem:[%s175 + $0x58] sm:$0xf] %vm1077, %v1049
      %1101 = vst.msk [vmem:[%s175 + $0x5c] sm:$0xf] %vm1077, %v1050
      %1102 = vst.msk [vmem:[%s175 + $0x60] sm:$0xf] %vm1077, %v1051
      %1103 = vst.msk [vmem:[%s175 + $0x64] sm:$0xf] %vm1077, %v1052
      %1104 = vst.msk [vmem:[%s175 + $0x68] sm:$0xf] %vm1077, %v1053
      %1105 = vst.msk [vmem:[%s175 + $0x6c] sm:$0xf] %vm1077, %v1054
      %1106 = vst.msk [vmem:[%s175 + $0x70] sm:$0xf] %vm1077, %v1055
      %1107 = vst.msk [vmem:[%s175 + $0x74] sm:$0xf] %vm1077, %v1056
      %1108 = vst.msk [vmem:[%s175 + $0x78] sm:$0xf] %vm1077, %v1057
      %1109 = vst.msk [vmem:[%s175 + $0x7c] sm:$0xf] %vm1077, %v1058
      %1110 = vst.msk [vmem:[%s175 + $0x80] sm:$0xf] %vm1077, %v1059
      %1111 = vst.msk [vmem:[%s175 + $0x84] sm:$0xf] %vm1077, %v1060
      %1112 = vst.msk [vmem:[%s175 + $0x88] sm:$0xf] %vm1077, %v1061
      %1113 = vst.msk [vmem:[%s175 + $0x8c] sm:$0xf] %vm1077, %v1062
      %1114 = vst.msk [vmem:[%s175 + $0x90] sm:$0xf] %vm1077, %v1063
      %1115 = vst.msk [vmem:[%s175 + $0x94] sm:$0xf] %vm1077, %v1064
      %1116 = vst.msk [vmem:[%s175 + $0x98] sm:$0xf] %vm1077, %v1065
      %1117 = vst.msk [vmem:[%s175 + $0x9c] sm:$0xf] %vm1077, %v1066
      %1118 = vst.msk [vmem:[%s175 + $0xa0] sm:$0xf] %vm1077, %v1067
      %1119 = vst.msk [vmem:[%s175 + $0xa4] sm:$0xf] %vm1077, %v1068
      %1120 = vst.msk [vmem:[%s175 + $0xa8] sm:$0xf] %vm1077, %v1069
      %1121 = vst.msk [vmem:[%s175 + $0xac] sm:$0xf] %vm1077, %v1070
      %1122 = vst.msk [vmem:[%s175 + $0xb0] sm:$0xf] %vm1077, %v1071
      %1123 = vst.msk [vmem:[%s175 + $0xb4] sm:$0xf] %vm1077, %v1072
      %1124 = vst.msk [vmem:[%s175 + $0xb8] sm:$0xf] %vm1077, %v1073
      %1125 = vst.msk [vmem:[%s175 + $0xbc] sm:$0xf] %vm1077, %v1074
      %1126 = vst.msk [vmem:[%s175 + $0xc0] sm:$0xf] %vm1077, %v1075
      %1127 = vst.msk [vmem:[%s175 + $0xc4] sm:$0xf] %vm1077, %v1076
      %s1128 = smul.u32 50, %s14
      %p1129 = scmp.lt.s32.totalorder %s1128, 99
      %s1130 = scalar_select %p1129, %s1128, 99
      %s1131 = smul.addr %s1130, 4
      %s1132 = scalar_lea.vmem %s3, %s1131
      // Predicated region
      $region33: #{forward.4} parent=31 // pred_check
        %p1133 = pneg %p100
      $region34: #{forward.4} parent=31 // pred_check_branch
        %1135 = sbr.rel (%p1133) target = $region36
      $region35: #{forward.4} parent=31 // pred_region
        %s1136 = smul.u32 50, %s14
      $region36: #{forward.4} parent=31 // pred_fallthru
        _
    $region32: #{forward.4} parent=5 // pred_fallthru
      _
    %p1137 = scmp.le.s32.totalorder 2, %s9
    // Predicated region
    $region37: #{forward.4} parent=5 // pred_check
      %p1138 = pneg %p1137
    $region38: #{forward.4} parent=5 // pred_check_branch
      %1140 = sbr.rel (%p1138) target = $region40
    $region39: #{forward.4} parent=5 // pred_region
      %s1141 = ssub.s32 %s9, 2
      // Predicated region
      $region41: #{forward.4} parent=39 // pred_check
        %p1142 = pneg %p106
      $region42: #{forward.4} parent=39 // pred_check_branch
        %1144 = sbr.rel (%p1142) target = $region44
      $region43: #{forward.4} parent=39 // pred_region
        %s1145 = smul.u32 50, %s15
        %p1146 = scmp.lt.s32.totalorder %s1145, 99
        %s1147 = scalar_select %p1146, %s1145, 99
        %s1148 = smul.addr %s1147, 4
        %s1149 = scalar_lea.vmem %s3, %s1148
      $region44: #{forward.4} parent=39 // pred_fallthru
        _
    $region40: #{forward.4} parent=5 // pred_fallthru
      _
  $region6: #{forward.4} parent=0 // loop_footer
    %s13 = sadd.s32 1, %s9
  $region7: #{forward.4} parent=0 // loop_footer_branch
    %8 = sbr.rel target = $region3
  $region8: #{forward.4} parent=0 // loop_exit
    _

// kernel: forward.5
$region0: #{forward.5}
  #allocation0 [shape = 'u32[]', space=smem, size = 0x4, offset = 0x4, fixed_abs, tag = 'smem constant byte address 0x4 - core index']
  #allocation1 [shape = 'u32[72,128]{1,0:T(1,128)}', space=vmem, size = 0x9000, scoped, tag = 'internal scratch']
  %s0 = inlined_call_operand.vmem [shape: bf16[162,512], index: 0, kind: input, shape index: {}]
  %s1 = inlined_call_operand.vmem [shape: bf16[512,64], index: 1, kind: input, shape index: {}]
  %s2 = inlined_call_operand.vmem [shape: f32[1,64], index: 2, kind: input, shape index: {}]
  %s3 = inlined_call_operand.vmem [shape: bf16[162,64], index: 3, kind: output, shape index: {}]
  %s4 = sld [smem:[#allocation0]]
  $region22: #{forward.5} parent=0
    _
  %s6 = ssub.s32 1, %s4
  %s7 = scalar_select 0, %s6, %s4
  // Predicated region
  $region2: #{forward.5} parent=0 // pred_check
    _
  $region3: #{forward.5} parent=0 // pred_check_branch
    %9 = sbr.rel (0) target = $region5
  $region4: #{forward.5} parent=0 // pred_region
    _
  $region5: #{forward.5} parent=0 // pred_fallthru
    _
  // Predicated region
  $region6: #{forward.5} parent=0 // pred_check
    _
  $region7: #{forward.5} parent=0 // pred_check_branch
    %11 = sbr.rel (0) target = $region9
  $region8: #{forward.5} parent=0 // pred_region
    _
  $region9: #{forward.5} parent=0 // pred_fallthru
    _
  // Predicated region
  $region10: #{forward.5} parent=0 // pred_check
    _
  $region11: #{forward.5} parent=0 // pred_check_branch
    %13 = sbr.rel (0) target = $region13
  $region12: #{forward.5} parent=0 // pred_region
    _
  $region13: #{forward.5} parent=0 // pred_fallthru
    _
  %v14 = vld [vmem:[%s0] sm:$0xff]
  %v15 = vld [vmem:[%s0 + $0x8] sm:$0xff]
  %v16 = vld [vmem:[%s0 + $0x10] sm:$0xff]
  %v17 = vld [vmem:[%s0 + $0x18] sm:$0xff]
  %v18 = vld [vmem:[%s0 + $0x20] sm:$0xff]
  %v19 = vld [vmem:[%s0 + $0x28] sm:$0xff]
  %v20 = vld [vmem:[%s0 + $0x30] sm:$0xff]
  %v21 = vld [vmem:[%s0 + $0x38] sm:$0xff]
  %v22 = vld [vmem:[%s0 + $0x40] sm:$0xff]
  %v23 = vld [vmem:[%s0 + $0x48] sm:$0xff]
  %v24 = vld [vmem:[%s0 + $0x50] sm:$0xff]
  %v25 = vld [vmem:[%s0 + $0x58] sm:$0xff]
  %v26 = vld [vmem:[%s0 + $0x60] sm:$0xff]
  %v27 = vld [vmem:[%s0 + $0x68] sm:$0xff]
  %v28 = vld [vmem:[%s0 + $0x70] sm:$0xff]
  %v29 = vld [vmem:[%s0 + $0x78] sm:$0xff]
  %v30 = vld [vmem:[%s0 + $0x80] sm:$0xff]
  %v31 = vld [vmem:[%s0 + $0x88] sm:$0xff]
  %v32 = vld [vmem:[%s0 + $0x90] sm:$0xff]
  %v33 = vld [vmem:[%s0 + $0x98] sm:$0xff]
  %v34 = vld [vmem:[%s0 + $0xa0] sm:$0xff]
  %v35 = vld [vmem:[%s0 + $0xa8] sm:$0xff]
  %v36 = vld [vmem:[%s0 + $0xb0] sm:$0xff]
  %v37 = vld [vmem:[%s0 + $0xb8] sm:$0xff]
  %v38 = vld [vmem:[%s0 + $0xc0] sm:$0xff]
  %v39 = vld [vmem:[%s0 + $0xc8] sm:$0xff]
  %v40 = vld [vmem:[%s0 + $0xd0] sm:$0xff]
  %v41 = vld [vmem:[%s0 + $0xd8] sm:$0xff]
  %v42 = vld [vmem:[%s0 + $0xe0] sm:$0xff]
  %v43 = vld [vmem:[%s0 + $0xe8] sm:$0xff]
  %v44 = vld [vmem:[%s0 + $0xf0] sm:$0xff]
  %v45 = vld [vmem:[%s0 + $0xf8] sm:$0xff]
  %v46 = vld [vmem:[%s0 + $0x100] sm:$0xff]
  %v47 = vld [vmem:[%s0 + $0x108] sm:$0xff]
  %v48 = vld [vmem:[%s0 + $0x110] sm:$0xff]
  %v49 = vld [vmem:[%s0 + $0x118] sm:$0xff]
  %v50 = vld [vmem:[%s0 + $0x120] sm:$0xff]
  %v51 = vld [vmem:[%s0 + $0x128] sm:$0xff]
  %v52 = vld [vmem:[%s0 + $0x130] sm:$0xff]
  %v53 = vld [vmem:[%s0 + $0x138] sm:$0xff]
  %v54 = vld [vmem:[%s0 + $0x140] sm:$0x11]
  %v55 = vld [vmem:[%s0 + $0x148] sm:$0x11]
  %v56 = vld [vmem:[%s1] sm:$0xf]
  %v57 = vld [vmem:[%s1 + $0x4] sm:$0xf]
  %v58 = vld [vmem:[%s1 + $0x8] sm:$0xf]
  %v59 = vld [vmem:[%s1 + $0xc] sm:$0xf]
  %v60 = vld [vmem:[%s1 + $0x10] sm:$0xf]
  %v61 = vld [vmem:[%s1 + $0x14] sm:$0xf]
  %v62 = vld [vmem:[%s1 + $0x18] sm:$0xf]
  %v63 = vld [vmem:[%s1 + $0x1c] sm:$0xf]
  %v64 = vld [vmem:[%s1 + $0x20] sm:$0xf]
  %v65 = vld [vmem:[%s1 + $0x24] sm:$0xf]
  %v66 = vld [vmem:[%s1 + $0x28] sm:$0xf]
  %v67 = vld [vmem:[%s1 + $0x2c] sm:$0xf]
  %v68 = vld [vmem:[%s1 + $0x30] sm:$0xf]
  %v69 = vld [vmem:[%s1 + $0x34] sm:$0xf]
  %v70 = vld [vmem:[%s1 + $0x38] sm:$0xf]
  %v71 = vld [vmem:[%s1 + $0x3c] sm:$0xf]
  %v72 = vld [vmem:[%s1 + $0x40] sm:$0xf]
  %v73 = vld [vmem:[%s1 + $0x44] sm:$0xf]
  %v74 = vld [vmem:[%s1 + $0x48] sm:$0xf]
  %v75 = vld [vmem:[%s1 + $0x4c] sm:$0xf]
  %v76 = vld [vmem:[%s1 + $0x50] sm:$0xf]
  %v77 = vld [vmem:[%s1 + $0x54] sm:$0xf]
  %v78 = vld [vmem:[%s1 + $0x58] sm:$0xf]
  %v79 = vld [vmem:[%s1 + $0x5c] sm:$0xf]
  %v80 = vld [vmem:[%s1 + $0x60] sm:$0xf]
  %v81 = vld [vmem:[%s1 + $0x64] sm:$0xf]
  %v82 = vld [vmem:[%s1 + $0x68] sm:$0xf]
  %v83 = vld [vmem:[%s1 + $0x6c] sm:$0xf]
  %v84 = vld [vmem:[%s1 + $0x70] sm:$0xf]
  %v85 = vld [vmem:[%s1 + $0x74] sm:$0xf]
  %v86 = vld [vmem:[%s1 + $0x78] sm:$0xf]
  %v87 = vld [vmem:[%s1 + $0x7c] sm:$0xf]
  %v88 = vld [vmem:[%s1 + $0x80] sm:$0xf]
  %v89 = vld [vmem:[%s1 + $0x84] sm:$0xf]
  %v90 = vld [vmem:[%s1 + $0x88] sm:$0xf]
  %v91 = vld [vmem:[%s1 + $0x8c] sm:$0xf]
  %v92 = vld [vmem:[%s1 + $0x90] sm:$0xf]
  %v93 = vld [vmem:[%s1 + $0x94] sm:$0xf]
  %v94 = vld [vmem:[%s1 + $0x98] sm:$0xf]
  %v95 = vld [vmem:[%s1 + $0x9c] sm:$0xf]
  %v96 = vld [vmem:[%s1 + $0xa0] sm:$0xf]
  %v97 = vld [vmem:[%s1 + $0xa4] sm:$0xf]
  %v98 = vld [vmem:[%s1 + $0xa8] sm:$0xf]
  %v99 = vld [vmem:[%s1 + $0xac] sm:$0xf]
  %v100 = vld [vmem:[%s1 + $0xb0] sm:$0xf]
  %v101 = vld [vmem:[%s1 + $0xb4] sm:$0xf]
  %v102 = vld [vmem:[%s1 + $0xb8] sm:$0xf]
  %v103 = vld [vmem:[%s1 + $0xbc] sm:$0xf]
  %v104 = vld [vmem:[%s1 + $0xc0] sm:$0xf]
  %v105 = vld [vmem:[%s1 + $0xc4] sm:$0xf]
  %v106 = vld [vmem:[%s1 + $0xc8] sm:$0xf]
  %v107 = vld [vmem:[%s1 + $0xcc] sm:$0xf]
  %v108 = vld [vmem:[%s1 + $0xd0] sm:$0xf]
  %v109 = vld [vmem:[%s1 + $0xd4] sm:$0xf]
  %v110 = vld [vmem:[%s1 + $0xd8] sm:$0xf]
  %v111 = vld [vmem:[%s1 + $0xdc] sm:$0xf]
  %v112 = vld [vmem:[%s1 + $0xe0] sm:$0xf]
  %v113 = vld [vmem:[%s1 + $0xe4] sm:$0xf]
  %v114 = vld [vmem:[%s1 + $0xe8] sm:$0xf]
  %v115 = vld [vmem:[%s1 + $0xec] sm:$0xf]
  %v116 = vld [vmem:[%s1 + $0xf0] sm:$0xf]
  %v117 = vld [vmem:[%s1 + $0xf4] sm:$0xf]
  %v118 = vld [vmem:[%s1 + $0xf8] sm:$0xf]
  %v119 = vld [vmem:[%s1 + $0xfc] sm:$0xf]
  %v120 = vld [vmem:[%s2] sm:$0x1]
  %v122 = vperm.slane %v120, 0
  %v166 = vunpack.c.l.b16 %v14
  %v167 = vunpack.c.h.b16 %v14
  %v168 = vunpack.c.l.b16 %v15
  %v169 = vunpack.c.h.b16 %v15
  %v170 = vunpack.c.l.b16 %v16
  %v171 = vunpack.c.h.b16 %v16
  %v172 = vunpack.c.l.b16 %v17
  %v173 = vunpack.c.h.b16 %v17
  %v174 = vunpack.c.l.b16 %v18
  %v175 = vunpack.c.h.b16 %v18
  %v176 = vunpack.c.l.b16 %v19
  %v177 = vunpack.c.h.b16 %v19
  %v178 = vunpack.c.l.b16 %v20
  %v179 = vunpack.c.h.b16 %v20
  %v180 = vunpack.c.l.b16 %v21
  %v181 = vunpack.c.h.b16 %v21
  %v182 = vunpack.c.l.b16 %v22
  %v183 = vunpack.c.h.b16 %v22
  %v184 = vunpack.c.l.b16 %v23
  %v185 = vunpack.c.h.b16 %v23
  %v186 = vunpack.c.l.b16 %v24
  %v187 = vunpack.c.h.b16 %v24
  %v188 = vunpack.c.l.b16 %v25
  %v189 = vunpack.c.h.b16 %v25
  %v190 = vunpack.c.l.b16 %v26
  %v191 = vunpack.c.h.b16 %v26
  %v192 = vunpack.c.l.b16 %v27
  %v193 = vunpack.c.h.b16 %v27
  %v194 = vunpack.c.l.b16 %v28
  %v195 = vunpack.c.h.b16 %v28
  %v196 = vunpack.c.l.b16 %v29
  %v197 = vunpack.c.h.b16 %v29
  %v198 = vunpack.c.l.b16 %v30
  %v199 = vunpack.c.h.b16 %v30
  %v200 = vunpack.c.l.b16 %v31
  %v201 = vunpack.c.h.b16 %v31
  %v202 = vunpack.c.l.b16 %v32
  %v203 = vunpack.c.h.b16 %v32
  %v204 = vunpack.c.l.b16 %v33
  %v205 = vunpack.c.h.b16 %v33
  %v206 = vunpack.c.l.b16 %v34
  %v207 = vunpack.c.h.b16 %v34
  %v208 = vunpack.c.l.b16 %v35
  %v209 = vunpack.c.h.b16 %v35
  %v210 = vunpack.c.l.b16 %v36
  %v211 = vunpack.c.h.b16 %v36
  %v212 = vunpack.c.l.b16 %v37
  %v213 = vunpack.c.h.b16 %v37
  %v214 = vunpack.c.l.b16 %v38
  %v215 = vunpack.c.h.b16 %v38
  %v216 = vunpack.c.l.b16 %v39
  %v217 = vunpack.c.h.b16 %v39
  %v218 = vunpack.c.l.b16 %v40
  %v219 = vunpack.c.h.b16 %v40
  %v220 = vunpack.c.l.b16 %v41
  %v221 = vunpack.c.h.b16 %v41
  %v222 = vunpack.c.l.b16 %v42
  %v223 = vunpack.c.h.b16 %v42
  %v224 = vunpack.c.l.b16 %v43
  %v225 = vunpack.c.h.b16 %v43
  %v226 = vunpack.c.l.b16 %v44
  %v227 = vunpack.c.h.b16 %v44
  %v228 = vunpack.c.l.b16 %v45
  %v229 = vunpack.c.h.b16 %v45
  %v230 = vunpack.c.l.b16 %v46
  %v231 = vunpack.c.h.b16 %v46
  %v232 = vunpack.c.l.b16 %v47
  %v233 = vunpack.c.h.b16 %v47
  %v234 = vunpack.c.l.b16 %v48
  %v235 = vunpack.c.h.b16 %v48
  %v236 = vunpack.c.l.b16 %v49
  %v237 = vunpack.c.h.b16 %v49
  %v238 = vunpack.c.l.b16 %v50
  %v239 = vunpack.c.h.b16 %v50
  %v240 = vunpack.c.l.b16 %v51
  %v241 = vunpack.c.h.b16 %v51
  %v242 = vunpack.c.l.b16 %v52
  %v243 = vunpack.c.h.b16 %v52
  %v244 = vunpack.c.l.b16 %v53
  %v245 = vunpack.c.h.b16 %v53
  %v246 = vunpack.c.l.b16 %v54
  %v247 = vunpack.c.h.b16 %v54
  %v248 = vunpack.c.l.b16 %v55
  %v249 = vunpack.c.h.b16 %v55
  %v250 = vpack.c.b16 %v170, %v166
  %v251 = vpack.c.b16 %v171, %v167
  %v252 = vpack.c.b16 %v172, %v168
  %v253 = vpack.c.b16 %v173, %v169
  %v254 = vpack.c.b16 %v178, %v174
  %v255 = vpack.c.b16 %v179, %v175
  %v256 = vpack.c.b16 %v180, %v176
  %v257 = vpack.c.b16 %v181, %v177
  %v258 = vpack.c.b16 %v186, %v182
  %v259 = vpack.c.b16 %v187, %v183
  %v260 = vpack.c.b16 %v188, %v184
  %v261 = vpack.c.b16 %v189, %v185
  %v262 = vpack.c.b16 %v194, %v190
  %v263 = vpack.c.b16 %v195, %v191
  %v264 = vpack.c.b16 %v196, %v192
  %v265 = vpack.c.b16 %v197, %v193
  %v266 = vpack.c.b16 %v202, %v198
  %v267 = vpack.c.b16 %v203, %v199
  %v268 = vpack.c.b16 %v204, %v200
  %v269 = vpack.c.b16 %v205, %v201
  %v270 = vpack.c.b16 %v210, %v206
  %v271 = vpack.c.b16 %v211, %v207
  %v272 = vpack.c.b16 %v212, %v208
  %v273 = vpack.c.b16 %v213, %v209
  %v274 = vpack.c.b16 %v218, %v214
  %v275 = vpack.c.b16 %v219, %v215
  %v276 = vpack.c.b16 %v220, %v216
  %v277 = vpack.c.b16 %v221, %v217
  %v278 = vpack.c.b16 %v226, %v222
  %v279 = vpack.c.b16 %v227, %v223
  %v280 = vpack.c.b16 %v228, %v224
  %v281 = vpack.c.b16 %v229, %v225
  %v282 = vpack.c.b16 %v234, %v230
  %v283 = vpack.c.b16 %v235, %v231
  %v284 = vpack.c.b16 %v236, %v232
  %v285 = vpack.c.b16 %v237, %v233
  %v286 = vpack.c.b16 %v242, %v238
  %v287 = vpack.c.b16 %v243, %v239
  %v288 = vpack.c.b16 %v244, %v240
  %v289 = vpack.c.b16 %v245, %v241
  %v290 = vpack.c.b16 %v246, %v246
  %v291 = vpack.c.b16 %v247, %v247
  %v292 = vpack.c.b16 %v248, %v248
  %v293 = vpack.c.b16 %v249, %v249
  %v402 = vunpack.c.l.b16 %v56
  %v403 = vunpack.c.l.b16 %v57
  %v404 = vunpack.c.l.b16 %v58
  %v405 = vunpack.c.l.b16 %v59
  %v406 = vunpack.c.l.b16 %v60
  %v407 = vunpack.c.l.b16 %v61
  %v408 = vunpack.c.l.b16 %v62
  %v409 = vunpack.c.l.b16 %v63
  %v410 = vunpack.c.l.b16 %v64
  %v411 = vunpack.c.l.b16 %v65
  %v412 = vunpack.c.l.b16 %v66
  %v413 = vunpack.c.l.b16 %v67
  %v414 = vunpack.c.l.b16 %v68
  %v415 = vunpack.c.l.b16 %v69
  %v416 = vunpack.c.l.b16 %v70
  %v417 = vunpack.c.l.b16 %v71
  %v418 = vunpack.c.l.b16 %v72
  %v419 = vunpack.c.l.b16 %v73
  %v420 = vunpack.c.l.b16 %v74
  %v421 = vunpack.c.l.b16 %v75
  %v422 = vunpack.c.l.b16 %v76
  %v423 = vunpack.c.l.b16 %v77
  %v424 = vunpack.c.l.b16 %v78
  %v425 = vunpack.c.l.b16 %v79
  %v426 = vunpack.c.l.b16 %v80
  %v427 = vunpack.c.l.b16 %v81
  %v428 = vunpack.c.l.b16 %v82
  %v429 = vunpack.c.l.b16 %v83
  %v430 = vunpack.c.l.b16 %v84
  %v431 = vunpack.c.l.b16 %v85
  %v432 = vunpack.c.l.b16 %v86
  %v433 = vunpack.c.l.b16 %v87
  %v434 = vunpack.c.l.b16 %v88
  %v435 = vunpack.c.l.b16 %v89
  %v436 = vunpack.c.l.b16 %v90
  %v437 = vunpack.c.l.b16 %v91
  %v438 = vunpack.c.l.b16 %v92
  %v439 = vunpack.c.l.b16 %v93
  %v440 = vunpack.c.l.b16 %v94
  %v441 = vunpack.c.l.b16 %v95
  %v442 = vunpack.c.l.b16 %v96
  %v443 = vunpack.c.l.b16 %v97
  %v444 = vunpack.c.l.b16 %v98
  %v445 = vunpack.c.l.b16 %v99
  %v446 = vunpack.c.l.b16 %v100
  %v447 = vunpack.c.l.b16 %v101
  %v448 = vunpack.c.l.b16 %v102
  %v449 = vunpack.c.l.b16 %v103
  %v450 = vunpack.c.l.b16 %v104
  %v451 = vunpack.c.l.b16 %v105
  %v452 = vunpack.c.l.b16 %v106
  %v453 = vunpack.c.l.b16 %v107
  %v454 = vunpack.c.l.b16 %v108
  %v455 = vunpack.c.l.b16 %v109
  %v456 = vunpack.c.l.b16 %v110
  %v457 = vunpack.c.l.b16 %v111
  %v458 = vunpack.c.l.b16 %v112
  %v459 = vunpack.c.l.b16 %v113
  %v460 = vunpack.c.l.b16 %v114
  %v461 = vunpack.c.l.b16 %v115
  %v462 = vunpack.c.l.b16 %v116
  %v463 = vunpack.c.l.b16 %v117
  %v464 = vunpack.c.l.b16 %v118
  %v465 = vunpack.c.l.b16 %v119
  %v466 = vpack.c.b16 %v403, %v402
  %v467 = vpack.c.b16 %v405, %v404
  %v468 = vpack.c.b16 %v407, %v406
  %v469 = vpack.c.b16 %v409, %v408
  %v470 = vpack.c.b16 %v411, %v410
  %v471 = vpack.c.b16 %v413, %v412
  %v472 = vpack.c.b16 %v415, %v414
  %v473 = vpack.c.b16 %v417, %v416
  %v474 = vpack.c.b16 %v419, %v418
  %v475 = vpack.c.b16 %v421, %v420
  %v476 = vpack.c.b16 %v423, %v422
  %v477 = vpack.c.b16 %v425, %v424
  %v478 = vpack.c.b16 %v427, %v426
  %v479 = vpack.c.b16 %v429, %v428
  %v480 = vpack.c.b16 %v431, %v430
  %v481 = vpack.c.b16 %v433, %v432
  %v482 = vpack.c.b16 %v435, %v434
  %v483 = vpack.c.b16 %v437, %v436
  %v484 = vpack.c.b16 %v439, %v438
  %v485 = vpack.c.b16 %v441, %v440
  %v486 = vpack.c.b16 %v443, %v442
  %v487 = vpack.c.b16 %v445, %v444
  %v488 = vpack.c.b16 %v447, %v446
  %v489 = vpack.c.b16 %v449, %v448
  %v490 = vpack.c.b16 %v451, %v450
  %v491 = vpack.c.b16 %v453, %v452
  %v492 = vpack.c.b16 %v455, %v454
  %v493 = vpack.c.b16 %v457, %v456
  %v494 = vpack.c.b16 %v459, %v458
  %v495 = vpack.c.b16 %v461, %v460
  %v496 = vpack.c.b16 %v463, %v462
  %v497 = vpack.c.b16 %v465, %v464
  %530 = vmatpush.bf16.msra.mxu0 %v473
  %531 = vmatpush.bf16.msra.mxu0 %v472
  %532 = vmatpush.bf16.msra.mxu0 %v471
  %533 = vmatpush.bf16.msra.mxu0 %v470
  %534 = vmatpush.bf16.msra.mxu0 %v469
  %535 = vmatpush.bf16.msra.mxu0 %v468
  %536 = vmatpush.bf16.msra.mxu0 %v467
  %537 = vmatpush.bf16.msra.mxu0 %v466
  %538 = vmatmul.bf16.gmra.mxu0 %v250
  %v539 = vpop.f32.mrf.mxu0
  %v540 = vadd.f32 %v122, %v539
  %v541 = vpop.f32.mrf.mxu0
  %v542 = vadd.f32 %v122, %v541
  %543 = vmatmul.bf16.gmra.mxu0 %v254
  %v544 = vpop.f32.mrf.mxu0
  %v545 = vadd.f32 %v122, %v544
  %v546 = vpop.f32.mrf.mxu0
  %v547 = vadd.f32 %v122, %v546
  %548 = vmatmul.bf16.gmra.mxu0 %v258
  %v549 = vpop.f32.mrf.mxu0
  %v550 = vadd.f32 %v122, %v549
  %v551 = vpop.f32.mrf.mxu0
  %v552 = vadd.f32 %v122, %v551
  %553 = vmatmul.bf16.gmra.mxu0 %v262
  %v554 = vpop.f32.mrf.mxu0
  %v555 = vadd.f32 %v122, %v554
  %v556 = vpop.f32.mrf.mxu0
  %v557 = vadd.f32 %v122, %v556
  %558 = vmatmul.bf16.gmra.mxu0 %v266
  %v559 = vpop.f32.mrf.mxu0
  %v560 = vadd.f32 %v122, %v559
  %v561 = vpop.f32.mrf.mxu0
  %v562 = vadd.f32 %v122, %v561
  %563 = vmatmul.bf16.gmra.mxu0 %v270
  %v564 = vpop.f32.mrf.mxu0
  %v565 = vadd.f32 %v122, %v564
  %v566 = vpop.f32.mrf.mxu0
  %v567 = vadd.f32 %v122, %v566
  %568 = vmatmul.bf16.gmra.mxu0 %v274
  %v569 = vpop.f32.mrf.mxu0
  %v570 = vadd.f32 %v122, %v569
  %v571 = vpop.f32.mrf.mxu0
  %v572 = vadd.f32 %v122, %v571
  %573 = vmatmul.bf16.gmra.mxu0 %v278
  %v574 = vpop.f32.mrf.mxu0
  %v575 = vadd.f32 %v122, %v574
  %v576 = vpop.f32.mrf.mxu0
  %v577 = vadd.f32 %v122, %v576
  %578 = vmatmul.bf16.gmra.mxu0 %v282
  %v579 = vpop.f32.mrf.mxu0
  %v580 = vadd.f32 %v122, %v579
  %v581 = vpop.f32.mrf.mxu0
  %v582 = vadd.f32 %v122, %v581
  %583 = vmatmul.bf16.gmra.mxu0 %v286
  %v584 = vpop.f32.mrf.mxu0
  %v585 = vadd.f32 %v122, %v584
  %v586 = vpop.f32.mrf.mxu0
  %v587 = vadd.f32 %v122, %v586
  %588 = vmatmul.bf16.gmra.mxu0 %v290
  %v589 = vpop.f32.mrf.mxu0
  %v590 = vadd.f32 %v122, %v589
  %v591 = vpop.f32.mrf.mxu0
  %592 = vdwg.mxu0
  %593 = vmatpush.bf16.msra.mxu0 %v481
  %594 = vmatpush.bf16.msra.mxu0 %v480
  %595 = vmatpush.bf16.msra.mxu0 %v479
  %596 = vmatpush.bf16.msra.mxu0 %v478
  %597 = vmatpush.bf16.msra.mxu0 %v477
  %598 = vmatpush.bf16.msra.mxu0 %v476
  %599 = vmatpush.bf16.msra.mxu0 %v475
  %600 = vmatpush.bf16.msra.mxu0 %v474
  %601 = vmatmul.bf16.gmra.mxu0 %v251
  %v602 = vpop.f32.mrf.mxu0
  %v603 = vadd.f32 %v540, %v602
  %v604 = vpop.f32.mrf.mxu0
  %v605 = vadd.f32 %v542, %v604
  %606 = vmatmul.bf16.gmra.mxu0 %v255
  %v607 = vpop.f32.mrf.mxu0
  %v608 = vadd.f32 %v545, %v607
  %v609 = vpop.f32.mrf.mxu0
  %v610 = vadd.f32 %v547, %v609
  %611 = vmatmul.bf16.gmra.mxu0 %v259
  %v612 = vpop.f32.mrf.mxu0
  %v613 = vadd.f32 %v550, %v612
  %v614 = vpop.f32.mrf.mxu0
  %v615 = vadd.f32 %v552, %v614
  %616 = vmatmul.bf16.gmra.mxu0 %v263
  %v617 = vpop.f32.mrf.mxu0
  %v618 = vadd.f32 %v555, %v617
  %v619 = vpop.f32.mrf.mxu0
  %v620 = vadd.f32 %v557, %v619
  %621 = vmatmul.bf16.gmra.mxu0 %v267
  %v622 = vpop.f32.mrf.mxu0
  %v623 = vadd.f32 %v560, %v622
  %v624 = vpop.f32.mrf.mxu0
  %v625 = vadd.f32 %v562, %v624
  %626 = vmatmul.bf16.gmra.mxu0 %v271
  %v627 = vpop.f32.mrf.mxu0
  %v628 = vadd.f32 %v565, %v627
  %v629 = vpop.f32.mrf.mxu0
  %v630 = vadd.f32 %v567, %v629
  %631 = vmatmul.bf16.gmra.mxu0 %v275
  %v632 = vpop.f32.mrf.mxu0
  %v633 = vadd.f32 %v570, %v632
  %v634 = vpop.f32.mrf.mxu0
  %v635 = vadd.f32 %v572, %v634
  %636 = vmatmul.bf16.gmra.mxu0 %v279
  %v637 = vpop.f32.mrf.mxu0
  %v638 = vadd.f32 %v575, %v637
  %v639 = vpop.f32.mrf.mxu0
  %v640 = vadd.f32 %v577, %v639
  %641 = vmatmul.bf16.gmra.mxu0 %v283
  %v642 = vpop.f32.mrf.mxu0
  %v643 = vadd.f32 %v580, %v642
  %v644 = vpop.f32.mrf.mxu0
  %v645 = vadd.f32 %v582, %v644
  %646 = vmatmul.bf16.gmra.mxu0 %v287
  %v647 = vpop.f32.mrf.mxu0
  %v648 = vadd.f32 %v585, %v647
  %v649 = vpop.f32.mrf.mxu0
  %v650 = vadd.f32 %v587, %v649
  %651 = vmatmul.bf16.gmra.mxu0 %v291
  %v652 = vpop.f32.mrf.mxu0
  %v653 = vadd.f32 %v590, %v652
  %v654 = vpop.f32.mrf.mxu0
  %655 = vdwg.mxu0
  %656 = vmatpush.bf16.msra.mxu0 %v489
  %657 = vmatpush.bf16.msra.mxu0 %v488
  %658 = vmatpush.bf16.msra.mxu0 %v487
  %659 = vmatpush.bf16.msra.mxu0 %v486
  %660 = vmatpush.bf16.msra.mxu0 %v485
  %661 = vmatpush.bf16.msra.mxu0 %v484
  %662 = vmatpush.bf16.msra.mxu0 %v483
  %663 = vmatpush.bf16.msra.mxu0 %v482
  %664 = vmatmul.bf16.gmra.mxu0 %v252
  %v665 = vpop.f32.mrf.mxu0
  %v666 = vadd.f32 %v603, %v665
  %v667 = vpop.f32.mrf.mxu0
  %v668 = vadd.f32 %v605, %v667
  %669 = vmatmul.bf16.gmra.mxu0 %v256
  %v670 = vpop.f32.mrf.mxu0
  %v671 = vadd.f32 %v608, %v670
  %v672 = vpop.f32.mrf.mxu0
  %v673 = vadd.f32 %v610, %v672
  %674 = vmatmul.bf16.gmra.mxu0 %v260
  %v675 = vpop.f32.mrf.mxu0
  %v676 = vadd.f32 %v613, %v675
  %v677 = vpop.f32.mrf.mxu0
  %v678 = vadd.f32 %v615, %v677
  %679 = vmatmul.bf16.gmra.mxu0 %v264
  %v680 = vpop.f32.mrf.mxu0
  %v681 = vadd.f32 %v618, %v680
  %v682 = vpop.f32.mrf.mxu0
  %v683 = vadd.f32 %v620, %v682
  %684 = vmatmul.bf16.gmra.mxu0 %v268
  %v685 = vpop.f32.mrf.mxu0
  %v686 = vadd.f32 %v623, %v685
  %v687 = vpop.f32.mrf.mxu0
  %v688 = vadd.f32 %v625, %v687
  %689 = vmatmul.bf16.gmra.mxu0 %v272
  %v690 = vpop.f32.mrf.mxu0
  %v691 = vadd.f32 %v628, %v690
  %v692 = vpop.f32.mrf.mxu0
  %v693 = vadd.f32 %v630, %v692
  %694 = vmatmul.bf16.gmra.mxu0 %v276
  %v695 = vpop.f32.mrf.mxu0
  %v696 = vadd.f32 %v633, %v695
  %v697 = vpop.f32.mrf.mxu0
  %v698 = vadd.f32 %v635, %v697
  %699 = vmatmul.bf16.gmra.mxu0 %v280
  %v700 = vpop.f32.mrf.mxu0
  %v701 = vadd.f32 %v638, %v700
  %v702 = vpop.f32.mrf.mxu0
  %v703 = vadd.f32 %v640, %v702
  %704 = vmatmul.bf16.gmra.mxu0 %v284
  %v705 = vpop.f32.mrf.mxu0
  %v706 = vadd.f32 %v643, %v705
  %v707 = vpop.f32.mrf.mxu0
  %v708 = vadd.f32 %v645, %v707
  %709 = vmatmul.bf16.gmra.mxu0 %v288
  %v710 = vpop.f32.mrf.mxu0
  %v711 = vadd.f32 %v648, %v710
  %v712 = vpop.f32.mrf.mxu0
  %v713 = vadd.f32 %v650, %v712
  %714 = vmatmul.bf16.gmra.mxu0 %v292
  %v715 = vpop.f32.mrf.mxu0
  %v716 = vadd.f32 %v653, %v715
  %v717 = vpop.f32.mrf.mxu0
  %718 = vdwg.mxu0
  %719 = vmatpush.bf16.msra.mxu0 %v497
  %720 = vmatpush.bf16.msra.mxu0 %v496
  %721 = vmatpush.bf16.msra.mxu0 %v495
  %722 = vmatpush.bf16.msra.mxu0 %v494
  %723 = vmatpush.bf16.msra.mxu0 %v493
  %724 = vmatpush.bf16.msra.mxu0 %v492
  %725 = vmatpush.bf16.msra.mxu0 %v491
  %726 = vmatpush.bf16.msra.mxu0 %v490
  %727 = vmatmul.bf16.gmra.mxu0 %v253
  %v728 = vpop.f32.mrf.mxu0
  %v729 = vadd.f32 %v666, %v728
  %v730 = vpop.f32.mrf.mxu0
  %v731 = vadd.f32 %v668, %v730
  %732 = vmatmul.bf16.gmra.mxu0 %v257
  %v733 = vpop.f32.mrf.mxu0
  %v734 = vadd.f32 %v671, %v733
  %v735 = vpop.f32.mrf.mxu0
  %v736 = vadd.f32 %v673, %v735
  %737 = vmatmul.bf16.gmra.mxu0 %v261
  %v738 = vpop.f32.mrf.mxu0
  %v739 = vadd.f32 %v676, %v738
  %v740 = vpop.f32.mrf.mxu0
  %v741 = vadd.f32 %v678, %v740
  %742 = vmatmul.bf16.gmra.mxu0 %v265
  %v743 = vpop.f32.mrf.mxu0
  %v744 = vadd.f32 %v681, %v743
  %v745 = vpop.f32.mrf.mxu0
  %v746 = vadd.f32 %v683, %v745
  %747 = vmatmul.bf16.gmra.mxu0 %v269
  %v748 = vpop.f32.mrf.mxu0
  %v749 = vadd.f32 %v686, %v748
  %v750 = vpop.f32.mrf.mxu0
  %v751 = vadd.f32 %v688, %v750
  %752 = vmatmul.bf16.gmra.mxu0 %v273
  %v753 = vpop.f32.mrf.mxu0
  %v754 = vadd.f32 %v691, %v753
  %v755 = vpop.f32.mrf.mxu0
  %v756 = vadd.f32 %v693, %v755
  %757 = vmatmul.bf16.gmra.mxu0 %v277
  %v758 = vpop.f32.mrf.mxu0
  %v759 = vadd.f32 %v696, %v758
  %v760 = vpop.f32.mrf.mxu0
  %v761 = vadd.f32 %v698, %v760
  %762 = vmatmul.bf16.gmra.mxu0 %v281
  %v763 = vpop.f32.mrf.mxu0
  %v764 = vadd.f32 %v701, %v763
  %v765 = vpop.f32.mrf.mxu0
  %v766 = vadd.f32 %v703, %v765
  %767 = vmatmul.bf16.gmra.mxu0 %v285
  %v768 = vpop.f32.mrf.mxu0
  %v769 = vadd.f32 %v706, %v768
  %v770 = vpop.f32.mrf.mxu0
  %v771 = vadd.f32 %v708, %v770
  %772 = vmatmul.bf16.gmra.mxu0 %v289
  %v773 = vpop.f32.mrf.mxu0
  %v774 = vadd.f32 %v711, %v773
  %v775 = vpop.f32.mrf.mxu0
  %v776 = vadd.f32 %v713, %v775
  %777 = vmatmul.bf16.gmra.mxu0 %v293
  %v778 = vpop.f32.mrf.mxu0
  %v779 = vadd.f32 %v716, %v778
  %v780 = vpop.f32.mrf.mxu0
  %781 = vdwg.mxu0
  %vm782 = vcmp.gt.f32.partialorder %v729, 0.0
  %vm783 = vcmp.gt.f32.partialorder %v731, 0.0
  %vm784 = vcmp.gt.f32.partialorder %v734, 0.0
  %vm785 = vcmp.gt.f32.partialorder %v736, 0.0
  %vm786 = vcmp.gt.f32.partialorder %v739, 0.0
  %vm787 = vcmp.gt.f32.partialorder %v741, 0.0
  %vm788 = vcmp.gt.f32.partialorder %v744, 0.0
  %vm789 = vcmp.gt.f32.partialorder %v746, 0.0
  %vm790 = vcmp.gt.f32.partialorder %v749, 0.0
  %vm791 = vcmp.gt.f32.partialorder %v751, 0.0
  %vm792 = vcmp.gt.f32.partialorder %v754, 0.0
  %vm793 = vcmp.gt.f32.partialorder %v756, 0.0
  %vm794 = vcmp.gt.f32.partialorder %v759, 0.0
  %vm795 = vcmp.gt.f32.partialorder %v761, 0.0
  %vm796 = vcmp.gt.f32.partialorder %v764, 0.0
  %vm797 = vcmp.gt.f32.partialorder %v766, 0.0
  %vm798 = vcmp.gt.f32.partialorder %v769, 0.0
  %vm799 = vcmp.gt.f32.partialorder %v771, 0.0
  %vm800 = vcmp.gt.f32.partialorder %v774, 0.0
  %vm801 = vcmp.gt.f32.partialorder %v776, 0.0
  %vm802 = vcmp.gt.f32.partialorder %v779, 0.0
  %v803 = vmul.f32 %v729, 0.01
  %v804 = vmul.f32 %v731, 0.01
  %v805 = vmul.f32 %v734, 0.01
  %v806 = vmul.f32 %v736, 0.01
  %v807 = vmul.f32 %v739, 0.01
  %v808 = vmul.f32 %v741, 0.01
  %v809 = vmul.f32 %v744, 0.01
  %v810 = vmul.f32 %v746, 0.01
  %v811 = vmul.f32 %v749, 0.01
  %v812 = vmul.f32 %v751, 0.01
  %v813 = vmul.f32 %v754, 0.01
  %v814 = vmul.f32 %v756, 0.01
  %v815 = vmul.f32 %v759, 0.01
  %v816 = vmul.f32 %v761, 0.01
  %v817 = vmul.f32 %v764, 0.01
  %v818 = vmul.f32 %v766, 0.01
  %v819 = vmul.f32 %v769, 0.01
  %v820 = vmul.f32 %v771, 0.01
  %v821 = vmul.f32 %v774, 0.01
  %v822 = vmul.f32 %v776, 0.01
  %v823 = vmul.f32 %v779, 0.01
  %v824 = vsel %vm782, %v729, %v803
  %v825 = vsel %vm783, %v731, %v804
  %v826 = vsel %vm784, %v734, %v805
  %v827 = vsel %vm785, %v736, %v806
  %v828 = vsel %vm786, %v739, %v807
  %v829 = vsel %vm787, %v741, %v808
  %v830 = vsel %vm788, %v744, %v809
  %v831 = vsel %vm789, %v746, %v810
  %v832 = vsel %vm790, %v749, %v811
  %v833 = vsel %vm791, %v751, %v812
  %v834 = vsel %vm792, %v754, %v813
  %v835 = vsel %vm793, %v756, %v814
  %v836 = vsel %vm794, %v759, %v815
  %v837 = vsel %vm795, %v761, %v816
  %v838 = vsel %vm796, %v764, %v817
  %v839 = vsel %vm797, %v766, %v818
  %v840 = vsel %vm798, %v769, %v819
  %v841 = vsel %vm799, %v771, %v820
  %v842 = vsel %vm800, %v774, %v821
  %v843 = vsel %vm801, %v776, %v822
  %v844 = vsel %vm802, %v779, %v823
  %v845 = vpack.c.bf16 %v824, %v824
  %v846 = vpack.c.bf16 %v825, %v825
  %v847 = vpack.c.bf16 %v826, %v826
  %v848 = vpack.c.bf16 %v827, %v827
  %v849 = vpack.c.bf16 %v828, %v828
  %v850 = vpack.c.bf16 %v829, %v829
  %v851 = vpack.c.bf16 %v830, %v830
  %v852 = vpack.c.bf16 %v831, %v831
  %v853 = vpack.c.bf16 %v832, %v832
  %v854 = vpack.c.bf16 %v833, %v833
  %v855 = vpack.c.bf16 %v834, %v834
  %v856 = vpack.c.bf16 %v835, %v835
  %v857 = vpack.c.bf16 %v836, %v836
  %v858 = vpack.c.bf16 %v837, %v837
  %v859 = vpack.c.bf16 %v838, %v838
  %v860 = vpack.c.bf16 %v839, %v839
  %v861 = vpack.c.bf16 %v840, %v840
  %v862 = vpack.c.bf16 %v841, %v841
  %v863 = vpack.c.bf16 %v842, %v842
  %v864 = vpack.c.bf16 %v843, %v843
  %v865 = vpack.c.bf16 %v844, %v844
  %vm866 = vcmask 519168
  %867 = vst.msk [vmem:[%s3] sm:$0xf] %vm866, %v845
  %868 = vst.msk [vmem:[%s3 + $0x4] sm:$0xf] %vm866, %v846
  %869 = vst.msk [vmem:[%s3 + $0x8] sm:$0xf] %vm866, %v847
  %870 = vst.msk [vmem:[%s3 + $0xc] sm:$0xf] %vm866, %v848
  %871 = vst.msk [vmem:[%s3 + $0x10] sm:$0xf] %vm866, %v849
  %872 = vst.msk [vmem:[%s3 + $0x14] sm:$0xf] %vm866, %v850
  %873 = vst.msk [vmem:[%s3 + $0x18] sm:$0xf] %vm866, %v851
  %874 = vst.msk [vmem:[%s3 + $0x1c] sm:$0xf] %vm866, %v852
  %875 = vst.msk [vmem:[%s3 + $0x20] sm:$0xf] %vm866, %v853
  %876 = vst.msk [vmem:[%s3 + $0x24] sm:$0xf] %vm866, %v854
  %877 = vst.msk [vmem:[%s3 + $0x28] sm:$0xf] %vm866, %v855
  %878 = vst.msk [vmem:[%s3 + $0x2c] sm:$0xf] %vm866, %v856
  %879 = vst.msk [vmem:[%s3 + $0x30] sm:$0xf] %vm866, %v857
  %880 = vst.msk [vmem:[%s3 + $0x34] sm:$0xf] %vm866, %v858
  %881 = vst.msk [vmem:[%s3 + $0x38] sm:$0xf] %vm866, %v859
  %882 = vst.msk [vmem:[%s3 + $0x3c] sm:$0xf] %vm866, %v860
  %883 = vst.msk [vmem:[%s3 + $0x40] sm:$0xf] %vm866, %v861
  %884 = vst.msk [vmem:[%s3 + $0x44] sm:$0xf] %vm866, %v862
  %885 = vst.msk [vmem:[%s3 + $0x48] sm:$0xf] %vm866, %v863
  %886 = vst.msk [vmem:[%s3 + $0x4c] sm:$0xf] %vm866, %v864
  %vm887 = vcmask 516096
  %888 = vst.msk [vmem:[%s3 + $0x50] sm:$0x1] %vm887, %v865
  // Predicated region
  $region14: #{forward.5} parent=0 // pred_check
    _
  $region15: #{forward.5} parent=0 // pred_check_branch
    %890 = sbr.rel (0) target = $region17
  $region16: #{forward.5} parent=0 // pred_region
    _
  $region17: #{forward.5} parent=0 // pred_fallthru
    _
  // Predicated region
  $region18: #{forward.5} parent=0 // pred_check
    _
  $region19: #{forward.5} parent=0 // pred_check_branch
    %892 = sbr.rel (0) target = $region21
  $region20: #{forward.5} parent=0 // pred_region
    _
  $region21: #{forward.5} parent=0 // pred_fallthru
    _

// kernel: forward.6
$region0: #{forward.6}
  #allocation0 [shape = 'u32[]', space=smem, size = 0x4, offset = 0x4, fixed_abs, tag = 'smem constant byte address 0x4 - core index']
  #allocation1 [shape = 'u32[72,128]{1,0:T(1,128)}', space=vmem, size = 0x9000, scoped, tag = 'internal scratch']
  %s0 = inlined_call_operand.vmem [shape: bf16[98,576], index: 0, kind: input, shape index: {}]
  %s1 = inlined_call_operand.vmem [shape: bf16[576,64], index: 1, kind: input, shape index: {}]
  %s2 = inlined_call_operand.vmem [shape: f32[1,64], index: 2, kind: input, shape index: {}]
  %s3 = inlined_call_operand.vmem [shape: bf16[98,64], index: 3, kind: output, shape index: {}]
  %s4 = sld [smem:[#allocation0]]
  $region22: #{forward.6} parent=0
    _
  %s6 = ssub.s32 1, %s4
  %s7 = scalar_select 0, %s6, %s4
  // Predicated region
  $region2: #{forward.6} parent=0 // pred_check
    _
  $region3: #{forward.6} parent=0 // pred_check_branch
    %9 = sbr.rel (0) target = $region5
  $region4: #{forward.6} parent=0 // pred_region
    _
  $region5: #{forward.6} parent=0 // pred_fallthru
    _
  // Predicated region
  $region6: #{forward.6} parent=0 // pred_check
    _
  $region7: #{forward.6} parent=0 // pred_check_branch
    %11 = sbr.rel (0) target = $region9
  $region8: #{forward.6} parent=0 // pred_region
    _
  $region9: #{forward.6} parent=0 // pred_fallthru
    _
  // Predicated region
  $region10: #{forward.6} parent=0 // pred_check
    _
  $region11: #{forward.6} parent=0 // pred_check_branch
    %13 = sbr.rel (0) target = $region13
  $region12: #{forward.6} parent=0 // pred_region
    _
  $region13: #{forward.6} parent=0 // pred_fallthru
    _
  %v15 = vld [vmem:[%s0] sm:$0xff]
  %v16 = vld [vmem:[%s0 + $0x8] sm:$0xff]
  %v17 = vld [vmem:[%s0 + $0x10] sm:$0xf]
  %v18 = vld [vmem:[%s0 + $0x14] sm:$0xff]
  %v19 = vld [vmem:[%s0 + $0x1c] sm:$0xff]
  %v20 = vld [vmem:[%s0 + $0x24] sm:$0xf]
  %v21 = vld [vmem:[%s0 + $0x28] sm:$0xff]
  %v22 = vld [vmem:[%s0 + $0x30] sm:$0xff]
  %v23 = vld [vmem:[%s0 + $0x38] sm:$0xf]
  %v24 = vld [vmem:[%s0 + $0x3c] sm:$0xff]
  %v25 = vld [vmem:[%s0 + $0x44] sm:$0xff]
  %v26 = vld [vmem:[%s0 + $0x4c] sm:$0xf]
  %v27 = vld [vmem:[%s0 + $0x50] sm:$0xff]
  %v28 = vld [vmem:[%s0 + $0x58] sm:$0xff]
  %v29 = vld [vmem:[%s0 + $0x60] sm:$0xf]
  %v30 = vld [vmem:[%s0 + $0x64] sm:$0xff]
  %v31 = vld [vmem:[%s0 + $0x6c] sm:$0xff]
  %v32 = vld [vmem:[%s0 + $0x74] sm:$0xf]
  %v33 = vld [vmem:[%s0 + $0x78] sm:$0xff]
  %v34 = vld [vmem:[%s0 + $0x80] sm:$0xff]
  %v35 = vld [vmem:[%s0 + $0x88] sm:$0xf]
  %v36 = vld [vmem:[%s0 + $0x8c] sm:$0xff]
  %v37 = vld [vmem:[%s0 + $0x94] sm:$0xff]
  %v38 = vld [vmem:[%s0 + $0x9c] sm:$0xf]
  %v39 = vld [vmem:[%s0 + $0xa0] sm:$0xff]
  %v40 = vld [vmem:[%s0 + $0xa8] sm:$0xff]
  %v41 = vld [vmem:[%s0 + $0xb0] sm:$0xf]
  %v42 = vld [vmem:[%s0 + $0xb4] sm:$0xff]
  %v43 = vld [vmem:[%s0 + $0xbc] sm:$0xff]
  %v44 = vld [vmem:[%s0 + $0xc4] sm:$0xf]
  %v45 = vld [vmem:[%s0 + $0xc8] sm:$0xff]
  %v46 = vld [vmem:[%s0 + $0xd0] sm:$0xff]
  %v47 = vld [vmem:[%s0 + $0xd8] sm:$0xf]
  %v48 = vld [vmem:[%s0 + $0xdc] sm:$0xff]
  %v49 = vld [vmem:[%s0 + $0xe4] sm:$0xff]
  %v50 = vld [vmem:[%s0 + $0xec] sm:$0xf]
  %v51 = vld [vmem:[%s0 + $0xf0] sm:$0x11]
  %v52 = vld [vmem:[%s0 + $0xf8] sm:$0x11]
  %v53 = vld [vmem:[%s0 + $0x100] sm:$0x1]
  %v54 = vld [vmem:[%s1] sm:$0xf]
  %v55 = vld [vmem:[%s1 + $0x4] sm:$0xf]
  %v56 = vld [vmem:[%s1 + $0x8] sm:$0xf]
  %v57 = vld [vmem:[%s1 + $0xc] sm:$0xf]
  %v58 = vld [vmem:[%s1 + $0x10] sm:$0xf]
  %v59 = vld [vmem:[%s1 + $0x14] sm:$0xf]
  %v60 = vld [vmem:[%s1 + $0x18] sm:$0xf]
  %v61 = vld [vmem:[%s1 + $0x1c] sm:$0xf]
  %v62 = vld [vmem:[%s1 + $0x20] sm:$0xf]
  %v63 = vld [vmem:[%s1 + $0x24] sm:$0xf]
  %v64 = vld [vmem:[%s1 + $0x28] sm:$0xf]
  %v65 = vld [vmem:[%s1 + $0x2c] sm:$0xf]
  %v66 = vld [vmem:[%s1 + $0x30] sm:$0xf]
  %v67 = vld [vmem:[%s1 + $0x34] sm:$0xf]
  %v68 = vld [vmem:[%s1 + $0x38] sm:$0xf]
  %v69 = vld [vmem:[%s1 + $0x3c] sm:$0xf]
  %v70 = vld [vmem:[%s1 + $0x40] sm:$0xf]
  %v71 = vld [vmem:[%s1 + $0x44] sm:$0xf]
  %v72 = vld [vmem:[%s1 + $0x48] sm:$0xf]
  %v73 = vld [vmem:[%s1 + $0x4c] sm:$0xf]
  %v74 = vld [vmem:[%s1 + $0x50] sm:$0xf]
  %v75 = vld [vmem:[%s1 + $0x54] sm:$0xf]
  %v76 = vld [vmem:[%s1 + $0x58] sm:$0xf]
  %v77 = vld [vmem:[%s1 + $0x5c] sm:$0xf]
  %v78 = vld [vmem:[%s1 + $0x60] sm:$0xf]
  %v79 = vld [vmem:[%s1 + $0x64] sm:$0xf]
  %v80 = vld [vmem:[%s1 + $0x68] sm:$0xf]
  %v81 = vld [vmem:[%s1 + $0x6c] sm:$0xf]
  %v82 = vld [vmem:[%s1 + $0x70] sm:$0xf]
  %v83 = vld [vmem:[%s1 + $0x74] sm:$0xf]
  %v84 = vld [vmem:[%s1 + $0x78] sm:$0xf]
  %v85 = vld [vmem:[%s1 + $0x7c] sm:$0xf]
  %v86 = vld [vmem:[%s1 + $0x80] sm:$0xf]
  %v87 = vld [vmem:[%s1 + $0x84] sm:$0xf]
  %v88 = vld [vmem:[%s1 + $0x88] sm:$0xf]
  %v89 = vld [vmem:[%s1 + $0x8c] sm:$0xf]
  %v90 = vld [vmem:[%s1 + $0x90] sm:$0xf]
  %v91 = vld [vmem:[%s1 + $0x94] sm:$0xf]
  %v92 = vld [vmem:[%s1 + $0x98] sm:$0xf]
  %v93 = vld [vmem:[%s1 + $0x9c] sm:$0xf]
  %v94 = vld [vmem:[%s1 + $0xa0] sm:$0xf]
  %v95 = vld [vmem:[%s1 + $0xa4] sm:$0xf]
  %v96 = vld [vmem:[%s1 + $0xa8] sm:$0xf]
  %v97 = vld [vmem:[%s1 + $0xac] sm:$0xf]
  %v98 = vld [vmem:[%s1 + $0xb0] sm:$0xf]
  %v99 = vld [vmem:[%s1 + $0xb4] sm:$0xf]
  %v100 = vld [vmem:[%s1 + $0xb8] sm:$0xf]
  %v101 = vld [vmem:[%s1 + $0xbc] sm:$0xf]
  %v102 = vld [vmem:[%s1 + $0xc0] sm:$0xf]
  %v103 = vld [vmem:[%s1 + $0xc4] sm:$0xf]
  %v104 = vld [vmem:[%s1 + $0xc8] sm:$0xf]
  %v105 = vld [vmem:[%s1 + $0xcc] sm:$0xf]
  %v106 = vld [vmem:[%s1 + $0xd0] sm:$0xf]
  %v107 = vld [vmem:[%s1 + $0xd4] sm:$0xf]
  %v108 = vld [vmem:[%s1 + $0xd8] sm:$0xf]
  %v109 = vld [vmem:[%s1 + $0xdc] sm:$0xf]
  %v110 = vld [vmem:[%s1 + $0xe0] sm:$0xf]
  %v111 = vld [vmem:[%s1 + $0xe4] sm:$0xf]
  %v112 = vld [vmem:[%s1 + $0xe8] sm:$0xf]
  %v113 = vld [vmem:[%s1 + $0xec] sm:$0xf]
  %v114 = vld [vmem:[%s1 + $0xf0] sm:$0xf]
  %v115 = vld [vmem:[%s1 + $0xf4] sm:$0xf]
  %v116 = vld [vmem:[%s1 + $0xf8] sm:$0xf]
  %v117 = vld [vmem:[%s1 + $0xfc] sm:$0xf]
  %v118 = vld [vmem:[%s1 + $0x100] sm:$0xf]
  %v119 = vld [vmem:[%s1 + $0x104] sm:$0xf]
  %v120 = vld [vmem:[%s1 + $0x108] sm:$0xf]
  %v121 = vld [vmem:[%s1 + $0x10c] sm:$0xf]
  %v122 = vld [vmem:[%s1 + $0x110] sm:$0xf]
  %v123 = vld [vmem:[%s1 + $0x114] sm:$0xf]
  %v124 = vld [vmem:[%s1 + $0x118] sm:$0xf]
  %v125 = vld [vmem:[%s1 + $0x11c] sm:$0xf]
  %v126 = vld [vmem:[%s2] sm:$0x1]
  %v128 = vperm.slane %v126, 0
  %v169 = vunpack.c.l.b16 %v15
  %v170 = vunpack.c.h.b16 %v15
  %v171 = vunpack.c.l.b16 %v16
  %v172 = vunpack.c.h.b16 %v16
  %v173 = vunpack.c.l.b16 %v17
  %v174 = vunpack.c.l.b16 %v18
  %v175 = vunpack.c.h.b16 %v18
  %v176 = vunpack.c.l.b16 %v19
  %v177 = vunpack.c.h.b16 %v19
  %v178 = vunpack.c.l.b16 %v20
  %v179 = vunpack.c.l.b16 %v21
  %v180 = vunpack.c.h.b16 %v21
  %v181 = vunpack.c.l.b16 %v22
  %v182 = vunpack.c.h.b16 %v22
  %v183 = vunpack.c.l.b16 %v23
  %v184 = vunpack.c.l.b16 %v24
  %v185 = vunpack.c.h.b16 %v24
  %v186 = vunpack.c.l.b16 %v25
  %v187 = vunpack.c.h.b16 %v25
  %v188 = vunpack.c.l.b16 %v26
  %v189 = vunpack.c.l.b16 %v27
  %v190 = vunpack.c.h.b16 %v27
  %v191 = vunpack.c.l.b16 %v28
  %v192 = vunpack.c.h.b16 %v28
  %v193 = vunpack.c.l.b16 %v29
  %v194 = vunpack.c.l.b16 %v30
  %v195 = vunpack.c.h.b16 %v30
  %v196 = vunpack.c.l.b16 %v31
  %v197 = vunpack.c.h.b16 %v31
  %v198 = vunpack.c.l.b16 %v32
  %v199 = vunpack.c.l.b16 %v33
  %v200 = vunpack.c.h.b16 %v33
  %v201 = vunpack.c.l.b16 %v34
  %v202 = vunpack.c.h.b16 %v34
  %v203 = vunpack.c.l.b16 %v35
  %v204 = vunpack.c.l.b16 %v36
  %v205 = vunpack.c.h.b16 %v36
  %v206 = vunpack.c.l.b16 %v37
  %v207 = vunpack.c.h.b16 %v37
  %v208 = vunpack.c.l.b16 %v38
  %v209 = vunpack.c.l.b16 %v39
  %v210 = vunpack.c.h.b16 %v39
  %v211 = vunpack.c.l.b16 %v40
  %v212 = vunpack.c.h.b16 %v40
  %v213 = vunpack.c.l.b16 %v41
  %v214 = vunpack.c.l.b16 %v42
  %v215 = vunpack.c.h.b16 %v42
  %v216 = vunpack.c.l.b16 %v43
  %v217 = vunpack.c.h.b16 %v43
  %v218 = vunpack.c.l.b16 %v44
  %v219 = vunpack.c.l.b16 %v45
  %v220 = vunpack.c.h.b16 %v45
  %v221 = vunpack.c.l.b16 %v46
  %v222 = vunpack.c.h.b16 %v46
  %v223 = vunpack.c.l.b16 %v47
  %v224 = vunpack.c.l.b16 %v48
  %v225 = vunpack.c.h.b16 %v48
  %v226 = vunpack.c.l.b16 %v49
  %v227 = vunpack.c.h.b16 %v49
  %v228 = vunpack.c.l.b16 %v50
  %v229 = vunpack.c.l.b16 %v51
  %v230 = vunpack.c.h.b16 %v51
  %v231 = vunpack.c.l.b16 %v52
  %v232 = vunpack.c.h.b16 %v52
  %v233 = vunpack.c.l.b16 %v53
  %v234 = vpack.c.b16 %v174, %v169
  %v235 = vpack.c.b16 %v175, %v170
  %v236 = vpack.c.b16 %v176, %v171
  %v237 = vpack.c.b16 %v177, %v172
  %v238 = vpack.c.b16 %v178, %v173
  %v239 = vpack.c.b16 %v184, %v179
  %v240 = vpack.c.b16 %v185, %v180
  %v241 = vpack.c.b16 %v186, %v181
  %v242 = vpack.c.b16 %v187, %v182
  %v243 = vpack.c.b16 %v188, %v183
  %v244 = vpack.c.b16 %v194, %v189
  %v245 = vpack.c.b16 %v195, %v190
  %v246 = vpack.c.b16 %v196, %v191
  %v247 = vpack.c.b16 %v197, %v192
  %v248 = vpack.c.b16 %v198, %v193
  %v249 = vpack.c.b16 %v204, %v199
  %v250 = vpack.c.b16 %v205, %v200
  %v251 = vpack.c.b16 %v206, %v201
  %v252 = vpack.c.b16 %v207, %v202
  %v253 = vpack.c.b16 %v208, %v203
  %v254 = vpack.c.b16 %v214, %v209
  %v255 = vpack.c.b16 %v215, %v210
  %v256 = vpack.c.b16 %v216, %v211
  %v257 = vpack.c.b16 %v217, %v212
  %v258 = vpack.c.b16 %v218, %v213
  %v259 = vpack.c.b16 %v224, %v219
  %v260 = vpack.c.b16 %v225, %v220
  %v261 = vpack.c.b16 %v226, %v221
  %v262 = vpack.c.b16 %v227, %v222
  %v263 = vpack.c.b16 %v228, %v223
  %v264 = vpack.c.b16 %v229, %v229
  %v265 = vpack.c.b16 %v230, %v230
  %v266 = vpack.c.b16 %v231, %v231
  %v267 = vpack.c.b16 %v232, %v232
  %v268 = vpack.c.b16 %v233, %v233
  %v369 = vunpack.c.l.b16 %v54
  %v370 = vunpack.c.l.b16 %v55
  %v371 = vunpack.c.l.b16 %v56
  %v372 = vunpack.c.l.b16 %v57
  %v373 = vunpack.c.l.b16 %v58
  %v374 = vunpack.c.l.b16 %v59
  %v375 = vunpack.c.l.b16 %v60
  %v376 = vunpack.c.l.b16 %v61
  %v377 = vunpack.c.l.b16 %v62
  %v378 = vunpack.c.l.b16 %v63
  %v379 = vunpack.c.l.b16 %v64
  %v380 = vunpack.c.l.b16 %v65
  %v381 = vunpack.c.l.b16 %v66
  %v382 = vunpack.c.l.b16 %v67
  %v383 = vunpack.c.l.b16 %v68
  %v384 = vunpack.c.l.b16 %v69
  %v385 = vunpack.c.l.b16 %v70
  %v386 = vunpack.c.l.b16 %v71
  %v387 = vunpack.c.l.b16 %v72
  %v388 = vunpack.c.l.b16 %v73
  %v389 = vunpack.c.l.b16 %v74
  %v390 = vunpack.c.l.b16 %v75
  %v391 = vunpack.c.l.b16 %v76
  %v392 = vunpack.c.l.b16 %v77
  %v393 = vunpack.c.l.b16 %v78
  %v394 = vunpack.c.l.b16 %v79
  %v395 = vunpack.c.l.b16 %v80
  %v396 = vunpack.c.l.b16 %v81
  %v397 = vunpack.c.l.b16 %v82
  %v398 = vunpack.c.l.b16 %v83
  %v399 = vunpack.c.l.b16 %v84
  %v400 = vunpack.c.l.b16 %v85
  %v401 = vunpack.c.l.b16 %v86
  %v402 = vunpack.c.l.b16 %v87
  %v403 = vunpack.c.l.b16 %v88
  %v404 = vunpack.c.l.b16 %v89
  %v405 = vunpack.c.l.b16 %v90
  %v406 = vunpack.c.l.b16 %v91
  %v407 = vunpack.c.l.b16 %v92
  %v408 = vunpack.c.l.b16 %v93
  %v409 = vunpack.c.l.b16 %v94
  %v410 = vunpack.c.l.b16 %v95
  %v411 = vunpack.c.l.b16 %v96
  %v412 = vunpack.c.l.b16 %v97
  %v413 = vunpack.c.l.b16 %v98
  %v414 = vunpack.c.l.b16 %v99
  %v415 = vunpack.c.l.b16 %v100
  %v416 = vunpack.c.l.b16 %v101
  %v417 = vunpack.c.l.b16 %v102
  %v418 = vunpack.c.l.b16 %v103
  %v419 = vunpack.c.l.b16 %v104
  %v420 = vunpack.c.l.b16 %v105
  %v421 = vunpack.c.l.b16 %v106
  %v422 = vunpack.c.l.b16 %v107
  %v423 = vunpack.c.l.b16 %v108
  %v424 = vunpack.c.l.b16 %v109
  %v425 = vunpack.c.l.b16 %v110
  %v426 = vunpack.c.l.b16 %v111
  %v427 = vunpack.c.l.b16 %v112
  %v428 = vunpack.c.l.b16 %v113
  %v429 = vunpack.c.l.b16 %v114
  %v430 = vunpack.c.l.b16 %v115
  %v431 = vunpack.c.l.b16 %v116
  %v432 = vunpack.c.l.b16 %v117
  %v433 = vunpack.c.l.b16 %v118
  %v434 = vunpack.c.l.b16 %v119
  %v435 = vunpack.c.l.b16 %v120
  %v436 = vunpack.c.l.b16 %v121
  %v437 = vunpack.c.l.b16 %v122
  %v438 = vunpack.c.l.b16 %v123
  %v439 = vunpack.c.l.b16 %v124
  %v440 = vunpack.c.l.b16 %v125
  %v441 = vpack.c.b16 %v370, %v369
  %v442 = vpack.c.b16 %v372, %v371
  %v443 = vpack.c.b16 %v374, %v373
  %v444 = vpack.c.b16 %v376, %v375
  %v445 = vpack.c.b16 %v378, %v377
  %v446 = vpack.c.b16 %v380, %v379
  %v447 = vpack.c.b16 %v382, %v381
  %v448 = vpack.c.b16 %v384, %v383
  %v449 = vpack.c.b16 %v386, %v385
  %v450 = vpack.c.b16 %v388, %v387
  %v451 = vpack.c.b16 %v390, %v389
  %v452 = vpack.c.b16 %v392, %v391
  %v453 = vpack.c.b16 %v394, %v393
  %v454 = vpack.c.b16 %v396, %v395
  %v455 = vpack.c.b16 %v398, %v397
  %v456 = vpack.c.b16 %v400, %v399
  %v457 = vpack.c.b16 %v402, %v401
  %v458 = vpack.c.b16 %v404, %v403
  %v459 = vpack.c.b16 %v406, %v405
  %v460 = vpack.c.b16 %v408, %v407
  %v461 = vpack.c.b16 %v410, %v409
  %v462 = vpack.c.b16 %v412, %v411
  %v463 = vpack.c.b16 %v414, %v413
  %v464 = vpack.c.b16 %v416, %v415
  %v465 = vpack.c.b16 %v418, %v417
  %v466 = vpack.c.b16 %v420, %v419
  %v467 = vpack.c.b16 %v422, %v421
  %v468 = vpack.c.b16 %v424, %v423
  %v469 = vpack.c.b16 %v426, %v425
  %v470 = vpack.c.b16 %v428, %v427
  %v471 = vpack.c.b16 %v430, %v429
  %v472 = vpack.c.b16 %v432, %v431
  %v473 = vpack.c.b16 %v434, %v433
  %v474 = vpack.c.b16 %v436, %v435
  %v475 = vpack.c.b16 %v438, %v437
  %v476 = vpack.c.b16 %v440, %v439
  %vm513 = vcmask 523264
  %v515 = vsel %vm513, %v238, 0
  %v518 = vsel %vm513, %v243, 0
  %v521 = vsel %vm513, %v248, 0
  %v524 = vsel %vm513, %v253, 0
  %v527 = vsel %vm513, %v258, 0
  %v530 = vsel %vm513, %v263, 0
  %v533 = vsel %vm513, %v268, 0
  %535 = vmatpush.bf16.msra.mxu0 %v448
  %536 = vmatpush.bf16.msra.mxu0 %v447
  %537 = vmatpush.bf16.msra.mxu0 %v446
  %538 = vmatpush.bf16.msra.mxu0 %v445
  %539 = vmatpush.bf16.msra.mxu0 %v444
  %540 = vmatpush.bf16.msra.mxu0 %v443
  %541 = vmatpush.bf16.msra.mxu0 %v442
  %542 = vmatpush.bf16.msra.mxu0 %v441
  %543 = vmatmul.bf16.gmra.mxu0 %v234
  %v544 = vpop.f32.mrf.mxu0
  %v545 = vadd.f32 %v128, %v544
  %v546 = vpop.f32.mrf.mxu0
  %v547 = vadd.f32 %v128, %v546
  %548 = vmatmul.bf16.gmra.mxu0 %v239
  %v549 = vpop.f32.mrf.mxu0
  %v550 = vadd.f32 %v128, %v549
  %v551 = vpop.f32.mrf.mxu0
  %v552 = vadd.f32 %v128, %v551
  %553 = vmatmul.bf16.gmra.mxu0 %v244
  %v554 = vpop.f32.mrf.mxu0
  %v555 = vadd.f32 %v128, %v554
  %v556 = vpop.f32.mrf.mxu0
  %v557 = vadd.f32 %v128, %v556
  %558 = vmatmul.bf16.gmra.mxu0 %v249
  %v559 = vpop.f32.mrf.mxu0
  %v560 = vadd.f32 %v128, %v559
  %v561 = vpop.f32.mrf.mxu0
  %v562 = vadd.f32 %v128, %v561
  %563 = vmatmul.bf16.gmra.mxu0 %v254
  %v564 = vpop.f32.mrf.mxu0
  %v565 = vadd.f32 %v128, %v564
  %v566 = vpop.f32.mrf.mxu0
  %v567 = vadd.f32 %v128, %v566
  %568 = vmatmul.bf16.gmra.mxu0 %v259
  %v569 = vpop.f32.mrf.mxu0
  %v570 = vadd.f32 %v128, %v569
  %v571 = vpop.f32.mrf.mxu0
  %v572 = vadd.f32 %v128, %v571
  %573 = vmatmul.bf16.gmra.mxu0 %v264
  %v574 = vpop.f32.mrf.mxu0
  %v575 = vadd.f32 %v128, %v574
  %v576 = vpop.f32.mrf.mxu0
  %577 = vdwg.mxu0
  %578 = vmatpush.bf16.msra.mxu0 %v456
  %579 = vmatpush.bf16.msra.mxu0 %v455
  %580 = vmatpush.bf16.msra.mxu0 %v454
  %581 = vmatpush.bf16.msra.mxu0 %v453
  %582 = vmatpush.bf16.msra.mxu0 %v452
  %583 = vmatpush.bf16.msra.mxu0 %v451
  %584 = vmatpush.bf16.msra.mxu0 %v450
  %585 = vmatpush.bf16.msra.mxu0 %v449
  %586 = vmatmul.bf16.gmra.mxu0 %v235
  %v587 = vpop.f32.mrf.mxu0
  %v588 = vadd.f32 %v545, %v587
  %v589 = vpop.f32.mrf.mxu0
  %v590 = vadd.f32 %v547, %v589
  %591 = vmatmul.bf16.gmra.mxu0 %v240
  %v592 = vpop.f32.mrf.mxu0
  %v593 = vadd.f32 %v550, %v592
  %v594 = vpop.f32.mrf.mxu0
  %v595 = vadd.f32 %v552, %v594
  %596 = vmatmul.bf16.gmra.mxu0 %v245
  %v597 = vpop.f32.mrf.mxu0
  %v598 = vadd.f32 %v555, %v597
  %v599 = vpop.f32.mrf.mxu0
  %v600 = vadd.f32 %v557, %v599
  %601 = vmatmul.bf16.gmra.mxu0 %v250
  %v602 = vpop.f32.mrf.mxu0
  %v603 = vadd.f32 %v560, %v602
  %v604 = vpop.f32.mrf.mxu0
  %v605 = vadd.f32 %v562, %v604
  %606 = vmatmul.bf16.gmra.mxu0 %v255
  %v607 = vpop.f32.mrf.mxu0
  %v608 = vadd.f32 %v565, %v607
  %v609 = vpop.f32.mrf.mxu0
  %v610 = vadd.f32 %v567, %v609
  %611 = vmatmul.bf16.gmra.mxu0 %v260
  %v612 = vpop.f32.mrf.mxu0
  %v613 = vadd.f32 %v570, %v612
  %v614 = vpop.f32.mrf.mxu0
  %v615 = vadd.f32 %v572, %v614
  %616 = vmatmul.bf16.gmra.mxu0 %v265
  %v617 = vpop.f32.mrf.mxu0
  %v618 = vadd.f32 %v575, %v617
  %v619 = vpop.f32.mrf.mxu0
  %620 = vdwg.mxu0
  %621 = vmatpush.bf16.msra.mxu0 %v464
  %622 = vmatpush.bf16.msra.mxu0 %v463
  %623 = vmatpush.bf16.msra.mxu0 %v462
  %624 = vmatpush.bf16.msra.mxu0 %v461
  %625 = vmatpush.bf16.msra.mxu0 %v460
  %626 = vmatpush.bf16.msra.mxu0 %v459
  %627 = vmatpush.bf16.msra.mxu0 %v458
  %628 = vmatpush.bf16.msra.mxu0 %v457
  %629 = vmatmul.bf16.gmra.mxu0 %v236
  %v630 = vpop.f32.mrf.mxu0
  %v631 = vadd.f32 %v588, %v630
  %v632 = vpop.f32.mrf.mxu0
  %v633 = vadd.f32 %v590, %v632
  %634 = vmatmul.bf16.gmra.mxu0 %v241
  %v635 = vpop.f32.mrf.mxu0
  %v636 = vadd.f32 %v593, %v635
  %v637 = vpop.f32.mrf.mxu0
  %v638 = vadd.f32 %v595, %v637
  %639 = vmatmul.bf16.gmra.mxu0 %v246
  %v640 = vpop.f32.mrf.mxu0
  %v641 = vadd.f32 %v598, %v640
  %v642 = vpop.f32.mrf.mxu0
  %v643 = vadd.f32 %v600, %v642
  %644 = vmatmul.bf16.gmra.mxu0 %v251
  %v645 = vpop.f32.mrf.mxu0
  %v646 = vadd.f32 %v603, %v645
  %v647 = vpop.f32.mrf.mxu0
  %v648 = vadd.f32 %v605, %v647
  %649 = vmatmul.bf16.gmra.mxu0 %v256
  %v650 = vpop.f32.mrf.mxu0
  %v651 = vadd.f32 %v608, %v650
  %v652 = vpop.f32.mrf.mxu0
  %v653 = vadd.f32 %v610, %v652
  %654 = vmatmul.bf16.gmra.mxu0 %v261
  %v655 = vpop.f32.mrf.mxu0
  %v656 = vadd.f32 %v613, %v655
  %v657 = vpop.f32.mrf.mxu0
  %v658 = vadd.f32 %v615, %v657
  %659 = vmatmul.bf16.gmra.mxu0 %v266
  %v660 = vpop.f32.mrf.mxu0
  %v661 = vadd.f32 %v618, %v660
  %v662 = vpop.f32.mrf.mxu0
  %663 = vdwg.mxu0
  %664 = vmatpush.bf16.msra.mxu0 %v472
  %665 = vmatpush.bf16.msra.mxu0 %v471
  %666 = vmatpush.bf16.msra.mxu0 %v470
  %667 = vmatpush.bf16.msra.mxu0 %v469
  %668 = vmatpush.bf16.msra.mxu0 %v468
  %669 = vmatpush.bf16.msra.mxu0 %v467
  %670 = vmatpush.bf16.msra.mxu0 %v466
  %671 = vmatpush.bf16.msra.mxu0 %v465
  %672 = vmatmul.bf16.gmra.mxu0 %v237
  %v673 = vpop.f32.mrf.mxu0
  %v674 = vadd.f32 %v631, %v673
  %v675 = vpop.f32.mrf.mxu0
  %v676 = vadd.f32 %v633, %v675
  %677 = vmatmul.bf16.gmra.mxu0 %v242
  %v678 = vpop.f32.mrf.mxu0
  %v679 = vadd.f32 %v636, %v678
  %v680 = vpop.f32.mrf.mxu0
  %v681 = vadd.f32 %v638, %v680
  %682 = vmatmul.bf16.gmra.mxu0 %v247
  %v683 = vpop.f32.mrf.mxu0
  %v684 = vadd.f32 %v641, %v683
  %v685 = vpop.f32.mrf.mxu0
  %v686 = vadd.f32 %v643, %v685
  %687 = vmatmul.bf16.gmra.mxu0 %v252
  %v688 = vpop.f32.mrf.mxu0
  %v689 = vadd.f32 %v646, %v688
  %v690 = vpop.f32.mrf.mxu0
  %v691 = vadd.f32 %v648, %v690
  %692 = vmatmul.bf16.gmra.mxu0 %v257
  %v693 = vpop.f32.mrf.mxu0
  %v694 = vadd.f32 %v651, %v693
  %v695 = vpop.f32.mrf.mxu0
  %v696 = vadd.f32 %v653, %v695
  %697 = vmatmul.bf16.gmra.mxu0 %v262
  %v698 = vpop.f32.mrf.mxu0
  %v699 = vadd.f32 %v656, %v698
  %v700 = vpop.f32.mrf.mxu0
  %v701 = vadd.f32 %v658, %v700
  %702 = vmatmul.bf16.gmra.mxu0 %v267
  %v703 = vpop.f32.mrf.mxu0
  %v704 = vadd.f32 %v661, %v703
  %v705 = vpop.f32.mrf.mxu0
  %706 = vdwg.mxu0
  %707 = vmatpush.bf16.msra.mxu0 0
  %708 = vmatpush.bf16.msra.mxu0 0
  %709 = vmatpush.bf16.msra.mxu0 0
  %710 = vmatpush.bf16.msra.mxu0 0
  %711 = vmatpush.bf16.msra.mxu0 %v476
  %712 = vmatpush.bf16.msra.mxu0 %v475
  %713 = vmatpush.bf16.msra.mxu0 %v474
  %714 = vmatpush.bf16.msra.mxu0 %v473
  %715 = vmatmul.bf16.gmra.mxu0 %v515
  %v716 = vpop.f32.mrf.mxu0
  %v717 = vadd.f32 %v674, %v716
  %v718 = vpop.f32.mrf.mxu0
  %v719 = vadd.f32 %v676, %v718
  %720 = vmatmul.bf16.gmra.mxu0 %v518
  %v721 = vpop.f32.mrf.mxu0
  %v722 = vadd.f32 %v679, %v721
  %v723 = vpop.f32.mrf.mxu0
  %v724 = vadd.f32 %v681, %v723
  %725 = vmatmul.bf16.gmra.mxu0 %v521
  %v726 = vpop.f32.mrf.mxu0
  %v727 = vadd.f32 %v684, %v726
  %v728 = vpop.f32.mrf.mxu0
  %v729 = vadd.f32 %v686, %v728
  %730 = vmatmul.bf16.gmra.mxu0 %v524
  %v731 = vpop.f32.mrf.mxu0
  %v732 = vadd.f32 %v689, %v731
  %v733 = vpop.f32.mrf.mxu0
  %v734 = vadd.f32 %v691, %v733
  %735 = vmatmul.bf16.gmra.mxu0 %v527
  %v736 = vpop.f32.mrf.mxu0
  %v737 = vadd.f32 %v694, %v736
  %v738 = vpop.f32.mrf.mxu0
  %v739 = vadd.f32 %v696, %v738
  %740 = vmatmul.bf16.gmra.mxu0 %v530
  %v741 = vpop.f32.mrf.mxu0
  %v742 = vadd.f32 %v699, %v741
  %v743 = vpop.f32.mrf.mxu0
  %v744 = vadd.f32 %v701, %v743
  %745 = vmatmul.bf16.gmra.mxu0 %v533
  %v746 = vpop.f32.mrf.mxu0
  %v747 = vadd.f32 %v704, %v746
  %v748 = vpop.f32.mrf.mxu0
  %749 = vdwg.mxu0
  %vm750 = vcmp.gt.f32.partialorder %v717, 0.0
  %vm751 = vcmp.gt.f32.partialorder %v719, 0.0
  %vm752 = vcmp.gt.f32.partialorder %v722, 0.0
  %vm753 = vcmp.gt.f32.partialorder %v724, 0.0
  %vm754 = vcmp.gt.f32.partialorder %v727, 0.0
  %vm755 = vcmp.gt.f32.partialorder %v729, 0.0
  %vm756 = vcmp.gt.f32.partialorder %v732, 0.0
  %vm757 = vcmp.gt.f32.partialorder %v734, 0.0
  %vm758 = vcmp.gt.f32.partialorder %v737, 0.0
  %vm759 = vcmp.gt.f32.partialorder %v739, 0.0
  %vm760 = vcmp.gt.f32.partialorder %v742, 0.0
  %vm761 = vcmp.gt.f32.partialorder %v744, 0.0
  %vm762 = vcmp.gt.f32.partialorder %v747, 0.0
  %v763 = vmul.f32 %v717, 0.01
  %v764 = vmul.f32 %v719, 0.01
  %v765 = vmul.f32 %v722, 0.01
  %v766 = vmul.f32 %v724, 0.01
  %v767 = vmul.f32 %v727, 0.01
  %v768 = vmul.f32 %v729, 0.01
  %v769 = vmul.f32 %v732, 0.01
  %v770 = vmul.f32 %v734, 0.01
  %v771 = vmul.f32 %v737, 0.01
  %v772 = vmul.f32 %v739, 0.01
  %v773 = vmul.f32 %v742, 0.01
  %v774 = vmul.f32 %v744, 0.01
  %v775 = vmul.f32 %v747, 0.01
  %v776 = vsel %vm750, %v717, %v763
  %v777 = vsel %vm751, %v719, %v764
  %v778 = vsel %vm752, %v722, %v765
  %v779 = vsel %vm753, %v724, %v766
  %v780 = vsel %vm754, %v727, %v767
  %v781 = vsel %vm755, %v729, %v768
  %v782 = vsel %vm756, %v732, %v769
  %v783 = vsel %vm757, %v734, %v770
  %v784 = vsel %vm758, %v737, %v771
  %v785 = vsel %vm759, %v739, %v772
  %v786 = vsel %vm760, %v742, %v773
  %v787 = vsel %vm761, %v744, %v774
  %v788 = vsel %vm762, %v747, %v775
  %v789 = vpack.c.bf16 %v776, %v776
  %v790 = vpack.c.bf16 %v777, %v777
  %v791 = vpack.c.bf16 %v778, %v778
  %v792 = vpack.c.bf16 %v779, %v779
  %v793 = vpack.c.bf16 %v780, %v780
  %v794 = vpack.c.bf16 %v781, %v781
  %v795 = vpack.c.bf16 %v782, %v782
  %v796 = vpack.c.bf16 %v783, %v783
  %v797 = vpack.c.bf16 %v784, %v784
  %v798 = vpack.c.bf16 %v785, %v785
  %v799 = vpack.c.bf16 %v786, %v786
  %v800 = vpack.c.bf16 %v787, %v787
  %v801 = vpack.c.bf16 %v788, %v788
  %vm802 = vcmask 519168
  %803 = vst.msk [vmem:[%s3] sm:$0xf] %vm802, %v789
  %804 = vst.msk [vmem:[%s3 + $0x4] sm:$0xf] %vm802, %v790
  %805 = vst.msk [vmem:[%s3 + $0x8] sm:$0xf] %vm802, %v791
  %806 = vst.msk [vmem:[%s3 + $0xc] sm:$0xf] %vm802, %v792
  %807 = vst.msk [vmem:[%s3 + $0x10] sm:$0xf] %vm802, %v793
  %808 = vst.msk [vmem:[%s3 + $0x14] sm:$0xf] %vm802, %v794
  %809 = vst.msk [vmem:[%s3 + $0x18] sm:$0xf] %vm802, %v795
  %810 = vst.msk [vmem:[%s3 + $0x1c] sm:$0xf] %vm802, %v796
  %811 = vst.msk [vmem:[%s3 + $0x20] sm:$0xf] %vm802, %v797
  %812 = vst.msk [vmem:[%s3 + $0x24] sm:$0xf] %vm802, %v798
  %813 = vst.msk [vmem:[%s3 + $0x28] sm:$0xf] %vm802, %v799
  %814 = vst.msk [vmem:[%s3 + $0x2c] sm:$0xf] %vm802, %v800
  %vm815 = vcmask 516096
  %816 = vst.msk [vmem:[%s3 + $0x30] sm:$0x1] %vm815, %v801
  // Predicated region
  $region14: #{forward.6} parent=0 // pred_check
    _
  $region15: #{forward.6} parent=0 // pred_check_branch
    %818 = sbr.rel (0) target = $region17
  $region16: #{forward.6} parent=0 // pred_region
    _
  $region17: #{forward.6} parent=0 // pred_fallthru
    _
  // Predicated region
  $region18: #{forward.6} parent=0 // pred_check
    _
  $region19: #{forward.6} parent=0 // pred_check_branch
    %820 = sbr.rel (0) target = $region21
  $region20: #{forward.6} parent=0 // pred_region
    _
  $region21: #{forward.6} parent=0 // pred_fallthru
    _

// kernel: forward.7
$region0: #{forward.7}
  #allocation0 [shape = 'u32[]', space=smem, size = 0x4, offset = 0x4, fixed_abs, tag = 'smem constant byte address 0x4 - core index']
  #allocation1 [shape = 'u32[72,128]{1,0:T(1,128)}', space=vmem, size = 0x9000, scoped, tag = 'internal scratch']
  #allocation2 [shape = 'f32[1,1]{1,0:T(1,128)S(1)}', space=vmem, size = 0x200, scoped, tag = 'scoped memory for forward.7']
  %s0 = inlined_call_operand.vmem [shape: bf16[2,3136], index: 0, kind: input, shape index: {}]
  %s1 = inlined_call_operand.vmem [shape: bf16[3136,512], index: 1, kind: input, shape index: {}]
  %s2 = inlined_call_operand.vmem [shape: f32[1,512], index: 2, kind: input, shape index: {}]
  %s3 = inlined_call_operand.vmem [shape: bf16[512,6], index: 3, kind: input, shape index: {}]
  %s4 = inlined_call_operand.vmem [shape: f32[1,6], index: 4, kind: input, shape index: {}]
  %s5 = inlined_call_operand.vmem [shape: bf16[512,1], index: 5, kind: input, shape index: {}]
  %s6 = inlined_call_operand.<no memory space> [shape: f32[1,1], index: 6, kind: input, shape index: {}]
  %s7 = inlined_call_operand.hbm [shape: f32[2,6], index: 7, kind: output, shape index: {0}]
  %s8 = inlined_call_operand.vmem [shape: f32[2,1], index: 8, kind: output, shape index: {1}]
  %9 = xla_tuple %s7, %s8
  %s10 = sld [smem:[#allocation0]]
  $region46: #{forward.7} parent=0
    _
  %s12 = ssub.s32 1, %s10
  %s13 = scalar_select 0, %s12, %s10
  %v14 = vstv %s6
  %15 = vst [vmem:[#allocation2] sm:$0x1] %v14
  $region1: #{forward.7} parent=0
    #allocation3 [shape = 'u8[1024]{0}', space=vmem, size = 0x400, scoped, tag = 'output window, operand 0, single buffered']
    #allocation4 [shape = 's32[1]{0}', space=sflag, size = 0x4, scoped, tag = 'scoped memory for forward.7']
    %16 = vsyncpa [#allocation4], 0
    // Predicated region
    $region2: #{forward.7} parent=1 // pred_check
      _
    $region3: #{forward.7} parent=1 // pred_check_branch
      %18 = sbr.rel (0) target = $region5
    $region4: #{forward.7} parent=1 // pred_region
      _
    $region5: #{forward.7} parent=1 // pred_fallthru
      _
    // Predicated region
    $region6: #{forward.7} parent=1 // pred_check
      _
    $region7: #{forward.7} parent=1 // pred_check_branch
      %20 = sbr.rel (0) target = $region9
    $region8: #{forward.7} parent=1 // pred_region
      _
    $region9: #{forward.7} parent=1 // pred_fallthru
      _
    // Predicated region
    $region10: #{forward.7} parent=1 // pred_check
      _
    $region11: #{forward.7} parent=1 // pred_check_branch
      %22 = sbr.rel (0) target = $region13
    $region12: #{forward.7} parent=1 // pred_region
      _
    $region13: #{forward.7} parent=1 // pred_fallthru
      _
    // Predicated region
    $region14: #{forward.7} parent=1 // pred_check
      _
    $region15: #{forward.7} parent=1 // pred_check_branch
      %24 = sbr.rel (0) target = $region17
    $region16: #{forward.7} parent=1 // pred_region
      _
    $region17: #{forward.7} parent=1 // pred_fallthru
      _
    // Predicated region
    $region18: #{forward.7} parent=1 // pred_check
      _
    $region19: #{forward.7} parent=1 // pred_check_branch
      %26 = sbr.rel (0) target = $region21
    $region20: #{forward.7} parent=1 // pred_region
      _
    $region21: #{forward.7} parent=1 // pred_fallthru
      _
    // Predicated region
    $region22: #{forward.7} parent=1 // pred_check
      _
    $region23: #{forward.7} parent=1 // pred_check_branch
      %28 = sbr.rel (0) target = $region25
    $region24: #{forward.7} parent=1 // pred_region
      _
    $region25: #{forward.7} parent=1 // pred_fallthru
      _
    // Predicated region
    $region26: #{forward.7} parent=1 // pred_check
      _
    $region27: #{forward.7} parent=1 // pred_check_branch
      %30 = sbr.rel (0) target = $region29
    $region28: #{forward.7} parent=1 // pred_region
      _
    $region29: #{forward.7} parent=1 // pred_fallthru
      _
    %v32 = vld [vmem:[%s0] sm:$0xff]
    %v33 = vld [vmem:[%s0 + $0x8] sm:$0xff]
    %v34 = vld [vmem:[%s0 + $0x10] sm:$0xff]
    %v35 = vld [vmem:[%s0 + $0x18] sm:$0x1]
    %v36 = vld [vmem:[%s1] sm:$0xff]
    %v37 = vld [vmem:[%s1 + $0x8] sm:$0xff]
    %v38 = vld [vmem:[%s1 + $0x10] sm:$0xff]
    %v39 = vld [vmem:[%s1 + $0x18] sm:$0xff]
    %v40 = vld [vmem:[%s1 + $0x20] sm:$0xff]
    %v41 = vld [vmem:[%s1 + $0x28] sm:$0xff]
    %v42 = vld [vmem:[%s1 + $0x30] sm:$0xff]
    %v43 = vld [vmem:[%s1 + $0x38] sm:$0xff]
    %v44 = vld [vmem:[%s1 + $0x40] sm:$0xff]
    %v45 = vld [vmem:[%s1 + $0x48] sm:$0xff]
    %v46 = vld [vmem:[%s1 + $0x50] sm:$0xff]
    %v47 = vld [vmem:[%s1 + $0x58] sm:$0xff]
    %v48 = vld [vmem:[%s1 + $0x60] sm:$0xff]
    %v49 = vld [vmem:[%s1 + $0x68] sm:$0xff]
    %v50 = vld [vmem:[%s1 + $0x70] sm:$0xff]
    %v51 = vld [vmem:[%s1 + $0x78] sm:$0xff]
    %v52 = vld [vmem:[%s1 + $0x80] sm:$0xff]
    %v53 = vld [vmem:[%s1 + $0x88] sm:$0xff]
    %v54 = vld [vmem:[%s1 + $0x90] sm:$0xff]
    %v55 = vld [vmem:[%s1 + $0x98] sm:$0xff]
    %v56 = vld [vmem:[%s1 + $0xa0] sm:$0xff]
    %v57 = vld [vmem:[%s1 + $0xa8] sm:$0xff]
    %v58 = vld [vmem:[%s1 + $0xb0] sm:$0xff]
    %v59 = vld [vmem:[%s1 + $0xb8] sm:$0xff]
    %v60 = vld [vmem:[%s1 + $0xc0] sm:$0xff]
    %v61 = vld [vmem:[%s1 + $0xc8] sm:$0xff]
    %v62 = vld [vmem:[%s1 + $0xd0] sm:$0xff]
    %v63 = vld [vmem:[%s1 + $0xd8] sm:$0xff]
    %v64 = vld [vmem:[%s1 + $0xe0] sm:$0xff]
    %v65 = vld [vmem:[%s1 + $0xe8] sm:$0xff]
    %v66 = vld [vmem:[%s1 + $0xf0] sm:$0xff]
    %v67 = vld [vmem:[%s1 + $0xf8] sm:$0xff]
    %v68 = vld [vmem:[%s1 + $0x100] sm:$0xff]
    %v69 = vld [vmem:[%s1 + $0x108] sm:$0xff]
    %v70 = vld [vmem:[%s1 + $0x110] sm:$0xff]
    %v71 = vld [vmem:[%s1 + $0x118] sm:$0xff]
    %v72 = vld [vmem:[%s1 + $0x120] sm:$0xff]
    %v73 = vld [vmem:[%s1 + $0x128] sm:$0xff]
    %v74 = vld [vmem:[%s1 + $0x130] sm:$0xff]
    %v75 = vld [vmem:[%s1 + $0x138] sm:$0xff]
    %v76 = vld [vmem:[%s1 + $0x140] sm:$0xff]
    %v77 = vld [vmem:[%s1 + $0x148] sm:$0xff]
    %v78 = vld [vmem:[%s1 + $0x150] sm:$0xff]
    %v79 = vld [vmem:[%s1 + $0x158] sm:$0xff]
    %v80 = vld [vmem:[%s1 + $0x160] sm:$0xff]
    %v81 = vld [vmem:[%s1 + $0x168] sm:$0xff]
    %v82 = vld [vmem:[%s1 + $0x170] sm:$0xff]
    %v83 = vld [vmem:[%s1 + $0x178] sm:$0xff]
    %v84 = vld [vmem:[%s1 + $0x180] sm:$0xff]
    %v85 = vld [vmem:[%s1 + $0x188] sm:$0xff]
    %v86 = vld [vmem:[%s1 + $0x190] sm:$0xff]
    %v87 = vld [vmem:[%s1 + $0x198] sm:$0xff]
    %v88 = vld [vmem:[%s1 + $0x1a0] sm:$0xff]
    %v89 = vld [vmem:[%s1 + $0x1a8] sm:$0xff]
    %v90 = vld [vmem:[%s1 + $0x1b0] sm:$0xff]
    %v91 = vld [vmem:[%s1 + $0x1b8] sm:$0xff]
    %v92 = vld [vmem:[%s1 + $0x1c0] sm:$0xff]
    %v93 = vld [vmem:[%s1 + $0x1c8] sm:$0xff]
    %v94 = vld [vmem:[%s1 + $0x1d0] sm:$0xff]
    %v95 = vld [vmem:[%s1 + $0x1d8] sm:$0xff]
    %v96 = vld [vmem:[%s1 + $0x1e0] sm:$0xff]
    %v97 = vld [vmem:[%s1 + $0x1e8] sm:$0xff]
    %v98 = vld [vmem:[%s1 + $0x1f0] sm:$0xff]
    %v99 = vld [vmem:[%s1 + $0x1f8] sm:$0xff]
    %v100 = vld [vmem:[%s1 + $0x200] sm:$0xff]
    %v101 = vld [vmem:[%s1 + $0x208] sm:$0xff]
    %v102 = vld [vmem:[%s1 + $0x210] sm:$0xff]
    %v103 = vld [vmem:[%s1 + $0x218] sm:$0xff]
    %v104 = vld [vmem:[%s1 + $0x220] sm:$0xff]
    %v105 = vld [vmem:[%s1 + $0x228] sm:$0xff]
    %v106 = vld [vmem:[%s1 + $0x230] sm:$0xff]
    %v107 = vld [vmem:[%s1 + $0x238] sm:$0xff]
    %v108 = vld [vmem:[%s1 + $0x240] sm:$0xff]
    %v109 = vld [vmem:[%s1 + $0x248] sm:$0xff]
    %v110 = vld [vmem:[%s1 + $0x250] sm:$0xff]
    %v111 = vld [vmem:[%s1 + $0x258] sm:$0xff]
    %v112 = vld [vmem:[%s1 + $0x260] sm:$0xff]
    %v113 = vld [vmem:[%s1 + $0x268] sm:$0xff]
    %v114 = vld [vmem:[%s1 + $0x270] sm:$0xff]
    %v115 = vld [vmem:[%s1 + $0x278] sm:$0xff]
    %v116 = vld [vmem:[%s1 + $0x280] sm:$0xff]
    %v117 = vld [vmem:[%s1 + $0x288] sm:$0xff]
    %v118 = vld [vmem:[%s1 + $0x290] sm:$0xff]
    %v119 = vld [vmem:[%s1 + $0x298] sm:$0xff]
    %v120 = vld [vmem:[%s1 + $0x2a0] sm:$0xff]
    %v121 = vld [vmem:[%s1 + $0x2a8] sm:$0xff]
    %v122 = vld [vmem:[%s1 + $0x2b0] sm:$0xff]
    %v123 = vld [vmem:[%s1 + $0x2b8] sm:$0xff]
    %v124 = vld [vmem:[%s1 + $0x2c0] sm:$0xff]
    %v125 = vld [vmem:[%s1 + $0x2c8] sm:$0xff]
    %v126 = vld [vmem:[%s1 + $0x2d0] sm:$0xff]
    %v127 = vld [vmem:[%s1 + $0x2d8] sm:$0xff]
    %v128 = vld [vmem:[%s1 + $0x2e0] sm:$0xff]
    %v129 = vld [vmem:[%s1 + $0x2e8] sm:$0xff]
    %v130 = vld [vmem:[%s1 + $0x2f0] sm:$0xff]
    %v131 = vld [vmem:[%s1 + $0x2f8] sm:$0xff]
    %v132 = vld [vmem:[%s1 + $0x300] sm:$0xff]
    %v133 = vld [vmem:[%s1 + $0x308] sm:$0xff]
    %v134 = vld [vmem:[%s1 + $0x310] sm:$0xff]
    %v135 = vld [vmem:[%s1 + $0x318] sm:$0xff]
    %v136 = vld [vmem:[%s1 + $0x320] sm:$0xff]
    %v137 = vld [vmem:[%s1 + $0x328] sm:$0xff]
    %v138 = vld [vmem:[%s1 + $0x330] sm:$0xff]
    %v139 = vld [vmem:[%s1 + $0x338] sm:$0xff]
    %v140 = vld [vmem:[%s1 + $0x340] sm:$0xff]
    %v141 = vld [vmem:[%s1 + $0x348] sm:$0xff]
    %v142 = vld [vmem:[%s1 + $0x350] sm:$0xff]
    %v143 = vld [vmem:[%s1 + $0x358] sm:$0xff]
    %v144 = vld [vmem:[%s1 + $0x360] sm:$0xff]
    %v145 = vld [vmem:[%s1 + $0x368] sm:$0xff]
    %v146 = vld [vmem:[%s1 + $0x370] sm:$0xff]
    %v147 = vld [vmem:[%s1 + $0x378] sm:$0xff]
    %v148 = vld [vmem:[%s1 + $0x380] sm:$0xff]
    %v149 = vld [vmem:[%s1 + $0x388] sm:$0xff]
    %v150 = vld [vmem:[%s1 + $0x390] sm:$0xff]
    %v151 = vld [vmem:[%s1 + $0x398] sm:$0xff]
    %v152 = vld [vmem:[%s1 + $0x3a0] sm:$0xff]
    %v153 = vld [vmem:[%s1 + $0x3a8] sm:$0xff]
    %v154 = vld [vmem:[%s1 + $0x3b0] sm:$0xff]
    %v155 = vld [vmem:[%s1 + $0x3b8] sm:$0xff]
    %v156 = vld [vmem:[%s1 + $0x3c0] sm:$0xff]
    %v157 = vld [vmem:[%s1 + $0x3c8] sm:$0xff]
    %v158 = vld [vmem:[%s1 + $0x3d0] sm:$0xff]
    %v159 = vld [vmem:[%s1 + $0x3d8] sm:$0xff]
    %v160 = vld [vmem:[%s1 + $0x3e0] sm:$0xff]
    %v161 = vld [vmem:[%s1 + $0x3e8] sm:$0xff]
    %v162 = vld [vmem:[%s1 + $0x3f0] sm:$0xff]
    %v163 = vld [vmem:[%s1 + $0x3f8] sm:$0xff]
    %v164 = vld [vmem:[%s1 + $0x400] sm:$0xff]
    %v165 = vld [vmem:[%s1 + $0x408] sm:$0xff]
    %v166 = vld [vmem:[%s1 + $0x410] sm:$0xff]
    %v167 = vld [vmem:[%s1 + $0x418] sm:$0xff]
    %v168 = vld [vmem:[%s1 + $0x420] sm:$0xff]
    %v169 = vld [vmem:[%s1 + $0x428] sm:$0xff]
    %v170 = vld [vmem:[%s1 + $0x430] sm:$0xff]
    %v171 = vld [vmem:[%s1 + $0x438] sm:$0xff]
    %v172 = vld [vmem:[%s1 + $0x440] sm:$0xff]
    %v173 = vld [vmem:[%s1 + $0x448] sm:$0xff]
    %v174 = vld [vmem:[%s1 + $0x450] sm:$0xff]
    %v175 = vld [vmem:[%s1 + $0x458] sm:$0xff]
    %v176 = vld [vmem:[%s1 + $0x460] sm:$0xff]
    %v177 = vld [vmem:[%s1 + $0x468] sm:$0xff]
    %v178 = vld [vmem:[%s1 + $0x470] sm:$0xff]
    %v179 = vld [vmem:[%s1 + $0x478] sm:$0xff]
    %v180 = vld [vmem:[%s1 + $0x480] sm:$0xff]
    %v181 = vld [vmem:[%s1 + $0x488] sm:$0xff]
    %v182 = vld [vmem:[%s1 + $0x490] sm:$0xff]
    %v183 = vld [vmem:[%s1 + $0x498] sm:$0xff]
    %v184 = vld [vmem:[%s1 + $0x4a0] sm:$0xff]
    %v185 = vld [vmem:[%s1 + $0x4a8] sm:$0xff]
    %v186 = vld [vmem:[%s1 + $0x4b0] sm:$0xff]
    %v187 = vld [vmem:[%s1 + $0x4b8] sm:$0xff]
    %v188 = vld [vmem:[%s1 + $0x4c0] sm:$0xff]
    %v189 = vld [vmem:[%s1 + $0x4c8] sm:$0xff]
    %v190 = vld [vmem:[%s1 + $0x4d0] sm:$0xff]
    %v191 = vld [vmem:[%s1 + $0x4d8] sm:$0xff]
    %v192 = vld [vmem:[%s1 + $0x4e0] sm:$0xff]
    %v193 = vld [vmem:[%s1 + $0x4e8] sm:$0xff]
    %v194 = vld [vmem:[%s1 + $0x4f0] sm:$0xff]
    %v195 = vld [vmem:[%s1 + $0x4f8] sm:$0xff]
    %v196 = vld [vmem:[%s1 + $0x500] sm:$0xff]
    %v197 = vld [vmem:[%s1 + $0x508] sm:$0xff]
    %v198 = vld [vmem:[%s1 + $0x510] sm:$0xff]
    %v199 = vld [vmem:[%s1 + $0x518] sm:$0xff]
    %v200 = vld [vmem:[%s1 + $0x520] sm:$0xff]
    %v201 = vld [vmem:[%s1 + $0x528] sm:$0xff]
    %v202 = vld [vmem:[%s1 + $0x530] sm:$0xff]
    %v203 = vld [vmem:[%s1 + $0x538] sm:$0xff]
    %v204 = vld [vmem:[%s1 + $0x540] sm:$0xff]
    %v205 = vld [vmem:[%s1 + $0x548] sm:$0xff]
    %v206 = vld [vmem:[%s1 + $0x550] sm:$0xff]
    %v207 = vld [vmem:[%s1 + $0x558] sm:$0xff]
    %v208 = vld [vmem:[%s1 + $0x560] sm:$0xff]
    %v209 = vld [vmem:[%s1 + $0x568] sm:$0xff]
    %v210 = vld [vmem:[%s1 + $0x570] sm:$0xff]
    %v211 = vld [vmem:[%s1 + $0x578] sm:$0xff]
    %v212 = vld [vmem:[%s1 + $0x580] sm:$0xff]
    %v213 = vld [vmem:[%s1 + $0x588] sm:$0xff]
    %v214 = vld [vmem:[%s1 + $0x590] sm:$0xff]
    %v215 = vld [vmem:[%s1 + $0x598] sm:$0xff]
    %v216 = vld [vmem:[%s1 + $0x5a0] sm:$0xff]
    %v217 = vld [vmem:[%s1 + $0x5a8] sm:$0xff]
    %v218 = vld [vmem:[%s1 + $0x5b0] sm:$0xff]
    %v219 = vld [vmem:[%s1 + $0x5b8] sm:$0xff]
    %v220 = vld [vmem:[%s1 + $0x5c0] sm:$0xff]
    %v221 = vld [vmem:[%s1 + $0x5c8] sm:$0xff]
    %v222 = vld [vmem:[%s1 + $0x5d0] sm:$0xff]
    %v223 = vld [vmem:[%s1 + $0x5d8] sm:$0xff]
    %v224 = vld [vmem:[%s1 + $0x5e0] sm:$0xff]
    %v225 = vld [vmem:[%s1 + $0x5e8] sm:$0xff]
    %v226 = vld [vmem:[%s1 + $0x5f0] sm:$0xff]
    %v227 = vld [vmem:[%s1 + $0x5f8] sm:$0xff]
    %v228 = vld [vmem:[%s1 + $0x600] sm:$0xff]
    %v229 = vld [vmem:[%s1 + $0x608] sm:$0xff]
    %v230 = vld [vmem:[%s1 + $0x610] sm:$0xff]
    %v231 = vld [vmem:[%s1 + $0x618] sm:$0xff]
    %v232 = vld [vmem:[%s1 + $0x620] sm:$0xff]
    %v233 = vld [vmem:[%s1 + $0x628] sm:$0xff]
    %v234 = vld [vmem:[%s1 + $0x630] sm:$0xff]
    %v235 = vld [vmem:[%s1 + $0x638] sm:$0xff]
    %v236 = vld [vmem:[%s1 + $0x640] sm:$0xff]
    %v237 = vld [vmem:[%s1 + $0x648] sm:$0xff]
    %v238 = vld [vmem:[%s1 + $0x650] sm:$0xff]
    %v239 = vld [vmem:[%s1 + $0x658] sm:$0xff]
    %v240 = vld [vmem:[%s1 + $0x660] sm:$0xff]
    %v241 = vld [vmem:[%s1 + $0x668] sm:$0xff]
    %v242 = vld [vmem:[%s1 + $0x670] sm:$0xff]
    %v243 = vld [vmem:[%s1 + $0x678] sm:$0xff]
    %v244 = vld [vmem:[%s1 + $0x680] sm:$0xff]
    %v245 = vld [vmem:[%s1 + $0x688] sm:$0xff]
    %v246 = vld [vmem:[%s1 + $0x690] sm:$0xff]
    %v247 = vld [vmem:[%s1 + $0x698] sm:$0xff]
    %v248 = vld [vmem:[%s1 + $0x6a0] sm:$0xff]
    %v249 = vld [vmem:[%s1 + $0x6a8] sm:$0xff]
    %v250 = vld [vmem:[%s1 + $0x6b0] sm:$0xff]
    %v251 = vld [vmem:[%s1 + $0x6b8] sm:$0xff]
    %v252 = vld [vmem:[%s1 + $0x6c0] sm:$0xff]
    %v253 = vld [vmem:[%s1 + $0x6c8] sm:$0xff]
    %v254 = vld [vmem:[%s1 + $0x6d0] sm:$0xff]
    %v255 = vld [vmem:[%s1 + $0x6d8] sm:$0xff]
    %v256 = vld [vmem:[%s1 + $0x6e0] sm:$0xff]
    %v257 = vld [vmem:[%s1 + $0x6e8] sm:$0xff]
    %v258 = vld [vmem:[%s1 + $0x6f0] sm:$0xff]
    %v259 = vld [vmem:[%s1 + $0x6f8] sm:$0xff]
    %v260 = vld [vmem:[%s1 + $0x700] sm:$0xff]
    %v261 = vld [vmem:[%s1 + $0x708] sm:$0xff]
    %v262 = vld [vmem:[%s1 + $0x710] sm:$0xff]
    %v263 = vld [vmem:[%s1 + $0x718] sm:$0xff]
    %v264 = vld [vmem:[%s1 + $0x720] sm:$0xff]
    %v265 = vld [vmem:[%s1 + $0x728] sm:$0xff]
    %v266 = vld [vmem:[%s1 + $0x730] sm:$0xff]
    %v267 = vld [vmem:[%s1 + $0x738] sm:$0xff]
    %v268 = vld [vmem:[%s1 + $0x740] sm:$0xff]
    %v269 = vld [vmem:[%s1 + $0x748] sm:$0xff]
    %v270 = vld [vmem:[%s1 + $0x750] sm:$0xff]
    %v271 = vld [vmem:[%s1 + $0x758] sm:$0xff]
    %v272 = vld [vmem:[%s1 + $0x760] sm:$0xff]
    %v273 = vld [vmem:[%s1 + $0x768] sm:$0xff]
    %v274 = vld [vmem:[%s1 + $0x770] sm:$0xff]
    %v275 = vld [vmem:[%s1 + $0x778] sm:$0xff]
    %v276 = vld [vmem:[%s1 + $0x780] sm:$0xff]
    %v277 = vld [vmem:[%s1 + $0x788] sm:$0xff]
    %v278 = vld [vmem:[%s1 + $0x790] sm:$0xff]
    %v279 = vld [vmem:[%s1 + $0x798] sm:$0xff]
    %v280 = vld [vmem:[%s1 + $0x7a0] sm:$0xff]
    %v281 = vld [vmem:[%s1 + $0x7a8] sm:$0xff]
    %v282 = vld [vmem:[%s1 + $0x7b0] sm:$0xff]
    %v283 = vld [vmem:[%s1 + $0x7b8] sm:$0xff]
    %v284 = vld [vmem:[%s1 + $0x7c0] sm:$0xff]
    %v285 = vld [vmem:[%s1 + $0x7c8] sm:$0xff]
    %v286 = vld [vmem:[%s1 + $0x7d0] sm:$0xff]
    %v287 = vld [vmem:[%s1 + $0x7d8] sm:$0xff]
    %v288 = vld [vmem:[%s1 + $0x7e0] sm:$0xff]
    %v289 = vld [vmem:[%s1 + $0x7e8] sm:$0xff]
    %v290 = vld [vmem:[%s1 + $0x7f0] sm:$0xff]
    %v291 = vld [vmem:[%s1 + $0x7f8] sm:$0xff]
    %v292 = vld [vmem:[%s1 + $0x800] sm:$0xff]
    %v293 = vld [vmem:[%s1 + $0x808] sm:$0xff]
    %v294 = vld [vmem:[%s1 + $0x810] sm:$0xff]
    %v295 = vld [vmem:[%s1 + $0x818] sm:$0xff]
    %v296 = vld [vmem:[%s1 + $0x820] sm:$0xff]
    %v297 = vld [vmem:[%s1 + $0x828] sm:$0xff]
    %v298 = vld [vmem:[%s1 + $0x830] sm:$0xff]
    %v299 = vld [vmem:[%s1 + $0x838] sm:$0xff]
    %v300 = vld [vmem:[%s1 + $0x840] sm:$0xff]
    %v301 = vld [vmem:[%s1 + $0x848] sm:$0xff]
    %v302 = vld [vmem:[%s1 + $0x850] sm:$0xff]
    %v303 = vld [vmem:[%s1 + $0x858] sm:$0xff]
    %v304 = vld [vmem:[%s1 + $0x860] sm:$0xff]
    %v305 = vld [vmem:[%s1 + $0x868] sm:$0xff]
    %v306 = vld [vmem:[%s1 + $0x870] sm:$0xff]
    %v307 = vld [vmem:[%s1 + $0x878] sm:$0xff]
    %v308 = vld [vmem:[%s1 + $0x880] sm:$0xff]
    %v309 = vld [vmem:[%s1 + $0x888] sm:$0xff]
    %v310 = vld [vmem:[%s1 + $0x890] sm:$0xff]
    %v311 = vld [vmem:[%s1 + $0x898] sm:$0xff]
    %v312 = vld [vmem:[%s1 + $0x8a0] sm:$0xff]
    %v313 = vld [vmem:[%s1 + $0x8a8] sm:$0xff]
    %v314 = vld [vmem:[%s1 + $0x8b0] sm:$0xff]
    %v315 = vld [vmem:[%s1 + $0x8b8] sm:$0xff]
    %v316 = vld [vmem:[%s1 + $0x8c0] sm:$0xff]
    %v317 = vld [vmem:[%s1 + $0x8c8] sm:$0xff]
    %v318 = vld [vmem:[%s1 + $0x8d0] sm:$0xff]
    %v319 = vld [vmem:[%s1 + $0x8d8] sm:$0xff]
    %v320 = vld [vmem:[%s1 + $0x8e0] sm:$0xff]
    %v321 = vld [vmem:[%s1 + $0x8e8] sm:$0xff]
    %v322 = vld [vmem:[%s1 + $0x8f0] sm:$0xff]
    %v323 = vld [vmem:[%s1 + $0x8f8] sm:$0xff]
    %v324 = vld [vmem:[%s1 + $0x900] sm:$0xff]
    %v325 = vld [vmem:[%s1 + $0x908] sm:$0xff]
    %v326 = vld [vmem:[%s1 + $0x910] sm:$0xff]
    %v327 = vld [vmem:[%s1 + $0x918] sm:$0xff]
    %v328 = vld [vmem:[%s1 + $0x920] sm:$0xff]
    %v329 = vld [vmem:[%s1 + $0x928] sm:$0xff]
    %v330 = vld [vmem:[%s1 + $0x930] sm:$0xff]
    %v331 = vld [vmem:[%s1 + $0x938] sm:$0xff]
    %v332 = vld [vmem:[%s1 + $0x940] sm:$0xff]
    %v333 = vld [vmem:[%s1 + $0x948] sm:$0xff]
    %v334 = vld [vmem:[%s1 + $0x950] sm:$0xff]
    %v335 = vld [vmem:[%s1 + $0x958] sm:$0xff]
    %v336 = vld [vmem:[%s1 + $0x960] sm:$0xff]
    %v337 = vld [vmem:[%s1 + $0x968] sm:$0xff]
    %v338 = vld [vmem:[%s1 + $0x970] sm:$0xff]
    %v339 = vld [vmem:[%s1 + $0x978] sm:$0xff]
    %v340 = vld [vmem:[%s1 + $0x980] sm:$0xff]
    %v341 = vld [vmem:[%s1 + $0x988] sm:$0xff]
    %v342 = vld [vmem:[%s1 + $0x990] sm:$0xff]
    %v343 = vld [vmem:[%s1 + $0x998] sm:$0xff]
    %v344 = vld [vmem:[%s1 + $0x9a0] sm:$0xff]
    %v345 = vld [vmem:[%s1 + $0x9a8] sm:$0xff]
    %v346 = vld [vmem:[%s1 + $0x9b0] sm:$0xff]
    %v347 = vld [vmem:[%s1 + $0x9b8] sm:$0xff]
    %v348 = vld [vmem:[%s1 + $0x9c0] sm:$0xff]
    %v349 = vld [vmem:[%s1 + $0x9c8] sm:$0xff]
    %v350 = vld [vmem:[%s1 + $0x9d0] sm:$0xff]
    %v351 = vld [vmem:[%s1 + $0x9d8] sm:$0xff]
    %v352 = vld [vmem:[%s1 + $0x9e0] sm:$0xff]
    %v353 = vld [vmem:[%s1 + $0x9e8] sm:$0xff]
    %v354 = vld [vmem:[%s1 + $0x9f0] sm:$0xff]
    %v355 = vld [vmem:[%s1 + $0x9f8] sm:$0xff]
    %v356 = vld [vmem:[%s1 + $0xa00] sm:$0xff]
    %v357 = vld [vmem:[%s1 + $0xa08] sm:$0xff]
    %v358 = vld [vmem:[%s1 + $0xa10] sm:$0xff]
    %v359 = vld [vmem:[%s1 + $0xa18] sm:$0xff]
    %v360 = vld [vmem:[%s1 + $0xa20] sm:$0xff]
    %v361 = vld [vmem:[%s1 + $0xa28] sm:$0xff]
    %v362 = vld [vmem:[%s1 + $0xa30] sm:$0xff]
    %v363 = vld [vmem:[%s1 + $0xa38] sm:$0xff]
    %v364 = vld [vmem:[%s1 + $0xa40] sm:$0xff]
    %v365 = vld [vmem:[%s1 + $0xa48] sm:$0xff]
    %v366 = vld [vmem:[%s1 + $0xa50] sm:$0xff]
    %v367 = vld [vmem:[%s1 + $0xa58] sm:$0xff]
    %v368 = vld [vmem:[%s1 + $0xa60] sm:$0xff]
    %v369 = vld [vmem:[%s1 + $0xa68] sm:$0xff]
    %v370 = vld [vmem:[%s1 + $0xa70] sm:$0xff]
    %v371 = vld [vmem:[%s1 + $0xa78] sm:$0xff]
    %v372 = vld [vmem:[%s1 + $0xa80] sm:$0xff]
    %v373 = vld [vmem:[%s1 + $0xa88] sm:$0xff]
    %v374 = vld [vmem:[%s1 + $0xa90] sm:$0xff]
    %v375 = vld [vmem:[%s1 + $0xa98] sm:$0xff]
    %v376 = vld [vmem:[%s1 + $0xaa0] sm:$0xff]
    %v377 = vld [vmem:[%s1 + $0xaa8] sm:$0xff]
    %v378 = vld [vmem:[%s1 + $0xab0] sm:$0xff]
    %v379 = vld [vmem:[%s1 + $0xab8] sm:$0xff]
    %v380 = vld [vmem:[%s1 + $0xac0] sm:$0xff]
    %v381 = vld [vmem:[%s1 + $0xac8] sm:$0xff]
    %v382 = vld [vmem:[%s1 + $0xad0] sm:$0xff]
    %v383 = vld [vmem:[%s1 + $0xad8] sm:$0xff]
    %v384 = vld [vmem:[%s1 + $0xae0] sm:$0xff]
    %v385 = vld [vmem:[%s1 + $0xae8] sm:$0xff]
    %v386 = vld [vmem:[%s1 + $0xaf0] sm:$0xff]
    %v387 = vld [vmem:[%s1 + $0xaf8] sm:$0xff]
    %v388 = vld [vmem:[%s1 + $0xb00] sm:$0xff]
    %v389 = vld [vmem:[%s1 + $0xb08] sm:$0xff]
    %v390 = vld [vmem:[%s1 + $0xb10] sm:$0xff]
    %v391 = vld [vmem:[%s1 + $0xb18] sm:$0xff]
    %v392 = vld [vmem:[%s1 + $0xb20] sm:$0xff]
    %v393 = vld [vmem:[%s1 + $0xb28] sm:$0xff]
    %v394 = vld [vmem:[%s1 + $0xb30] sm:$0xff]
    %v395 = vld [vmem:[%s1 + $0xb38] sm:$0xff]
    %v396 = vld [vmem:[%s1 + $0xb40] sm:$0xff]
    %v397 = vld [vmem:[%s1 + $0xb48] sm:$0xff]
    %v398 = vld [vmem:[%s1 + $0xb50] sm:$0xff]
    %v399 = vld [vmem:[%s1 + $0xb58] sm:$0xff]
    %v400 = vld [vmem:[%s1 + $0xb60] sm:$0xff]
    %v401 = vld [vmem:[%s1 + $0xb68] sm:$0xff]
    %v402 = vld [vmem:[%s1 + $0xb70] sm:$0xff]
    %v403 = vld [vmem:[%s1 + $0xb78] sm:$0xff]
    %v404 = vld [vmem:[%s1 + $0xb80] sm:$0xff]
    %v405 = vld [vmem:[%s1 + $0xb88] sm:$0xff]
    %v406 = vld [vmem:[%s1 + $0xb90] sm:$0xff]
    %v407 = vld [vmem:[%s1 + $0xb98] sm:$0xff]
    %v408 = vld [vmem:[%s1 + $0xba0] sm:$0xff]
    %v409 = vld [vmem:[%s1 + $0xba8] sm:$0xff]
    %v410 = vld [vmem:[%s1 + $0xbb0] sm:$0xff]
    %v411 = vld [vmem:[%s1 + $0xbb8] sm:$0xff]
    %v412 = vld [vmem:[%s1 + $0xbc0] sm:$0xff]
    %v413 = vld [vmem:[%s1 + $0xbc8] sm:$0xff]
    %v414 = vld [vmem:[%s1 + $0xbd0] sm:$0xff]
    %v415 = vld [vmem:[%s1 + $0xbd8] sm:$0xff]
    %v416 = vld [vmem:[%s1 + $0xbe0] sm:$0xff]
    %v417 = vld [vmem:[%s1 + $0xbe8] sm:$0xff]
    %v418 = vld [vmem:[%s1 + $0xbf0] sm:$0xff]
    %v419 = vld [vmem:[%s1 + $0xbf8] sm:$0xff]
    %v420 = vld [vmem:[%s1 + $0xc00] sm:$0xff]
    %v421 = vld [vmem:[%s1 + $0xc08] sm:$0xff]
    %v422 = vld [vmem:[%s1 + $0xc10] sm:$0xff]
    %v423 = vld [vmem:[%s1 + $0xc18] sm:$0xff]
    %v424 = vld [vmem:[%s1 + $0xc20] sm:$0xff]
    %v425 = vld [vmem:[%s1 + $0xc28] sm:$0xff]
    %v426 = vld [vmem:[%s1 + $0xc30] sm:$0xff]
    %v427 = vld [vmem:[%s1 + $0xc38] sm:$0xff]
    %v428 = vld [vmem:[%s1 + $0xc40] sm:$0xff]
    %v429 = vld [vmem:[%s1 + $0xc48] sm:$0xff]
    %v430 = vld [vmem:[%s1 + $0xc50] sm:$0xff]
    %v431 = vld [vmem:[%s1 + $0xc58] sm:$0xff]
    %v432 = vld [vmem:[%s1 + $0xc60] sm:$0xff]
    %v433 = vld [vmem:[%s1 + $0xc68] sm:$0xff]
    %v434 = vld [vmem:[%s1 + $0xc70] sm:$0xff]
    %v435 = vld [vmem:[%s1 + $0xc78] sm:$0xff]
    %v436 = vld [vmem:[%s1 + $0xc80] sm:$0xff]
    %v437 = vld [vmem:[%s1 + $0xc88] sm:$0xff]
    %v438 = vld [vmem:[%s1 + $0xc90] sm:$0xff]
    %v439 = vld [vmem:[%s1 + $0xc98] sm:$0xff]
    %v440 = vld [vmem:[%s1 + $0xca0] sm:$0xff]
    %v441 = vld [vmem:[%s1 + $0xca8] sm:$0xff]
    %v442 = vld [vmem:[%s1 + $0xcb0] sm:$0xff]
    %v443 = vld [vmem:[%s1 + $0xcb8] sm:$0xff]
    %v444 = vld [vmem:[%s1 + $0xcc0] sm:$0xff]
    %v445 = vld [vmem:[%s1 + $0xcc8] sm:$0xff]
    %v446 = vld [vmem:[%s1 + $0xcd0] sm:$0xff]
    %v447 = vld [vmem:[%s1 + $0xcd8] sm:$0xff]
    %v448 = vld [vmem:[%s1 + $0xce0] sm:$0xff]
    %v449 = vld [vmem:[%s1 + $0xce8] sm:$0xff]
    %v450 = vld [vmem:[%s1 + $0xcf0] sm:$0xff]
    %v451 = vld [vmem:[%s1 + $0xcf8] sm:$0xff]
    %v452 = vld [vmem:[%s1 + $0xd00] sm:$0xff]
    %v453 = vld [vmem:[%s1 + $0xd08] sm:$0xff]
    %v454 = vld [vmem:[%s1 + $0xd10] sm:$0xff]
    %v455 = vld [vmem:[%s1 + $0xd18] sm:$0xff]
    %v456 = vld [vmem:[%s1 + $0xd20] sm:$0xff]
    %v457 = vld [vmem:[%s1 + $0xd28] sm:$0xff]
    %v458 = vld [vmem:[%s1 + $0xd30] sm:$0xff]
    %v459 = vld [vmem:[%s1 + $0xd38] sm:$0xff]
    %v460 = vld [vmem:[%s1 + $0xd40] sm:$0xff]
    %v461 = vld [vmem:[%s1 + $0xd48] sm:$0xff]
    %v462 = vld [vmem:[%s1 + $0xd50] sm:$0xff]
    %v463 = vld [vmem:[%s1 + $0xd58] sm:$0xff]
    %v464 = vld [vmem:[%s1 + $0xd60] sm:$0xff]
    %v465 = vld [vmem:[%s1 + $0xd68] sm:$0xff]
    %v466 = vld [vmem:[%s1 + $0xd70] sm:$0xff]
    %v467 = vld [vmem:[%s1 + $0xd78] sm:$0xff]
    %v468 = vld [vmem:[%s1 + $0xd80] sm:$0xff]
    %v469 = vld [vmem:[%s1 + $0xd88] sm:$0xff]
    %v470 = vld [vmem:[%s1 + $0xd90] sm:$0xff]
    %v471 = vld [vmem:[%s1 + $0xd98] sm:$0xff]
    %v472 = vld [vmem:[%s1 + $0xda0] sm:$0xff]
    %v473 = vld [vmem:[%s1 + $0xda8] sm:$0xff]
    %v474 = vld [vmem:[%s1 + $0xdb0] sm:$0xff]
    %v475 = vld [vmem:[%s1 + $0xdb8] sm:$0xff]
    %v476 = vld [vmem:[%s1 + $0xdc0] sm:$0xff]
    %v477 = vld [vmem:[%s1 + $0xdc8] sm:$0xff]
    %v478 = vld [vmem:[%s1 + $0xdd0] sm:$0xff]
    %v479 = vld [vmem:[%s1 + $0xdd8] sm:$0xff]
    %v480 = vld [vmem:[%s1 + $0xde0] sm:$0xff]
    %v481 = vld [vmem:[%s1 + $0xde8] sm:$0xff]
    %v482 = vld [vmem:[%s1 + $0xdf0] sm:$0xff]
    %v483 = vld [vmem:[%s1 + $0xdf8] sm:$0xff]
    %v484 = vld [vmem:[%s1 + $0xe00] sm:$0xff]
    %v485 = vld [vmem:[%s1 + $0xe08] sm:$0xff]
    %v486 = vld [vmem:[%s1 + $0xe10] sm:$0xff]
    %v487 = vld [vmem:[%s1 + $0xe18] sm:$0xff]
    %v488 = vld [vmem:[%s1 + $0xe20] sm:$0xff]
    %v489 = vld [vmem:[%s1 + $0xe28] sm:$0xff]
    %v490 = vld [vmem:[%s1 + $0xe30] sm:$0xff]
    %v491 = vld [vmem:[%s1 + $0xe38] sm:$0xff]
    %v492 = vld [vmem:[%s1 + $0xe40] sm:$0xff]
    %v493 = vld [vmem:[%s1 + $0xe48] sm:$0xff]
    %v494 = vld [vmem:[%s1 + $0xe50] sm:$0xff]
    %v495 = vld [vmem:[%s1 + $0xe58] sm:$0xff]
    %v496 = vld [vmem:[%s1 + $0xe60] sm:$0xff]
    %v497 = vld [vmem:[%s1 + $0xe68] sm:$0xff]
    %v498 = vld [vmem:[%s1 + $0xe70] sm:$0xff]
    %v499 = vld [vmem:[%s1 + $0xe78] sm:$0xff]
    %v500 = vld [vmem:[%s1 + $0xe80] sm:$0xff]
    %v501 = vld [vmem:[%s1 + $0xe88] sm:$0xff]
    %v502 = vld [vmem:[%s1 + $0xe90] sm:$0xff]
    %v503 = vld [vmem:[%s1 + $0xe98] sm:$0xff]
    %v504 = vld [vmem:[%s1 + $0xea0] sm:$0xff]
    %v505 = vld [vmem:[%s1 + $0xea8] sm:$0xff]
    %v506 = vld [vmem:[%s1 + $0xeb0] sm:$0xff]
    %v507 = vld [vmem:[%s1 + $0xeb8] sm:$0xff]
    %v508 = vld [vmem:[%s1 + $0xec0] sm:$0xff]
    %v509 = vld [vmem:[%s1 + $0xec8] sm:$0xff]
    %v510 = vld [vmem:[%s1 + $0xed0] sm:$0xff]
    %v511 = vld [vmem:[%s1 + $0xed8] sm:$0xff]
    %v512 = vld [vmem:[%s1 + $0xee0] sm:$0xff]
    %v513 = vld [vmem:[%s1 + $0xee8] sm:$0xff]
    %v514 = vld [vmem:[%s1 + $0xef0] sm:$0xff]
    %v515 = vld [vmem:[%s1 + $0xef8] sm:$0xff]
    %v516 = vld [vmem:[%s1 + $0xf00] sm:$0xff]
    %v517 = vld [vmem:[%s1 + $0xf08] sm:$0xff]
    %v518 = vld [vmem:[%s1 + $0xf10] sm:$0xff]
    %v519 = vld [vmem:[%s1 + $0xf18] sm:$0xff]
    %v520 = vld [vmem:[%s1 + $0xf20] sm:$0xff]
    %v521 = vld [vmem:[%s1 + $0xf28] sm:$0xff]
    %v522 = vld [vmem:[%s1 + $0xf30] sm:$0xff]
    %v523 = vld [vmem:[%s1 + $0xf38] sm:$0xff]
    %v524 = vld [vmem:[%s1 + $0xf40] sm:$0xff]
    %v525 = vld [vmem:[%s1 + $0xf48] sm:$0xff]
    %v526 = vld [vmem:[%s1 + $0xf50] sm:$0xff]
    %v527 = vld [vmem:[%s1 + $0xf58] sm:$0xff]
    %v528 = vld [vmem:[%s1 + $0xf60] sm:$0xff]
    %v529 = vld [vmem:[%s1 + $0xf68] sm:$0xff]
    %v530 = vld [vmem:[%s1 + $0xf70] sm:$0xff]
    %v531 = vld [vmem:[%s1 + $0xf78] sm:$0xff]
    %v532 = vld [vmem:[%s1 + $0xf80] sm:$0xff]
    %v533 = vld [vmem:[%s1 + $0xf88] sm:$0xff]
    %v534 = vld [vmem:[%s1 + $0xf90] sm:$0xff]
    %v535 = vld [vmem:[%s1 + $0xf98] sm:$0xff]
    %v536 = vld [vmem:[%s1 + $0xfa0] sm:$0xff]
    %v537 = vld [vmem:[%s1 + $0xfa8] sm:$0xff]
    %v538 = vld [vmem:[%s1 + $0xfb0] sm:$0xff]
    %v539 = vld [vmem:[%s1 + $0xfb8] sm:$0xff]
    %v540 = vld [vmem:[%s1 + $0xfc0] sm:$0xff]
    %v541 = vld [vmem:[%s1 + $0xfc8] sm:$0xff]
    %v542 = vld [vmem:[%s1 + $0xfd0] sm:$0xff]
    %v543 = vld [vmem:[%s1 + $0xfd8] sm:$0xff]
    %v544 = vld [vmem:[%s1 + $0xfe0] sm:$0xff]
    %v545 = vld [vmem:[%s1 + $0xfe8] sm:$0xff]
    %v546 = vld [vmem:[%s1 + $0xff0] sm:$0xff]
    %v547 = vld [vmem:[%s1 + $0xff8] sm:$0xff]
    %v548 = vld [vmem:[%s1 + $0x1000] sm:$0xff]
    %v549 = vld [vmem:[%s1 + $0x1008] sm:$0xff]
    %v550 = vld [vmem:[%s1 + $0x1010] sm:$0xff]
    %v551 = vld [vmem:[%s1 + $0x1018] sm:$0xff]
    %v552 = vld [vmem:[%s1 + $0x1020] sm:$0xff]
    %v553 = vld [vmem:[%s1 + $0x1028] sm:$0xff]
    %v554 = vld [vmem:[%s1 + $0x1030] sm:$0xff]
    %v555 = vld [vmem:[%s1 + $0x1038] sm:$0xff]
    %v556 = vld [vmem:[%s1 + $0x1040] sm:$0xff]
    %v557 = vld [vmem:[%s1 + $0x1048] sm:$0xff]
    %v558 = vld [vmem:[%s1 + $0x1050] sm:$0xff]
    %v559 = vld [vmem:[%s1 + $0x1058] sm:$0xff]
    %v560 = vld [vmem:[%s1 + $0x1060] sm:$0xff]
    %v561 = vld [vmem:[%s1 + $0x1068] sm:$0xff]
    %v562 = vld [vmem:[%s1 + $0x1070] sm:$0xff]
    %v563 = vld [vmem:[%s1 + $0x1078] sm:$0xff]
    %v564 = vld [vmem:[%s1 + $0x1080] sm:$0xff]
    %v565 = vld [vmem:[%s1 + $0x1088] sm:$0xff]
    %v566 = vld [vmem:[%s1 + $0x1090] sm:$0xff]
    %v567 = vld [vmem:[%s1 + $0x1098] sm:$0xff]
    %v568 = vld [vmem:[%s1 + $0x10a0] sm:$0xff]
    %v569 = vld [vmem:[%s1 + $0x10a8] sm:$0xff]
    %v570 = vld [vmem:[%s1 + $0x10b0] sm:$0xff]
    %v571 = vld [vmem:[%s1 + $0x10b8] sm:$0xff]
    %v572 = vld [vmem:[%s1 + $0x10c0] sm:$0xff]
    %v573 = vld [vmem:[%s1 + $0x10c8] sm:$0xff]
    %v574 = vld [vmem:[%s1 + $0x10d0] sm:$0xff]
    %v575 = vld [vmem:[%s1 + $0x10d8] sm:$0xff]
    %v576 = vld [vmem:[%s1 + $0x10e0] sm:$0xff]
    %v577 = vld [vmem:[%s1 + $0x10e8] sm:$0xff]
    %v578 = vld [vmem:[%s1 + $0x10f0] sm:$0xff]
    %v579 = vld [vmem:[%s1 + $0x10f8] sm:$0xff]
    %v580 = vld [vmem:[%s1 + $0x1100] sm:$0xff]
    %v581 = vld [vmem:[%s1 + $0x1108] sm:$0xff]
    %v582 = vld [vmem:[%s1 + $0x1110] sm:$0xff]
    %v583 = vld [vmem:[%s1 + $0x1118] sm:$0xff]
    %v584 = vld [vmem:[%s1 + $0x1120] sm:$0xff]
    %v585 = vld [vmem:[%s1 + $0x1128] sm:$0xff]
    %v586 = vld [vmem:[%s1 + $0x1130] sm:$0xff]
    %v587 = vld [vmem:[%s1 + $0x1138] sm:$0xff]
    %v588 = vld [vmem:[%s1 + $0x1140] sm:$0xff]
    %v589 = vld [vmem:[%s1 + $0x1148] sm:$0xff]
    %v590 = vld [vmem:[%s1 + $0x1150] sm:$0xff]
    %v591 = vld [vmem:[%s1 + $0x1158] sm:$0xff]
    %v592 = vld [vmem:[%s1 + $0x1160] sm:$0xff]
    %v593 = vld [vmem:[%s1 + $0x1168] sm:$0xff]
    %v594 = vld [vmem:[%s1 + $0x1170] sm:$0xff]
    %v595 = vld [vmem:[%s1 + $0x1178] sm:$0xff]
    %v596 = vld [vmem:[%s1 + $0x1180] sm:$0xff]
    %v597 = vld [vmem:[%s1 + $0x1188] sm:$0xff]
    %v598 = vld [vmem:[%s1 + $0x1190] sm:$0xff]
    %v599 = vld [vmem:[%s1 + $0x1198] sm:$0xff]
    %v600 = vld [vmem:[%s1 + $0x11a0] sm:$0xff]
    %v601 = vld [vmem:[%s1 + $0x11a8] sm:$0xff]
    %v602 = vld [vmem:[%s1 + $0x11b0] sm:$0xff]
    %v603 = vld [vmem:[%s1 + $0x11b8] sm:$0xff]
    %v604 = vld [vmem:[%s1 + $0x11c0] sm:$0xff]
    %v605 = vld [vmem:[%s1 + $0x11c8] sm:$0xff]
    %v606 = vld [vmem:[%s1 + $0x11d0] sm:$0xff]
    %v607 = vld [vmem:[%s1 + $0x11d8] sm:$0xff]
    %v608 = vld [vmem:[%s1 + $0x11e0] sm:$0xff]
    %v609 = vld [vmem:[%s1 + $0x11e8] sm:$0xff]
    %v610 = vld [vmem:[%s1 + $0x11f0] sm:$0xff]
    %v611 = vld [vmem:[%s1 + $0x11f8] sm:$0xff]
    %v612 = vld [vmem:[%s1 + $0x1200] sm:$0xff]
    %v613 = vld [vmem:[%s1 + $0x1208] sm:$0xff]
    %v614 = vld [vmem:[%s1 + $0x1210] sm:$0xff]
    %v615 = vld [vmem:[%s1 + $0x1218] sm:$0xff]
    %v616 = vld [vmem:[%s1 + $0x1220] sm:$0xff]
    %v617 = vld [vmem:[%s1 + $0x1228] sm:$0xff]
    %v618 = vld [vmem:[%s1 + $0x1230] sm:$0xff]
    %v619 = vld [vmem:[%s1 + $0x1238] sm:$0xff]
    %v620 = vld [vmem:[%s1 + $0x1240] sm:$0xff]
    %v621 = vld [vmem:[%s1 + $0x1248] sm:$0xff]
    %v622 = vld [vmem:[%s1 + $0x1250] sm:$0xff]
    %v623 = vld [vmem:[%s1 + $0x1258] sm:$0xff]
    %v624 = vld [vmem:[%s1 + $0x1260] sm:$0xff]
    %v625 = vld [vmem:[%s1 + $0x1268] sm:$0xff]
    %v626 = vld [vmem:[%s1 + $0x1270] sm:$0xff]
    %v627 = vld [vmem:[%s1 + $0x1278] sm:$0xff]
    %v628 = vld [vmem:[%s1 + $0x1280] sm:$0xff]
    %v629 = vld [vmem:[%s1 + $0x1288] sm:$0xff]
    %v630 = vld [vmem:[%s1 + $0x1290] sm:$0xff]
    %v631 = vld [vmem:[%s1 + $0x1298] sm:$0xff]
    %v632 = vld [vmem:[%s1 + $0x12a0] sm:$0xff]
    %v633 = vld [vmem:[%s1 + $0x12a8] sm:$0xff]
    %v634 = vld [vmem:[%s1 + $0x12b0] sm:$0xff]
    %v635 = vld [vmem:[%s1 + $0x12b8] sm:$0xff]
    %v636 = vld [vmem:[%s1 + $0x12c0] sm:$0xff]
    %v637 = vld [vmem:[%s1 + $0x12c8] sm:$0xff]
    %v638 = vld [vmem:[%s1 + $0x12d0] sm:$0xff]
    %v639 = vld [vmem:[%s1 + $0x12d8] sm:$0xff]
    %v640 = vld [vmem:[%s1 + $0x12e0] sm:$0xff]
    %v641 = vld [vmem:[%s1 + $0x12e8] sm:$0xff]
    %v642 = vld [vmem:[%s1 + $0x12f0] sm:$0xff]
    %v643 = vld [vmem:[%s1 + $0x12f8] sm:$0xff]
    %v644 = vld [vmem:[%s1 + $0x1300] sm:$0xff]
    %v645 = vld [vmem:[%s1 + $0x1308] sm:$0xff]
    %v646 = vld [vmem:[%s1 + $0x1310] sm:$0xff]
    %v647 = vld [vmem:[%s1 + $0x1318] sm:$0xff]
    %v648 = vld [vmem:[%s1 + $0x1320] sm:$0xff]
    %v649 = vld [vmem:[%s1 + $0x1328] sm:$0xff]
    %v650 = vld [vmem:[%s1 + $0x1330] sm:$0xff]
    %v651 = vld [vmem:[%s1 + $0x1338] sm:$0xff]
    %v652 = vld [vmem:[%s1 + $0x1340] sm:$0xff]
    %v653 = vld [vmem:[%s1 + $0x1348] sm:$0xff]
    %v654 = vld [vmem:[%s1 + $0x1350] sm:$0xff]
    %v655 = vld [vmem:[%s1 + $0x1358] sm:$0xff]
    %v656 = vld [vmem:[%s1 + $0x1360] sm:$0xff]
    %v657 = vld [vmem:[%s1 + $0x1368] sm:$0xff]
    %v658 = vld [vmem:[%s1 + $0x1370] sm:$0xff]
    %v659 = vld [vmem:[%s1 + $0x1378] sm:$0xff]
    %v660 = vld [vmem:[%s1 + $0x1380] sm:$0xff]
    %v661 = vld [vmem:[%s1 + $0x1388] sm:$0xff]
    %v662 = vld [vmem:[%s1 + $0x1390] sm:$0xff]
    %v663 = vld [vmem:[%s1 + $0x1398] sm:$0xff]
    %v664 = vld [vmem:[%s1 + $0x13a0] sm:$0xff]
    %v665 = vld [vmem:[%s1 + $0x13a8] sm:$0xff]
    %v666 = vld [vmem:[%s1 + $0x13b0] sm:$0xff]
    %v667 = vld [vmem:[%s1 + $0x13b8] sm:$0xff]
    %v668 = vld [vmem:[%s1 + $0x13c0] sm:$0xff]
    %v669 = vld [vmem:[%s1 + $0x13c8] sm:$0xff]
    %v670 = vld [vmem:[%s1 + $0x13d0] sm:$0xff]
    %v671 = vld [vmem:[%s1 + $0x13d8] sm:$0xff]
    %v672 = vld [vmem:[%s1 + $0x13e0] sm:$0xff]
    %v673 = vld [vmem:[%s1 + $0x13e8] sm:$0xff]
    %v674 = vld [vmem:[%s1 + $0x13f0] sm:$0xff]
    %v675 = vld [vmem:[%s1 + $0x13f8] sm:$0xff]
    %v676 = vld [vmem:[%s1 + $0x1400] sm:$0xff]
    %v677 = vld [vmem:[%s1 + $0x1408] sm:$0xff]
    %v678 = vld [vmem:[%s1 + $0x1410] sm:$0xff]
    %v679 = vld [vmem:[%s1 + $0x1418] sm:$0xff]
    %v680 = vld [vmem:[%s1 + $0x1420] sm:$0xff]
    %v681 = vld [vmem:[%s1 + $0x1428] sm:$0xff]
    %v682 = vld [vmem:[%s1 + $0x1430] sm:$0xff]
    %v683 = vld [vmem:[%s1 + $0x1438] sm:$0xff]
    %v684 = vld [vmem:[%s1 + $0x1440] sm:$0xff]
    %v685 = vld [vmem:[%s1 + $0x1448] sm:$0xff]
    %v686 = vld [vmem:[%s1 + $0x1450] sm:$0xff]
    %v687 = vld [vmem:[%s1 + $0x1458] sm:$0xff]
    %v688 = vld [vmem:[%s1 + $0x1460] sm:$0xff]
    %v689 = vld [vmem:[%s1 + $0x1468] sm:$0xff]
    %v690 = vld [vmem:[%s1 + $0x1470] sm:$0xff]
    %v691 = vld [vmem:[%s1 + $0x1478] sm:$0xff]
    %v692 = vld [vmem:[%s1 + $0x1480] sm:$0xff]
    %v693 = vld [vmem:[%s1 + $0x1488] sm:$0xff]
    %v694 = vld [vmem:[%s1 + $0x1490] sm:$0xff]
    %v695 = vld [vmem:[%s1 + $0x1498] sm:$0xff]
    %v696 = vld [vmem:[%s1 + $0x14a0] sm:$0xff]
    %v697 = vld [vmem:[%s1 + $0x14a8] sm:$0xff]
    %v698 = vld [vmem:[%s1 + $0x14b0] sm:$0xff]
    %v699 = vld [vmem:[%s1 + $0x14b8] sm:$0xff]
    %v700 = vld [vmem:[%s1 + $0x14c0] sm:$0xff]
    %v701 = vld [vmem:[%s1 + $0x14c8] sm:$0xff]
    %v702 = vld [vmem:[%s1 + $0x14d0] sm:$0xff]
    %v703 = vld [vmem:[%s1 + $0x14d8] sm:$0xff]
    %v704 = vld [vmem:[%s1 + $0x14e0] sm:$0xff]
    %v705 = vld [vmem:[%s1 + $0x14e8] sm:$0xff]
    %v706 = vld [vmem:[%s1 + $0x14f0] sm:$0xff]
    %v707 = vld [vmem:[%s1 + $0x14f8] sm:$0xff]
    %v708 = vld [vmem:[%s1 + $0x1500] sm:$0xff]
    %v709 = vld [vmem:[%s1 + $0x1508] sm:$0xff]
    %v710 = vld [vmem:[%s1 + $0x1510] sm:$0xff]
    %v711 = vld [vmem:[%s1 + $0x1518] sm:$0xff]
    %v712 = vld [vmem:[%s1 + $0x1520] sm:$0xff]
    %v713 = vld [vmem:[%s1 + $0x1528] sm:$0xff]
    %v714 = vld [vmem:[%s1 + $0x1530] sm:$0xff]
    %v715 = vld [vmem:[%s1 + $0x1538] sm:$0xff]
    %v716 = vld [vmem:[%s1 + $0x1540] sm:$0xff]
    %v717 = vld [vmem:[%s1 + $0x1548] sm:$0xff]
    %v718 = vld [vmem:[%s1 + $0x1550] sm:$0xff]
    %v719 = vld [vmem:[%s1 + $0x1558] sm:$0xff]
    %v720 = vld [vmem:[%s1 + $0x1560] sm:$0xff]
    %v721 = vld [vmem:[%s1 + $0x1568] sm:$0xff]
    %v722 = vld [vmem:[%s1 + $0x1570] sm:$0xff]
    %v723 = vld [vmem:[%s1 + $0x1578] sm:$0xff]
    %v724 = vld [vmem:[%s1 + $0x1580] sm:$0xff]
    %v725 = vld [vmem:[%s1 + $0x1588] sm:$0xff]
    %v726 = vld [vmem:[%s1 + $0x1590] sm:$0xff]
    %v727 = vld [vmem:[%s1 + $0x1598] sm:$0xff]
    %v728 = vld [vmem:[%s1 + $0x15a0] sm:$0xff]
    %v729 = vld [vmem:[%s1 + $0x15a8] sm:$0xff]
    %v730 = vld [vmem:[%s1 + $0x15b0] sm:$0xff]
    %v731 = vld [vmem:[%s1 + $0x15b8] sm:$0xff]
    %v732 = vld [vmem:[%s1 + $0x15c0] sm:$0xff]
    %v733 = vld [vmem:[%s1 + $0x15c8] sm:$0xff]
    %v734 = vld [vmem:[%s1 + $0x15d0] sm:$0xff]
    %v735 = vld [vmem:[%s1 + $0x15d8] sm:$0xff]
    %v736 = vld [vmem:[%s1 + $0x15e0] sm:$0xff]
    %v737 = vld [vmem:[%s1 + $0x15e8] sm:$0xff]
    %v738 = vld [vmem:[%s1 + $0x15f0] sm:$0xff]
    %v739 = vld [vmem:[%s1 + $0x15f8] sm:$0xff]
    %v740 = vld [vmem:[%s1 + $0x1600] sm:$0xff]
    %v741 = vld [vmem:[%s1 + $0x1608] sm:$0xff]
    %v742 = vld [vmem:[%s1 + $0x1610] sm:$0xff]
    %v743 = vld [vmem:[%s1 + $0x1618] sm:$0xff]
    %v744 = vld [vmem:[%s1 + $0x1620] sm:$0xff]
    %v745 = vld [vmem:[%s1 + $0x1628] sm:$0xff]
    %v746 = vld [vmem:[%s1 + $0x1630] sm:$0xff]
    %v747 = vld [vmem:[%s1 + $0x1638] sm:$0xff]
    %v748 = vld [vmem:[%s1 + $0x1640] sm:$0xff]
    %v749 = vld [vmem:[%s1 + $0x1648] sm:$0xff]
    %v750 = vld [vmem:[%s1 + $0x1650] sm:$0xff]
    %v751 = vld [vmem:[%s1 + $0x1658] sm:$0xff]
    %v752 = vld [vmem:[%s1 + $0x1660] sm:$0xff]
    %v753 = vld [vmem:[%s1 + $0x1668] sm:$0xff]
    %v754 = vld [vmem:[%s1 + $0x1670] sm:$0xff]
    %v755 = vld [vmem:[%s1 + $0x1678] sm:$0xff]
    %v756 = vld [vmem:[%s1 + $0x1680] sm:$0xff]
    %v757 = vld [vmem:[%s1 + $0x1688] sm:$0xff]
    %v758 = vld [vmem:[%s1 + $0x1690] sm:$0xff]
    %v759 = vld [vmem:[%s1 + $0x1698] sm:$0xff]
    %v760 = vld [vmem:[%s1 + $0x16a0] sm:$0xff]
    %v761 = vld [vmem:[%s1 + $0x16a8] sm:$0xff]
    %v762 = vld [vmem:[%s1 + $0x16b0] sm:$0xff]
    %v763 = vld [vmem:[%s1 + $0x16b8] sm:$0xff]
    %v764 = vld [vmem:[%s1 + $0x16c0] sm:$0xff]
    %v765 = vld [vmem:[%s1 + $0x16c8] sm:$0xff]
    %v766 = vld [vmem:[%s1 + $0x16d0] sm:$0xff]
    %v767 = vld [vmem:[%s1 + $0x16d8] sm:$0xff]
    %v768 = vld [vmem:[%s1 + $0x16e0] sm:$0xff]
    %v769 = vld [vmem:[%s1 + $0x16e8] sm:$0xff]
    %v770 = vld [vmem:[%s1 + $0x16f0] sm:$0xff]
    %v771 = vld [vmem:[%s1 + $0x16f8] sm:$0xff]
    %v772 = vld [vmem:[%s1 + $0x1700] sm:$0xff]
    %v773 = vld [vmem:[%s1 + $0x1708] sm:$0xff]
    %v774 = vld [vmem:[%s1 + $0x1710] sm:$0xff]
    %v775 = vld [vmem:[%s1 + $0x1718] sm:$0xff]
    %v776 = vld [vmem:[%s1 + $0x1720] sm:$0xff]
    %v777 = vld [vmem:[%s1 + $0x1728] sm:$0xff]
    %v778 = vld [vmem:[%s1 + $0x1730] sm:$0xff]
    %v779 = vld [vmem:[%s1 + $0x1738] sm:$0xff]
    %v780 = vld [vmem:[%s1 + $0x1740] sm:$0xff]
    %v781 = vld [vmem:[%s1 + $0x1748] sm:$0xff]
    %v782 = vld [vmem:[%s1 + $0x1750] sm:$0xff]
    %v783 = vld [vmem:[%s1 + $0x1758] sm:$0xff]
    %v784 = vld [vmem:[%s1 + $0x1760] sm:$0xff]
    %v785 = vld [vmem:[%s1 + $0x1768] sm:$0xff]
    %v786 = vld [vmem:[%s1 + $0x1770] sm:$0xff]
    %v787 = vld [vmem:[%s1 + $0x1778] sm:$0xff]
    %v788 = vld [vmem:[%s1 + $0x1780] sm:$0xff]
    %v789 = vld [vmem:[%s1 + $0x1788] sm:$0xff]
    %v790 = vld [vmem:[%s1 + $0x1790] sm:$0xff]
    %v791 = vld [vmem:[%s1 + $0x1798] sm:$0xff]
    %v792 = vld [vmem:[%s1 + $0x17a0] sm:$0xff]
    %v793 = vld [vmem:[%s1 + $0x17a8] sm:$0xff]
    %v794 = vld [vmem:[%s1 + $0x17b0] sm:$0xff]
    %v795 = vld [vmem:[%s1 + $0x17b8] sm:$0xff]
    %v796 = vld [vmem:[%s1 + $0x17c0] sm:$0xff]
    %v797 = vld [vmem:[%s1 + $0x17c8] sm:$0xff]
    %v798 = vld [vmem:[%s1 + $0x17d0] sm:$0xff]
    %v799 = vld [vmem:[%s1 + $0x17d8] sm:$0xff]
    %v800 = vld [vmem:[%s1 + $0x17e0] sm:$0xff]
    %v801 = vld [vmem:[%s1 + $0x17e8] sm:$0xff]
    %v802 = vld [vmem:[%s1 + $0x17f0] sm:$0xff]
    %v803 = vld [vmem:[%s1 + $0x17f8] sm:$0xff]
    %v804 = vld [vmem:[%s1 + $0x1800] sm:$0xff]
    %v805 = vld [vmem:[%s1 + $0x1808] sm:$0xff]
    %v806 = vld [vmem:[%s1 + $0x1810] sm:$0xff]
    %v807 = vld [vmem:[%s1 + $0x1818] sm:$0xff]
    %v808 = vld [vmem:[%s1 + $0x1820] sm:$0xff]
    %v809 = vld [vmem:[%s1 + $0x1828] sm:$0xff]
    %v810 = vld [vmem:[%s1 + $0x1830] sm:$0xff]
    %v811 = vld [vmem:[%s1 + $0x1838] sm:$0xff]
    %v812 = vld [vmem:[%s1 + $0x1840] sm:$0xff]
    %v813 = vld [vmem:[%s1 + $0x1848] sm:$0xff]
    %v814 = vld [vmem:[%s1 + $0x1850] sm:$0xff]
    %v815 = vld [vmem:[%s1 + $0x1858] sm:$0xff]
    %v816 = vld [vmem:[%s1 + $0x1860] sm:$0xff]
    %v817 = vld [vmem:[%s1 + $0x1868] sm:$0xff]
    %v818 = vld [vmem:[%s1 + $0x1870] sm:$0xff]
    %v819 = vld [vmem:[%s1 + $0x1878] sm:$0xff]
    %v820 = vld [vmem:[%s2] sm:$0xf]
    %v822 = vperm.slane %v820, 0
    %v823 = vperm.slane %v820, 1
    %v824 = vperm.slane %v820, 2
    %v825 = vperm.slane %v820, 3
    %831 = vst [vmem:[#allocation1] ss:$9 sm:$0xff] %v32
    %v832 = vld [vmem:[#allocation1] sm:$0xff]
    %v833 = vld [vmem:[#allocation1 + $0x9] sm:$0xff]
    %v834 = vld [vmem:[#allocation1 + $0x12] sm:$0xff]
    %v835 = vld [vmem:[#allocation1 + $0x1b] sm:$0xff]
    %v836 = vld [vmem:[#allocation1 + $0x24] sm:$0xff]
    %v837 = vld [vmem:[#allocation1 + $0x2d] sm:$0xff]
    %v838 = vld [vmem:[#allocation1 + $0x36] sm:$0xff]
    %v839 = vld [vmem:[#allocation1 + $0x3f] sm:$0xff]
    %841 = vst [vmem:[#allocation1] ss:$9 sm:$0xff] %v33
    %v842 = vld [vmem:[#allocation1] sm:$0xff]
    %v843 = vld [vmem:[#allocation1 + $0x9] sm:$0xff]
    %v844 = vld [vmem:[#allocation1 + $0x12] sm:$0xff]
    %v845 = vld [vmem:[#allocation1 + $0x1b] sm:$0xff]
    %v846 = vld [vmem:[#allocation1 + $0x24] sm:$0xff]
    %v847 = vld [vmem:[#allocation1 + $0x2d] sm:$0xff]
    %v848 = vld [vmem:[#allocation1 + $0x36] sm:$0xff]
    %v849 = vld [vmem:[#allocation1 + $0x3f] sm:$0xff]
    %851 = vst [vmem:[#allocation1] ss:$9 sm:$0xff] %v34
    %v852 = vld [vmem:[#allocation1] sm:$0xff]
    %v853 = vld [vmem:[#allocation1 + $0x9] sm:$0xff]
    %v854 = vld [vmem:[#allocation1 + $0x12] sm:$0xff]
    %v855 = vld [vmem:[#allocation1 + $0x1b] sm:$0xff]
    %v856 = vld [vmem:[#allocation1 + $0x24] sm:$0xff]
    %v857 = vld [vmem:[#allocation1 + $0x2d] sm:$0xff]
    %v858 = vld [vmem:[#allocation1 + $0x36] sm:$0xff]
    %v859 = vld [vmem:[#allocation1 + $0x3f] sm:$0xff]
    %861 = vst [vmem:[#allocation1] ss:$9 sm:$0xff] %v35
    %v862 = vld [vmem:[#allocation1] sm:$0xff]
    %v1671 = vunpack.c.l.b16 %v36
    %v1672 = vunpack.c.h.b16 %v36
    %v1673 = vunpack.c.l.b16 %v37
    %v1674 = vunpack.c.h.b16 %v37
    %v1675 = vunpack.c.l.b16 %v38
    %v1676 = vunpack.c.h.b16 %v38
    %v1677 = vunpack.c.l.b16 %v39
    %v1678 = vunpack.c.h.b16 %v39
    %v1679 = vunpack.c.l.b16 %v40
    %v1680 = vunpack.c.h.b16 %v40
    %v1681 = vunpack.c.l.b16 %v41
    %v1682 = vunpack.c.h.b16 %v41
    %v1683 = vunpack.c.l.b16 %v42
    %v1684 = vunpack.c.h.b16 %v42
    %v1685 = vunpack.c.l.b16 %v43
    %v1686 = vunpack.c.h.b16 %v43
    %v1687 = vunpack.c.l.b16 %v44
    %v1688 = vunpack.c.h.b16 %v44
    %v1689 = vunpack.c.l.b16 %v45
    %v1690 = vunpack.c.h.b16 %v45
    %v1691 = vunpack.c.l.b16 %v46
    %v1692 = vunpack.c.h.b16 %v46
    %v1693 = vunpack.c.l.b16 %v47
    %v1694 = vunpack.c.h.b16 %v47
    %v1695 = vunpack.c.l.b16 %v48
    %v1696 = vunpack.c.h.b16 %v48
    %v1697 = vunpack.c.l.b16 %v49
    %v1698 = vunpack.c.h.b16 %v49
    %v1699 = vunpack.c.l.b16 %v50
    %v1700 = vunpack.c.h.b16 %v50
    %v1701 = vunpack.c.l.b16 %v51
    %v1702 = vunpack.c.h.b16 %v51
    %v1703 = vunpack.c.l.b16 %v52
    %v1704 = vunpack.c.h.b16 %v52
    %v1705 = vunpack.c.l.b16 %v53
    %v1706 = vunpack.c.h.b16 %v53
    %v1707 = vunpack.c.l.b16 %v54
    %v1708 = vunpack.c.h.b16 %v54
    %v1709 = vunpack.c.l.b16 %v55
    %v1710 = vunpack.c.h.b16 %v55
    %v1711 = vunpack.c.l.b16 %v56
    %v1712 = vunpack.c.h.b16 %v56
    %v1713 = vunpack.c.l.b16 %v57
    %v1714 = vunpack.c.h.b16 %v57
    %v1715 = vunpack.c.l.b16 %v58
    %v1716 = vunpack.c.h.b16 %v58
    %v1717 = vunpack.c.l.b16 %v59
    %v1718 = vunpack.c.h.b16 %v59
    %v1719 = vunpack.c.l.b16 %v60
    %v1720 = vunpack.c.h.b16 %v60
    %v1721 = vunpack.c.l.b16 %v61
    %v1722 = vunpack.c.h.b16 %v61
    %v1723 = vunpack.c.l.b16 %v62
    %v1724 = vunpack.c.h.b16 %v62
    %v1725 = vunpack.c.l.b16 %v63
    %v1726 = vunpack.c.h.b16 %v63
    %v1727 = vunpack.c.l.b16 %v64
    %v1728 = vunpack.c.h.b16 %v64
    %v1729 = vunpack.c.l.b16 %v65
    %v1730 = vunpack.c.h.b16 %v65
    %v1731 = vunpack.c.l.b16 %v66
    %v1732 = vunpack.c.h.b16 %v66
    %v1733 = vunpack.c.l.b16 %v67
    %v1734 = vunpack.c.h.b16 %v67
    %v1735 = vunpack.c.l.b16 %v68
    %v1736 = vunpack.c.h.b16 %v68
    %v1737 = vunpack.c.l.b16 %v69
    %v1738 = vunpack.c.h.b16 %v69
    %v1739 = vunpack.c.l.b16 %v70
    %v1740 = vunpack.c.h.b16 %v70
    %v1741 = vunpack.c.l.b16 %v71
    %v1742 = vunpack.c.h.b16 %v71
    %v1743 = vunpack.c.l.b16 %v72
    %v1744 = vunpack.c.h.b16 %v72
    %v1745 = vunpack.c.l.b16 %v73
    %v1746 = vunpack.c.h.b16 %v73
    %v1747 = vunpack.c.l.b16 %v74
    %v1748 = vunpack.c.h.b16 %v74
    %v1749 = vunpack.c.l.b16 %v75
    %v1750 = vunpack.c.h.b16 %v75
    %v1751 = vunpack.c.l.b16 %v76
    %v1752 = vunpack.c.h.b16 %v76
    %v1753 = vunpack.c.l.b16 %v77
    %v1754 = vunpack.c.h.b16 %v77
    %v1755 = vunpack.c.l.b16 %v78
    %v1756 = vunpack.c.h.b16 %v78
    %v1757 = vunpack.c.l.b16 %v79
    %v1758 = vunpack.c.h.b16 %v79
    %v1759 = vunpack.c.l.b16 %v80
    %v1760 = vunpack.c.h.b16 %v80
    %v1761 = vunpack.c.l.b16 %v81
    %v1762 = vunpack.c.h.b16 %v81
    %v1763 = vunpack.c.l.b16 %v82
    %v1764 = vunpack.c.h.b16 %v82
    %v1765 = vunpack.c.l.b16 %v83
    %v1766 = vunpack.c.h.b16 %v83
    %v1767 = vunpack.c.l.b16 %v84
    %v1768 = vunpack.c.h.b16 %v84
    %v1769 = vunpack.c.l.b16 %v85
    %v1770 = vunpack.c.h.b16 %v85
    %v1771 = vunpack.c.l.b16 %v86
    %v1772 = vunpack.c.h.b16 %v86
    %v1773 = vunpack.c.l.b16 %v87
    %v1774 = vunpack.c.h.b16 %v87
    %v1775 = vunpack.c.l.b16 %v88
    %v1776 = vunpack.c.h.b16 %v88
    %v1777 = vunpack.c.l.b16 %v89
    %v1778 = vunpack.c.h.b16 %v89
    %v1779 = vunpack.c.l.b16 %v90
    %v1780 = vunpack.c.h.b16 %v90
    %v1781 = vunpack.c.l.b16 %v91
    %v1782 = vunpack.c.h.b16 %v91
    %v1783 = vunpack.c.l.b16 %v92
    %v1784 = vunpack.c.h.b16 %v92
    %v1785 = vunpack.c.l.b16 %v93
    %v1786 = vunpack.c.h.b16 %v93
    %v1787 = vunpack.c.l.b16 %v94
    %v1788 = vunpack.c.h.b16 %v94
    %v1789 = vunpack.c.l.b16 %v95
    %v1790 = vunpack.c.h.b16 %v95
    %v1791 = vunpack.c.l.b16 %v96
    %v1792 = vunpack.c.h.b16 %v96
    %v1793 = vunpack.c.l.b16 %v97
    %v1794 = vunpack.c.h.b16 %v97
    %v1795 = vunpack.c.l.b16 %v98
    %v1796 = vunpack.c.h.b16 %v98
    %v1797 = vunpack.c.l.b16 %v99
    %v1798 = vunpack.c.h.b16 %v99
    %v1799 = vunpack.c.l.b16 %v100
    %v1800 = vunpack.c.h.b16 %v100
    %v1801 = vunpack.c.l.b16 %v101
    %v1802 = vunpack.c.h.b16 %v101
    %v1803 = vunpack.c.l.b16 %v102
    %v1804 = vunpack.c.h.b16 %v102
    %v1805 = vunpack.c.l.b16 %v103
    %v1806 = vunpack.c.h.b16 %v103
    %v1807 = vunpack.c.l.b16 %v104
    %v1808 = vunpack.c.h.b16 %v104
    %v1809 = vunpack.c.l.b16 %v105
    %v1810 = vunpack.c.h.b16 %v105
    %v1811 = vunpack.c.l.b16 %v106
    %v1812 = vunpack.c.h.b16 %v106
    %v1813 = vunpack.c.l.b16 %v107
    %v1814 = vunpack.c.h.b16 %v107
    %v1815 = vunpack.c.l.b16 %v108
    %v1816 = vunpack.c.h.b16 %v108
    %v1817 = vunpack.c.l.b16 %v109
    %v1818 = vunpack.c.h.b16 %v109
    %v1819 = vunpack.c.l.b16 %v110
    %v1820 = vunpack.c.h.b16 %v110
    %v1821 = vunpack.c.l.b16 %v111
    %v1822 = vunpack.c.h.b16 %v111
    %v1823 = vunpack.c.l.b16 %v112
    %v1824 = vunpack.c.h.b16 %v112
    %v1825 = vunpack.c.l.b16 %v113
    %v1826 = vunpack.c.h.b16 %v113
    %v1827 = vunpack.c.l.b16 %v114
    %v1828 = vunpack.c.h.b16 %v114
    %v1829 = vunpack.c.l.b16 %v115
    %v1830 = vunpack.c.h.b16 %v115
    %v1831 = vunpack.c.l.b16 %v116
    %v1832 = vunpack.c.h.b16 %v116
    %v1833 = vunpack.c.l.b16 %v117
    %v1834 = vunpack.c.h.b16 %v117
    %v1835 = vunpack.c.l.b16 %v118
    %v1836 = vunpack.c.h.b16 %v118
    %v1837 = vunpack.c.l.b16 %v119
    %v1838 = vunpack.c.h.b16 %v119
    %v1839 = vunpack.c.l.b16 %v120
    %v1840 = vunpack.c.h.b16 %v120
    %v1841 = vunpack.c.l.b16 %v121
    %v1842 = vunpack.c.h.b16 %v121
    %v1843 = vunpack.c.l.b16 %v122
    %v1844 = vunpack.c.h.b16 %v122
    %v1845 = vunpack.c.l.b16 %v123
    %v1846 = vunpack.c.h.b16 %v123
    %v1847 = vunpack.c.l.b16 %v124
    %v1848 = vunpack.c.h.b16 %v124
    %v1849 = vunpack.c.l.b16 %v125
    %v1850 = vunpack.c.h.b16 %v125
    %v1851 = vunpack.c.l.b16 %v126
    %v1852 = vunpack.c.h.b16 %v126
    %v1853 = vunpack.c.l.b16 %v127
    %v1854 = vunpack.c.h.b16 %v127
    %v1855 = vunpack.c.l.b16 %v128
    %v1856 = vunpack.c.h.b16 %v128
    %v1857 = vunpack.c.l.b16 %v129
    %v1858 = vunpack.c.h.b16 %v129
    %v1859 = vunpack.c.l.b16 %v130
    %v1860 = vunpack.c.h.b16 %v130
    %v1861 = vunpack.c.l.b16 %v131
    %v1862 = vunpack.c.h.b16 %v131
    %v1863 = vunpack.c.l.b16 %v132
    %v1864 = vunpack.c.h.b16 %v132
    %v1865 = vunpack.c.l.b16 %v133
    %v1866 = vunpack.c.h.b16 %v133
    %v1867 = vunpack.c.l.b16 %v134
    %v1868 = vunpack.c.h.b16 %v134
    %v1869 = vunpack.c.l.b16 %v135
    %v1870 = vunpack.c.h.b16 %v135
    %v1871 = vunpack.c.l.b16 %v136
    %v1872 = vunpack.c.h.b16 %v136
    %v1873 = vunpack.c.l.b16 %v137
    %v1874 = vunpack.c.h.b16 %v137
    %v1875 = vunpack.c.l.b16 %v138
    %v1876 = vunpack.c.h.b16 %v138
    %v1877 = vunpack.c.l.b16 %v139
    %v1878 = vunpack.c.h.b16 %v139
    %v1879 = vunpack.c.l.b16 %v140
    %v1880 = vunpack.c.h.b16 %v140
    %v1881 = vunpack.c.l.b16 %v141
    %v1882 = vunpack.c.h.b16 %v141
    %v1883 = vunpack.c.l.b16 %v142
    %v1884 = vunpack.c.h.b16 %v142
    %v1885 = vunpack.c.l.b16 %v143
    %v1886 = vunpack.c.h.b16 %v143
    %v1887 = vunpack.c.l.b16 %v144
    %v1888 = vunpack.c.h.b16 %v144
    %v1889 = vunpack.c.l.b16 %v145
    %v1890 = vunpack.c.h.b16 %v145
    %v1891 = vunpack.c.l.b16 %v146
    %v1892 = vunpack.c.h.b16 %v146
    %v1893 = vunpack.c.l.b16 %v147
    %v1894 = vunpack.c.h.b16 %v147
    %v1895 = vunpack.c.l.b16 %v148
    %v1896 = vunpack.c.h.b16 %v148
    %v1897 = vunpack.c.l.b16 %v149
    %v1898 = vunpack.c.h.b16 %v149
    %v1899 = vunpack.c.l.b16 %v150
    %v1900 = vunpack.c.h.b16 %v150
    %v1901 = vunpack.c.l.b16 %v151
    %v1902 = vunpack.c.h.b16 %v151
    %v1903 = vunpack.c.l.b16 %v152
    %v1904 = vunpack.c.h.b16 %v152
    %v1905 = vunpack.c.l.b16 %v153
    %v1906 = vunpack.c.h.b16 %v153
    %v1907 = vunpack.c.l.b16 %v154
    %v1908 = vunpack.c.h.b16 %v154
    %v1909 = vunpack.c.l.b16 %v155
    %v1910 = vunpack.c.h.b16 %v155
    %v1911 = vunpack.c.l.b16 %v156
    %v1912 = vunpack.c.h.b16 %v156
    %v1913 = vunpack.c.l.b16 %v157
    %v1914 = vunpack.c.h.b16 %v157
    %v1915 = vunpack.c.l.b16 %v158
    %v1916 = vunpack.c.h.b16 %v158
    %v1917 = vunpack.c.l.b16 %v159
    %v1918 = vunpack.c.h.b16 %v159
    %v1919 = vunpack.c.l.b16 %v160
    %v1920 = vunpack.c.h.b16 %v160
    %v1921 = vunpack.c.l.b16 %v161
    %v1922 = vunpack.c.h.b16 %v161
    %v1923 = vunpack.c.l.b16 %v162
    %v1924 = vunpack.c.h.b16 %v162
    %v1925 = vunpack.c.l.b16 %v163
    %v1926 = vunpack.c.h.b16 %v163
    %v1927 = vunpack.c.l.b16 %v164
    %v1928 = vunpack.c.h.b16 %v164
    %v1929 = vunpack.c.l.b16 %v165
    %v1930 = vunpack.c.h.b16 %v165
    %v1931 = vunpack.c.l.b16 %v166
    %v1932 = vunpack.c.h.b16 %v166
    %v1933 = vunpack.c.l.b16 %v167
    %v1934 = vunpack.c.h.b16 %v167
    %v1935 = vunpack.c.l.b16 %v168
    %v1936 = vunpack.c.h.b16 %v168
    %v1937 = vunpack.c.l.b16 %v169
    %v1938 = vunpack.c.h.b16 %v169
    %v1939 = vunpack.c.l.b16 %v170
    %v1940 = vunpack.c.h.b16 %v170
    %v1941 = vunpack.c.l.b16 %v171
    %v1942 = vunpack.c.h.b16 %v171
    %v1943 = vunpack.c.l.b16 %v172
    %v1944 = vunpack.c.h.b16 %v172
    %v1945 = vunpack.c.l.b16 %v173
    %v1946 = vunpack.c.h.b16 %v173
    %v1947 = vunpack.c.l.b16 %v174
    %v1948 = vunpack.c.h.b16 %v174
    %v1949 = vunpack.c.l.b16 %v175
    %v1950 = vunpack.c.h.b16 %v175
    %v1951 = vunpack.c.l.b16 %v176
    %v1952 = vunpack.c.h.b16 %v176
    %v1953 = vunpack.c.l.b16 %v177
    %v1954 = vunpack.c.h.b16 %v177
    %v1955 = vunpack.c.l.b16 %v178
    %v1956 = vunpack.c.h.b16 %v178
    %v1957 = vunpack.c.l.b16 %v179
    %v1958 = vunpack.c.h.b16 %v179
    %v1959 = vunpack.c.l.b16 %v180
    %v1960 = vunpack.c.h.b16 %v180
    %v1961 = vunpack.c.l.b16 %v181
    %v1962 = vunpack.c.h.b16 %v181
    %v1963 = vunpack.c.l.b16 %v182
    %v1964 = vunpack.c.h.b16 %v182
    %v1965 = vunpack.c.l.b16 %v183
    %v1966 = vunpack.c.h.b16 %v183
    %v1967 = vunpack.c.l.b16 %v184
    %v1968 = vunpack.c.h.b16 %v184
    %v1969 = vunpack.c.l.b16 %v185
    %v1970 = vunpack.c.h.b16 %v185
    %v1971 = vunpack.c.l.b16 %v186
    %v1972 = vunpack.c.h.b16 %v186
    %v1973 = vunpack.c.l.b16 %v187
    %v1974 = vunpack.c.h.b16 %v187
    %v1975 = vunpack.c.l.b16 %v188
    %v1976 = vunpack.c.h.b16 %v188
    %v1977 = vunpack.c.l.b16 %v189
    %v1978 = vunpack.c.h.b16 %v189
    %v1979 = vunpack.c.l.b16 %v190
    %v1980 = vunpack.c.h.b16 %v190
    %v1981 = vunpack.c.l.b16 %v191
    %v1982 = vunpack.c.h.b16 %v191
    %v1983 = vunpack.c.l.b16 %v192
    %v1984 = vunpack.c.h.b16 %v192
    %v1985 = vunpack.c.l.b16 %v193
    %v1986 = vunpack.c.h.b16 %v193
    %v1987 = vunpack.c.l.b16 %v194
    %v1988 = vunpack.c.h.b16 %v194
    %v1989 = vunpack.c.l.b16 %v195
    %v1990 = vunpack.c.h.b16 %v195
    %v1991 = vunpack.c.l.b16 %v196
    %v1992 = vunpack.c.h.b16 %v196
    %v1993 = vunpack.c.l.b16 %v197
    %v1994 = vunpack.c.h.b16 %v197
    %v1995 = vunpack.c.l.b16 %v198
    %v1996 = vunpack.c.h.b16 %v198
    %v1997 = vunpack.c.l.b16 %v199
    %v1998 = vunpack.c.h.b16 %v199
    %v1999 = vunpack.c.l.b16 %v200
    %v2000 = vunpack.c.h.b16 %v200
    %v2001 = vunpack.c.l.b16 %v201
    %v2002 = vunpack.c.h.b16 %v201
    %v2003 = vunpack.c.l.b16 %v202
    %v2004 = vunpack.c.h.b16 %v202
    %v2005 = vunpack.c.l.b16 %v203
    %v2006 = vunpack.c.h.b16 %v203
    %v2007 = vunpack.c.l.b16 %v204
    %v2008 = vunpack.c.h.b16 %v204
    %v2009 = vunpack.c.l.b16 %v205
    %v2010 = vunpack.c.h.b16 %v205
    %v2011 = vunpack.c.l.b16 %v206
    %v2012 = vunpack.c.h.b16 %v206
    %v2013 = vunpack.c.l.b16 %v207
    %v2014 = vunpack.c.h.b16 %v207
    %v2015 = vunpack.c.l.b16 %v208
    %v2016 = vunpack.c.h.b16 %v208
    %v2017 = vunpack.c.l.b16 %v209
    %v2018 = vunpack.c.h.b16 %v209
    %v2019 = vunpack.c.l.b16 %v210
    %v2020 = vunpack.c.h.b16 %v210
    %v2021 = vunpack.c.l.b16 %v211
    %v2022 = vunpack.c.h.b16 %v211
    %v2023 = vunpack.c.l.b16 %v212
    %v2024 = vunpack.c.h.b16 %v212
    %v2025 = vunpack.c.l.b16 %v213
    %v2026 = vunpack.c.h.b16 %v213
    %v2027 = vunpack.c.l.b16 %v214
    %v2028 = vunpack.c.h.b16 %v214
    %v2029 = vunpack.c.l.b16 %v215
    %v2030 = vunpack.c.h.b16 %v215
    %v2031 = vunpack.c.l.b16 %v216
    %v2032 = vunpack.c.h.b16 %v216
    %v2033 = vunpack.c.l.b16 %v217
    %v2034 = vunpack.c.h.b16 %v217
    %v2035 = vunpack.c.l.b16 %v218
    %v2036 = vunpack.c.h.b16 %v218
    %v2037 = vunpack.c.l.b16 %v219
    %v2038 = vunpack.c.h.b16 %v219
    %v2039 = vunpack.c.l.b16 %v220
    %v2040 = vunpack.c.h.b16 %v220
    %v2041 = vunpack.c.l.b16 %v221
    %v2042 = vunpack.c.h.b16 %v221
    %v2043 = vunpack.c.l.b16 %v222
    %v2044 = vunpack.c.h.b16 %v222
    %v2045 = vunpack.c.l.b16 %v223
    %v2046 = vunpack.c.h.b16 %v223
    %v2047 = vunpack.c.l.b16 %v224
    %v2048 = vunpack.c.h.b16 %v224
    %v2049 = vunpack.c.l.b16 %v225
    %v2050 = vunpack.c.h.b16 %v225
    %v2051 = vunpack.c.l.b16 %v226
    %v2052 = vunpack.c.h.b16 %v226
    %v2053 = vunpack.c.l.b16 %v227
    %v2054 = vunpack.c.h.b16 %v227
    %v2055 = vunpack.c.l.b16 %v228
    %v2056 = vunpack.c.h.b16 %v228
    %v2057 = vunpack.c.l.b16 %v229
    %v2058 = vunpack.c.h.b16 %v229
    %v2059 = vunpack.c.l.b16 %v230
    %v2060 = vunpack.c.h.b16 %v230
    %v2061 = vunpack.c.l.b16 %v231
    %v2062 = vunpack.c.h.b16 %v231
    %v2063 = vunpack.c.l.b16 %v232
    %v2064 = vunpack.c.h.b16 %v232
    %v2065 = vunpack.c.l.b16 %v233
    %v2066 = vunpack.c.h.b16 %v233
    %v2067 = vunpack.c.l.b16 %v234
    %v2068 = vunpack.c.h.b16 %v234
    %v2069 = vunpack.c.l.b16 %v235
    %v2070 = vunpack.c.h.b16 %v235
    %v2071 = vunpack.c.l.b16 %v236
    %v2072 = vunpack.c.h.b16 %v236
    %v2073 = vunpack.c.l.b16 %v237
    %v2074 = vunpack.c.h.b16 %v237
    %v2075 = vunpack.c.l.b16 %v238
    %v2076 = vunpack.c.h.b16 %v238
    %v2077 = vunpack.c.l.b16 %v239
    %v2078 = vunpack.c.h.b16 %v239
    %v2079 = vunpack.c.l.b16 %v240
    %v2080 = vunpack.c.h.b16 %v240
    %v2081 = vunpack.c.l.b16 %v241
    %v2082 = vunpack.c.h.b16 %v241
    %v2083 = vunpack.c.l.b16 %v242
    %v2084 = vunpack.c.h.b16 %v242
    %v2085 = vunpack.c.l.b16 %v243
    %v2086 = vunpack.c.h.b16 %v243
    %v2087 = vunpack.c.l.b16 %v244
    %v2088 = vunpack.c.h.b16 %v244
    %v2089 = vunpack.c.l.b16 %v245
    %v2090 = vunpack.c.h.b16 %v245
    %v2091 = vunpack.c.l.b16 %v246
    %v2092 = vunpack.c.h.b16 %v246
    %v2093 = vunpack.c.l.b16 %v247
    %v2094 = vunpack.c.h.b16 %v247
    %v2095 = vunpack.c.l.b16 %v248
    %v2096 = vunpack.c.h.b16 %v248
    %v2097 = vunpack.c.l.b16 %v249
    %v2098 = vunpack.c.h.b16 %v249
    %v2099 = vunpack.c.l.b16 %v250
    %v2100 = vunpack.c.h.b16 %v250
    %v2101 = vunpack.c.l.b16 %v251
    %v2102 = vunpack.c.h.b16 %v251
    %v2103 = vunpack.c.l.b16 %v252
    %v2104 = vunpack.c.h.b16 %v252
    %v2105 = vunpack.c.l.b16 %v253
    %v2106 = vunpack.c.h.b16 %v253
    %v2107 = vunpack.c.l.b16 %v254
    %v2108 = vunpack.c.h.b16 %v254
    %v2109 = vunpack.c.l.b16 %v255
    %v2110 = vunpack.c.h.b16 %v255
    %v2111 = vunpack.c.l.b16 %v256
    %v2112 = vunpack.c.h.b16 %v256
    %v2113 = vunpack.c.l.b16 %v257
    %v2114 = vunpack.c.h.b16 %v257
    %v2115 = vunpack.c.l.b16 %v258
    %v2116 = vunpack.c.h.b16 %v258
    %v2117 = vunpack.c.l.b16 %v259
    %v2118 = vunpack.c.h.b16 %v259
    %v2119 = vunpack.c.l.b16 %v260
    %v2120 = vunpack.c.h.b16 %v260
    %v2121 = vunpack.c.l.b16 %v261
    %v2122 = vunpack.c.h.b16 %v261
    %v2123 = vunpack.c.l.b16 %v262
    %v2124 = vunpack.c.h.b16 %v262
    %v2125 = vunpack.c.l.b16 %v263
    %v2126 = vunpack.c.h.b16 %v263
    %v2127 = vunpack.c.l.b16 %v264
    %v2128 = vunpack.c.h.b16 %v264
    %v2129 = vunpack.c.l.b16 %v265
    %v2130 = vunpack.c.h.b16 %v265
    %v2131 = vunpack.c.l.b16 %v266
    %v2132 = vunpack.c.h.b16 %v266
    %v2133 = vunpack.c.l.b16 %v267
    %v2134 = vunpack.c.h.b16 %v267
    %v2135 = vunpack.c.l.b16 %v268
    %v2136 = vunpack.c.h.b16 %v268
    %v2137 = vunpack.c.l.b16 %v269
    %v2138 = vunpack.c.h.b16 %v269
    %v2139 = vunpack.c.l.b16 %v270
    %v2140 = vunpack.c.h.b16 %v270
    %v2141 = vunpack.c.l.b16 %v271
    %v2142 = vunpack.c.h.b16 %v271
    %v2143 = vunpack.c.l.b16 %v272
    %v2144 = vunpack.c.h.b16 %v272
    %v2145 = vunpack.c.l.b16 %v273
    %v2146 = vunpack.c.h.b16 %v273
    %v2147 = vunpack.c.l.b16 %v274
    %v2148 = vunpack.c.h.b16 %v274
    %v2149 = vunpack.c.l.b16 %v275
    %v2150 = vunpack.c.h.b16 %v275
    %v2151 = vunpack.c.l.b16 %v276
    %v2152 = vunpack.c.h.b16 %v276
    %v2153 = vunpack.c.l.b16 %v277
    %v2154 = vunpack.c.h.b16 %v277
    %v2155 = vunpack.c.l.b16 %v278
    %v2156 = vunpack.c.h.b16 %v278
    %v2157 = vunpack.c.l.b16 %v279
    %v2158 = vunpack.c.h.b16 %v279
    %v2159 = vunpack.c.l.b16 %v280
    %v2160 = vunpack.c.h.b16 %v280
    %v2161 = vunpack.c.l.b16 %v281
    %v2162 = vunpack.c.h.b16 %v281
    %v2163 = vunpack.c.l.b16 %v282
    %v2164 = vunpack.c.h.b16 %v282
    %v2165 = vunpack.c.l.b16 %v283
    %v2166 = vunpack.c.h.b16 %v283
    %v2167 = vunpack.c.l.b16 %v284
    %v2168 = vunpack.c.h.b16 %v284
    %v2169 = vunpack.c.l.b16 %v285
    %v2170 = vunpack.c.h.b16 %v285
    %v2171 = vunpack.c.l.b16 %v286
    %v2172 = vunpack.c.h.b16 %v286
    %v2173 = vunpack.c.l.b16 %v287
    %v2174 = vunpack.c.h.b16 %v287
    %v2175 = vunpack.c.l.b16 %v288
    %v2176 = vunpack.c.h.b16 %v288
    %v2177 = vunpack.c.l.b16 %v289
    %v2178 = vunpack.c.h.b16 %v289
    %v2179 = vunpack.c.l.b16 %v290
    %v2180 = vunpack.c.h.b16 %v290
    %v2181 = vunpack.c.l.b16 %v291
    %v2182 = vunpack.c.h.b16 %v291
    %v2183 = vunpack.c.l.b16 %v292
    %v2184 = vunpack.c.h.b16 %v292
    %v2185 = vunpack.c.l.b16 %v293
    %v2186 = vunpack.c.h.b16 %v293
    %v2187 = vunpack.c.l.b16 %v294
    %v2188 = vunpack.c.h.b16 %v294
    %v2189 = vunpack.c.l.b16 %v295
    %v2190 = vunpack.c.h.b16 %v295
    %v2191 = vunpack.c.l.b16 %v296
    %v2192 = vunpack.c.h.b16 %v296
    %v2193 = vunpack.c.l.b16 %v297
    %v2194 = vunpack.c.h.b16 %v297
    %v2195 = vunpack.c.l.b16 %v298
    %v2196 = vunpack.c.h.b16 %v298
    %v2197 = vunpack.c.l.b16 %v299
    %v2198 = vunpack.c.h.b16 %v299
    %v2199 = vunpack.c.l.b16 %v300
    %v2200 = vunpack.c.h.b16 %v300
    %v2201 = vunpack.c.l.b16 %v301
    %v2202 = vunpack.c.h.b16 %v301
    %v2203 = vunpack.c.l.b16 %v302
    %v2204 = vunpack.c.h.b16 %v302
    %v2205 = vunpack.c.l.b16 %v303
    %v2206 = vunpack.c.h.b16 %v303
    %v2207 = vunpack.c.l.b16 %v304
    %v2208 = vunpack.c.h.b16 %v304
    %v2209 = vunpack.c.l.b16 %v305
    %v2210 = vunpack.c.h.b16 %v305
    %v2211 = vunpack.c.l.b16 %v306
    %v2212 = vunpack.c.h.b16 %v306
    %v2213 = vunpack.c.l.b16 %v307
    %v2214 = vunpack.c.h.b16 %v307
    %v2215 = vunpack.c.l.b16 %v308
    %v2216 = vunpack.c.h.b16 %v308
    %v2217 = vunpack.c.l.b16 %v309
    %v2218 = vunpack.c.h.b16 %v309
    %v2219 = vunpack.c.l.b16 %v310
    %v2220 = vunpack.c.h.b16 %v310
    %v2221 = vunpack.c.l.b16 %v311
    %v2222 = vunpack.c.h.b16 %v311
    %v2223 = vunpack.c.l.b16 %v312
    %v2224 = vunpack.c.h.b16 %v312
    %v2225 = vunpack.c.l.b16 %v313
    %v2226 = vunpack.c.h.b16 %v313
    %v2227 = vunpack.c.l.b16 %v314
    %v2228 = vunpack.c.h.b16 %v314
    %v2229 = vunpack.c.l.b16 %v315
    %v2230 = vunpack.c.h.b16 %v315
    %v2231 = vunpack.c.l.b16 %v316
    %v2232 = vunpack.c.h.b16 %v316
    %v2233 = vunpack.c.l.b16 %v317
    %v2234 = vunpack.c.h.b16 %v317
    %v2235 = vunpack.c.l.b16 %v318
    %v2236 = vunpack.c.h.b16 %v318
    %v2237 = vunpack.c.l.b16 %v319
    %v2238 = vunpack.c.h.b16 %v319
    %v2239 = vunpack.c.l.b16 %v320
    %v2240 = vunpack.c.h.b16 %v320
    %v2241 = vunpack.c.l.b16 %v321
    %v2242 = vunpack.c.h.b16 %v321
    %v2243 = vunpack.c.l.b16 %v322
    %v2244 = vunpack.c.h.b16 %v322
    %v2245 = vunpack.c.l.b16 %v323
    %v2246 = vunpack.c.h.b16 %v323
    %v2247 = vunpack.c.l.b16 %v324
    %v2248 = vunpack.c.h.b16 %v324
    %v2249 = vunpack.c.l.b16 %v325
    %v2250 = vunpack.c.h.b16 %v325
    %v2251 = vunpack.c.l.b16 %v326
    %v2252 = vunpack.c.h.b16 %v326
    %v2253 = vunpack.c.l.b16 %v327
    %v2254 = vunpack.c.h.b16 %v327
    %v2255 = vunpack.c.l.b16 %v328
    %v2256 = vunpack.c.h.b16 %v328
    %v2257 = vunpack.c.l.b16 %v329
    %v2258 = vunpack.c.h.b16 %v329
    %v2259 = vunpack.c.l.b16 %v330
    %v2260 = vunpack.c.h.b16 %v330
    %v2261 = vunpack.c.l.b16 %v331
    %v2262 = vunpack.c.h.b16 %v331
    %v2263 = vunpack.c.l.b16 %v332
    %v2264 = vunpack.c.h.b16 %v332
    %v2265 = vunpack.c.l.b16 %v333
    %v2266 = vunpack.c.h.b16 %v333
    %v2267 = vunpack.c.l.b16 %v334
    %v2268 = vunpack.c.h.b16 %v334
    %v2269 = vunpack.c.l.b16 %v335
    %v2270 = vunpack.c.h.b16 %v335
    %v2271 = vunpack.c.l.b16 %v336
    %v2272 = vunpack.c.h.b16 %v336
    %v2273 = vunpack.c.l.b16 %v337
    %v2274 = vunpack.c.h.b16 %v337
    %v2275 = vunpack.c.l.b16 %v338
    %v2276 = vunpack.c.h.b16 %v338
    %v2277 = vunpack.c.l.b16 %v339
    %v2278 = vunpack.c.h.b16 %v339
    %v2279 = vunpack.c.l.b16 %v340
    %v2280 = vunpack.c.h.b16 %v340
    %v2281 = vunpack.c.l.b16 %v341
    %v2282 = vunpack.c.h.b16 %v341
    %v2283 = vunpack.c.l.b16 %v342
    %v2284 = vunpack.c.h.b16 %v342
    %v2285 = vunpack.c.l.b16 %v343
    %v2286 = vunpack.c.h.b16 %v343
    %v2287 = vunpack.c.l.b16 %v344
    %v2288 = vunpack.c.h.b16 %v344
    %v2289 = vunpack.c.l.b16 %v345
    %v2290 = vunpack.c.h.b16 %v345
    %v2291 = vunpack.c.l.b16 %v346
    %v2292 = vunpack.c.h.b16 %v346
    %v2293 = vunpack.c.l.b16 %v347
    %v2294 = vunpack.c.h.b16 %v347
    %v2295 = vunpack.c.l.b16 %v348
    %v2296 = vunpack.c.h.b16 %v348
    %v2297 = vunpack.c.l.b16 %v349
    %v2298 = vunpack.c.h.b16 %v349
    %v2299 = vunpack.c.l.b16 %v350
    %v2300 = vunpack.c.h.b16 %v350
    %v2301 = vunpack.c.l.b16 %v351
    %v2302 = vunpack.c.h.b16 %v351
    %v2303 = vunpack.c.l.b16 %v352
    %v2304 = vunpack.c.h.b16 %v352
    %v2305 = vunpack.c.l.b16 %v353
    %v2306 = vunpack.c.h.b16 %v353
    %v2307 = vunpack.c.l.b16 %v354
    %v2308 = vunpack.c.h.b16 %v354
    %v2309 = vunpack.c.l.b16 %v355
    %v2310 = vunpack.c.h.b16 %v355
    %v2311 = vunpack.c.l.b16 %v356
    %v2312 = vunpack.c.h.b16 %v356
    %v2313 = vunpack.c.l.b16 %v357
    %v2314 = vunpack.c.h.b16 %v357
    %v2315 = vunpack.c.l.b16 %v358
    %v2316 = vunpack.c.h.b16 %v358
    %v2317 = vunpack.c.l.b16 %v359
    %v2318 = vunpack.c.h.b16 %v359
    %v2319 = vunpack.c.l.b16 %v360
    %v2320 = vunpack.c.h.b16 %v360
    %v2321 = vunpack.c.l.b16 %v361
    %v2322 = vunpack.c.h.b16 %v361
    %v2323 = vunpack.c.l.b16 %v362
    %v2324 = vunpack.c.h.b16 %v362
    %v2325 = vunpack.c.l.b16 %v363
    %v2326 = vunpack.c.h.b16 %v363
    %v2327 = vunpack.c.l.b16 %v364
    %v2328 = vunpack.c.h.b16 %v364
    %v2329 = vunpack.c.l.b16 %v365
    %v2330 = vunpack.c.h.b16 %v365
    %v2331 = vunpack.c.l.b16 %v366
    %v2332 = vunpack.c.h.b16 %v366
    %v2333 = vunpack.c.l.b16 %v367
    %v2334 = vunpack.c.h.b16 %v367
    %v2335 = vunpack.c.l.b16 %v368
    %v2336 = vunpack.c.h.b16 %v368
    %v2337 = vunpack.c.l.b16 %v369
    %v2338 = vunpack.c.h.b16 %v369
    %v2339 = vunpack.c.l.b16 %v370
    %v2340 = vunpack.c.h.b16 %v370
    %v2341 = vunpack.c.l.b16 %v371
    %v2342 = vunpack.c.h.b16 %v371
    %v2343 = vunpack.c.l.b16 %v372
    %v2344 = vunpack.c.h.b16 %v372
    %v2345 = vunpack.c.l.b16 %v373
    %v2346 = vunpack.c.h.b16 %v373
    %v2347 = vunpack.c.l.b16 %v374
    %v2348 = vunpack.c.h.b16 %v374
    %v2349 = vunpack.c.l.b16 %v375
    %v2350 = vunpack.c.h.b16 %v375
    %v2351 = vunpack.c.l.b16 %v376
    %v2352 = vunpack.c.h.b16 %v376
    %v2353 = vunpack.c.l.b16 %v377
    %v2354 = vunpack.c.h.b16 %v377
    %v2355 = vunpack.c.l.b16 %v378
    %v2356 = vunpack.c.h.b16 %v378
    %v2357 = vunpack.c.l.b16 %v379
    %v2358 = vunpack.c.h.b16 %v379
    %v2359 = vunpack.c.l.b16 %v380
    %v2360 = vunpack.c.h.b16 %v380
    %v2361 = vunpack.c.l.b16 %v381
    %v2362 = vunpack.c.h.b16 %v381
    %v2363 = vunpack.c.l.b16 %v382
    %v2364 = vunpack.c.h.b16 %v382
    %v2365 = vunpack.c.l.b16 %v383
    %v2366 = vunpack.c.h.b16 %v383
    %v2367 = vunpack.c.l.b16 %v384
    %v2368 = vunpack.c.h.b16 %v384
    %v2369 = vunpack.c.l.b16 %v385
    %v2370 = vunpack.c.h.b16 %v385
    %v2371 = vunpack.c.l.b16 %v386
    %v2372 = vunpack.c.h.b16 %v386
    %v2373 = vunpack.c.l.b16 %v387
    %v2374 = vunpack.c.h.b16 %v387
    %v2375 = vunpack.c.l.b16 %v388
    %v2376 = vunpack.c.h.b16 %v388
    %v2377 = vunpack.c.l.b16 %v389
    %v2378 = vunpack.c.h.b16 %v389
    %v2379 = vunpack.c.l.b16 %v390
    %v2380 = vunpack.c.h.b16 %v390
    %v2381 = vunpack.c.l.b16 %v391
    %v2382 = vunpack.c.h.b16 %v391
    %v2383 = vunpack.c.l.b16 %v392
    %v2384 = vunpack.c.h.b16 %v392
    %v2385 = vunpack.c.l.b16 %v393
    %v2386 = vunpack.c.h.b16 %v393
    %v2387 = vunpack.c.l.b16 %v394
    %v2388 = vunpack.c.h.b16 %v394
    %v2389 = vunpack.c.l.b16 %v395
    %v2390 = vunpack.c.h.b16 %v395
    %v2391 = vunpack.c.l.b16 %v396
    %v2392 = vunpack.c.h.b16 %v396
    %v2393 = vunpack.c.l.b16 %v397
    %v2394 = vunpack.c.h.b16 %v397
    %v2395 = vunpack.c.l.b16 %v398
    %v2396 = vunpack.c.h.b16 %v398
    %v2397 = vunpack.c.l.b16 %v399
    %v2398 = vunpack.c.h.b16 %v399
    %v2399 = vunpack.c.l.b16 %v400
    %v2400 = vunpack.c.h.b16 %v400
    %v2401 = vunpack.c.l.b16 %v401
    %v2402 = vunpack.c.h.b16 %v401
    %v2403 = vunpack.c.l.b16 %v402
    %v2404 = vunpack.c.h.b16 %v402
    %v2405 = vunpack.c.l.b16 %v403
    %v2406 = vunpack.c.h.b16 %v403
    %v2407 = vunpack.c.l.b16 %v404
    %v2408 = vunpack.c.h.b16 %v404
    %v2409 = vunpack.c.l.b16 %v405
    %v2410 = vunpack.c.h.b16 %v405
    %v2411 = vunpack.c.l.b16 %v406
    %v2412 = vunpack.c.h.b16 %v406
    %v2413 = vunpack.c.l.b16 %v407
    %v2414 = vunpack.c.h.b16 %v407
    %v2415 = vunpack.c.l.b16 %v408
    %v2416 = vunpack.c.h.b16 %v408
    %v2417 = vunpack.c.l.b16 %v409
    %v2418 = vunpack.c.h.b16 %v409
    %v2419 = vunpack.c.l.b16 %v410
    %v2420 = vunpack.c.h.b16 %v410
    %v2421 = vunpack.c.l.b16 %v411
    %v2422 = vunpack.c.h.b16 %v411
    %v2423 = vunpack.c.l.b16 %v412
    %v2424 = vunpack.c.h.b16 %v412
    %v2425 = vunpack.c.l.b16 %v413
    %v2426 = vunpack.c.h.b16 %v413
    %v2427 = vunpack.c.l.b16 %v414
    %v2428 = vunpack.c.h.b16 %v414
    %v2429 = vunpack.c.l.b16 %v415
    %v2430 = vunpack.c.h.b16 %v415
    %v2431 = vunpack.c.l.b16 %v416
    %v2432 = vunpack.c.h.b16 %v416
    %v2433 = vunpack.c.l.b16 %v417
    %v2434 = vunpack.c.h.b16 %v417
    %v2435 = vunpack.c.l.b16 %v418
    %v2436 = vunpack.c.h.b16 %v418
    %v2437 = vunpack.c.l.b16 %v419
    %v2438 = vunpack.c.h.b16 %v419
    %v2439 = vunpack.c.l.b16 %v420
    %v2440 = vunpack.c.h.b16 %v420
    %v2441 = vunpack.c.l.b16 %v421
    %v2442 = vunpack.c.h.b16 %v421
    %v2443 = vunpack.c.l.b16 %v422
    %v2444 = vunpack.c.h.b16 %v422
    %v2445 = vunpack.c.l.b16 %v423
    %v2446 = vunpack.c.h.b16 %v423
    %v2447 = vunpack.c.l.b16 %v424
    %v2448 = vunpack.c.h.b16 %v424
    %v2449 = vunpack.c.l.b16 %v425
    %v2450 = vunpack.c.h.b16 %v425
    %v2451 = vunpack.c.l.b16 %v426
    %v2452 = vunpack.c.h.b16 %v426
    %v2453 = vunpack.c.l.b16 %v427
    %v2454 = vunpack.c.h.b16 %v427
    %v2455 = vunpack.c.l.b16 %v428
    %v2456 = vunpack.c.h.b16 %v428
    %v2457 = vunpack.c.l.b16 %v429
    %v2458 = vunpack.c.h.b16 %v429
    %v2459 = vunpack.c.l.b16 %v430
    %v2460 = vunpack.c.h.b16 %v430
    %v2461 = vunpack.c.l.b16 %v431
    %v2462 = vunpack.c.h.b16 %v431
    %v2463 = vunpack.c.l.b16 %v432
    %v2464 = vunpack.c.h.b16 %v432
    %v2465 = vunpack.c.l.b16 %v433
    %v2466 = vunpack.c.h.b16 %v433
    %v2467 = vunpack.c.l.b16 %v434
    %v2468 = vunpack.c.h.b16 %v434
    %v2469 = vunpack.c.l.b16 %v435
    %v2470 = vunpack.c.h.b16 %v435
    %v2471 = vunpack.c.l.b16 %v436
    %v2472 = vunpack.c.h.b16 %v436
    %v2473 = vunpack.c.l.b16 %v437
    %v2474 = vunpack.c.h.b16 %v437
    %v2475 = vunpack.c.l.b16 %v438
    %v2476 = vunpack.c.h.b16 %v438
    %v2477 = vunpack.c.l.b16 %v439
    %v2478 = vunpack.c.h.b16 %v439
    %v2479 = vunpack.c.l.b16 %v440
    %v2480 = vunpack.c.h.b16 %v440
    %v2481 = vunpack.c.l.b16 %v441
    %v2482 = vunpack.c.h.b16 %v441
    %v2483 = vunpack.c.l.b16 %v442
    %v2484 = vunpack.c.h.b16 %v442
    %v2485 = vunpack.c.l.b16 %v443
    %v2486 = vunpack.c.h.b16 %v443
    %v2487 = vunpack.c.l.b16 %v444
    %v2488 = vunpack.c.h.b16 %v444
    %v2489 = vunpack.c.l.b16 %v445
    %v2490 = vunpack.c.h.b16 %v445
    %v2491 = vunpack.c.l.b16 %v446
    %v2492 = vunpack.c.h.b16 %v446
    %v2493 = vunpack.c.l.b16 %v447
    %v2494 = vunpack.c.h.b16 %v447
    %v2495 = vunpack.c.l.b16 %v448
    %v2496 = vunpack.c.h.b16 %v448
    %v2497 = vunpack.c.l.b16 %v449
    %v2498 = vunpack.c.h.b16 %v449
    %v2499 = vunpack.c.l.b16 %v450
    %v2500 = vunpack.c.h.b16 %v450
    %v2501 = vunpack.c.l.b16 %v451
    %v2502 = vunpack.c.h.b16 %v451
    %v2503 = vunpack.c.l.b16 %v452
    %v2504 = vunpack.c.h.b16 %v452
    %v2505 = vunpack.c.l.b16 %v453
    %v2506 = vunpack.c.h.b16 %v453
    %v2507 = vunpack.c.l.b16 %v454
    %v2508 = vunpack.c.h.b16 %v454
    %v2509 = vunpack.c.l.b16 %v455
    %v2510 = vunpack.c.h.b16 %v455
    %v2511 = vunpack.c.l.b16 %v456
    %v2512 = vunpack.c.h.b16 %v456
    %v2513 = vunpack.c.l.b16 %v457
    %v2514 = vunpack.c.h.b16 %v457
    %v2515 = vunpack.c.l.b16 %v458
    %v2516 = vunpack.c.h.b16 %v458
    %v2517 = vunpack.c.l.b16 %v459
    %v2518 = vunpack.c.h.b16 %v459
    %v2519 = vunpack.c.l.b16 %v460
    %v2520 = vunpack.c.h.b16 %v460
    %v2521 = vunpack.c.l.b16 %v461
    %v2522 = vunpack.c.h.b16 %v461
    %v2523 = vunpack.c.l.b16 %v462
    %v2524 = vunpack.c.h.b16 %v462
    %v2525 = vunpack.c.l.b16 %v463
    %v2526 = vunpack.c.h.b16 %v463
    %v2527 = vunpack.c.l.b16 %v464
    %v2528 = vunpack.c.h.b16 %v464
    %v2529 = vunpack.c.l.b16 %v465
    %v2530 = vunpack.c.h.b16 %v465
    %v2531 = vunpack.c.l.b16 %v466
    %v2532 = vunpack.c.h.b16 %v466
    %v2533 = vunpack.c.l.b16 %v467
    %v2534 = vunpack.c.h.b16 %v467
    %v2535 = vunpack.c.l.b16 %v468
    %v2536 = vunpack.c.h.b16 %v468
    %v2537 = vunpack.c.l.b16 %v469
    %v2538 = vunpack.c.h.b16 %v469
    %v2539 = vunpack.c.l.b16 %v470
    %v2540 = vunpack.c.h.b16 %v470
    %v2541 = vunpack.c.l.b16 %v471
    %v2542 = vunpack.c.h.b16 %v471
    %v2543 = vunpack.c.l.b16 %v472
    %v2544 = vunpack.c.h.b16 %v472
    %v2545 = vunpack.c.l.b16 %v473
    %v2546 = vunpack.c.h.b16 %v473
    %v2547 = vunpack.c.l.b16 %v474
    %v2548 = vunpack.c.h.b16 %v474
    %v2549 = vunpack.c.l.b16 %v475
    %v2550 = vunpack.c.h.b16 %v475
    %v2551 = vunpack.c.l.b16 %v476
    %v2552 = vunpack.c.h.b16 %v476
    %v2553 = vunpack.c.l.b16 %v477
    %v2554 = vunpack.c.h.b16 %v477
    %v2555 = vunpack.c.l.b16 %v478
    %v2556 = vunpack.c.h.b16 %v478
    %v2557 = vunpack.c.l.b16 %v479
    %v2558 = vunpack.c.h.b16 %v479
    %v2559 = vunpack.c.l.b16 %v480
    %v2560 = vunpack.c.h.b16 %v480
    %v2561 = vunpack.c.l.b16 %v481
    %v2562 = vunpack.c.h.b16 %v481
    %v2563 = vunpack.c.l.b16 %v482
    %v2564 = vunpack.c.h.b16 %v482
    %v2565 = vunpack.c.l.b16 %v483
    %v2566 = vunpack.c.h.b16 %v483
    %v2567 = vunpack.c.l.b16 %v484
    %v2568 = vunpack.c.h.b16 %v484
    %v2569 = vunpack.c.l.b16 %v485
    %v2570 = vunpack.c.h.b16 %v485
    %v2571 = vunpack.c.l.b16 %v486
    %v2572 = vunpack.c.h.b16 %v486
    %v2573 = vunpack.c.l.b16 %v487
    %v2574 = vunpack.c.h.b16 %v487
    %v2575 = vunpack.c.l.b16 %v488
    %v2576 = vunpack.c.h.b16 %v488
    %v2577 = vunpack.c.l.b16 %v489
    %v2578 = vunpack.c.h.b16 %v489
    %v2579 = vunpack.c.l.b16 %v490
    %v2580 = vunpack.c.h.b16 %v490
    %v2581 = vunpack.c.l.b16 %v491
    %v2582 = vunpack.c.h.b16 %v491
    %v2583 = vunpack.c.l.b16 %v492
    %v2584 = vunpack.c.h.b16 %v492
    %v2585 = vunpack.c.l.b16 %v493
    %v2586 = vunpack.c.h.b16 %v493
    %v2587 = vunpack.c.l.b16 %v494
    %v2588 = vunpack.c.h.b16 %v494
    %v2589 = vunpack.c.l.b16 %v495
    %v2590 = vunpack.c.h.b16 %v495
    %v2591 = vunpack.c.l.b16 %v496
    %v2592 = vunpack.c.h.b16 %v496
    %v2593 = vunpack.c.l.b16 %v497
    %v2594 = vunpack.c.h.b16 %v497
    %v2595 = vunpack.c.l.b16 %v498
    %v2596 = vunpack.c.h.b16 %v498
    %v2597 = vunpack.c.l.b16 %v499
    %v2598 = vunpack.c.h.b16 %v499
    %v2599 = vunpack.c.l.b16 %v500
    %v2600 = vunpack.c.h.b16 %v500
    %v2601 = vunpack.c.l.b16 %v501
    %v2602 = vunpack.c.h.b16 %v501
    %v2603 = vunpack.c.l.b16 %v502
    %v2604 = vunpack.c.h.b16 %v502
    %v2605 = vunpack.c.l.b16 %v503
    %v2606 = vunpack.c.h.b16 %v503
    %v2607 = vunpack.c.l.b16 %v504
    %v2608 = vunpack.c.h.b16 %v504
    %v2609 = vunpack.c.l.b16 %v505
    %v2610 = vunpack.c.h.b16 %v505
    %v2611 = vunpack.c.l.b16 %v506
    %v2612 = vunpack.c.h.b16 %v506
    %v2613 = vunpack.c.l.b16 %v507
    %v2614 = vunpack.c.h.b16 %v507
    %v2615 = vunpack.c.l.b16 %v508
    %v2616 = vunpack.c.h.b16 %v508
    %v2617 = vunpack.c.l.b16 %v509
    %v2618 = vunpack.c.h.b16 %v509
    %v2619 = vunpack.c.l.b16 %v510
    %v2620 = vunpack.c.h.b16 %v510
    %v2621 = vunpack.c.l.b16 %v511
    %v2622 = vunpack.c.h.b16 %v511
    %v2623 = vunpack.c.l.b16 %v512
    %v2624 = vunpack.c.h.b16 %v512
    %v2625 = vunpack.c.l.b16 %v513
    %v2626 = vunpack.c.h.b16 %v513
    %v2627 = vunpack.c.l.b16 %v514
    %v2628 = vunpack.c.h.b16 %v514
    %v2629 = vunpack.c.l.b16 %v515
    %v2630 = vunpack.c.h.b16 %v515
    %v2631 = vunpack.c.l.b16 %v516
    %v2632 = vunpack.c.h.b16 %v516
    %v2633 = vunpack.c.l.b16 %v517
    %v2634 = vunpack.c.h.b16 %v517
    %v2635 = vunpack.c.l.b16 %v518
    %v2636 = vunpack.c.h.b16 %v518
    %v2637 = vunpack.c.l.b16 %v519
    %v2638 = vunpack.c.h.b16 %v519
    %v2639 = vunpack.c.l.b16 %v520
    %v2640 = vunpack.c.h.b16 %v520
    %v2641 = vunpack.c.l.b16 %v521
    %v2642 = vunpack.c.h.b16 %v521
    %v2643 = vunpack.c.l.b16 %v522
    %v2644 = vunpack.c.h.b16 %v522
    %v2645 = vunpack.c.l.b16 %v523
    %v2646 = vunpack.c.h.b16 %v523
    %v2647 = vunpack.c.l.b16 %v524
    %v2648 = vunpack.c.h.b16 %v524
    %v2649 = vunpack.c.l.b16 %v525
    %v2650 = vunpack.c.h.b16 %v525
    %v2651 = vunpack.c.l.b16 %v526
    %v2652 = vunpack.c.h.b16 %v526
    %v2653 = vunpack.c.l.b16 %v527
    %v2654 = vunpack.c.h.b16 %v527
    %v2655 = vunpack.c.l.b16 %v528
    %v2656 = vunpack.c.h.b16 %v528
    %v2657 = vunpack.c.l.b16 %v529
    %v2658 = vunpack.c.h.b16 %v529
    %v2659 = vunpack.c.l.b16 %v530
    %v2660 = vunpack.c.h.b16 %v530
    %v2661 = vunpack.c.l.b16 %v531
    %v2662 = vunpack.c.h.b16 %v531
    %v2663 = vunpack.c.l.b16 %v532
    %v2664 = vunpack.c.h.b16 %v532
    %v2665 = vunpack.c.l.b16 %v533
    %v2666 = vunpack.c.h.b16 %v533
    %v2667 = vunpack.c.l.b16 %v534
    %v2668 = vunpack.c.h.b16 %v534
    %v2669 = vunpack.c.l.b16 %v535
    %v2670 = vunpack.c.h.b16 %v535
    %v2671 = vunpack.c.l.b16 %v536
    %v2672 = vunpack.c.h.b16 %v536
    %v2673 = vunpack.c.l.b16 %v537
    %v2674 = vunpack.c.h.b16 %v537
    %v2675 = vunpack.c.l.b16 %v538
    %v2676 = vunpack.c.h.b16 %v538
    %v2677 = vunpack.c.l.b16 %v539
    %v2678 = vunpack.c.h.b16 %v539
    %v2679 = vunpack.c.l.b16 %v540
    %v2680 = vunpack.c.h.b16 %v540
    %v2681 = vunpack.c.l.b16 %v541
    %v2682 = vunpack.c.h.b16 %v541
    %v2683 = vunpack.c.l.b16 %v542
    %v2684 = vunpack.c.h.b16 %v542
    %v2685 = vunpack.c.l.b16 %v543
    %v2686 = vunpack.c.h.b16 %v543
    %v2687 = vunpack.c.l.b16 %v544
    %v2688 = vunpack.c.h.b16 %v544
    %v2689 = vunpack.c.l.b16 %v545
    %v2690 = vunpack.c.h.b16 %v545
    %v2691 = vunpack.c.l.b16 %v546
    %v2692 = vunpack.c.h.b16 %v546
    %v2693 = vunpack.c.l.b16 %v547
    %v2694 = vunpack.c.h.b16 %v547
    %v2695 = vunpack.c.l.b16 %v548
    %v2696 = vunpack.c.h.b16 %v548
    %v2697 = vunpack.c.l.b16 %v549
    %v2698 = vunpack.c.h.b16 %v549
    %v2699 = vunpack.c.l.b16 %v550
    %v2700 = vunpack.c.h.b16 %v550
    %v2701 = vunpack.c.l.b16 %v551
    %v2702 = vunpack.c.h.b16 %v551
    %v2703 = vunpack.c.l.b16 %v552
    %v2704 = vunpack.c.h.b16 %v552
    %v2705 = vunpack.c.l.b16 %v553
    %v2706 = vunpack.c.h.b16 %v553
    %v2707 = vunpack.c.l.b16 %v554
    %v2708 = vunpack.c.h.b16 %v554
    %v2709 = vunpack.c.l.b16 %v555
    %v2710 = vunpack.c.h.b16 %v555
    %v2711 = vunpack.c.l.b16 %v556
    %v2712 = vunpack.c.h.b16 %v556
    %v2713 = vunpack.c.l.b16 %v557
    %v2714 = vunpack.c.h.b16 %v557
    %v2715 = vunpack.c.l.b16 %v558
    %v2716 = vunpack.c.h.b16 %v558
    %v2717 = vunpack.c.l.b16 %v559
    %v2718 = vunpack.c.h.b16 %v559
    %v2719 = vunpack.c.l.b16 %v560
    %v2720 = vunpack.c.h.b16 %v560
    %v2721 = vunpack.c.l.b16 %v561
    %v2722 = vunpack.c.h.b16 %v561
    %v2723 = vunpack.c.l.b16 %v562
    %v2724 = vunpack.c.h.b16 %v562
    %v2725 = vunpack.c.l.b16 %v563
    %v2726 = vunpack.c.h.b16 %v563
    %v2727 = vunpack.c.l.b16 %v564
    %v2728 = vunpack.c.h.b16 %v564
    %v2729 = vunpack.c.l.b16 %v565
    %v2730 = vunpack.c.h.b16 %v565
    %v2731 = vunpack.c.l.b16 %v566
    %v2732 = vunpack.c.h.b16 %v566
    %v2733 = vunpack.c.l.b16 %v567
    %v2734 = vunpack.c.h.b16 %v567
    %v2735 = vunpack.c.l.b16 %v568
    %v2736 = vunpack.c.h.b16 %v568
    %v2737 = vunpack.c.l.b16 %v569
    %v2738 = vunpack.c.h.b16 %v569
    %v2739 = vunpack.c.l.b16 %v570
    %v2740 = vunpack.c.h.b16 %v570
    %v2741 = vunpack.c.l.b16 %v571
    %v2742 = vunpack.c.h.b16 %v571
    %v2743 = vunpack.c.l.b16 %v572
    %v2744 = vunpack.c.h.b16 %v572
    %v2745 = vunpack.c.l.b16 %v573
    %v2746 = vunpack.c.h.b16 %v573
    %v2747 = vunpack.c.l.b16 %v574
    %v2748 = vunpack.c.h.b16 %v574
    %v2749 = vunpack.c.l.b16 %v575
    %v2750 = vunpack.c.h.b16 %v575
    %v2751 = vunpack.c.l.b16 %v576
    %v2752 = vunpack.c.h.b16 %v576
    %v2753 = vunpack.c.l.b16 %v577
    %v2754 = vunpack.c.h.b16 %v577
    %v2755 = vunpack.c.l.b16 %v578
    %v2756 = vunpack.c.h.b16 %v578
    %v2757 = vunpack.c.l.b16 %v579
    %v2758 = vunpack.c.h.b16 %v579
    %v2759 = vunpack.c.l.b16 %v580
    %v2760 = vunpack.c.h.b16 %v580
    %v2761 = vunpack.c.l.b16 %v581
    %v2762 = vunpack.c.h.b16 %v581
    %v2763 = vunpack.c.l.b16 %v582
    %v2764 = vunpack.c.h.b16 %v582
    %v2765 = vunpack.c.l.b16 %v583
    %v2766 = vunpack.c.h.b16 %v583
    %v2767 = vunpack.c.l.b16 %v584
    %v2768 = vunpack.c.h.b16 %v584
    %v2769 = vunpack.c.l.b16 %v585
    %v2770 = vunpack.c.h.b16 %v585
    %v2771 = vunpack.c.l.b16 %v586
    %v2772 = vunpack.c.h.b16 %v586
    %v2773 = vunpack.c.l.b16 %v587
    %v2774 = vunpack.c.h.b16 %v587
    %v2775 = vunpack.c.l.b16 %v588
    %v2776 = vunpack.c.h.b16 %v588
    %v2777 = vunpack.c.l.b16 %v589
    %v2778 = vunpack.c.h.b16 %v589
    %v2779 = vunpack.c.l.b16 %v590
    %v2780 = vunpack.c.h.b16 %v590
    %v2781 = vunpack.c.l.b16 %v591
    %v2782 = vunpack.c.h.b16 %v591
    %v2783 = vunpack.c.l.b16 %v592
    %v2784 = vunpack.c.h.b16 %v592
    %v2785 = vunpack.c.l.b16 %v593
    %v2786 = vunpack.c.h.b16 %v593
    %v2787 = vunpack.c.l.b16 %v594
    %v2788 = vunpack.c.h.b16 %v594
    %v2789 = vunpack.c.l.b16 %v595
    %v2790 = vunpack.c.h.b16 %v595
    %v2791 = vunpack.c.l.b16 %v596
    %v2792 = vunpack.c.h.b16 %v596
    %v2793 = vunpack.c.l.b16 %v597
    %v2794 = vunpack.c.h.b16 %v597
    %v2795 = vunpack.c.l.b16 %v598
    %v2796 = vunpack.c.h.b16 %v598
    %v2797 = vunpack.c.l.b16 %v599
    %v2798 = vunpack.c.h.b16 %v599
    %v2799 = vunpack.c.l.b16 %v600
    %v2800 = vunpack.c.h.b16 %v600
    %v2801 = vunpack.c.l.b16 %v601
    %v2802 = vunpack.c.h.b16 %v601
    %v2803 = vunpack.c.l.b16 %v602
    %v2804 = vunpack.c.h.b16 %v602
    %v2805 = vunpack.c.l.b16 %v603
    %v2806 = vunpack.c.h.b16 %v603
    %v2807 = vunpack.c.l.b16 %v604
    %v2808 = vunpack.c.h.b16 %v604
    %v2809 = vunpack.c.l.b16 %v605
    %v2810 = vunpack.c.h.b16 %v605
    %v2811 = vunpack.c.l.b16 %v606
    %v2812 = vunpack.c.h.b16 %v606
    %v2813 = vunpack.c.l.b16 %v607
    %v2814 = vunpack.c.h.b16 %v607
    %v2815 = vunpack.c.l.b16 %v608
    %v2816 = vunpack.c.h.b16 %v608
    %v2817 = vunpack.c.l.b16 %v609
    %v2818 = vunpack.c.h.b16 %v609
    %v2819 = vunpack.c.l.b16 %v610
    %v2820 = vunpack.c.h.b16 %v610
    %v2821 = vunpack.c.l.b16 %v611
    %v2822 = vunpack.c.h.b16 %v611
    %v2823 = vunpack.c.l.b16 %v612
    %v2824 = vunpack.c.h.b16 %v612
    %v2825 = vunpack.c.l.b16 %v613
    %v2826 = vunpack.c.h.b16 %v613
    %v2827 = vunpack.c.l.b16 %v614
    %v2828 = vunpack.c.h.b16 %v614
    %v2829 = vunpack.c.l.b16 %v615
    %v2830 = vunpack.c.h.b16 %v615
    %v2831 = vunpack.c.l.b16 %v616
    %v2832 = vunpack.c.h.b16 %v616
    %v2833 = vunpack.c.l.b16 %v617
    %v2834 = vunpack.c.h.b16 %v617
    %v2835 = vunpack.c.l.b16 %v618
    %v2836 = vunpack.c.h.b16 %v618
    %v2837 = vunpack.c.l.b16 %v619
    %v2838 = vunpack.c.h.b16 %v619
    %v2839 = vunpack.c.l.b16 %v620
    %v2840 = vunpack.c.h.b16 %v620
    %v2841 = vunpack.c.l.b16 %v621
    %v2842 = vunpack.c.h.b16 %v621
    %v2843 = vunpack.c.l.b16 %v622
    %v2844 = vunpack.c.h.b16 %v622
    %v2845 = vunpack.c.l.b16 %v623
    %v2846 = vunpack.c.h.b16 %v623
    %v2847 = vunpack.c.l.b16 %v624
    %v2848 = vunpack.c.h.b16 %v624
    %v2849 = vunpack.c.l.b16 %v625
    %v2850 = vunpack.c.h.b16 %v625
    %v2851 = vunpack.c.l.b16 %v626
    %v2852 = vunpack.c.h.b16 %v626
    %v2853 = vunpack.c.l.b16 %v627
    %v2854 = vunpack.c.h.b16 %v627
    %v2855 = vunpack.c.l.b16 %v628
    %v2856 = vunpack.c.h.b16 %v628
    %v2857 = vunpack.c.l.b16 %v629
    %v2858 = vunpack.c.h.b16 %v629
    %v2859 = vunpack.c.l.b16 %v630
    %v2860 = vunpack.c.h.b16 %v630
    %v2861 = vunpack.c.l.b16 %v631
    %v2862 = vunpack.c.h.b16 %v631
    %v2863 = vunpack.c.l.b16 %v632
    %v2864 = vunpack.c.h.b16 %v632
    %v2865 = vunpack.c.l.b16 %v633
    %v2866 = vunpack.c.h.b16 %v633
    %v2867 = vunpack.c.l.b16 %v634
    %v2868 = vunpack.c.h.b16 %v634
    %v2869 = vunpack.c.l.b16 %v635
    %v2870 = vunpack.c.h.b16 %v635
    %v2871 = vunpack.c.l.b16 %v636
    %v2872 = vunpack.c.h.b16 %v636
    %v2873 = vunpack.c.l.b16 %v637
    %v2874 = vunpack.c.h.b16 %v637
    %v2875 = vunpack.c.l.b16 %v638
    %v2876 = vunpack.c.h.b16 %v638
    %v2877 = vunpack.c.l.b16 %v639
    %v2878 = vunpack.c.h.b16 %v639
    %v2879 = vunpack.c.l.b16 %v640
    %v2880 = vunpack.c.h.b16 %v640
    %v2881 = vunpack.c.l.b16 %v641
    %v2882 = vunpack.c.h.b16 %v641
    %v2883 = vunpack.c.l.b16 %v642
    %v2884 = vunpack.c.h.b16 %v642
    %v2885 = vunpack.c.l.b16 %v643
    %v2886 = vunpack.c.h.b16 %v643
    %v2887 = vunpack.c.l.b16 %v644
    %v2888 = vunpack.c.h.b16 %v644
    %v2889 = vunpack.c.l.b16 %v645
    %v2890 = vunpack.c.h.b16 %v645
    %v2891 = vunpack.c.l.b16 %v646
    %v2892 = vunpack.c.h.b16 %v646
    %v2893 = vunpack.c.l.b16 %v647
    %v2894 = vunpack.c.h.b16 %v647
    %v2895 = vunpack.c.l.b16 %v648
    %v2896 = vunpack.c.h.b16 %v648
    %v2897 = vunpack.c.l.b16 %v649
    %v2898 = vunpack.c.h.b16 %v649
    %v2899 = vunpack.c.l.b16 %v650
    %v2900 = vunpack.c.h.b16 %v650
    %v2901 = vunpack.c.l.b16 %v651
    %v2902 = vunpack.c.h.b16 %v651
    %v2903 = vunpack.c.l.b16 %v652
    %v2904 = vunpack.c.h.b16 %v652
    %v2905 = vunpack.c.l.b16 %v653
    %v2906 = vunpack.c.h.b16 %v653
    %v2907 = vunpack.c.l.b16 %v654
    %v2908 = vunpack.c.h.b16 %v654
    %v2909 = vunpack.c.l.b16 %v655
    %v2910 = vunpack.c.h.b16 %v655
    %v2911 = vunpack.c.l.b16 %v656
    %v2912 = vunpack.c.h.b16 %v656
    %v2913 = vunpack.c.l.b16 %v657
    %v2914 = vunpack.c.h.b16 %v657
    %v2915 = vunpack.c.l.b16 %v658
    %v2916 = vunpack.c.h.b16 %v658
    %v2917 = vunpack.c.l.b16 %v659
    %v2918 = vunpack.c.h.b16 %v659
    %v2919 = vunpack.c.l.b16 %v660
    %v2920 = vunpack.c.h.b16 %v660
    %v2921 = vunpack.c.l.b16 %v661
    %v2922 = vunpack.c.h.b16 %v661
    %v2923 = vunpack.c.l.b16 %v662
    %v2924 = vunpack.c.h.b16 %v662
    %v2925 = vunpack.c.l.b16 %v663
    %v2926 = vunpack.c.h.b16 %v663
    %v2927 = vunpack.c.l.b16 %v664
    %v2928 = vunpack.c.h.b16 %v664
    %v2929 = vunpack.c.l.b16 %v665
    %v2930 = vunpack.c.h.b16 %v665
    %v2931 = vunpack.c.l.b16 %v666
    %v2932 = vunpack.c.h.b16 %v666
    %v2933 = vunpack.c.l.b16 %v667
    %v2934 = vunpack.c.h.b16 %v667
    %v2935 = vunpack.c.l.b16 %v668
    %v2936 = vunpack.c.h.b16 %v668
    %v2937 = vunpack.c.l.b16 %v669
    %v2938 = vunpack.c.h.b16 %v669
    %v2939 = vunpack.c.l.b16 %v670
    %v2940 = vunpack.c.h.b16 %v670
    %v2941 = vunpack.c.l.b16 %v671
    %v2942 = vunpack.c.h.b16 %v671
    %v2943 = vunpack.c.l.b16 %v672
    %v2944 = vunpack.c.h.b16 %v672
    %v2945 = vunpack.c.l.b16 %v673
    %v2946 = vunpack.c.h.b16 %v673
    %v2947 = vunpack.c.l.b16 %v674
    %v2948 = vunpack.c.h.b16 %v674
    %v2949 = vunpack.c.l.b16 %v675
    %v2950 = vunpack.c.h.b16 %v675
    %v2951 = vunpack.c.l.b16 %v676
    %v2952 = vunpack.c.h.b16 %v676
    %v2953 = vunpack.c.l.b16 %v677
    %v2954 = vunpack.c.h.b16 %v677
    %v2955 = vunpack.c.l.b16 %v678
    %v2956 = vunpack.c.h.b16 %v678
    %v2957 = vunpack.c.l.b16 %v679
    %v2958 = vunpack.c.h.b16 %v679
    %v2959 = vunpack.c.l.b16 %v680
    %v2960 = vunpack.c.h.b16 %v680
    %v2961 = vunpack.c.l.b16 %v681
    %v2962 = vunpack.c.h.b16 %v681
    %v2963 = vunpack.c.l.b16 %v682
    %v2964 = vunpack.c.h.b16 %v682
    %v2965 = vunpack.c.l.b16 %v683
    %v2966 = vunpack.c.h.b16 %v683
    %v2967 = vunpack.c.l.b16 %v684
    %v2968 = vunpack.c.h.b16 %v684
    %v2969 = vunpack.c.l.b16 %v685
    %v2970 = vunpack.c.h.b16 %v685
    %v2971 = vunpack.c.l.b16 %v686
    %v2972 = vunpack.c.h.b16 %v686
    %v2973 = vunpack.c.l.b16 %v687
    %v2974 = vunpack.c.h.b16 %v687
    %v2975 = vunpack.c.l.b16 %v688
    %v2976 = vunpack.c.h.b16 %v688
    %v2977 = vunpack.c.l.b16 %v689
    %v2978 = vunpack.c.h.b16 %v689
    %v2979 = vunpack.c.l.b16 %v690
    %v2980 = vunpack.c.h.b16 %v690
    %v2981 = vunpack.c.l.b16 %v691
    %v2982 = vunpack.c.h.b16 %v691
    %v2983 = vunpack.c.l.b16 %v692
    %v2984 = vunpack.c.h.b16 %v692
    %v2985 = vunpack.c.l.b16 %v693
    %v2986 = vunpack.c.h.b16 %v693
    %v2987 = vunpack.c.l.b16 %v694
    %v2988 = vunpack.c.h.b16 %v694
    %v2989 = vunpack.c.l.b16 %v695
    %v2990 = vunpack.c.h.b16 %v695
    %v2991 = vunpack.c.l.b16 %v696
    %v2992 = vunpack.c.h.b16 %v696
    %v2993 = vunpack.c.l.b16 %v697
    %v2994 = vunpack.c.h.b16 %v697
    %v2995 = vunpack.c.l.b16 %v698
    %v2996 = vunpack.c.h.b16 %v698
    %v2997 = vunpack.c.l.b16 %v699
    %v2998 = vunpack.c.h.b16 %v699
    %v2999 = vunpack.c.l.b16 %v700
    %v3000 = vunpack.c.h.b16 %v700
    %v3001 = vunpack.c.l.b16 %v701
    %v3002 = vunpack.c.h.b16 %v701
    %v3003 = vunpack.c.l.b16 %v702
    %v3004 = vunpack.c.h.b16 %v702
    %v3005 = vunpack.c.l.b16 %v703
    %v3006 = vunpack.c.h.b16 %v703
    %v3007 = vunpack.c.l.b16 %v704
    %v3008 = vunpack.c.h.b16 %v704
    %v3009 = vunpack.c.l.b16 %v705
    %v3010 = vunpack.c.h.b16 %v705
    %v3011 = vunpack.c.l.b16 %v706
    %v3012 = vunpack.c.h.b16 %v706
    %v3013 = vunpack.c.l.b16 %v707
    %v3014 = vunpack.c.h.b16 %v707
    %v3015 = vunpack.c.l.b16 %v708
    %v3016 = vunpack.c.h.b16 %v708
    %v3017 = vunpack.c.l.b16 %v709
    %v3018 = vunpack.c.h.b16 %v709
    %v3019 = vunpack.c.l.b16 %v710
    %v3020 = vunpack.c.h.b16 %v710
    %v3021 = vunpack.c.l.b16 %v711
    %v3022 = vunpack.c.h.b16 %v711
    %v3023 = vunpack.c.l.b16 %v712
    %v3024 = vunpack.c.h.b16 %v712
    %v3025 = vunpack.c.l.b16 %v713
    %v3026 = vunpack.c.h.b16 %v713
    %v3027 = vunpack.c.l.b16 %v714
    %v3028 = vunpack.c.h.b16 %v714
    %v3029 = vunpack.c.l.b16 %v715
    %v3030 = vunpack.c.h.b16 %v715
    %v3031 = vunpack.c.l.b16 %v716
    %v3032 = vunpack.c.h.b16 %v716
    %v3033 = vunpack.c.l.b16 %v717
    %v3034 = vunpack.c.h.b16 %v717
    %v3035 = vunpack.c.l.b16 %v718
    %v3036 = vunpack.c.h.b16 %v718
    %v3037 = vunpack.c.l.b16 %v719
    %v3038 = vunpack.c.h.b16 %v719
    %v3039 = vunpack.c.l.b16 %v720
    %v3040 = vunpack.c.h.b16 %v720
    %v3041 = vunpack.c.l.b16 %v721
    %v3042 = vunpack.c.h.b16 %v721
    %v3043 = vunpack.c.l.b16 %v722
    %v3044 = vunpack.c.h.b16 %v722
    %v3045 = vunpack.c.l.b16 %v723
    %v3046 = vunpack.c.h.b16 %v723
    %v3047 = vunpack.c.l.b16 %v724
    %v3048 = vunpack.c.h.b16 %v724
    %v3049 = vunpack.c.l.b16 %v725
    %v3050 = vunpack.c.h.b16 %v725
    %v3051 = vunpack.c.l.b16 %v726
    %v3052 = vunpack.c.h.b16 %v726
    %v3053 = vunpack.c.l.b16 %v727
    %v3054 = vunpack.c.h.b16 %v727
    %v3055 = vunpack.c.l.b16 %v728
    %v3056 = vunpack.c.h.b16 %v728
    %v3057 = vunpack.c.l.b16 %v729
    %v3058 = vunpack.c.h.b16 %v729
    %v3059 = vunpack.c.l.b16 %v730
    %v3060 = vunpack.c.h.b16 %v730
    %v3061 = vunpack.c.l.b16 %v731
    %v3062 = vunpack.c.h.b16 %v731
    %v3063 = vunpack.c.l.b16 %v732
    %v3064 = vunpack.c.h.b16 %v732
    %v3065 = vunpack.c.l.b16 %v733
    %v3066 = vunpack.c.h.b16 %v733
    %v3067 = vunpack.c.l.b16 %v734
    %v3068 = vunpack.c.h.b16 %v734
    %v3069 = vunpack.c.l.b16 %v735
    %v3070 = vunpack.c.h.b16 %v735
    %v3071 = vunpack.c.l.b16 %v736
    %v3072 = vunpack.c.h.b16 %v736
    %v3073 = vunpack.c.l.b16 %v737
    %v3074 = vunpack.c.h.b16 %v737
    %v3075 = vunpack.c.l.b16 %v738
    %v3076 = vunpack.c.h.b16 %v738
    %v3077 = vunpack.c.l.b16 %v739
    %v3078 = vunpack.c.h.b16 %v739
    %v3079 = vunpack.c.l.b16 %v740
    %v3080 = vunpack.c.h.b16 %v740
    %v3081 = vunpack.c.l.b16 %v741
    %v3082 = vunpack.c.h.b16 %v741
    %v3083 = vunpack.c.l.b16 %v742
    %v3084 = vunpack.c.h.b16 %v742
    %v3085 = vunpack.c.l.b16 %v743
    %v3086 = vunpack.c.h.b16 %v743
    %v3087 = vunpack.c.l.b16 %v744
    %v3088 = vunpack.c.h.b16 %v744
    %v3089 = vunpack.c.l.b16 %v745
    %v3090 = vunpack.c.h.b16 %v745
    %v3091 = vunpack.c.l.b16 %v746
    %v3092 = vunpack.c.h.b16 %v746
    %v3093 = vunpack.c.l.b16 %v747
    %v3094 = vunpack.c.h.b16 %v747
    %v3095 = vunpack.c.l.b16 %v748
    %v3096 = vunpack.c.h.b16 %v748
    %v3097 = vunpack.c.l.b16 %v749
    %v3098 = vunpack.c.h.b16 %v749
    %v3099 = vunpack.c.l.b16 %v750
    %v3100 = vunpack.c.h.b16 %v750
    %v3101 = vunpack.c.l.b16 %v751
    %v3102 = vunpack.c.h.b16 %v751
    %v3103 = vunpack.c.l.b16 %v752
    %v3104 = vunpack.c.h.b16 %v752
    %v3105 = vunpack.c.l.b16 %v753
    %v3106 = vunpack.c.h.b16 %v753
    %v3107 = vunpack.c.l.b16 %v754
    %v3108 = vunpack.c.h.b16 %v754
    %v3109 = vunpack.c.l.b16 %v755
    %v3110 = vunpack.c.h.b16 %v755
    %v3111 = vunpack.c.l.b16 %v756
    %v3112 = vunpack.c.h.b16 %v756
    %v3113 = vunpack.c.l.b16 %v757
    %v3114 = vunpack.c.h.b16 %v757
    %v3115 = vunpack.c.l.b16 %v758
    %v3116 = vunpack.c.h.b16 %v758
    %v3117 = vunpack.c.l.b16 %v759
    %v3118 = vunpack.c.h.b16 %v759
    %v3119 = vunpack.c.l.b16 %v760
    %v3120 = vunpack.c.h.b16 %v760
    %v3121 = vunpack.c.l.b16 %v761
    %v3122 = vunpack.c.h.b16 %v761
    %v3123 = vunpack.c.l.b16 %v762
    %v3124 = vunpack.c.h.b16 %v762
    %v3125 = vunpack.c.l.b16 %v763
    %v3126 = vunpack.c.h.b16 %v763
    %v3127 = vunpack.c.l.b16 %v764
    %v3128 = vunpack.c.h.b16 %v764
    %v3129 = vunpack.c.l.b16 %v765
    %v3130 = vunpack.c.h.b16 %v765
    %v3131 = vunpack.c.l.b16 %v766
    %v3132 = vunpack.c.h.b16 %v766
    %v3133 = vunpack.c.l.b16 %v767
    %v3134 = vunpack.c.h.b16 %v767
    %v3135 = vunpack.c.l.b16 %v768
    %v3136 = vunpack.c.h.b16 %v768
    %v3137 = vunpack.c.l.b16 %v769
    %v3138 = vunpack.c.h.b16 %v769
    %v3139 = vunpack.c.l.b16 %v770
    %v3140 = vunpack.c.h.b16 %v770
    %v3141 = vunpack.c.l.b16 %v771
    %v3142 = vunpack.c.h.b16 %v771
    %v3143 = vunpack.c.l.b16 %v772
    %v3144 = vunpack.c.h.b16 %v772
    %v3145 = vunpack.c.l.b16 %v773
    %v3146 = vunpack.c.h.b16 %v773
    %v3147 = vunpack.c.l.b16 %v774
    %v3148 = vunpack.c.h.b16 %v774
    %v3149 = vunpack.c.l.b16 %v775
    %v3150 = vunpack.c.h.b16 %v775
    %v3151 = vunpack.c.l.b16 %v776
    %v3152 = vunpack.c.h.b16 %v776
    %v3153 = vunpack.c.l.b16 %v777
    %v3154 = vunpack.c.h.b16 %v777
    %v3155 = vunpack.c.l.b16 %v778
    %v3156 = vunpack.c.h.b16 %v778
    %v3157 = vunpack.c.l.b16 %v779
    %v3158 = vunpack.c.h.b16 %v779
    %v3159 = vunpack.c.l.b16 %v780
    %v3160 = vunpack.c.h.b16 %v780
    %v3161 = vunpack.c.l.b16 %v781
    %v3162 = vunpack.c.h.b16 %v781
    %v3163 = vunpack.c.l.b16 %v782
    %v3164 = vunpack.c.h.b16 %v782
    %v3165 = vunpack.c.l.b16 %v783
    %v3166 = vunpack.c.h.b16 %v783
    %v3167 = vunpack.c.l.b16 %v784
    %v3168 = vunpack.c.h.b16 %v784
    %v3169 = vunpack.c.l.b16 %v785
    %v3170 = vunpack.c.h.b16 %v785
    %v3171 = vunpack.c.l.b16 %v786
    %v3172 = vunpack.c.h.b16 %v786
    %v3173 = vunpack.c.l.b16 %v787
    %v3174 = vunpack.c.h.b16 %v787
    %v3175 = vunpack.c.l.b16 %v788
    %v3176 = vunpack.c.h.b16 %v788
    %v3177 = vunpack.c.l.b16 %v789
    %v3178 = vunpack.c.h.b16 %v789
    %v3179 = vunpack.c.l.b16 %v790
    %v3180 = vunpack.c.h.b16 %v790
    %v3181 = vunpack.c.l.b16 %v791
    %v3182 = vunpack.c.h.b16 %v791
    %v3183 = vunpack.c.l.b16 %v792
    %v3184 = vunpack.c.h.b16 %v792
    %v3185 = vunpack.c.l.b16 %v793
    %v3186 = vunpack.c.h.b16 %v793
    %v3187 = vunpack.c.l.b16 %v794
    %v3188 = vunpack.c.h.b16 %v794
    %v3189 = vunpack.c.l.b16 %v795
    %v3190 = vunpack.c.h.b16 %v795
    %v3191 = vunpack.c.l.b16 %v796
    %v3192 = vunpack.c.h.b16 %v796
    %v3193 = vunpack.c.l.b16 %v797
    %v3194 = vunpack.c.h.b16 %v797
    %v3195 = vunpack.c.l.b16 %v798
    %v3196 = vunpack.c.h.b16 %v798
    %v3197 = vunpack.c.l.b16 %v799
    %v3198 = vunpack.c.h.b16 %v799
    %v3199 = vunpack.c.l.b16 %v800
    %v3200 = vunpack.c.h.b16 %v800
    %v3201 = vunpack.c.l.b16 %v801
    %v3202 = vunpack.c.h.b16 %v801
    %v3203 = vunpack.c.l.b16 %v802
    %v3204 = vunpack.c.h.b16 %v802
    %v3205 = vunpack.c.l.b16 %v803
    %v3206 = vunpack.c.h.b16 %v803
    %v3207 = vunpack.c.l.b16 %v804
    %v3208 = vunpack.c.h.b16 %v804
    %v3209 = vunpack.c.l.b16 %v805
    %v3210 = vunpack.c.h.b16 %v805
    %v3211 = vunpack.c.l.b16 %v806
    %v3212 = vunpack.c.h.b16 %v806
    %v3213 = vunpack.c.l.b16 %v807
    %v3214 = vunpack.c.h.b16 %v807
    %v3215 = vunpack.c.l.b16 %v808
    %v3216 = vunpack.c.h.b16 %v808
    %v3217 = vunpack.c.l.b16 %v809
    %v3218 = vunpack.c.h.b16 %v809
    %v3219 = vunpack.c.l.b16 %v810
    %v3220 = vunpack.c.h.b16 %v810
    %v3221 = vunpack.c.l.b16 %v811
    %v3222 = vunpack.c.h.b16 %v811
    %v3223 = vunpack.c.l.b16 %v812
    %v3224 = vunpack.c.h.b16 %v812
    %v3225 = vunpack.c.l.b16 %v813
    %v3226 = vunpack.c.h.b16 %v813
    %v3227 = vunpack.c.l.b16 %v814
    %v3228 = vunpack.c.h.b16 %v814
    %v3229 = vunpack.c.l.b16 %v815
    %v3230 = vunpack.c.h.b16 %v815
    %v3231 = vunpack.c.l.b16 %v816
    %v3232 = vunpack.c.h.b16 %v816
    %v3233 = vunpack.c.l.b16 %v817
    %v3234 = vunpack.c.h.b16 %v817
    %v3235 = vunpack.c.l.b16 %v818
    %v3236 = vunpack.c.h.b16 %v818
    %v3237 = vunpack.c.l.b16 %v819
    %v3238 = vunpack.c.h.b16 %v819
    %v3239 = vpack.c.b16 %v1675, %v1671
    %v3240 = vpack.c.b16 %v1676, %v1672
    %v3241 = vpack.c.b16 %v1677, %v1673
    %v3242 = vpack.c.b16 %v1678, %v1674
    %v3243 = vpack.c.b16 %v1683, %v1679
    %v3244 = vpack.c.b16 %v1684, %v1680
    %v3245 = vpack.c.b16 %v1685, %v1681
    %v3246 = vpack.c.b16 %v1686, %v1682
    %v3247 = vpack.c.b16 %v1691, %v1687
    %v3248 = vpack.c.b16 %v1692, %v1688
    %v3249 = vpack.c.b16 %v1693, %v1689
    %v3250 = vpack.c.b16 %v1694, %v1690
    %v3251 = vpack.c.b16 %v1699, %v1695
    %v3252 = vpack.c.b16 %v1700, %v1696
    %v3253 = vpack.c.b16 %v1701, %v1697
    %v3254 = vpack.c.b16 %v1702, %v1698
    %v3255 = vpack.c.b16 %v1707, %v1703
    %v3256 = vpack.c.b16 %v1708, %v1704
    %v3257 = vpack.c.b16 %v1709, %v1705
    %v3258 = vpack.c.b16 %v1710, %v1706
    %v3259 = vpack.c.b16 %v1715, %v1711
    %v3260 = vpack.c.b16 %v1716, %v1712
    %v3261 = vpack.c.b16 %v1717, %v1713
    %v3262 = vpack.c.b16 %v1718, %v1714
    %v3263 = vpack.c.b16 %v1723, %v1719
    %v3264 = vpack.c.b16 %v1724, %v1720
    %v3265 = vpack.c.b16 %v1725, %v1721
    %v3266 = vpack.c.b16 %v1726, %v1722
    %v3267 = vpack.c.b16 %v1731, %v1727
    %v3268 = vpack.c.b16 %v1732, %v1728
    %v3269 = vpack.c.b16 %v1733, %v1729
    %v3270 = vpack.c.b16 %v1734, %v1730
    %v3271 = vpack.c.b16 %v1739, %v1735
    %v3272 = vpack.c.b16 %v1740, %v1736
    %v3273 = vpack.c.b16 %v1741, %v1737
    %v3274 = vpack.c.b16 %v1742, %v1738
    %v3275 = vpack.c.b16 %v1747, %v1743
    %v3276 = vpack.c.b16 %v1748, %v1744
    %v3277 = vpack.c.b16 %v1749, %v1745
    %v3278 = vpack.c.b16 %v1750, %v1746
    %v3279 = vpack.c.b16 %v1755, %v1751
    %v3280 = vpack.c.b16 %v1756, %v1752
    %v3281 = vpack.c.b16 %v1757, %v1753
    %v3282 = vpack.c.b16 %v1758, %v1754
    %v3283 = vpack.c.b16 %v1763, %v1759
    %v3284 = vpack.c.b16 %v1764, %v1760
    %v3285 = vpack.c.b16 %v1765, %v1761
    %v3286 = vpack.c.b16 %v1766, %v1762
    %v3287 = vpack.c.b16 %v1771, %v1767
    %v3288 = vpack.c.b16 %v1772, %v1768
    %v3289 = vpack.c.b16 %v1773, %v1769
    %v3290 = vpack.c.b16 %v1774, %v1770
    %v3291 = vpack.c.b16 %v1779, %v1775
    %v3292 = vpack.c.b16 %v1780, %v1776
    %v3293 = vpack.c.b16 %v1781, %v1777
    %v3294 = vpack.c.b16 %v1782, %v1778
    %v3295 = vpack.c.b16 %v1787, %v1783
    %v3296 = vpack.c.b16 %v1788, %v1784
    %v3297 = vpack.c.b16 %v1789, %v1785
    %v3298 = vpack.c.b16 %v1790, %v1786
    %v3299 = vpack.c.b16 %v1795, %v1791
    %v3300 = vpack.c.b16 %v1796, %v1792
    %v3301 = vpack.c.b16 %v1797, %v1793
    %v3302 = vpack.c.b16 %v1798, %v1794
    %v3303 = vpack.c.b16 %v1803, %v1799
    %v3304 = vpack.c.b16 %v1804, %v1800
    %v3305 = vpack.c.b16 %v1805, %v1801
    %v3306 = vpack.c.b16 %v1806, %v1802
    %v3307 = vpack.c.b16 %v1811, %v1807
    %v3308 = vpack.c.b16 %v1812, %v1808
    %v3309 = vpack.c.b16 %v1813, %v1809
    %v3310 = vpack.c.b16 %v1814, %v1810
    %v3311 = vpack.c.b16 %v1819, %v1815
    %v3312 = vpack.c.b16 %v1820, %v1816
    %v3313 = vpack.c.b16 %v1821, %v1817
    %v3314 = vpack.c.b16 %v1822, %v1818
    %v3315 = vpack.c.b16 %v1827, %v1823
    %v3316 = vpack.c.b16 %v1828, %v1824
    %v3317 = vpack.c.b16 %v1829, %v1825
    %v3318 = vpack.c.b16 %v1830, %v1826
    %v3319 = vpack.c.b16 %v1835, %v1831
    %v3320 = vpack.c.b16 %v1836, %v1832
    %v3321 = vpack.c.b16 %v1837, %v1833
    %v3322 = vpack.c.b16 %v1838, %v1834
    %v3323 = vpack.c.b16 %v1843, %v1839
    %v3324 = vpack.c.b16 %v1844, %v1840
    %v3325 = vpack.c.b16 %v1845, %v1841
    %v3326 = vpack.c.b16 %v1846, %v1842
    %v3327 = vpack.c.b16 %v1851, %v1847
    %v3328 = vpack.c.b16 %v1852, %v1848
    %v3329 = vpack.c.b16 %v1853, %v1849
    %v3330 = vpack.c.b16 %v1854, %v1850
    %v3331 = vpack.c.b16 %v1859, %v1855
    %v3332 = vpack.c.b16 %v1860, %v1856
    %v3333 = vpack.c.b16 %v1861, %v1857
    %v3334 = vpack.c.b16 %v1862, %v1858
    %v3335 = vpack.c.b16 %v1867, %v1863
    %v3336 = vpack.c.b16 %v1868, %v1864
    %v3337 = vpack.c.b16 %v1869, %v1865
    %v3338 = vpack.c.b16 %v1870, %v1866
    %v3339 = vpack.c.b16 %v1875, %v1871
    %v3340 = vpack.c.b16 %v1876, %v1872
    %v3341 = vpack.c.b16 %v1877, %v1873
    %v3342 = vpack.c.b16 %v1878, %v1874
    %v3343 = vpack.c.b16 %v1883, %v1879
    %v3344 = vpack.c.b16 %v1884, %v1880
    %v3345 = vpack.c.b16 %v1885, %v1881
    %v3346 = vpack.c.b16 %v1886, %v1882
    %v3347 = vpack.c.b16 %v1891, %v1887
    %v3348 = vpack.c.b16 %v1892, %v1888
    %v3349 = vpack.c.b16 %v1893, %v1889
    %v3350 = vpack.c.b16 %v1894, %v1890
    %v3351 = vpack.c.b16 %v1899, %v1895
    %v3352 = vpack.c.b16 %v1900, %v1896
    %v3353 = vpack.c.b16 %v1901, %v1897
    %v3354 = vpack.c.b16 %v1902, %v1898
    %v3355 = vpack.c.b16 %v1907, %v1903
    %v3356 = vpack.c.b16 %v1908, %v1904
    %v3357 = vpack.c.b16 %v1909, %v1905
    %v3358 = vpack.c.b16 %v1910, %v1906
    %v3359 = vpack.c.b16 %v1915, %v1911
    %v3360 = vpack.c.b16 %v1916, %v1912
    %v3361 = vpack.c.b16 %v1917, %v1913
    %v3362 = vpack.c.b16 %v1918, %v1914
    %v3363 = vpack.c.b16 %v1923, %v1919
    %v3364 = vpack.c.b16 %v1924, %v1920
    %v3365 = vpack.c.b16 %v1925, %v1921
    %v3366 = vpack.c.b16 %v1926, %v1922
    %v3367 = vpack.c.b16 %v1931, %v1927
    %v3368 = vpack.c.b16 %v1932, %v1928
    %v3369 = vpack.c.b16 %v1933, %v1929
    %v3370 = vpack.c.b16 %v1934, %v1930
    %v3371 = vpack.c.b16 %v1939, %v1935
    %v3372 = vpack.c.b16 %v1940, %v1936
    %v3373 = vpack.c.b16 %v1941, %v1937
    %v3374 = vpack.c.b16 %v1942, %v1938
    %v3375 = vpack.c.b16 %v1947, %v1943
    %v3376 = vpack.c.b16 %v1948, %v1944
    %v3377 = vpack.c.b16 %v1949, %v1945
    %v3378 = vpack.c.b16 %v1950, %v1946
    %v3379 = vpack.c.b16 %v1955, %v1951
    %v3380 = vpack.c.b16 %v1956, %v1952
    %v3381 = vpack.c.b16 %v1957, %v1953
    %v3382 = vpack.c.b16 %v1958, %v1954
    %v3383 = vpack.c.b16 %v1963, %v1959
    %v3384 = vpack.c.b16 %v1964, %v1960
    %v3385 = vpack.c.b16 %v1965, %v1961
    %v3386 = vpack.c.b16 %v1966, %v1962
    %v3387 = vpack.c.b16 %v1971, %v1967
    %v3388 = vpack.c.b16 %v1972, %v1968
    %v3389 = vpack.c.b16 %v1973, %v1969
    %v3390 = vpack.c.b16 %v1974, %v1970
    %v3391 = vpack.c.b16 %v1979, %v1975
    %v3392 = vpack.c.b16 %v1980, %v1976
    %v3393 = vpack.c.b16 %v1981, %v1977
    %v3394 = vpack.c.b16 %v1982, %v1978
    %v3395 = vpack.c.b16 %v1987, %v1983
    %v3396 = vpack.c.b16 %v1988, %v1984
    %v3397 = vpack.c.b16 %v1989, %v1985
    %v3398 = vpack.c.b16 %v1990, %v1986
    %v3399 = vpack.c.b16 %v1995, %v1991
    %v3400 = vpack.c.b16 %v1996, %v1992
    %v3401 = vpack.c.b16 %v1997, %v1993
    %v3402 = vpack.c.b16 %v1998, %v1994
    %v3403 = vpack.c.b16 %v2003, %v1999
    %v3404 = vpack.c.b16 %v2004, %v2000
    %v3405 = vpack.c.b16 %v2005, %v2001
    %v3406 = vpack.c.b16 %v2006, %v2002
    %v3407 = vpack.c.b16 %v2011, %v2007
    %v3408 = vpack.c.b16 %v2012, %v2008
    %v3409 = vpack.c.b16 %v2013, %v2009
    %v3410 = vpack.c.b16 %v2014, %v2010
    %v3411 = vpack.c.b16 %v2019, %v2015
    %v3412 = vpack.c.b16 %v2020, %v2016
    %v3413 = vpack.c.b16 %v2021, %v2017
    %v3414 = vpack.c.b16 %v2022, %v2018
    %v3415 = vpack.c.b16 %v2027, %v2023
    %v3416 = vpack.c.b16 %v2028, %v2024
    %v3417 = vpack.c.b16 %v2029, %v2025
    %v3418 = vpack.c.b16 %v2030, %v2026
    %v3419 = vpack.c.b16 %v2035, %v2031
    %v3420 = vpack.c.b16 %v2036, %v2032
    %v3421 = vpack.c.b16 %v2037, %v2033
    %v3422 = vpack.c.b16 %v2038, %v2034
    %v3423 = vpack.c.b16 %v2043, %v2039
    %v3424 = vpack.c.b16 %v2044, %v2040
    %v3425 = vpack.c.b16 %v2045, %v2041
    %v3426 = vpack.c.b16 %v2046, %v2042
    %v3427 = vpack.c.b16 %v2051, %v2047
    %v3428 = vpack.c.b16 %v2052, %v2048
    %v3429 = vpack.c.b16 %v2053, %v2049
    %v3430 = vpack.c.b16 %v2054, %v2050
    %v3431 = vpack.c.b16 %v2059, %v2055
    %v3432 = vpack.c.b16 %v2060, %v2056
    %v3433 = vpack.c.b16 %v2061, %v2057
    %v3434 = vpack.c.b16 %v2062, %v2058
    %v3435 = vpack.c.b16 %v2067, %v2063
    %v3436 = vpack.c.b16 %v2068, %v2064
    %v3437 = vpack.c.b16 %v2069, %v2065
    %v3438 = vpack.c.b16 %v2070, %v2066
    %v3439 = vpack.c.b16 %v2075, %v2071
    %v3440 = vpack.c.b16 %v2076, %v2072
    %v3441 = vpack.c.b16 %v2077, %v2073
    %v3442 = vpack.c.b16 %v2078, %v2074
    %v3443 = vpack.c.b16 %v2083, %v2079
    %v3444 = vpack.c.b16 %v2084, %v2080
    %v3445 = vpack.c.b16 %v2085, %v2081
    %v3446 = vpack.c.b16 %v2086, %v2082
    %v3447 = vpack.c.b16 %v2091, %v2087
    %v3448 = vpack.c.b16 %v2092, %v2088
    %v3449 = vpack.c.b16 %v2093, %v2089
    %v3450 = vpack.c.b16 %v2094, %v2090
    %v3451 = vpack.c.b16 %v2099, %v2095
    %v3452 = vpack.c.b16 %v2100, %v2096
    %v3453 = vpack.c.b16 %v2101, %v2097
    %v3454 = vpack.c.b16 %v2102, %v2098
    %v3455 = vpack.c.b16 %v2107, %v2103
    %v3456 = vpack.c.b16 %v2108, %v2104
    %v3457 = vpack.c.b16 %v2109, %v2105
    %v3458 = vpack.c.b16 %v2110, %v2106
    %v3459 = vpack.c.b16 %v2115, %v2111
    %v3460 = vpack.c.b16 %v2116, %v2112
    %v3461 = vpack.c.b16 %v2117, %v2113
    %v3462 = vpack.c.b16 %v2118, %v2114
    %v3463 = vpack.c.b16 %v2123, %v2119
    %v3464 = vpack.c.b16 %v2124, %v2120
    %v3465 = vpack.c.b16 %v2125, %v2121
    %v3466 = vpack.c.b16 %v2126, %v2122
    %v3467 = vpack.c.b16 %v2131, %v2127
    %v3468 = vpack.c.b16 %v2132, %v2128
    %v3469 = vpack.c.b16 %v2133, %v2129
    %v3470 = vpack.c.b16 %v2134, %v2130
    %v3471 = vpack.c.b16 %v2139, %v2135
    %v3472 = vpack.c.b16 %v2140, %v2136
    %v3473 = vpack.c.b16 %v2141, %v2137
    %v3474 = vpack.c.b16 %v2142, %v2138
    %v3475 = vpack.c.b16 %v2147, %v2143
    %v3476 = vpack.c.b16 %v2148, %v2144
    %v3477 = vpack.c.b16 %v2149, %v2145
    %v3478 = vpack.c.b16 %v2150, %v2146
    %v3479 = vpack.c.b16 %v2155, %v2151
    %v3480 = vpack.c.b16 %v2156, %v2152
    %v3481 = vpack.c.b16 %v2157, %v2153
    %v3482 = vpack.c.b16 %v2158, %v2154
    %v3483 = vpack.c.b16 %v2163, %v2159
    %v3484 = vpack.c.b16 %v2164, %v2160
    %v3485 = vpack.c.b16 %v2165, %v2161
    %v3486 = vpack.c.b16 %v2166, %v2162
    %v3487 = vpack.c.b16 %v2171, %v2167
    %v3488 = vpack.c.b16 %v2172, %v2168
    %v3489 = vpack.c.b16 %v2173, %v2169
    %v3490 = vpack.c.b16 %v2174, %v2170
    %v3491 = vpack.c.b16 %v2179, %v2175
    %v3492 = vpack.c.b16 %v2180, %v2176
    %v3493 = vpack.c.b16 %v2181, %v2177
    %v3494 = vpack.c.b16 %v2182, %v2178
    %v3495 = vpack.c.b16 %v2187, %v2183
    %v3496 = vpack.c.b16 %v2188, %v2184
    %v3497 = vpack.c.b16 %v2189, %v2185
    %v3498 = vpack.c.b16 %v2190, %v2186
    %v3499 = vpack.c.b16 %v2195, %v2191
    %v3500 = vpack.c.b16 %v2196, %v2192
    %v3501 = vpack.c.b16 %v2197, %v2193
    %v3502 = vpack.c.b16 %v2198, %v2194
    %v3503 = vpack.c.b16 %v2203, %v2199
    %v3504 = vpack.c.b16 %v2204, %v2200
    %v3505 = vpack.c.b16 %v2205, %v2201
    %v3506 = vpack.c.b16 %v2206, %v2202
    %v3507 = vpack.c.b16 %v2211, %v2207
    %v3508 = vpack.c.b16 %v2212, %v2208
    %v3509 = vpack.c.b16 %v2213, %v2209
    %v3510 = vpack.c.b16 %v2214, %v2210
    %v3511 = vpack.c.b16 %v2219, %v2215
    %v3512 = vpack.c.b16 %v2220, %v2216
    %v3513 = vpack.c.b16 %v2221, %v2217
    %v3514 = vpack.c.b16 %v2222, %v2218
    %v3515 = vpack.c.b16 %v2227, %v2223
    %v3516 = vpack.c.b16 %v2228, %v2224
    %v3517 = vpack.c.b16 %v2229, %v2225
    %v3518 = vpack.c.b16 %v2230, %v2226
    %v3519 = vpack.c.b16 %v2235, %v2231
    %v3520 = vpack.c.b16 %v2236, %v2232
    %v3521 = vpack.c.b16 %v2237, %v2233
    %v3522 = vpack.c.b16 %v2238, %v2234
    %v3523 = vpack.c.b16 %v2243, %v2239
    %v3524 = vpack.c.b16 %v2244, %v2240
    %v3525 = vpack.c.b16 %v2245, %v2241
    %v3526 = vpack.c.b16 %v2246, %v2242
    %v3527 = vpack.c.b16 %v2251, %v2247
    %v3528 = vpack.c.b16 %v2252, %v2248
    %v3529 = vpack.c.b16 %v2253, %v2249
    %v3530 = vpack.c.b16 %v2254, %v2250
    %v3531 = vpack.c.b16 %v2259, %v2255
    %v3532 = vpack.c.b16 %v2260, %v2256
    %v3533 = vpack.c.b16 %v2261, %v2257
    %v3534 = vpack.c.b16 %v2262, %v2258
    %v3535 = vpack.c.b16 %v2267, %v2263
    %v3536 = vpack.c.b16 %v2268, %v2264
    %v3537 = vpack.c.b16 %v2269, %v2265
    %v3538 = vpack.c.b16 %v2270, %v2266
    %v3539 = vpack.c.b16 %v2275, %v2271
    %v3540 = vpack.c.b16 %v2276, %v2272
    %v3541 = vpack.c.b16 %v2277, %v2273
    %v3542 = vpack.c.b16 %v2278, %v2274
    %v3543 = vpack.c.b16 %v2283, %v2279
    %v3544 = vpack.c.b16 %v2284, %v2280
    %v3545 = vpack.c.b16 %v2285, %v2281
    %v3546 = vpack.c.b16 %v2286, %v2282
    %v3547 = vpack.c.b16 %v2291, %v2287
    %v3548 = vpack.c.b16 %v2292, %v2288
    %v3549 = vpack.c.b16 %v2293, %v2289
    %v3550 = vpack.c.b16 %v2294, %v2290
    %v3551 = vpack.c.b16 %v2299, %v2295
    %v3552 = vpack.c.b16 %v2300, %v2296
    %v3553 = vpack.c.b16 %v2301, %v2297
    %v3554 = vpack.c.b16 %v2302, %v2298
    %v3555 = vpack.c.b16 %v2307, %v2303
    %v3556 = vpack.c.b16 %v2308, %v2304
    %v3557 = vpack.c.b16 %v2309, %v2305
    %v3558 = vpack.c.b16 %v2310, %v2306
    %v3559 = vpack.c.b16 %v2315, %v2311
    %v3560 = vpack.c.b16 %v2316, %v2312
    %v3561 = vpack.c.b16 %v2317, %v2313
    %v3562 = vpack.c.b16 %v2318, %v2314
    %v3563 = vpack.c.b16 %v2323, %v2319
    %v3564 = vpack.c.b16 %v2324, %v2320
    %v3565 = vpack.c.b16 %v2325, %v2321
    %v3566 = vpack.c.b16 %v2326, %v2322
    %v3567 = vpack.c.b16 %v2331, %v2327
    %v3568 = vpack.c.b16 %v2332, %v2328
    %v3569 = vpack.c.b16 %v2333, %v2329
    %v3570 = vpack.c.b16 %v2334, %v2330
    %v3571 = vpack.c.b16 %v2339, %v2335
    %v3572 = vpack.c.b16 %v2340, %v2336
    %v3573 = vpack.c.b16 %v2341, %v2337
    %v3574 = vpack.c.b16 %v2342, %v2338
    %v3575 = vpack.c.b16 %v2347, %v2343
    %v3576 = vpack.c.b16 %v2348, %v2344
    %v3577 = vpack.c.b16 %v2349, %v2345
    %v3578 = vpack.c.b16 %v2350, %v2346
    %v3579 = vpack.c.b16 %v2355, %v2351
    %v3580 = vpack.c.b16 %v2356, %v2352
    %v3581 = vpack.c.b16 %v2357, %v2353
    %v3582 = vpack.c.b16 %v2358, %v2354
    %v3583 = vpack.c.b16 %v2363, %v2359
    %v3584 = vpack.c.b16 %v2364, %v2360
    %v3585 = vpack.c.b16 %v2365, %v2361
    %v3586 = vpack.c.b16 %v2366, %v2362
    %v3587 = vpack.c.b16 %v2371, %v2367
    %v3588 = vpack.c.b16 %v2372, %v2368
    %v3589 = vpack.c.b16 %v2373, %v2369
    %v3590 = vpack.c.b16 %v2374, %v2370
    %v3591 = vpack.c.b16 %v2379, %v2375
    %v3592 = vpack.c.b16 %v2380, %v2376
    %v3593 = vpack.c.b16 %v2381, %v2377
    %v3594 = vpack.c.b16 %v2382, %v2378
    %v3595 = vpack.c.b16 %v2387, %v2383
    %v3596 = vpack.c.b16 %v2388, %v2384
    %v3597 = vpack.c.b16 %v2389, %v2385
    %v3598 = vpack.c.b16 %v2390, %v2386
    %v3599 = vpack.c.b16 %v2395, %v2391
    %v3600 = vpack.c.b16 %v2396, %v2392
    %v3601 = vpack.c.b16 %v2397, %v2393
    %v3602 = vpack.c.b16 %v2398, %v2394
    %v3603 = vpack.c.b16 %v2403, %v2399
    %v3604 = vpack.c.b16 %v2404, %v2400
    %v3605 = vpack.c.b16 %v2405, %v2401
    %v3606 = vpack.c.b16 %v2406, %v2402
    %v3607 = vpack.c.b16 %v2411, %v2407
    %v3608 = vpack.c.b16 %v2412, %v2408
    %v3609 = vpack.c.b16 %v2413, %v2409
    %v3610 = vpack.c.b16 %v2414, %v2410
    %v3611 = vpack.c.b16 %v2419, %v2415
    %v3612 = vpack.c.b16 %v2420, %v2416
    %v3613 = vpack.c.b16 %v2421, %v2417
    %v3614 = vpack.c.b16 %v2422, %v2418
    %v3615 = vpack.c.b16 %v2427, %v2423
    %v3616 = vpack.c.b16 %v2428, %v2424
    %v3617 = vpack.c.b16 %v2429, %v2425
    %v3618 = vpack.c.b16 %v2430, %v2426
    %v3619 = vpack.c.b16 %v2435, %v2431
    %v3620 = vpack.c.b16 %v2436, %v2432
    %v3621 = vpack.c.b16 %v2437, %v2433
    %v3622 = vpack.c.b16 %v2438, %v2434
    %v3623 = vpack.c.b16 %v2443, %v2439
    %v3624 = vpack.c.b16 %v2444, %v2440
    %v3625 = vpack.c.b16 %v2445, %v2441
    %v3626 = vpack.c.b16 %v2446, %v2442
    %v3627 = vpack.c.b16 %v2451, %v2447
    %v3628 = vpack.c.b16 %v2452, %v2448
    %v3629 = vpack.c.b16 %v2453, %v2449
    %v3630 = vpack.c.b16 %v2454, %v2450
    %v3631 = vpack.c.b16 %v2459, %v2455
    %v3632 = vpack.c.b16 %v2460, %v2456
    %v3633 = vpack.c.b16 %v2461, %v2457
    %v3634 = vpack.c.b16 %v2462, %v2458
    %v3635 = vpack.c.b16 %v2467, %v2463
    %v3636 = vpack.c.b16 %v2468, %v2464
    %v3637 = vpack.c.b16 %v2469, %v2465
    %v3638 = vpack.c.b16 %v2470, %v2466
    %v3639 = vpack.c.b16 %v2475, %v2471
    %v3640 = vpack.c.b16 %v2476, %v2472
    %v3641 = vpack.c.b16 %v2477, %v2473
    %v3642 = vpack.c.b16 %v2478, %v2474
    %v3643 = vpack.c.b16 %v2483, %v2479
    %v3644 = vpack.c.b16 %v2484, %v2480
    %v3645 = vpack.c.b16 %v2485, %v2481
    %v3646 = vpack.c.b16 %v2486, %v2482
    %v3647 = vpack.c.b16 %v2491, %v2487
    %v3648 = vpack.c.b16 %v2492, %v2488
    %v3649 = vpack.c.b16 %v2493, %v2489
    %v3650 = vpack.c.b16 %v2494, %v2490
    %v3651 = vpack.c.b16 %v2499, %v2495
    %v3652 = vpack.c.b16 %v2500, %v2496
    %v3653 = vpack.c.b16 %v2501, %v2497
    %v3654 = vpack.c.b16 %v2502, %v2498
    %v3655 = vpack.c.b16 %v2507, %v2503
    %v3656 = vpack.c.b16 %v2508, %v2504
    %v3657 = vpack.c.b16 %v2509, %v2505
    %v3658 = vpack.c.b16 %v2510, %v2506
    %v3659 = vpack.c.b16 %v2515, %v2511
    %v3660 = vpack.c.b16 %v2516, %v2512
    %v3661 = vpack.c.b16 %v2517, %v2513
    %v3662 = vpack.c.b16 %v2518, %v2514
    %v3663 = vpack.c.b16 %v2523, %v2519
    %v3664 = vpack.c.b16 %v2524, %v2520
    %v3665 = vpack.c.b16 %v2525, %v2521
    %v3666 = vpack.c.b16 %v2526, %v2522
    %v3667 = vpack.c.b16 %v2531, %v2527
    %v3668 = vpack.c.b16 %v2532, %v2528
    %v3669 = vpack.c.b16 %v2533, %v2529
    %v3670 = vpack.c.b16 %v2534, %v2530
    %v3671 = vpack.c.b16 %v2539, %v2535
    %v3672 = vpack.c.b16 %v2540, %v2536
    %v3673 = vpack.c.b16 %v2541, %v2537
    %v3674 = vpack.c.b16 %v2542, %v2538
    %v3675 = vpack.c.b16 %v2547, %v2543
    %v3676 = vpack.c.b16 %v2548, %v2544
    %v3677 = vpack.c.b16 %v2549, %v2545
    %v3678 = vpack.c.b16 %v2550, %v2546
    %v3679 = vpack.c.b16 %v2555, %v2551
    %v3680 = vpack.c.b16 %v2556, %v2552
    %v3681 = vpack.c.b16 %v2557, %v2553
    %v3682 = vpack.c.b16 %v2558, %v2554
    %v3683 = vpack.c.b16 %v2563, %v2559
    %v3684 = vpack.c.b16 %v2564, %v2560
    %v3685 = vpack.c.b16 %v2565, %v2561
    %v3686 = vpack.c.b16 %v2566, %v2562
    %v3687 = vpack.c.b16 %v2571, %v2567
    %v3688 = vpack.c.b16 %v2572, %v2568
    %v3689 = vpack.c.b16 %v2573, %v2569
    %v3690 = vpack.c.b16 %v2574, %v2570
    %v3691 = vpack.c.b16 %v2579, %v2575
    %v3692 = vpack.c.b16 %v2580, %v2576
    %v3693 = vpack.c.b16 %v2581, %v2577
    %v3694 = vpack.c.b16 %v2582, %v2578
    %v3695 = vpack.c.b16 %v2587, %v2583
    %v3696 = vpack.c.b16 %v2588, %v2584
    %v3697 = vpack.c.b16 %v2589, %v2585
    %v3698 = vpack.c.b16 %v2590, %v2586
    %v3699 = vpack.c.b16 %v2595, %v2591
    %v3700 = vpack.c.b16 %v2596, %v2592
    %v3701 = vpack.c.b16 %v2597, %v2593
    %v3702 = vpack.c.b16 %v2598, %v2594
    %v3703 = vpack.c.b16 %v2603, %v2599
    %v3704 = vpack.c.b16 %v2604, %v2600
    %v3705 = vpack.c.b16 %v2605, %v2601
    %v3706 = vpack.c.b16 %v2606, %v2602
    %v3707 = vpack.c.b16 %v2611, %v2607
    %v3708 = vpack.c.b16 %v2612, %v2608
    %v3709 = vpack.c.b16 %v2613, %v2609
    %v3710 = vpack.c.b16 %v2614, %v2610
    %v3711 = vpack.c.b16 %v2619, %v2615
    %v3712 = vpack.c.b16 %v2620, %v2616
    %v3713 = vpack.c.b16 %v2621, %v2617
    %v3714 = vpack.c.b16 %v2622, %v2618
    %v3715 = vpack.c.b16 %v2627, %v2623
    %v3716 = vpack.c.b16 %v2628, %v2624
    %v3717 = vpack.c.b16 %v2629, %v2625
    %v3718 = vpack.c.b16 %v2630, %v2626
    %v3719 = vpack.c.b16 %v2635, %v2631
    %v3720 = vpack.c.b16 %v2636, %v2632
    %v3721 = vpack.c.b16 %v2637, %v2633
    %v3722 = vpack.c.b16 %v2638, %v2634
    %v3723 = vpack.c.b16 %v2643, %v2639
    %v3724 = vpack.c.b16 %v2644, %v2640
    %v3725 = vpack.c.b16 %v2645, %v2641
    %v3726 = vpack.c.b16 %v2646, %v2642
    %v3727 = vpack.c.b16 %v2651, %v2647
    %v3728 = vpack.c.b16 %v2652, %v2648
    %v3729 = vpack.c.b16 %v2653, %v2649
    %v3730 = vpack.c.b16 %v2654, %v2650
    %v3731 = vpack.c.b16 %v2659, %v2655
    %v3732 = vpack.c.b16 %v2660, %v2656
    %v3733 = vpack.c.b16 %v2661, %v2657
    %v3734 = vpack.c.b16 %v2662, %v2658
    %v3735 = vpack.c.b16 %v2667, %v2663
    %v3736 = vpack.c.b16 %v2668, %v2664
    %v3737 = vpack.c.b16 %v2669, %v2665
    %v3738 = vpack.c.b16 %v2670, %v2666
    %v3739 = vpack.c.b16 %v2675, %v2671
    %v3740 = vpack.c.b16 %v2676, %v2672
    %v3741 = vpack.c.b16 %v2677, %v2673
    %v3742 = vpack.c.b16 %v2678, %v2674
    %v3743 = vpack.c.b16 %v2683, %v2679
    %v3744 = vpack.c.b16 %v2684, %v2680
    %v3745 = vpack.c.b16 %v2685, %v2681
    %v3746 = vpack.c.b16 %v2686, %v2682
    %v3747 = vpack.c.b16 %v2691, %v2687
    %v3748 = vpack.c.b16 %v2692, %v2688
    %v3749 = vpack.c.b16 %v2693, %v2689
    %v3750 = vpack.c.b16 %v2694, %v2690
    %v3751 = vpack.c.b16 %v2699, %v2695
    %v3752 = vpack.c.b16 %v2700, %v2696
    %v3753 = vpack.c.b16 %v2701, %v2697
    %v3754 = vpack.c.b16 %v2702, %v2698
    %v3755 = vpack.c.b16 %v2707, %v2703
    %v3756 = vpack.c.b16 %v2708, %v2704
    %v3757 = vpack.c.b16 %v2709, %v2705
    %v3758 = vpack.c.b16 %v2710, %v2706
    %v3759 = vpack.c.b16 %v2715, %v2711
    %v3760 = vpack.c.b16 %v2716, %v2712
    %v3761 = vpack.c.b16 %v2717, %v2713
    %v3762 = vpack.c.b16 %v2718, %v2714
    %v3763 = vpack.c.b16 %v2723, %v2719
    %v3764 = vpack.c.b16 %v2724, %v2720
    %v3765 = vpack.c.b16 %v2725, %v2721
    %v3766 = vpack.c.b16 %v2726, %v2722
    %v3767 = vpack.c.b16 %v2731, %v2727
    %v3768 = vpack.c.b16 %v2732, %v2728
    %v3769 = vpack.c.b16 %v2733, %v2729
    %v3770 = vpack.c.b16 %v2734, %v2730
    %v3771 = vpack.c.b16 %v2739, %v2735
    %v3772 = vpack.c.b16 %v2740, %v2736
    %v3773 = vpack.c.b16 %v2741, %v2737
    %v3774 = vpack.c.b16 %v2742, %v2738
    %v3775 = vpack.c.b16 %v2747, %v2743
    %v3776 = vpack.c.b16 %v2748, %v2744
    %v3777 = vpack.c.b16 %v2749, %v2745
    %v3778 = vpack.c.b16 %v2750, %v2746
    %v3779 = vpack.c.b16 %v2755, %v2751
    %v3780 = vpack.c.b16 %v2756, %v2752
    %v3781 = vpack.c.b16 %v2757, %v2753
    %v3782 = vpack.c.b16 %v2758, %v2754
    %v3783 = vpack.c.b16 %v2763, %v2759
    %v3784 = vpack.c.b16 %v2764, %v2760
    %v3785 = vpack.c.b16 %v2765, %v2761
    %v3786 = vpack.c.b16 %v2766, %v2762
    %v3787 = vpack.c.b16 %v2771, %v2767
    %v3788 = vpack.c.b16 %v2772, %v2768
    %v3789 = vpack.c.b16 %v2773, %v2769
    %v3790 = vpack.c.b16 %v2774, %v2770
    %v3791 = vpack.c.b16 %v2779, %v2775
    %v3792 = vpack.c.b16 %v2780, %v2776
    %v3793 = vpack.c.b16 %v2781, %v2777
    %v3794 = vpack.c.b16 %v2782, %v2778
    %v3795 = vpack.c.b16 %v2787, %v2783
    %v3796 = vpack.c.b16 %v2788, %v2784
    %v3797 = vpack.c.b16 %v2789, %v2785
    %v3798 = vpack.c.b16 %v2790, %v2786
    %v3799 = vpack.c.b16 %v2795, %v2791
    %v3800 = vpack.c.b16 %v2796, %v2792
    %v3801 = vpack.c.b16 %v2797, %v2793
    %v3802 = vpack.c.b16 %v2798, %v2794
    %v3803 = vpack.c.b16 %v2803, %v2799
    %v3804 = vpack.c.b16 %v2804, %v2800
    %v3805 = vpack.c.b16 %v2805, %v2801
    %v3806 = vpack.c.b16 %v2806, %v2802
    %v3807 = vpack.c.b16 %v2811, %v2807
    %v3808 = vpack.c.b16 %v2812, %v2808
    %v3809 = vpack.c.b16 %v2813, %v2809
    %v3810 = vpack.c.b16 %v2814, %v2810
    %v3811 = vpack.c.b16 %v2819, %v2815
    %v3812 = vpack.c.b16 %v2820, %v2816
    %v3813 = vpack.c.b16 %v2821, %v2817
    %v3814 = vpack.c.b16 %v2822, %v2818
    %v3815 = vpack.c.b16 %v2827, %v2823
    %v3816 = vpack.c.b16 %v2828, %v2824
    %v3817 = vpack.c.b16 %v2829, %v2825
    %v3818 = vpack.c.b16 %v2830, %v2826
    %v3819 = vpack.c.b16 %v2835, %v2831
    %v3820 = vpack.c.b16 %v2836, %v2832
    %v3821 = vpack.c.b16 %v2837, %v2833
    %v3822 = vpack.c.b16 %v2838, %v2834
    %v3823 = vpack.c.b16 %v2843, %v2839
    %v3824 = vpack.c.b16 %v2844, %v2840
    %v3825 = vpack.c.b16 %v2845, %v2841
    %v3826 = vpack.c.b16 %v2846, %v2842
    %v3827 = vpack.c.b16 %v2851, %v2847
    %v3828 = vpack.c.b16 %v2852, %v2848
    %v3829 = vpack.c.b16 %v2853, %v2849
    %v3830 = vpack.c.b16 %v2854, %v2850
    %v3831 = vpack.c.b16 %v2859, %v2855
    %v3832 = vpack.c.b16 %v2860, %v2856
    %v3833 = vpack.c.b16 %v2861, %v2857
    %v3834 = vpack.c.b16 %v2862, %v2858
    %v3835 = vpack.c.b16 %v2867, %v2863
    %v3836 = vpack.c.b16 %v2868, %v2864
    %v3837 = vpack.c.b16 %v2869, %v2865
    %v3838 = vpack.c.b16 %v2870, %v2866
    %v3839 = vpack.c.b16 %v2875, %v2871
    %v3840 = vpack.c.b16 %v2876, %v2872
    %v3841 = vpack.c.b16 %v2877, %v2873
    %v3842 = vpack.c.b16 %v2878, %v2874
    %v3843 = vpack.c.b16 %v2883, %v2879
    %v3844 = vpack.c.b16 %v2884, %v2880
    %v3845 = vpack.c.b16 %v2885, %v2881
    %v3846 = vpack.c.b16 %v2886, %v2882
    %v3847 = vpack.c.b16 %v2891, %v2887
    %v3848 = vpack.c.b16 %v2892, %v2888
    %v3849 = vpack.c.b16 %v2893, %v2889
    %v3850 = vpack.c.b16 %v2894, %v2890
    %v3851 = vpack.c.b16 %v2899, %v2895
    %v3852 = vpack.c.b16 %v2900, %v2896
    %v3853 = vpack.c.b16 %v2901, %v2897
    %v3854 = vpack.c.b16 %v2902, %v2898
    %v3855 = vpack.c.b16 %v2907, %v2903
    %v3856 = vpack.c.b16 %v2908, %v2904
    %v3857 = vpack.c.b16 %v2909, %v2905
    %v3858 = vpack.c.b16 %v2910, %v2906
    %v3859 = vpack.c.b16 %v2915, %v2911
    %v3860 = vpack.c.b16 %v2916, %v2912
    %v3861 = vpack.c.b16 %v2917, %v2913
    %v3862 = vpack.c.b16 %v2918, %v2914
    %v3863 = vpack.c.b16 %v2923, %v2919
    %v3864 = vpack.c.b16 %v2924, %v2920
    %v3865 = vpack.c.b16 %v2925, %v2921
    %v3866 = vpack.c.b16 %v2926, %v2922
    %v3867 = vpack.c.b16 %v2931, %v2927
    %v3868 = vpack.c.b16 %v2932, %v2928
    %v3869 = vpack.c.b16 %v2933, %v2929
    %v3870 = vpack.c.b16 %v2934, %v2930
    %v3871 = vpack.c.b16 %v2939, %v2935
    %v3872 = vpack.c.b16 %v2940, %v2936
    %v3873 = vpack.c.b16 %v2941, %v2937
    %v3874 = vpack.c.b16 %v2942, %v2938
    %v3875 = vpack.c.b16 %v2947, %v2943
    %v3876 = vpack.c.b16 %v2948, %v2944
    %v3877 = vpack.c.b16 %v2949, %v2945
    %v3878 = vpack.c.b16 %v2950, %v2946
    %v3879 = vpack.c.b16 %v2955, %v2951
    %v3880 = vpack.c.b16 %v2956, %v2952
    %v3881 = vpack.c.b16 %v2957, %v2953
    %v3882 = vpack.c.b16 %v2958, %v2954
    %v3883 = vpack.c.b16 %v2963, %v2959
    %v3884 = vpack.c.b16 %v2964, %v2960
    %v3885 = vpack.c.b16 %v2965, %v2961
    %v3886 = vpack.c.b16 %v2966, %v2962
    %v3887 = vpack.c.b16 %v2971, %v2967
    %v3888 = vpack.c.b16 %v2972, %v2968
    %v3889 = vpack.c.b16 %v2973, %v2969
    %v3890 = vpack.c.b16 %v2974, %v2970
    %v3891 = vpack.c.b16 %v2979, %v2975
    %v3892 = vpack.c.b16 %v2980, %v2976
    %v3893 = vpack.c.b16 %v2981, %v2977
    %v3894 = vpack.c.b16 %v2982, %v2978
    %v3895 = vpack.c.b16 %v2987, %v2983
    %v3896 = vpack.c.b16 %v2988, %v2984
    %v3897 = vpack.c.b16 %v2989, %v2985
    %v3898 = vpack.c.b16 %v2990, %v2986
    %v3899 = vpack.c.b16 %v2995, %v2991
    %v3900 = vpack.c.b16 %v2996, %v2992
    %v3901 = vpack.c.b16 %v2997, %v2993
    %v3902 = vpack.c.b16 %v2998, %v2994
    %v3903 = vpack.c.b16 %v3003, %v2999
    %v3904 = vpack.c.b16 %v3004, %v3000
    %v3905 = vpack.c.b16 %v3005, %v3001
    %v3906 = vpack.c.b16 %v3006, %v3002
    %v3907 = vpack.c.b16 %v3011, %v3007
    %v3908 = vpack.c.b16 %v3012, %v3008
    %v3909 = vpack.c.b16 %v3013, %v3009
    %v3910 = vpack.c.b16 %v3014, %v3010
    %v3911 = vpack.c.b16 %v3019, %v3015
    %v3912 = vpack.c.b16 %v3020, %v3016
    %v3913 = vpack.c.b16 %v3021, %v3017
    %v3914 = vpack.c.b16 %v3022, %v3018
    %v3915 = vpack.c.b16 %v3027, %v3023
    %v3916 = vpack.c.b16 %v3028, %v3024
    %v3917 = vpack.c.b16 %v3029, %v3025
    %v3918 = vpack.c.b16 %v3030, %v3026
    %v3919 = vpack.c.b16 %v3035, %v3031
    %v3920 = vpack.c.b16 %v3036, %v3032
    %v3921 = vpack.c.b16 %v3037, %v3033
    %v3922 = vpack.c.b16 %v3038, %v3034
    %v3923 = vpack.c.b16 %v3043, %v3039
    %v3924 = vpack.c.b16 %v3044, %v3040
    %v3925 = vpack.c.b16 %v3045, %v3041
    %v3926 = vpack.c.b16 %v3046, %v3042
    %v3927 = vpack.c.b16 %v3051, %v3047
    %v3928 = vpack.c.b16 %v3052, %v3048
    %v3929 = vpack.c.b16 %v3053, %v3049
    %v3930 = vpack.c.b16 %v3054, %v3050
    %v3931 = vpack.c.b16 %v3059, %v3055
    %v3932 = vpack.c.b16 %v3060, %v3056
    %v3933 = vpack.c.b16 %v3061, %v3057
    %v3934 = vpack.c.b16 %v3062, %v3058
    %v3935 = vpack.c.b16 %v3067, %v3063
    %v3936 = vpack.c.b16 %v3068, %v3064
    %v3937 = vpack.c.b16 %v3069, %v3065
    %v3938 = vpack.c.b16 %v3070, %v3066
    %v3939 = vpack.c.b16 %v3075, %v3071
    %v3940 = vpack.c.b16 %v3076, %v3072
    %v3941 = vpack.c.b16 %v3077, %v3073
    %v3942 = vpack.c.b16 %v3078, %v3074
    %v3943 = vpack.c.b16 %v3083, %v3079
    %v3944 = vpack.c.b16 %v3084, %v3080
    %v3945 = vpack.c.b16 %v3085, %v3081
    %v3946 = vpack.c.b16 %v3086, %v3082
    %v3947 = vpack.c.b16 %v3091, %v3087
    %v3948 = vpack.c.b16 %v3092, %v3088
    %v3949 = vpack.c.b16 %v3093, %v3089
    %v3950 = vpack.c.b16 %v3094, %v3090
    %v3951 = vpack.c.b16 %v3099, %v3095
    %v3952 = vpack.c.b16 %v3100, %v3096
    %v3953 = vpack.c.b16 %v3101, %v3097
    %v3954 = vpack.c.b16 %v3102, %v3098
    %v3955 = vpack.c.b16 %v3107, %v3103
    %v3956 = vpack.c.b16 %v3108, %v3104
    %v3957 = vpack.c.b16 %v3109, %v3105
    %v3958 = vpack.c.b16 %v3110, %v3106
    %v3959 = vpack.c.b16 %v3115, %v3111
    %v3960 = vpack.c.b16 %v3116, %v3112
    %v3961 = vpack.c.b16 %v3117, %v3113
    %v3962 = vpack.c.b16 %v3118, %v3114
    %v3963 = vpack.c.b16 %v3123, %v3119
    %v3964 = vpack.c.b16 %v3124, %v3120
    %v3965 = vpack.c.b16 %v3125, %v3121
    %v3966 = vpack.c.b16 %v3126, %v3122
    %v3967 = vpack.c.b16 %v3131, %v3127
    %v3968 = vpack.c.b16 %v3132, %v3128
    %v3969 = vpack.c.b16 %v3133, %v3129
    %v3970 = vpack.c.b16 %v3134, %v3130
    %v3971 = vpack.c.b16 %v3139, %v3135
    %v3972 = vpack.c.b16 %v3140, %v3136
    %v3973 = vpack.c.b16 %v3141, %v3137
    %v3974 = vpack.c.b16 %v3142, %v3138
    %v3975 = vpack.c.b16 %v3147, %v3143
    %v3976 = vpack.c.b16 %v3148, %v3144
    %v3977 = vpack.c.b16 %v3149, %v3145
    %v3978 = vpack.c.b16 %v3150, %v3146
    %v3979 = vpack.c.b16 %v3155, %v3151
    %v3980 = vpack.c.b16 %v3156, %v3152
    %v3981 = vpack.c.b16 %v3157, %v3153
    %v3982 = vpack.c.b16 %v3158, %v3154
    %v3983 = vpack.c.b16 %v3163, %v3159
    %v3984 = vpack.c.b16 %v3164, %v3160
    %v3985 = vpack.c.b16 %v3165, %v3161
    %v3986 = vpack.c.b16 %v3166, %v3162
    %v3987 = vpack.c.b16 %v3171, %v3167
    %v3988 = vpack.c.b16 %v3172, %v3168
    %v3989 = vpack.c.b16 %v3173, %v3169
    %v3990 = vpack.c.b16 %v3174, %v3170
    %v3991 = vpack.c.b16 %v3179, %v3175
    %v3992 = vpack.c.b16 %v3180, %v3176
    %v3993 = vpack.c.b16 %v3181, %v3177
    %v3994 = vpack.c.b16 %v3182, %v3178
    %v3995 = vpack.c.b16 %v3187, %v3183
    %v3996 = vpack.c.b16 %v3188, %v3184
    %v3997 = vpack.c.b16 %v3189, %v3185
    %v3998 = vpack.c.b16 %v3190, %v3186
    %v3999 = vpack.c.b16 %v3195, %v3191
    %v4000 = vpack.c.b16 %v3196, %v3192
    %v4001 = vpack.c.b16 %v3197, %v3193
    %v4002 = vpack.c.b16 %v3198, %v3194
    %v4003 = vpack.c.b16 %v3203, %v3199
    %v4004 = vpack.c.b16 %v3204, %v3200
    %v4005 = vpack.c.b16 %v3205, %v3201
    %v4006 = vpack.c.b16 %v3206, %v3202
    %v4007 = vpack.c.b16 %v3211, %v3207
    %v4008 = vpack.c.b16 %v3212, %v3208
    %v4009 = vpack.c.b16 %v3213, %v3209
    %v4010 = vpack.c.b16 %v3214, %v3210
    %v4011 = vpack.c.b16 %v3219, %v3215
    %v4012 = vpack.c.b16 %v3220, %v3216
    %v4013 = vpack.c.b16 %v3221, %v3217
    %v4014 = vpack.c.b16 %v3222, %v3218
    %v4015 = vpack.c.b16 %v3227, %v3223
    %v4016 = vpack.c.b16 %v3228, %v3224
    %v4017 = vpack.c.b16 %v3229, %v3225
    %v4018 = vpack.c.b16 %v3230, %v3226
    %v4019 = vpack.c.b16 %v3235, %v3231
    %v4020 = vpack.c.b16 %v3236, %v3232
    %v4021 = vpack.c.b16 %v3237, %v3233
    %v4022 = vpack.c.b16 %v3238, %v3234
    %vm4807 = vcmask 523264
    %v4808 = vsel %vm4807, %v862, 0
    %4810 = vmatpush.bf16.msra.mxu0 %v3267
    %4811 = vmatpush.bf16.msra.mxu0 %v3263
    %4812 = vmatpush.bf16.msra.mxu0 %v3259
    %4813 = vmatpush.bf16.msra.mxu0 %v3255
    %4814 = vmatpush.bf16.msra.mxu0 %v3251
    %4815 = vmatpush.bf16.msra.mxu0 %v3247
    %4816 = vmatpush.bf16.msra.mxu0 %v3243
    %4817 = vmatpush.bf16.msra.mxu0 %v3239
    %4818 = vmatmul.bf16.gmra.mxu0 %v832
    %v4819 = vpop.f32.mrf.mxu0
    %v4820 = vadd.f32 %v822, %v4819
    %v4821 = vpop.f32.mrf.mxu0
    %4822 = vdwg.mxu0
    %4823 = vmatpush.bf16.msra.mxu0 %v3299
    %4824 = vmatpush.bf16.msra.mxu0 %v3295
    %4825 = vmatpush.bf16.msra.mxu0 %v3291
    %4826 = vmatpush.bf16.msra.mxu0 %v3287
    %4827 = vmatpush.bf16.msra.mxu0 %v3283
    %4828 = vmatpush.bf16.msra.mxu0 %v3279
    %4829 = vmatpush.bf16.msra.mxu0 %v3275
    %4830 = vmatpush.bf16.msra.mxu0 %v3271
    %4831 = vmatmul.bf16.gmra.mxu0 %v833
    %v4832 = vpop.f32.mrf.mxu0
    %v4833 = vadd.f32 %v4820, %v4832
    %v4834 = vpop.f32.mrf.mxu0
    %4835 = vdwg.mxu0
    %4836 = vmatpush.bf16.msra.mxu0 %v3331
    %4837 = vmatpush.bf16.msra.mxu0 %v3327
    %4838 = vmatpush.bf16.msra.mxu0 %v3323
    %4839 = vmatpush.bf16.msra.mxu0 %v3319
    %4840 = vmatpush.bf16.msra.mxu0 %v3315
    %4841 = vmatpush.bf16.msra.mxu0 %v3311
    %4842 = vmatpush.bf16.msra.mxu0 %v3307
    %4843 = vmatpush.bf16.msra.mxu0 %v3303
    %4844 = vmatmul.bf16.gmra.mxu0 %v834
    %v4845 = vpop.f32.mrf.mxu0
    %v4846 = vadd.f32 %v4833, %v4845
    %v4847 = vpop.f32.mrf.mxu0
    %4848 = vdwg.mxu0
    %4849 = vmatpush.bf16.msra.mxu0 %v3363
    %4850 = vmatpush.bf16.msra.mxu0 %v3359
    %4851 = vmatpush.bf16.msra.mxu0 %v3355
    %4852 = vmatpush.bf16.msra.mxu0 %v3351
    %4853 = vmatpush.bf16.msra.mxu0 %v3347
    %4854 = vmatpush.bf16.msra.mxu0 %v3343
    %4855 = vmatpush.bf16.msra.mxu0 %v3339
    %4856 = vmatpush.bf16.msra.mxu0 %v3335
    %4857 = vmatmul.bf16.gmra.mxu0 %v835
    %v4858 = vpop.f32.mrf.mxu0
    %v4859 = vadd.f32 %v4846, %v4858
    %v4860 = vpop.f32.mrf.mxu0
    %4861 = vdwg.mxu0
    %4862 = vmatpush.bf16.msra.mxu0 %v3395
    %4863 = vmatpush.bf16.msra.mxu0 %v3391
    %4864 = vmatpush.bf16.msra.mxu0 %v3387
    %4865 = vmatpush.bf16.msra.mxu0 %v3383
    %4866 = vmatpush.bf16.msra.mxu0 %v3379
    %4867 = vmatpush.bf16.msra.mxu0 %v3375
    %4868 = vmatpush.bf16.msra.mxu0 %v3371
    %4869 = vmatpush.bf16.msra.mxu0 %v3367
    %4870 = vmatmul.bf16.gmra.mxu0 %v836
    %v4871 = vpop.f32.mrf.mxu0
    %v4872 = vadd.f32 %v4859, %v4871
    %v4873 = vpop.f32.mrf.mxu0
    %4874 = vdwg.mxu0
    %4875 = vmatpush.bf16.msra.mxu0 %v3427
    %4876 = vmatpush.bf16.msra.mxu0 %v3423
    %4877 = vmatpush.bf16.msra.mxu0 %v3419
    %4878 = vmatpush.bf16.msra.mxu0 %v3415
    %4879 = vmatpush.bf16.msra.mxu0 %v3411
    %4880 = vmatpush.bf16.msra.mxu0 %v3407
    %4881 = vmatpush.bf16.msra.mxu0 %v3403
    %4882 = vmatpush.bf16.msra.mxu0 %v3399
    %4883 = vmatmul.bf16.gmra.mxu0 %v837
    %v4884 = vpop.f32.mrf.mxu0
    %v4885 = vadd.f32 %v4872, %v4884
    %v4886 = vpop.f32.mrf.mxu0
    %4887 = vdwg.mxu0
    %4888 = vmatpush.bf16.msra.mxu0 %v3459
    %4889 = vmatpush.bf16.msra.mxu0 %v3455
    %4890 = vmatpush.bf16.msra.mxu0 %v3451
    %4891 = vmatpush.bf16.msra.mxu0 %v3447
    %4892 = vmatpush.bf16.msra.mxu0 %v3443
    %4893 = vmatpush.bf16.msra.mxu0 %v3439
    %4894 = vmatpush.bf16.msra.mxu0 %v3435
    %4895 = vmatpush.bf16.msra.mxu0 %v3431
    %4896 = vmatmul.bf16.gmra.mxu0 %v838
    %v4897 = vpop.f32.mrf.mxu0
    %v4898 = vadd.f32 %v4885, %v4897
    %v4899 = vpop.f32.mrf.mxu0
    %4900 = vdwg.mxu0
    %4901 = vmatpush.bf16.msra.mxu0 %v3491
    %4902 = vmatpush.bf16.msra.mxu0 %v3487
    %4903 = vmatpush.bf16.msra.mxu0 %v3483
    %4904 = vmatpush.bf16.msra.mxu0 %v3479
    %4905 = vmatpush.bf16.msra.mxu0 %v3475
    %4906 = vmatpush.bf16.msra.mxu0 %v3471
    %4907 = vmatpush.bf16.msra.mxu0 %v3467
    %4908 = vmatpush.bf16.msra.mxu0 %v3463
    %4909 = vmatmul.bf16.gmra.mxu0 %v839
    %v4910 = vpop.f32.mrf.mxu0
    %v4911 = vadd.f32 %v4898, %v4910
    %v4912 = vpop.f32.mrf.mxu0
    %4913 = vdwg.mxu0
    %4914 = vmatpush.bf16.msra.mxu0 %v3523
    %4915 = vmatpush.bf16.msra.mxu0 %v3519
    %4916 = vmatpush.bf16.msra.mxu0 %v3515
    %4917 = vmatpush.bf16.msra.mxu0 %v3511
    %4918 = vmatpush.bf16.msra.mxu0 %v3507
    %4919 = vmatpush.bf16.msra.mxu0 %v3503
    %4920 = vmatpush.bf16.msra.mxu0 %v3499
    %4921 = vmatpush.bf16.msra.mxu0 %v3495
    %4922 = vmatmul.bf16.gmra.mxu0 %v842
    %v4923 = vpop.f32.mrf.mxu0
    %v4924 = vadd.f32 %v4911, %v4923
    %v4925 = vpop.f32.mrf.mxu0
    %4926 = vdwg.mxu0
    %4927 = vmatpush.bf16.msra.mxu0 %v3555
    %4928 = vmatpush.bf16.msra.mxu0 %v3551
    %4929 = vmatpush.bf16.msra.mxu0 %v3547
    %4930 = vmatpush.bf16.msra.mxu0 %v3543
    %4931 = vmatpush.bf16.msra.mxu0 %v3539
    %4932 = vmatpush.bf16.msra.mxu0 %v3535
    %4933 = vmatpush.bf16.msra.mxu0 %v3531
    %4934 = vmatpush.bf16.msra.mxu0 %v3527
    %4935 = vmatmul.bf16.gmra.mxu0 %v843
    %v4936 = vpop.f32.mrf.mxu0
    %v4937 = vadd.f32 %v4924, %v4936
    %v4938 = vpop.f32.mrf.mxu0
    %4939 = vdwg.mxu0
    %4940 = vmatpush.bf16.msra.mxu0 %v3587
    %4941 = vmatpush.bf16.msra.mxu0 %v3583
    %4942 = vmatpush.bf16.msra.mxu0 %v3579
    %4943 = vmatpush.bf16.msra.mxu0 %v3575
    %4944 = vmatpush.bf16.msra.mxu0 %v3571
    %4945 = vmatpush.bf16.msra.mxu0 %v3567
    %4946 = vmatpush.bf16.msra.mxu0 %v3563
    %4947 = vmatpush.bf16.msra.mxu0 %v3559
    %4948 = vmatmul.bf16.gmra.mxu0 %v844
    %v4949 = vpop.f32.mrf.mxu0
    %v4950 = vadd.f32 %v4937, %v4949
    %v4951 = vpop.f32.mrf.mxu0
    %4952 = vdwg.mxu0
    %4953 = vmatpush.bf16.msra.mxu0 %v3619
    %4954 = vmatpush.bf16.msra.mxu0 %v3615
    %4955 = vmatpush.bf16.msra.mxu0 %v3611
    %4956 = vmatpush.bf16.msra.mxu0 %v3607
    %4957 = vmatpush.bf16.msra.mxu0 %v3603
    %4958 = vmatpush.bf16.msra.mxu0 %v3599
    %4959 = vmatpush.bf16.msra.mxu0 %v3595
    %4960 = vmatpush.bf16.msra.mxu0 %v3591
    %4961 = vmatmul.bf16.gmra.mxu0 %v845
    %v4962 = vpop.f32.mrf.mxu0
    %v4963 = vadd.f32 %v4950, %v4962
    %v4964 = vpop.f32.mrf.mxu0
    %4965 = vdwg.mxu0
    %4966 = vmatpush.bf16.msra.mxu0 %v3651
    %4967 = vmatpush.bf16.msra.mxu0 %v3647
    %4968 = vmatpush.bf16.msra.mxu0 %v3643
    %4969 = vmatpush.bf16.msra.mxu0 %v3639
    %4970 = vmatpush.bf16.msra.mxu0 %v3635
    %4971 = vmatpush.bf16.msra.mxu0 %v3631
    %4972 = vmatpush.bf16.msra.mxu0 %v3627
    %4973 = vmatpush.bf16.msra.mxu0 %v3623
    %4974 = vmatmul.bf16.gmra.mxu0 %v846
    %v4975 = vpop.f32.mrf.mxu0
    %v4976 = vadd.f32 %v4963, %v4975
    %v4977 = vpop.f32.mrf.mxu0
    %4978 = vdwg.mxu0
    %4979 = vmatpush.bf16.msra.mxu0 %v3683
    %4980 = vmatpush.bf16.msra.mxu0 %v3679
    %4981 = vmatpush.bf16.msra.mxu0 %v3675
    %4982 = vmatpush.bf16.msra.mxu0 %v3671
    %4983 = vmatpush.bf16.msra.mxu0 %v3667
    %4984 = vmatpush.bf16.msra.mxu0 %v3663
    %4985 = vmatpush.bf16.msra.mxu0 %v3659
    %4986 = vmatpush.bf16.msra.mxu0 %v3655
    %4987 = vmatmul.bf16.gmra.mxu0 %v847
    %v4988 = vpop.f32.mrf.mxu0
    %v4989 = vadd.f32 %v4976, %v4988
    %v4990 = vpop.f32.mrf.mxu0
    %4991 = vdwg.mxu0
    %4992 = vmatpush.bf16.msra.mxu0 %v3715
    %4993 = vmatpush.bf16.msra.mxu0 %v3711
    %4994 = vmatpush.bf16.msra.mxu0 %v3707
    %4995 = vmatpush.bf16.msra.mxu0 %v3703
    %4996 = vmatpush.bf16.msra.mxu0 %v3699
    %4997 = vmatpush.bf16.msra.mxu0 %v3695
    %4998 = vmatpush.bf16.msra.mxu0 %v3691
    %4999 = vmatpush.bf16.msra.mxu0 %v3687
    %5000 = vmatmul.bf16.gmra.mxu0 %v848
    %v5001 = vpop.f32.mrf.mxu0
    %v5002 = vadd.f32 %v4989, %v5001
    %v5003 = vpop.f32.mrf.mxu0
    %5004 = vdwg.mxu0
    %5005 = vmatpush.bf16.msra.mxu0 %v3747
    %5006 = vmatpush.bf16.msra.mxu0 %v3743
    %5007 = vmatpush.bf16.msra.mxu0 %v3739
    %5008 = vmatpush.bf16.msra.mxu0 %v3735
    %5009 = vmatpush.bf16.msra.mxu0 %v3731
    %5010 = vmatpush.bf16.msra.mxu0 %v3727
    %5011 = vmatpush.bf16.msra.mxu0 %v3723
    %5012 = vmatpush.bf16.msra.mxu0 %v3719
    %5013 = vmatmul.bf16.gmra.mxu0 %v849
    %v5014 = vpop.f32.mrf.mxu0
    %v5015 = vadd.f32 %v5002, %v5014
    %v5016 = vpop.f32.mrf.mxu0
    %5017 = vdwg.mxu0
    %5018 = vmatpush.bf16.msra.mxu0 %v3779
    %5019 = vmatpush.bf16.msra.mxu0 %v3775
    %5020 = vmatpush.bf16.msra.mxu0 %v3771
    %5021 = vmatpush.bf16.msra.mxu0 %v3767
    %5022 = vmatpush.bf16.msra.mxu0 %v3763
    %5023 = vmatpush.bf16.msra.mxu0 %v3759
    %5024 = vmatpush.bf16.msra.mxu0 %v3755
    %5025 = vmatpush.bf16.msra.mxu0 %v3751
    %5026 = vmatmul.bf16.gmra.mxu0 %v852
    %v5027 = vpop.f32.mrf.mxu0
    %v5028 = vadd.f32 %v5015, %v5027
    %v5029 = vpop.f32.mrf.mxu0
    %5030 = vdwg.mxu0
    %5031 = vmatpush.bf16.msra.mxu0 %v3811
    %5032 = vmatpush.bf16.msra.mxu0 %v3807
    %5033 = vmatpush.bf16.msra.mxu0 %v3803
    %5034 = vmatpush.bf16.msra.mxu0 %v3799
    %5035 = vmatpush.bf16.msra.mxu0 %v3795
    %5036 = vmatpush.bf16.msra.mxu0 %v3791
    %5037 = vmatpush.bf16.msra.mxu0 %v3787
    %5038 = vmatpush.bf16.msra.mxu0 %v3783
    %5039 = vmatmul.bf16.gmra.mxu0 %v853
    %v5040 = vpop.f32.mrf.mxu0
    %v5041 = vadd.f32 %v5028, %v5040
    %v5042 = vpop.f32.mrf.mxu0
    %5043 = vdwg.mxu0
    %5044 = vmatpush.bf16.msra.mxu0 %v3843
    %5045 = vmatpush.bf16.msra.mxu0 %v3839
    %5046 = vmatpush.bf16.msra.mxu0 %v3835
    %5047 = vmatpush.bf16.msra.mxu0 %v3831
    %5048 = vmatpush.bf16.msra.mxu0 %v3827
    %5049 = vmatpush.bf16.msra.mxu0 %v3823
    %5050 = vmatpush.bf16.msra.mxu0 %v3819
    %5051 = vmatpush.bf16.msra.mxu0 %v3815
    %5052 = vmatmul.bf16.gmra.mxu0 %v854
    %v5053 = vpop.f32.mrf.mxu0
    %v5054 = vadd.f32 %v5041, %v5053
    %v5055 = vpop.f32.mrf.mxu0
    %5056 = vdwg.mxu0
    %5057 = vmatpush.bf16.msra.mxu0 %v3875
    %5058 = vmatpush.bf16.msra.mxu0 %v3871
    %5059 = vmatpush.bf16.msra.mxu0 %v3867
    %5060 = vmatpush.bf16.msra.mxu0 %v3863
    %5061 = vmatpush.bf16.msra.mxu0 %v3859
    %5062 = vmatpush.bf16.msra.mxu0 %v3855
    %5063 = vmatpush.bf16.msra.mxu0 %v3851
    %5064 = vmatpush.bf16.msra.mxu0 %v3847
    %5065 = vmatmul.bf16.gmra.mxu0 %v855
    %v5066 = vpop.f32.mrf.mxu0
    %v5067 = vadd.f32 %v5054, %v5066
    %v5068 = vpop.f32.mrf.mxu0
    %5069 = vdwg.mxu0
    %5070 = vmatpush.bf16.msra.mxu0 %v3907
    %5071 = vmatpush.bf16.msra.mxu0 %v3903
    %5072 = vmatpush.bf16.msra.mxu0 %v3899
    %5073 = vmatpush.bf16.msra.mxu0 %v3895
    %5074 = vmatpush.bf16.msra.mxu0 %v3891
    %5075 = vmatpush.bf16.msra.mxu0 %v3887
    %5076 = vmatpush.bf16.msra.mxu0 %v3883
    %5077 = vmatpush.bf16.msra.mxu0 %v3879
    %5078 = vmatmul.bf16.gmra.mxu0 %v856
    %v5079 = vpop.f32.mrf.mxu0
    %v5080 = vadd.f32 %v5067, %v5079
    %v5081 = vpop.f32.mrf.mxu0
    %5082 = vdwg.mxu0
    %5083 = vmatpush.bf16.msra.mxu0 %v3939
    %5084 = vmatpush.bf16.msra.mxu0 %v3935
    %5085 = vmatpush.bf16.msra.mxu0 %v3931
    %5086 = vmatpush.bf16.msra.mxu0 %v3927
    %5087 = vmatpush.bf16.msra.mxu0 %v3923
    %5088 = vmatpush.bf16.msra.mxu0 %v3919
    %5089 = vmatpush.bf16.msra.mxu0 %v3915
    %5090 = vmatpush.bf16.msra.mxu0 %v3911
    %5091 = vmatmul.bf16.gmra.mxu0 %v857
    %v5092 = vpop.f32.mrf.mxu0
    %v5093 = vadd.f32 %v5080, %v5092
    %v5094 = vpop.f32.mrf.mxu0
    %5095 = vdwg.mxu0
    %5096 = vmatpush.bf16.msra.mxu0 %v3971
    %5097 = vmatpush.bf16.msra.mxu0 %v3967
    %5098 = vmatpush.bf16.msra.mxu0 %v3963
    %5099 = vmatpush.bf16.msra.mxu0 %v3959
    %5100 = vmatpush.bf16.msra.mxu0 %v3955
    %5101 = vmatpush.bf16.msra.mxu0 %v3951
    %5102 = vmatpush.bf16.msra.mxu0 %v3947
    %5103 = vmatpush.bf16.msra.mxu0 %v3943
    %5104 = vmatmul.bf16.gmra.mxu0 %v858
    %v5105 = vpop.f32.mrf.mxu0
    %v5106 = vadd.f32 %v5093, %v5105
    %v5107 = vpop.f32.mrf.mxu0
    %5108 = vdwg.mxu0
    %5109 = vmatpush.bf16.msra.mxu0 %v4003
    %5110 = vmatpush.bf16.msra.mxu0 %v3999
    %5111 = vmatpush.bf16.msra.mxu0 %v3995
    %5112 = vmatpush.bf16.msra.mxu0 %v3991
    %5113 = vmatpush.bf16.msra.mxu0 %v3987
    %5114 = vmatpush.bf16.msra.mxu0 %v3983
    %5115 = vmatpush.bf16.msra.mxu0 %v3979
    %5116 = vmatpush.bf16.msra.mxu0 %v3975
    %5117 = vmatmul.bf16.gmra.mxu0 %v859
    %v5118 = vpop.f32.mrf.mxu0
    %v5119 = vadd.f32 %v5106, %v5118
    %v5120 = vpop.f32.mrf.mxu0
    %5121 = vdwg.mxu0
    %5122 = vmatpush.bf16.msra.mxu0 0
    %5123 = vmatpush.bf16.msra.mxu0 0
    %5124 = vmatpush.bf16.msra.mxu0 0
    %5125 = vmatpush.bf16.msra.mxu0 0
    %5126 = vmatpush.bf16.msra.mxu0 %v4019
    %5127 = vmatpush.bf16.msra.mxu0 %v4015
    %5128 = vmatpush.bf16.msra.mxu0 %v4011
    %5129 = vmatpush.bf16.msra.mxu0 %v4007
    %5130 = vmatmul.bf16.gmra.mxu0 %v4808
    %v5131 = vpop.f32.mrf.mxu0
    %v5132 = vadd.f32 %v5119, %v5131
    %v5133 = vpop.f32.mrf.mxu0
    %5134 = vdwg.mxu0
    %5135 = vmatpush.bf16.msra.mxu0 %v3268
    %5136 = vmatpush.bf16.msra.mxu0 %v3264
    %5137 = vmatpush.bf16.msra.mxu0 %v3260
    %5138 = vmatpush.bf16.msra.mxu0 %v3256
    %5139 = vmatpush.bf16.msra.mxu0 %v3252
    %5140 = vmatpush.bf16.msra.mxu0 %v3248
    %5141 = vmatpush.bf16.msra.mxu0 %v3244
    %5142 = vmatpush.bf16.msra.mxu0 %v3240
    %5143 = vmatmul.bf16.gmra.mxu0 %v832
    %v5144 = vpop.f32.mrf.mxu0
    %v5145 = vadd.f32 %v823, %v5144
    %v5146 = vpop.f32.mrf.mxu0
    %5147 = vdwg.mxu0
    %5148 = vmatpush.bf16.msra.mxu0 %v3300
    %5149 = vmatpush.bf16.msra.mxu0 %v3296
    %5150 = vmatpush.bf16.msra.mxu0 %v3292
    %5151 = vmatpush.bf16.msra.mxu0 %v3288
    %5152 = vmatpush.bf16.msra.mxu0 %v3284
    %5153 = vmatpush.bf16.msra.mxu0 %v3280
    %5154 = vmatpush.bf16.msra.mxu0 %v3276
    %5155 = vmatpush.bf16.msra.mxu0 %v3272
    %5156 = vmatmul.bf16.gmra.mxu0 %v833
    %v5157 = vpop.f32.mrf.mxu0
    %v5158 = vadd.f32 %v5145, %v5157
    %v5159 = vpop.f32.mrf.mxu0
    %5160 = vdwg.mxu0
    %5161 = vmatpush.bf16.msra.mxu0 %v3332
    %5162 = vmatpush.bf16.msra.mxu0 %v3328
    %5163 = vmatpush.bf16.msra.mxu0 %v3324
    %5164 = vmatpush.bf16.msra.mxu0 %v3320
    %5165 = vmatpush.bf16.msra.mxu0 %v3316
    %5166 = vmatpush.bf16.msra.mxu0 %v3312
    %5167 = vmatpush.bf16.msra.mxu0 %v3308
    %5168 = vmatpush.bf16.msra.mxu0 %v3304
    %5169 = vmatmul.bf16.gmra.mxu0 %v834
    %v5170 = vpop.f32.mrf.mxu0
    %v5171 = vadd.f32 %v5158, %v5170
    %v5172 = vpop.f32.mrf.mxu0
    %5173 = vdwg.mxu0
    %5174 = vmatpush.bf16.msra.mxu0 %v3364
    %5175 = vmatpush.bf16.msra.mxu0 %v3360
    %5176 = vmatpush.bf16.msra.mxu0 %v3356
    %5177 = vmatpush.bf16.msra.mxu0 %v3352
    %5178 = vmatpush.bf16.msra.mxu0 %v3348
    %5179 = vmatpush.bf16.msra.mxu0 %v3344
    %5180 = vmatpush.bf16.msra.mxu0 %v3340
    %5181 = vmatpush.bf16.msra.mxu0 %v3336
    %5182 = vmatmul.bf16.gmra.mxu0 %v835
    %v5183 = vpop.f32.mrf.mxu0
    %v5184 = vadd.f32 %v5171, %v5183
    %v5185 = vpop.f32.mrf.mxu0
    %5186 = vdwg.mxu0
    %5187 = vmatpush.bf16.msra.mxu0 %v3396
    %5188 = vmatpush.bf16.msra.mxu0 %v3392
    %5189 = vmatpush.bf16.msra.mxu0 %v3388
    %5190 = vmatpush.bf16.msra.mxu0 %v3384
    %5191 = vmatpush.bf16.msra.mxu0 %v3380
    %5192 = vmatpush.bf16.msra.mxu0 %v3376
    %5193 = vmatpush.bf16.msra.mxu0 %v3372
    %5194 = vmatpush.bf16.msra.mxu0 %v3368
    %5195 = vmatmul.bf16.gmra.mxu0 %v836
    %v5196 = vpop.f32.mrf.mxu0
    %v5197 = vadd.f32 %v5184, %v5196
    %v5198 = vpop.f32.mrf.mxu0
    %5199 = vdwg.mxu0
    %5200 = vmatpush.bf16.msra.mxu0 %v3428
    %5201 = vmatpush.bf16.msra.mxu0 %v3424
    %5202 = vmatpush.bf16.msra.mxu0 %v3420
    %5203 = vmatpush.bf16.msra.mxu0 %v3416
    %5204 = vmatpush.bf16.msra.mxu0 %v3412
    %5205 = vmatpush.bf16.msra.mxu0 %v3408
    %5206 = vmatpush.bf16.msra.mxu0 %v3404
    %5207 = vmatpush.bf16.msra.mxu0 %v3400
    %5208 = vmatmul.bf16.gmra.mxu0 %v837
    %v5209 = vpop.f32.mrf.mxu0
    %v5210 = vadd.f32 %v5197, %v5209
    %v5211 = vpop.f32.mrf.mxu0
    %5212 = vdwg.mxu0
    %5213 = vmatpush.bf16.msra.mxu0 %v3460
    %5214 = vmatpush.bf16.msra.mxu0 %v3456
    %5215 = vmatpush.bf16.msra.mxu0 %v3452
    %5216 = vmatpush.bf16.msra.mxu0 %v3448
    %5217 = vmatpush.bf16.msra.mxu0 %v3444
    %5218 = vmatpush.bf16.msra.mxu0 %v3440
    %5219 = vmatpush.bf16.msra.mxu0 %v3436
    %5220 = vmatpush.bf16.msra.mxu0 %v3432
    %5221 = vmatmul.bf16.gmra.mxu0 %v838
    %v5222 = vpop.f32.mrf.mxu0
    %v5223 = vadd.f32 %v5210, %v5222
    %v5224 = vpop.f32.mrf.mxu0
    %5225 = vdwg.mxu0
    %5226 = vmatpush.bf16.msra.mxu0 %v3492
    %5227 = vmatpush.bf16.msra.mxu0 %v3488
    %5228 = vmatpush.bf16.msra.mxu0 %v3484
    %5229 = vmatpush.bf16.msra.mxu0 %v3480
    %5230 = vmatpush.bf16.msra.mxu0 %v3476
    %5231 = vmatpush.bf16.msra.mxu0 %v3472
    %5232 = vmatpush.bf16.msra.mxu0 %v3468
    %5233 = vmatpush.bf16.msra.mxu0 %v3464
    %5234 = vmatmul.bf16.gmra.mxu0 %v839
    %v5235 = vpop.f32.mrf.mxu0
    %v5236 = vadd.f32 %v5223, %v5235
    %v5237 = vpop.f32.mrf.mxu0
    %5238 = vdwg.mxu0
    %5239 = vmatpush.bf16.msra.mxu0 %v3524
    %5240 = vmatpush.bf16.msra.mxu0 %v3520
    %5241 = vmatpush.bf16.msra.mxu0 %v3516
    %5242 = vmatpush.bf16.msra.mxu0 %v3512
    %5243 = vmatpush.bf16.msra.mxu0 %v3508
    %5244 = vmatpush.bf16.msra.mxu0 %v3504
    %5245 = vmatpush.bf16.msra.mxu0 %v3500
    %5246 = vmatpush.bf16.msra.mxu0 %v3496
    %5247 = vmatmul.bf16.gmra.mxu0 %v842
    %v5248 = vpop.f32.mrf.mxu0
    %v5249 = vadd.f32 %v5236, %v5248
    %v5250 = vpop.f32.mrf.mxu0
    %5251 = vdwg.mxu0
    %5252 = vmatpush.bf16.msra.mxu0 %v3556
    %5253 = vmatpush.bf16.msra.mxu0 %v3552
    %5254 = vmatpush.bf16.msra.mxu0 %v3548
    %5255 = vmatpush.bf16.msra.mxu0 %v3544
    %5256 = vmatpush.bf16.msra.mxu0 %v3540
    %5257 = vmatpush.bf16.msra.mxu0 %v3536
    %5258 = vmatpush.bf16.msra.mxu0 %v3532
    %5259 = vmatpush.bf16.msra.mxu0 %v3528
    %5260 = vmatmul.bf16.gmra.mxu0 %v843
    %v5261 = vpop.f32.mrf.mxu0
    %v5262 = vadd.f32 %v5249, %v5261
    %v5263 = vpop.f32.mrf.mxu0
    %5264 = vdwg.mxu0
    %5265 = vmatpush.bf16.msra.mxu0 %v3588
    %5266 = vmatpush.bf16.msra.mxu0 %v3584
    %5267 = vmatpush.bf16.msra.mxu0 %v3580
    %5268 = vmatpush.bf16.msra.mxu0 %v3576
    %5269 = vmatpush.bf16.msra.mxu0 %v3572
    %5270 = vmatpush.bf16.msra.mxu0 %v3568
    %5271 = vmatpush.bf16.msra.mxu0 %v3564
    %5272 = vmatpush.bf16.msra.mxu0 %v3560
    %5273 = vmatmul.bf16.gmra.mxu0 %v844
    %v5274 = vpop.f32.mrf.mxu0
    %v5275 = vadd.f32 %v5262, %v5274
    %v5276 = vpop.f32.mrf.mxu0
    %5277 = vdwg.mxu0
    %5278 = vmatpush.bf16.msra.mxu0 %v3620
    %5279 = vmatpush.bf16.msra.mxu0 %v3616
    %5280 = vmatpush.bf16.msra.mxu0 %v3612
    %5281 = vmatpush.bf16.msra.mxu0 %v3608
    %5282 = vmatpush.bf16.msra.mxu0 %v3604
    %5283 = vmatpush.bf16.msra.mxu0 %v3600
    %5284 = vmatpush.bf16.msra.mxu0 %v3596
    %5285 = vmatpush.bf16.msra.mxu0 %v3592
    %5286 = vmatmul.bf16.gmra.mxu0 %v845
    %v5287 = vpop.f32.mrf.mxu0
    %v5288 = vadd.f32 %v5275, %v5287
    %v5289 = vpop.f32.mrf.mxu0
    %5290 = vdwg.mxu0
    %5291 = vmatpush.bf16.msra.mxu0 %v3652
    %5292 = vmatpush.bf16.msra.mxu0 %v3648
    %5293 = vmatpush.bf16.msra.mxu0 %v3644
    %5294 = vmatpush.bf16.msra.mxu0 %v3640
    %5295 = vmatpush.bf16.msra.mxu0 %v3636
    %5296 = vmatpush.bf16.msra.mxu0 %v3632
    %5297 = vmatpush.bf16.msra.mxu0 %v3628
    %5298 = vmatpush.bf16.msra.mxu0 %v3624
    %5299 = vmatmul.bf16.gmra.mxu0 %v846
    %v5300 = vpop.f32.mrf.mxu0
    %v5301 = vadd.f32 %v5288, %v5300
    %v5302 = vpop.f32.mrf.mxu0
    %5303 = vdwg.mxu0
    %5304 = vmatpush.bf16.msra.mxu0 %v3684
    %5305 = vmatpush.bf16.msra.mxu0 %v3680
    %5306 = vmatpush.bf16.msra.mxu0 %v3676
    %5307 = vmatpush.bf16.msra.mxu0 %v3672
    %5308 = vmatpush.bf16.msra.mxu0 %v3668
    %5309 = vmatpush.bf16.msra.mxu0 %v3664
    %5310 = vmatpush.bf16.msra.mxu0 %v3660
    %5311 = vmatpush.bf16.msra.mxu0 %v3656
    %5312 = vmatmul.bf16.gmra.mxu0 %v847
    %v5313 = vpop.f32.mrf.mxu0
    %v5314 = vadd.f32 %v5301, %v5313
    %v5315 = vpop.f32.mrf.mxu0
    %5316 = vdwg.mxu0
    %5317 = vmatpush.bf16.msra.mxu0 %v3716
    %5318 = vmatpush.bf16.msra.mxu0 %v3712
    %5319 = vmatpush.bf16.msra.mxu0 %v3708
    %5320 = vmatpush.bf16.msra.mxu0 %v3704
    %5321 = vmatpush.bf16.msra.mxu0 %v3700
    %5322 = vmatpush.bf16.msra.mxu0 %v3696
    %5323 = vmatpush.bf16.msra.mxu0 %v3692
    %5324 = vmatpush.bf16.msra.mxu0 %v3688
    %5325 = vmatmul.bf16.gmra.mxu0 %v848
    %v5326 = vpop.f32.mrf.mxu0
    %v5327 = vadd.f32 %v5314, %v5326
    %v5328 = vpop.f32.mrf.mxu0
    %5329 = vdwg.mxu0
    %5330 = vmatpush.bf16.msra.mxu0 %v3748
    %5331 = vmatpush.bf16.msra.mxu0 %v3744
    %5332 = vmatpush.bf16.msra.mxu0 %v3740
    %5333 = vmatpush.bf16.msra.mxu0 %v3736
    %5334 = vmatpush.bf16.msra.mxu0 %v3732
    %5335 = vmatpush.bf16.msra.mxu0 %v3728
    %5336 = vmatpush.bf16.msra.mxu0 %v3724
    %5337 = vmatpush.bf16.msra.mxu0 %v3720
    %5338 = vmatmul.bf16.gmra.mxu0 %v849
    %v5339 = vpop.f32.mrf.mxu0
    %v5340 = vadd.f32 %v5327, %v5339
    %v5341 = vpop.f32.mrf.mxu0
    %5342 = vdwg.mxu0
    %5343 = vmatpush.bf16.msra.mxu0 %v3780
    %5344 = vmatpush.bf16.msra.mxu0 %v3776
    %5345 = vmatpush.bf16.msra.mxu0 %v3772
    %5346 = vmatpush.bf16.msra.mxu0 %v3768
    %5347 = vmatpush.bf16.msra.mxu0 %v3764
    %5348 = vmatpush.bf16.msra.mxu0 %v3760
    %5349 = vmatpush.bf16.msra.mxu0 %v3756
    %5350 = vmatpush.bf16.msra.mxu0 %v3752
    %5351 = vmatmul.bf16.gmra.mxu0 %v852
    %v5352 = vpop.f32.mrf.mxu0
    %v5353 = vadd.f32 %v5340, %v5352
    %v5354 = vpop.f32.mrf.mxu0
    %5355 = vdwg.mxu0
    %5356 = vmatpush.bf16.msra.mxu0 %v3812
    %5357 = vmatpush.bf16.msra.mxu0 %v3808
    %5358 = vmatpush.bf16.msra.mxu0 %v3804
    %5359 = vmatpush.bf16.msra.mxu0 %v3800
    %5360 = vmatpush.bf16.msra.mxu0 %v3796
    %5361 = vmatpush.bf16.msra.mxu0 %v3792
    %5362 = vmatpush.bf16.msra.mxu0 %v3788
    %5363 = vmatpush.bf16.msra.mxu0 %v3784
    %5364 = vmatmul.bf16.gmra.mxu0 %v853
    %v5365 = vpop.f32.mrf.mxu0
    %v5366 = vadd.f32 %v5353, %v5365
    %v5367 = vpop.f32.mrf.mxu0
    %5368 = vdwg.mxu0
    %5369 = vmatpush.bf16.msra.mxu0 %v3844
    %5370 = vmatpush.bf16.msra.mxu0 %v3840
    %5371 = vmatpush.bf16.msra.mxu0 %v3836
    %5372 = vmatpush.bf16.msra.mxu0 %v3832
    %5373 = vmatpush.bf16.msra.mxu0 %v3828
    %5374 = vmatpush.bf16.msra.mxu0 %v3824
    %5375 = vmatpush.bf16.msra.mxu0 %v3820
    %5376 = vmatpush.bf16.msra.mxu0 %v3816
    %5377 = vmatmul.bf16.gmra.mxu0 %v854
    %v5378 = vpop.f32.mrf.mxu0
    %v5379 = vadd.f32 %v5366, %v5378
    %v5380 = vpop.f32.mrf.mxu0
    %5381 = vdwg.mxu0
    %5382 = vmatpush.bf16.msra.mxu0 %v3876
    %5383 = vmatpush.bf16.msra.mxu0 %v3872
    %5384 = vmatpush.bf16.msra.mxu0 %v3868
    %5385 = vmatpush.bf16.msra.mxu0 %v3864
    %5386 = vmatpush.bf16.msra.mxu0 %v3860
    %5387 = vmatpush.bf16.msra.mxu0 %v3856
    %5388 = vmatpush.bf16.msra.mxu0 %v3852
    %5389 = vmatpush.bf16.msra.mxu0 %v3848
    %5390 = vmatmul.bf16.gmra.mxu0 %v855
    %v5391 = vpop.f32.mrf.mxu0
    %v5392 = vadd.f32 %v5379, %v5391
    %v5393 = vpop.f32.mrf.mxu0
    %5394 = vdwg.mxu0
    %5395 = vmatpush.bf16.msra.mxu0 %v3908
    %5396 = vmatpush.bf16.msra.mxu0 %v3904
    %5397 = vmatpush.bf16.msra.mxu0 %v3900
    %5398 = vmatpush.bf16.msra.mxu0 %v3896
    %5399 = vmatpush.bf16.msra.mxu0 %v3892
    %5400 = vmatpush.bf16.msra.mxu0 %v3888
    %5401 = vmatpush.bf16.msra.mxu0 %v3884
    %5402 = vmatpush.bf16.msra.mxu0 %v3880
    %5403 = vmatmul.bf16.gmra.mxu0 %v856
    %v5404 = vpop.f32.mrf.mxu0
    %v5405 = vadd.f32 %v5392, %v5404
    %v5406 = vpop.f32.mrf.mxu0
    %5407 = vdwg.mxu0
    %5408 = vmatpush.bf16.msra.mxu0 %v3940
    %5409 = vmatpush.bf16.msra.mxu0 %v3936
    %5410 = vmatpush.bf16.msra.mxu0 %v3932
    %5411 = vmatpush.bf16.msra.mxu0 %v3928
    %5412 = vmatpush.bf16.msra.mxu0 %v3924
    %5413 = vmatpush.bf16.msra.mxu0 %v3920
    %5414 = vmatpush.bf16.msra.mxu0 %v3916
    %5415 = vmatpush.bf16.msra.mxu0 %v3912
    %5416 = vmatmul.bf16.gmra.mxu0 %v857
    %v5417 = vpop.f32.mrf.mxu0
    %v5418 = vadd.f32 %v5405, %v5417
    %v5419 = vpop.f32.mrf.mxu0
    %5420 = vdwg.mxu0
    %5421 = vmatpush.bf16.msra.mxu0 %v3972
    %5422 = vmatpush.bf16.msra.mxu0 %v3968
    %5423 = vmatpush.bf16.msra.mxu0 %v3964
    %5424 = vmatpush.bf16.msra.mxu0 %v3960
    %5425 = vmatpush.bf16.msra.mxu0 %v3956
    %5426 = vmatpush.bf16.msra.mxu0 %v3952
    %5427 = vmatpush.bf16.msra.mxu0 %v3948
    %5428 = vmatpush.bf16.msra.mxu0 %v3944
    %5429 = vmatmul.bf16.gmra.mxu0 %v858
    %v5430 = vpop.f32.mrf.mxu0
    %v5431 = vadd.f32 %v5418, %v5430
    %v5432 = vpop.f32.mrf.mxu0
    %5433 = vdwg.mxu0
    %5434 = vmatpush.bf16.msra.mxu0 %v4004
    %5435 = vmatpush.bf16.msra.mxu0 %v4000
    %5436 = vmatpush.bf16.msra.mxu0 %v3996
    %5437 = vmatpush.bf16.msra.mxu0 %v3992
    %5438 = vmatpush.bf16.msra.mxu0 %v3988
    %5439 = vmatpush.bf16.msra.mxu0 %v3984
    %5440 = vmatpush.bf16.msra.mxu0 %v3980
    %5441 = vmatpush.bf16.msra.mxu0 %v3976
    %5442 = vmatmul.bf16.gmra.mxu0 %v859
    %v5443 = vpop.f32.mrf.mxu0
    %v5444 = vadd.f32 %v5431, %v5443
    %v5445 = vpop.f32.mrf.mxu0
    %5446 = vdwg.mxu0
    %5447 = vmatpush.bf16.msra.mxu0 0
    %5448 = vmatpush.bf16.msra.mxu0 0
    %5449 = vmatpush.bf16.msra.mxu0 0
    %5450 = vmatpush.bf16.msra.mxu0 0
    %5451 = vmatpush.bf16.msra.mxu0 %v4020
    %5452 = vmatpush.bf16.msra.mxu0 %v4016
    %5453 = vmatpush.bf16.msra.mxu0 %v4012
    %5454 = vmatpush.bf16.msra.mxu0 %v4008
    %5455 = vmatmul.bf16.gmra.mxu0 %v4808
    %v5456 = vpop.f32.mrf.mxu0
    %v5457 = vadd.f32 %v5444, %v5456
    %v5458 = vpop.f32.mrf.mxu0
    %5459 = vdwg.mxu0
    %5460 = vmatpush.bf16.msra.mxu0 %v3269
    %5461 = vmatpush.bf16.msra.mxu0 %v3265
    %5462 = vmatpush.bf16.msra.mxu0 %v3261
    %5463 = vmatpush.bf16.msra.mxu0 %v3257
    %5464 = vmatpush.bf16.msra.mxu0 %v3253
    %5465 = vmatpush.bf16.msra.mxu0 %v3249
    %5466 = vmatpush.bf16.msra.mxu0 %v3245
    %5467 = vmatpush.bf16.msra.mxu0 %v3241
    %5468 = vmatmul.bf16.gmra.mxu0 %v832
    %v5469 = vpop.f32.mrf.mxu0
    %v5470 = vadd.f32 %v824, %v5469
    %v5471 = vpop.f32.mrf.mxu0
    %5472 = vdwg.mxu0
    %5473 = vmatpush.bf16.msra.mxu0 %v3301
    %5474 = vmatpush.bf16.msra.mxu0 %v3297
    %5475 = vmatpush.bf16.msra.mxu0 %v3293
    %5476 = vmatpush.bf16.msra.mxu0 %v3289
    %5477 = vmatpush.bf16.msra.mxu0 %v3285
    %5478 = vmatpush.bf16.msra.mxu0 %v3281
    %5479 = vmatpush.bf16.msra.mxu0 %v3277
    %5480 = vmatpush.bf16.msra.mxu0 %v3273
    %5481 = vmatmul.bf16.gmra.mxu0 %v833
    %v5482 = vpop.f32.mrf.mxu0
    %v5483 = vadd.f32 %v5470, %v5482
    %v5484 = vpop.f32.mrf.mxu0
    %5485 = vdwg.mxu0
    %5486 = vmatpush.bf16.msra.mxu0 %v3333
    %5487 = vmatpush.bf16.msra.mxu0 %v3329
    %5488 = vmatpush.bf16.msra.mxu0 %v3325
    %5489 = vmatpush.bf16.msra.mxu0 %v3321
    %5490 = vmatpush.bf16.msra.mxu0 %v3317
    %5491 = vmatpush.bf16.msra.mxu0 %v3313
    %5492 = vmatpush.bf16.msra.mxu0 %v3309
    %5493 = vmatpush.bf16.msra.mxu0 %v3305
    %5494 = vmatmul.bf16.gmra.mxu0 %v834
    %v5495 = vpop.f32.mrf.mxu0
    %v5496 = vadd.f32 %v5483, %v5495
    %v5497 = vpop.f32.mrf.mxu0
    %5498 = vdwg.mxu0
    %5499 = vmatpush.bf16.msra.mxu0 %v3365
    %5500 = vmatpush.bf16.msra.mxu0 %v3361
    %5501 = vmatpush.bf16.msra.mxu0 %v3357
    %5502 = vmatpush.bf16.msra.mxu0 %v3353
    %5503 = vmatpush.bf16.msra.mxu0 %v3349
    %5504 = vmatpush.bf16.msra.mxu0 %v3345
    %5505 = vmatpush.bf16.msra.mxu0 %v3341
    %5506 = vmatpush.bf16.msra.mxu0 %v3337
    %5507 = vmatmul.bf16.gmra.mxu0 %v835
    %v5508 = vpop.f32.mrf.mxu0
    %v5509 = vadd.f32 %v5496, %v5508
    %v5510 = vpop.f32.mrf.mxu0
    %5511 = vdwg.mxu0
    %5512 = vmatpush.bf16.msra.mxu0 %v3397
    %5513 = vmatpush.bf16.msra.mxu0 %v3393
    %5514 = vmatpush.bf16.msra.mxu0 %v3389
    %5515 = vmatpush.bf16.msra.mxu0 %v3385
    %5516 = vmatpush.bf16.msra.mxu0 %v3381
    %5517 = vmatpush.bf16.msra.mxu0 %v3377
    %5518 = vmatpush.bf16.msra.mxu0 %v3373
    %5519 = vmatpush.bf16.msra.mxu0 %v3369
    %5520 = vmatmul.bf16.gmra.mxu0 %v836
    %v5521 = vpop.f32.mrf.mxu0
    %v5522 = vadd.f32 %v5509, %v5521
    %v5523 = vpop.f32.mrf.mxu0
    %5524 = vdwg.mxu0
    %5525 = vmatpush.bf16.msra.mxu0 %v3429
    %5526 = vmatpush.bf16.msra.mxu0 %v3425
    %5527 = vmatpush.bf16.msra.mxu0 %v3421
    %5528 = vmatpush.bf16.msra.mxu0 %v3417
    %5529 = vmatpush.bf16.msra.mxu0 %v3413
    %5530 = vmatpush.bf16.msra.mxu0 %v3409
    %5531 = vmatpush.bf16.msra.mxu0 %v3405
    %5532 = vmatpush.bf16.msra.mxu0 %v3401
    %5533 = vmatmul.bf16.gmra.mxu0 %v837
    %v5534 = vpop.f32.mrf.mxu0
    %v5535 = vadd.f32 %v5522, %v5534
    %v5536 = vpop.f32.mrf.mxu0
    %5537 = vdwg.mxu0
    %5538 = vmatpush.bf16.msra.mxu0 %v3461
    %5539 = vmatpush.bf16.msra.mxu0 %v3457
    %5540 = vmatpush.bf16.msra.mxu0 %v3453
    %5541 = vmatpush.bf16.msra.mxu0 %v3449
    %5542 = vmatpush.bf16.msra.mxu0 %v3445
    %5543 = vmatpush.bf16.msra.mxu0 %v3441
    %5544 = vmatpush.bf16.msra.mxu0 %v3437
    %5545 = vmatpush.bf16.msra.mxu0 %v3433
    %5546 = vmatmul.bf16.gmra.mxu0 %v838
    %v5547 = vpop.f32.mrf.mxu0
    %v5548 = vadd.f32 %v5535, %v5547
    %v5549 = vpop.f32.mrf.mxu0
    %5550 = vdwg.mxu0
    %5551 = vmatpush.bf16.msra.mxu0 %v3493
    %5552 = vmatpush.bf16.msra.mxu0 %v3489
    %5553 = vmatpush.bf16.msra.mxu0 %v3485
    %5554 = vmatpush.bf16.msra.mxu0 %v3481
    %5555 = vmatpush.bf16.msra.mxu0 %v3477
    %5556 = vmatpush.bf16.msra.mxu0 %v3473
    %5557 = vmatpush.bf16.msra.mxu0 %v3469
    %5558 = vmatpush.bf16.msra.mxu0 %v3465
    %5559 = vmatmul.bf16.gmra.mxu0 %v839
    %v5560 = vpop.f32.mrf.mxu0
    %v5561 = vadd.f32 %v5548, %v5560
    %v5562 = vpop.f32.mrf.mxu0
    %5563 = vdwg.mxu0
    %5564 = vmatpush.bf16.msra.mxu0 %v3525
    %5565 = vmatpush.bf16.msra.mxu0 %v3521
    %5566 = vmatpush.bf16.msra.mxu0 %v3517
    %5567 = vmatpush.bf16.msra.mxu0 %v3513
    %5568 = vmatpush.bf16.msra.mxu0 %v3509
    %5569 = vmatpush.bf16.msra.mxu0 %v3505
    %5570 = vmatpush.bf16.msra.mxu0 %v3501
    %5571 = vmatpush.bf16.msra.mxu0 %v3497
    %5572 = vmatmul.bf16.gmra.mxu0 %v842
    %v5573 = vpop.f32.mrf.mxu0
    %v5574 = vadd.f32 %v5561, %v5573
    %v5575 = vpop.f32.mrf.mxu0
    %5576 = vdwg.mxu0
    %5577 = vmatpush.bf16.msra.mxu0 %v3557
    %5578 = vmatpush.bf16.msra.mxu0 %v3553
    %5579 = vmatpush.bf16.msra.mxu0 %v3549
    %5580 = vmatpush.bf16.msra.mxu0 %v3545
    %5581 = vmatpush.bf16.msra.mxu0 %v3541
    %5582 = vmatpush.bf16.msra.mxu0 %v3537
    %5583 = vmatpush.bf16.msra.mxu0 %v3533
    %5584 = vmatpush.bf16.msra.mxu0 %v3529
    %5585 = vmatmul.bf16.gmra.mxu0 %v843
    %v5586 = vpop.f32.mrf.mxu0
    %v5587 = vadd.f32 %v5574, %v5586
    %v5588 = vpop.f32.mrf.mxu0
    %5589 = vdwg.mxu0
    %5590 = vmatpush.bf16.msra.mxu0 %v3589
    %5591 = vmatpush.bf16.msra.mxu0 %v3585
    %5592 = vmatpush.bf16.msra.mxu0 %v3581
    %5593 = vmatpush.bf16.msra.mxu0 %v3577
    %5594 = vmatpush.bf16.msra.mxu0 %v3573
    %5595 = vmatpush.bf16.msra.mxu0 %v3569
    %5596 = vmatpush.bf16.msra.mxu0 %v3565
    %5597 = vmatpush.bf16.msra.mxu0 %v3561
    %5598 = vmatmul.bf16.gmra.mxu0 %v844
    %v5599 = vpop.f32.mrf.mxu0
    %v5600 = vadd.f32 %v5587, %v5599
    %v5601 = vpop.f32.mrf.mxu0
    %5602 = vdwg.mxu0
    %5603 = vmatpush.bf16.msra.mxu0 %v3621
    %5604 = vmatpush.bf16.msra.mxu0 %v3617
    %5605 = vmatpush.bf16.msra.mxu0 %v3613
    %5606 = vmatpush.bf16.msra.mxu0 %v3609
    %5607 = vmatpush.bf16.msra.mxu0 %v3605
    %5608 = vmatpush.bf16.msra.mxu0 %v3601
    %5609 = vmatpush.bf16.msra.mxu0 %v3597
    %5610 = vmatpush.bf16.msra.mxu0 %v3593
    %5611 = vmatmul.bf16.gmra.mxu0 %v845
    %v5612 = vpop.f32.mrf.mxu0
    %v5613 = vadd.f32 %v5600, %v5612
    %v5614 = vpop.f32.mrf.mxu0
    %5615 = vdwg.mxu0
    %5616 = vmatpush.bf16.msra.mxu0 %v3653
    %5617 = vmatpush.bf16.msra.mxu0 %v3649
    %5618 = vmatpush.bf16.msra.mxu0 %v3645
    %5619 = vmatpush.bf16.msra.mxu0 %v3641
    %5620 = vmatpush.bf16.msra.mxu0 %v3637
    %5621 = vmatpush.bf16.msra.mxu0 %v3633
    %5622 = vmatpush.bf16.msra.mxu0 %v3629
    %5623 = vmatpush.bf16.msra.mxu0 %v3625
    %5624 = vmatmul.bf16.gmra.mxu0 %v846
    %v5625 = vpop.f32.mrf.mxu0
    %v5626 = vadd.f32 %v5613, %v5625
    %v5627 = vpop.f32.mrf.mxu0
    %5628 = vdwg.mxu0
    %5629 = vmatpush.bf16.msra.mxu0 %v3685
    %5630 = vmatpush.bf16.msra.mxu0 %v3681
    %5631 = vmatpush.bf16.msra.mxu0 %v3677
    %5632 = vmatpush.bf16.msra.mxu0 %v3673
    %5633 = vmatpush.bf16.msra.mxu0 %v3669
    %5634 = vmatpush.bf16.msra.mxu0 %v3665
    %5635 = vmatpush.bf16.msra.mxu0 %v3661
    %5636 = vmatpush.bf16.msra.mxu0 %v3657
    %5637 = vmatmul.bf16.gmra.mxu0 %v847
    %v5638 = vpop.f32.mrf.mxu0
    %v5639 = vadd.f32 %v5626, %v5638
    %v5640 = vpop.f32.mrf.mxu0
    %5641 = vdwg.mxu0
    %5642 = vmatpush.bf16.msra.mxu0 %v3717
    %5643 = vmatpush.bf16.msra.mxu0 %v3713
    %5644 = vmatpush.bf16.msra.mxu0 %v3709
    %5645 = vmatpush.bf16.msra.mxu0 %v3705
    %5646 = vmatpush.bf16.msra.mxu0 %v3701
    %5647 = vmatpush.bf16.msra.mxu0 %v3697
    %5648 = vmatpush.bf16.msra.mxu0 %v3693
    %5649 = vmatpush.bf16.msra.mxu0 %v3689
    %5650 = vmatmul.bf16.gmra.mxu0 %v848
    %v5651 = vpop.f32.mrf.mxu0
    %v5652 = vadd.f32 %v5639, %v5651
    %v5653 = vpop.f32.mrf.mxu0
    %5654 = vdwg.mxu0
    %5655 = vmatpush.bf16.msra.mxu0 %v3749
    %5656 = vmatpush.bf16.msra.mxu0 %v3745
    %5657 = vmatpush.bf16.msra.mxu0 %v3741
    %5658 = vmatpush.bf16.msra.mxu0 %v3737
    %5659 = vmatpush.bf16.msra.mxu0 %v3733
    %5660 = vmatpush.bf16.msra.mxu0 %v3729
    %5661 = vmatpush.bf16.msra.mxu0 %v3725
    %5662 = vmatpush.bf16.msra.mxu0 %v3721
    %5663 = vmatmul.bf16.gmra.mxu0 %v849
    %v5664 = vpop.f32.mrf.mxu0
    %v5665 = vadd.f32 %v5652, %v5664
    %v5666 = vpop.f32.mrf.mxu0
    %5667 = vdwg.mxu0
    %5668 = vmatpush.bf16.msra.mxu0 %v3781
    %5669 = vmatpush.bf16.msra.mxu0 %v3777
    %5670 = vmatpush.bf16.msra.mxu0 %v3773
    %5671 = vmatpush.bf16.msra.mxu0 %v3769
    %5672 = vmatpush.bf16.msra.mxu0 %v3765
    %5673 = vmatpush.bf16.msra.mxu0 %v3761
    %5674 = vmatpush.bf16.msra.mxu0 %v3757
    %5675 = vmatpush.bf16.msra.mxu0 %v3753
    %5676 = vmatmul.bf16.gmra.mxu0 %v852
    %v5677 = vpop.f32.mrf.mxu0
    %v5678 = vadd.f32 %v5665, %v5677
    %v5679 = vpop.f32.mrf.mxu0
    %5680 = vdwg.mxu0
    %5681 = vmatpush.bf16.msra.mxu0 %v3813
    %5682 = vmatpush.bf16.msra.mxu0 %v3809
    %5683 = vmatpush.bf16.msra.mxu0 %v3805
    %5684 = vmatpush.bf16.msra.mxu0 %v3801
    %5685 = vmatpush.bf16.msra.mxu0 %v3797
    %5686 = vmatpush.bf16.msra.mxu0 %v3793
    %5687 = vmatpush.bf16.msra.mxu0 %v3789
    %5688 = vmatpush.bf16.msra.mxu0 %v3785
    %5689 = vmatmul.bf16.gmra.mxu0 %v853
    %v5690 = vpop.f32.mrf.mxu0
    %v5691 = vadd.f32 %v5678, %v5690
    %v5692 = vpop.f32.mrf.mxu0
    %5693 = vdwg.mxu0
    %5694 = vmatpush.bf16.msra.mxu0 %v3845
    %5695 = vmatpush.bf16.msra.mxu0 %v3841
    %5696 = vmatpush.bf16.msra.mxu0 %v3837
    %5697 = vmatpush.bf16.msra.mxu0 %v3833
    %5698 = vmatpush.bf16.msra.mxu0 %v3829
    %5699 = vmatpush.bf16.msra.mxu0 %v3825
    %5700 = vmatpush.bf16.msra.mxu0 %v3821
    %5701 = vmatpush.bf16.msra.mxu0 %v3817
    %5702 = vmatmul.bf16.gmra.mxu0 %v854
    %v5703 = vpop.f32.mrf.mxu0
    %v5704 = vadd.f32 %v5691, %v5703
    %v5705 = vpop.f32.mrf.mxu0
    %5706 = vdwg.mxu0
    %5707 = vmatpush.bf16.msra.mxu0 %v3877
    %5708 = vmatpush.bf16.msra.mxu0 %v3873
    %5709 = vmatpush.bf16.msra.mxu0 %v3869
    %5710 = vmatpush.bf16.msra.mxu0 %v3865
    %5711 = vmatpush.bf16.msra.mxu0 %v3861
    %5712 = vmatpush.bf16.msra.mxu0 %v3857
    %5713 = vmatpush.bf16.msra.mxu0 %v3853
    %5714 = vmatpush.bf16.msra.mxu0 %v3849
    %5715 = vmatmul.bf16.gmra.mxu0 %v855
    %v5716 = vpop.f32.mrf.mxu0
    %v5717 = vadd.f32 %v5704, %v5716
    %v5718 = vpop.f32.mrf.mxu0
    %5719 = vdwg.mxu0
    %5720 = vmatpush.bf16.msra.mxu0 %v3909
    %5721 = vmatpush.bf16.msra.mxu0 %v3905
    %5722 = vmatpush.bf16.msra.mxu0 %v3901
    %5723 = vmatpush.bf16.msra.mxu0 %v3897
    %5724 = vmatpush.bf16.msra.mxu0 %v3893
    %5725 = vmatpush.bf16.msra.mxu0 %v3889
    %5726 = vmatpush.bf16.msra.mxu0 %v3885
    %5727 = vmatpush.bf16.msra.mxu0 %v3881
    %5728 = vmatmul.bf16.gmra.mxu0 %v856
    %v5729 = vpop.f32.mrf.mxu0
    %v5730 = vadd.f32 %v5717, %v5729
    %v5731 = vpop.f32.mrf.mxu0
    %5732 = vdwg.mxu0
    %5733 = vmatpush.bf16.msra.mxu0 %v3941
    %5734 = vmatpush.bf16.msra.mxu0 %v3937
    %5735 = vmatpush.bf16.msra.mxu0 %v3933
    %5736 = vmatpush.bf16.msra.mxu0 %v3929
    %5737 = vmatpush.bf16.msra.mxu0 %v3925
    %5738 = vmatpush.bf16.msra.mxu0 %v3921
    %5739 = vmatpush.bf16.msra.mxu0 %v3917
    %5740 = vmatpush.bf16.msra.mxu0 %v3913
    %5741 = vmatmul.bf16.gmra.mxu0 %v857
    %v5742 = vpop.f32.mrf.mxu0
    %v5743 = vadd.f32 %v5730, %v5742
    %v5744 = vpop.f32.mrf.mxu0
    %5745 = vdwg.mxu0
    %5746 = vmatpush.bf16.msra.mxu0 %v3973
    %5747 = vmatpush.bf16.msra.mxu0 %v3969
    %5748 = vmatpush.bf16.msra.mxu0 %v3965
    %5749 = vmatpush.bf16.msra.mxu0 %v3961
    %5750 = vmatpush.bf16.msra.mxu0 %v3957
    %5751 = vmatpush.bf16.msra.mxu0 %v3953
    %5752 = vmatpush.bf16.msra.mxu0 %v3949
    %5753 = vmatpush.bf16.msra.mxu0 %v3945
    %5754 = vmatmul.bf16.gmra.mxu0 %v858
    %v5755 = vpop.f32.mrf.mxu0
    %v5756 = vadd.f32 %v5743, %v5755
    %v5757 = vpop.f32.mrf.mxu0
    %5758 = vdwg.mxu0
    %5759 = vmatpush.bf16.msra.mxu0 %v4005
    %5760 = vmatpush.bf16.msra.mxu0 %v4001
    %5761 = vmatpush.bf16.msra.mxu0 %v3997
    %5762 = vmatpush.bf16.msra.mxu0 %v3993
    %5763 = vmatpush.bf16.msra.mxu0 %v3989
    %5764 = vmatpush.bf16.msra.mxu0 %v3985
    %5765 = vmatpush.bf16.msra.mxu0 %v3981
    %5766 = vmatpush.bf16.msra.mxu0 %v3977
    %5767 = vmatmul.bf16.gmra.mxu0 %v859
    %v5768 = vpop.f32.mrf.mxu0
    %v5769 = vadd.f32 %v5756, %v5768
    %v5770 = vpop.f32.mrf.mxu0
    %5771 = vdwg.mxu0
    %5772 = vmatpush.bf16.msra.mxu0 0
    %5773 = vmatpush.bf16.msra.mxu0 0
    %5774 = vmatpush.bf16.msra.mxu0 0
    %5775 = vmatpush.bf16.msra.mxu0 0
    %5776 = vmatpush.bf16.msra.mxu0 %v4021
    %5777 = vmatpush.bf16.msra.mxu0 %v4017
    %5778 = vmatpush.bf16.msra.mxu0 %v4013
    %5779 = vmatpush.bf16.msra.mxu0 %v4009
    %5780 = vmatmul.bf16.gmra.mxu0 %v4808
    %v5781 = vpop.f32.mrf.mxu0
    %v5782 = vadd.f32 %v5769, %v5781
    %v5783 = vpop.f32.mrf.mxu0
    %5784 = vdwg.mxu0
    %5785 = vmatpush.bf16.msra.mxu0 %v3270
    %5786 = vmatpush.bf16.msra.mxu0 %v3266
    %5787 = vmatpush.bf16.msra.mxu0 %v3262
    %5788 = vmatpush.bf16.msra.mxu0 %v3258
    %5789 = vmatpush.bf16.msra.mxu0 %v3254
    %5790 = vmatpush.bf16.msra.mxu0 %v3250
    %5791 = vmatpush.bf16.msra.mxu0 %v3246
    %5792 = vmatpush.bf16.msra.mxu0 %v3242
    %5793 = vmatmul.bf16.gmra.mxu0 %v832
    %v5794 = vpop.f32.mrf.mxu0
    %v5795 = vadd.f32 %v825, %v5794
    %v5796 = vpop.f32.mrf.mxu0
    %5797 = vdwg.mxu0
    %5798 = vmatpush.bf16.msra.mxu0 %v3302
    %5799 = vmatpush.bf16.msra.mxu0 %v3298
    %5800 = vmatpush.bf16.msra.mxu0 %v3294
    %5801 = vmatpush.bf16.msra.mxu0 %v3290
    %5802 = vmatpush.bf16.msra.mxu0 %v3286
    %5803 = vmatpush.bf16.msra.mxu0 %v3282
    %5804 = vmatpush.bf16.msra.mxu0 %v3278
    %5805 = vmatpush.bf16.msra.mxu0 %v3274
    %5806 = vmatmul.bf16.gmra.mxu0 %v833
    %v5807 = vpop.f32.mrf.mxu0
    %v5808 = vadd.f32 %v5795, %v5807
    %v5809 = vpop.f32.mrf.mxu0
    %5810 = vdwg.mxu0
    %5811 = vmatpush.bf16.msra.mxu0 %v3334
    %5812 = vmatpush.bf16.msra.mxu0 %v3330
    %5813 = vmatpush.bf16.msra.mxu0 %v3326
    %5814 = vmatpush.bf16.msra.mxu0 %v3322
    %5815 = vmatpush.bf16.msra.mxu0 %v3318
    %5816 = vmatpush.bf16.msra.mxu0 %v3314
    %5817 = vmatpush.bf16.msra.mxu0 %v3310
    %5818 = vmatpush.bf16.msra.mxu0 %v3306
    %5819 = vmatmul.bf16.gmra.mxu0 %v834
    %v5820 = vpop.f32.mrf.mxu0
    %v5821 = vadd.f32 %v5808, %v5820
    %v5822 = vpop.f32.mrf.mxu0
    %5823 = vdwg.mxu0
    %5824 = vmatpush.bf16.msra.mxu0 %v3366
    %5825 = vmatpush.bf16.msra.mxu0 %v3362
    %5826 = vmatpush.bf16.msra.mxu0 %v3358
    %5827 = vmatpush.bf16.msra.mxu0 %v3354
    %5828 = vmatpush.bf16.msra.mxu0 %v3350
    %5829 = vmatpush.bf16.msra.mxu0 %v3346
    %5830 = vmatpush.bf16.msra.mxu0 %v3342
    %5831 = vmatpush.bf16.msra.mxu0 %v3338
    %5832 = vmatmul.bf16.gmra.mxu0 %v835
    %v5833 = vpop.f32.mrf.mxu0
    %v5834 = vadd.f32 %v5821, %v5833
    %v5835 = vpop.f32.mrf.mxu0
    %5836 = vdwg.mxu0
    %5837 = vmatpush.bf16.msra.mxu0 %v3398
    %5838 = vmatpush.bf16.msra.mxu0 %v3394
    %5839 = vmatpush.bf16.msra.mxu0 %v3390
    %5840 = vmatpush.bf16.msra.mxu0 %v3386
    %5841 = vmatpush.bf16.msra.mxu0 %v3382
    %5842 = vmatpush.bf16.msra.mxu0 %v3378
    %5843 = vmatpush.bf16.msra.mxu0 %v3374
    %5844 = vmatpush.bf16.msra.mxu0 %v3370
    %5845 = vmatmul.bf16.gmra.mxu0 %v836
    %v5846 = vpop.f32.mrf.mxu0
    %v5847 = vadd.f32 %v5834, %v5846
    %v5848 = vpop.f32.mrf.mxu0
    %5849 = vdwg.mxu0
    %5850 = vmatpush.bf16.msra.mxu0 %v3430
    %5851 = vmatpush.bf16.msra.mxu0 %v3426
    %5852 = vmatpush.bf16.msra.mxu0 %v3422
    %5853 = vmatpush.bf16.msra.mxu0 %v3418
    %5854 = vmatpush.bf16.msra.mxu0 %v3414
    %5855 = vmatpush.bf16.msra.mxu0 %v3410
    %5856 = vmatpush.bf16.msra.mxu0 %v3406
    %5857 = vmatpush.bf16.msra.mxu0 %v3402
    %5858 = vmatmul.bf16.gmra.mxu0 %v837
    %v5859 = vpop.f32.mrf.mxu0
    %v5860 = vadd.f32 %v5847, %v5859
    %v5861 = vpop.f32.mrf.mxu0
    %5862 = vdwg.mxu0
    %5863 = vmatpush.bf16.msra.mxu0 %v3462
    %5864 = vmatpush.bf16.msra.mxu0 %v3458
    %5865 = vmatpush.bf16.msra.mxu0 %v3454
    %5866 = vmatpush.bf16.msra.mxu0 %v3450
    %5867 = vmatpush.bf16.msra.mxu0 %v3446
    %5868 = vmatpush.bf16.msra.mxu0 %v3442
    %5869 = vmatpush.bf16.msra.mxu0 %v3438
    %5870 = vmatpush.bf16.msra.mxu0 %v3434
    %5871 = vmatmul.bf16.gmra.mxu0 %v838
    %v5872 = vpop.f32.mrf.mxu0
    %v5873 = vadd.f32 %v5860, %v5872
    %v5874 = vpop.f32.mrf.mxu0
    %5875 = vdwg.mxu0
    %5876 = vmatpush.bf16.msra.mxu0 %v3494
    %5877 = vmatpush.bf16.msra.mxu0 %v3490
    %5878 = vmatpush.bf16.msra.mxu0 %v3486
    %5879 = vmatpush.bf16.msra.mxu0 %v3482
    %5880 = vmatpush.bf16.msra.mxu0 %v3478
    %5881 = vmatpush.bf16.msra.mxu0 %v3474
    %5882 = vmatpush.bf16.msra.mxu0 %v3470
    %5883 = vmatpush.bf16.msra.mxu0 %v3466
    %5884 = vmatmul.bf16.gmra.mxu0 %v839
    %v5885 = vpop.f32.mrf.mxu0
    %v5886 = vadd.f32 %v5873, %v5885
    %v5887 = vpop.f32.mrf.mxu0
    %5888 = vdwg.mxu0
    %5889 = vmatpush.bf16.msra.mxu0 %v3526
    %5890 = vmatpush.bf16.msra.mxu0 %v3522
    %5891 = vmatpush.bf16.msra.mxu0 %v3518
    %5892 = vmatpush.bf16.msra.mxu0 %v3514
    %5893 = vmatpush.bf16.msra.mxu0 %v3510
    %5894 = vmatpush.bf16.msra.mxu0 %v3506
    %5895 = vmatpush.bf16.msra.mxu0 %v3502
    %5896 = vmatpush.bf16.msra.mxu0 %v3498
    %5897 = vmatmul.bf16.gmra.mxu0 %v842
    %v5898 = vpop.f32.mrf.mxu0
    %v5899 = vadd.f32 %v5886, %v5898
    %v5900 = vpop.f32.mrf.mxu0
    %5901 = vdwg.mxu0
    %5902 = vmatpush.bf16.msra.mxu0 %v3558
    %5903 = vmatpush.bf16.msra.mxu0 %v3554
    %5904 = vmatpush.bf16.msra.mxu0 %v3550
    %5905 = vmatpush.bf16.msra.mxu0 %v3546
    %5906 = vmatpush.bf16.msra.mxu0 %v3542
    %5907 = vmatpush.bf16.msra.mxu0 %v3538
    %5908 = vmatpush.bf16.msra.mxu0 %v3534
    %5909 = vmatpush.bf16.msra.mxu0 %v3530
    %5910 = vmatmul.bf16.gmra.mxu0 %v843
    %v5911 = vpop.f32.mrf.mxu0
    %v5912 = vadd.f32 %v5899, %v5911
    %v5913 = vpop.f32.mrf.mxu0
    %5914 = vdwg.mxu0
    %5915 = vmatpush.bf16.msra.mxu0 %v3590
    %5916 = vmatpush.bf16.msra.mxu0 %v3586
    %5917 = vmatpush.bf16.msra.mxu0 %v3582
    %5918 = vmatpush.bf16.msra.mxu0 %v3578
    %5919 = vmatpush.bf16.msra.mxu0 %v3574
    %5920 = vmatpush.bf16.msra.mxu0 %v3570
    %5921 = vmatpush.bf16.msra.mxu0 %v3566
    %5922 = vmatpush.bf16.msra.mxu0 %v3562
    %5923 = vmatmul.bf16.gmra.mxu0 %v844
    %v5924 = vpop.f32.mrf.mxu0
    %v5925 = vadd.f32 %v5912, %v5924
    %v5926 = vpop.f32.mrf.mxu0
    %5927 = vdwg.mxu0
    %5928 = vmatpush.bf16.msra.mxu0 %v3622
    %5929 = vmatpush.bf16.msra.mxu0 %v3618
    %5930 = vmatpush.bf16.msra.mxu0 %v3614
    %5931 = vmatpush.bf16.msra.mxu0 %v3610
    %5932 = vmatpush.bf16.msra.mxu0 %v3606
    %5933 = vmatpush.bf16.msra.mxu0 %v3602
    %5934 = vmatpush.bf16.msra.mxu0 %v3598
    %5935 = vmatpush.bf16.msra.mxu0 %v3594
    %5936 = vmatmul.bf16.gmra.mxu0 %v845
    %v5937 = vpop.f32.mrf.mxu0
    %v5938 = vadd.f32 %v5925, %v5937
    %v5939 = vpop.f32.mrf.mxu0
    %5940 = vdwg.mxu0
    %5941 = vmatpush.bf16.msra.mxu0 %v3654
    %5942 = vmatpush.bf16.msra.mxu0 %v3650
    %5943 = vmatpush.bf16.msra.mxu0 %v3646
    %5944 = vmatpush.bf16.msra.mxu0 %v3642
    %5945 = vmatpush.bf16.msra.mxu0 %v3638
    %5946 = vmatpush.bf16.msra.mxu0 %v3634
    %5947 = vmatpush.bf16.msra.mxu0 %v3630
    %5948 = vmatpush.bf16.msra.mxu0 %v3626
    %5949 = vmatmul.bf16.gmra.mxu0 %v846
    %v5950 = vpop.f32.mrf.mxu0
    %v5951 = vadd.f32 %v5938, %v5950
    %v5952 = vpop.f32.mrf.mxu0
    %5953 = vdwg.mxu0
    %5954 = vmatpush.bf16.msra.mxu0 %v3686
    %5955 = vmatpush.bf16.msra.mxu0 %v3682
    %5956 = vmatpush.bf16.msra.mxu0 %v3678
    %5957 = vmatpush.bf16.msra.mxu0 %v3674
    %5958 = vmatpush.bf16.msra.mxu0 %v3670
    %5959 = vmatpush.bf16.msra.mxu0 %v3666
    %5960 = vmatpush.bf16.msra.mxu0 %v3662
    %5961 = vmatpush.bf16.msra.mxu0 %v3658
    %5962 = vmatmul.bf16.gmra.mxu0 %v847
    %v5963 = vpop.f32.mrf.mxu0
    %v5964 = vadd.f32 %v5951, %v5963
    %v5965 = vpop.f32.mrf.mxu0
    %5966 = vdwg.mxu0
    %5967 = vmatpush.bf16.msra.mxu0 %v3718
    %5968 = vmatpush.bf16.msra.mxu0 %v3714
    %5969 = vmatpush.bf16.msra.mxu0 %v3710
    %5970 = vmatpush.bf16.msra.mxu0 %v3706
    %5971 = vmatpush.bf16.msra.mxu0 %v3702
    %5972 = vmatpush.bf16.msra.mxu0 %v3698
    %5973 = vmatpush.bf16.msra.mxu0 %v3694
    %5974 = vmatpush.bf16.msra.mxu0 %v3690
    %5975 = vmatmul.bf16.gmra.mxu0 %v848
    %v5976 = vpop.f32.mrf.mxu0
    %v5977 = vadd.f32 %v5964, %v5976
    %v5978 = vpop.f32.mrf.mxu0
    %5979 = vdwg.mxu0
    %5980 = vmatpush.bf16.msra.mxu0 %v3750
    %5981 = vmatpush.bf16.msra.mxu0 %v3746
    %5982 = vmatpush.bf16.msra.mxu0 %v3742
    %5983 = vmatpush.bf16.msra.mxu0 %v3738
    %5984 = vmatpush.bf16.msra.mxu0 %v3734
    %5985 = vmatpush.bf16.msra.mxu0 %v3730
    %5986 = vmatpush.bf16.msra.mxu0 %v3726
    %5987 = vmatpush.bf16.msra.mxu0 %v3722
    %5988 = vmatmul.bf16.gmra.mxu0 %v849
    %v5989 = vpop.f32.mrf.mxu0
    %v5990 = vadd.f32 %v5977, %v5989
    %v5991 = vpop.f32.mrf.mxu0
    %5992 = vdwg.mxu0
    %5993 = vmatpush.bf16.msra.mxu0 %v3782
    %5994 = vmatpush.bf16.msra.mxu0 %v3778
    %5995 = vmatpush.bf16.msra.mxu0 %v3774
    %5996 = vmatpush.bf16.msra.mxu0 %v3770
    %5997 = vmatpush.bf16.msra.mxu0 %v3766
    %5998 = vmatpush.bf16.msra.mxu0 %v3762
    %5999 = vmatpush.bf16.msra.mxu0 %v3758
    %6000 = vmatpush.bf16.msra.mxu0 %v3754
    %6001 = vmatmul.bf16.gmra.mxu0 %v852
    %v6002 = vpop.f32.mrf.mxu0
    %v6003 = vadd.f32 %v5990, %v6002
    %v6004 = vpop.f32.mrf.mxu0
    %6005 = vdwg.mxu0
    %6006 = vmatpush.bf16.msra.mxu0 %v3814
    %6007 = vmatpush.bf16.msra.mxu0 %v3810
    %6008 = vmatpush.bf16.msra.mxu0 %v3806
    %6009 = vmatpush.bf16.msra.mxu0 %v3802
    %6010 = vmatpush.bf16.msra.mxu0 %v3798
    %6011 = vmatpush.bf16.msra.mxu0 %v3794
    %6012 = vmatpush.bf16.msra.mxu0 %v3790
    %6013 = vmatpush.bf16.msra.mxu0 %v3786
    %6014 = vmatmul.bf16.gmra.mxu0 %v853
    %v6015 = vpop.f32.mrf.mxu0
    %v6016 = vadd.f32 %v6003, %v6015
    %v6017 = vpop.f32.mrf.mxu0
    %6018 = vdwg.mxu0
    %6019 = vmatpush.bf16.msra.mxu0 %v3846
    %6020 = vmatpush.bf16.msra.mxu0 %v3842
    %6021 = vmatpush.bf16.msra.mxu0 %v3838
    %6022 = vmatpush.bf16.msra.mxu0 %v3834
    %6023 = vmatpush.bf16.msra.mxu0 %v3830
    %6024 = vmatpush.bf16.msra.mxu0 %v3826
    %6025 = vmatpush.bf16.msra.mxu0 %v3822
    %6026 = vmatpush.bf16.msra.mxu0 %v3818
    %6027 = vmatmul.bf16.gmra.mxu0 %v854
    %v6028 = vpop.f32.mrf.mxu0
    %v6029 = vadd.f32 %v6016, %v6028
    %v6030 = vpop.f32.mrf.mxu0
    %6031 = vdwg.mxu0
    %6032 = vmatpush.bf16.msra.mxu0 %v3878
    %6033 = vmatpush.bf16.msra.mxu0 %v3874
    %6034 = vmatpush.bf16.msra.mxu0 %v3870
    %6035 = vmatpush.bf16.msra.mxu0 %v3866
    %6036 = vmatpush.bf16.msra.mxu0 %v3862
    %6037 = vmatpush.bf16.msra.mxu0 %v3858
    %6038 = vmatpush.bf16.msra.mxu0 %v3854
    %6039 = vmatpush.bf16.msra.mxu0 %v3850
    %6040 = vmatmul.bf16.gmra.mxu0 %v855
    %v6041 = vpop.f32.mrf.mxu0
    %v6042 = vadd.f32 %v6029, %v6041
    %v6043 = vpop.f32.mrf.mxu0
    %6044 = vdwg.mxu0
    %6045 = vmatpush.bf16.msra.mxu0 %v3910
    %6046 = vmatpush.bf16.msra.mxu0 %v3906
    %6047 = vmatpush.bf16.msra.mxu0 %v3902
    %6048 = vmatpush.bf16.msra.mxu0 %v3898
    %6049 = vmatpush.bf16.msra.mxu0 %v3894
    %6050 = vmatpush.bf16.msra.mxu0 %v3890
    %6051 = vmatpush.bf16.msra.mxu0 %v3886
    %6052 = vmatpush.bf16.msra.mxu0 %v3882
    %6053 = vmatmul.bf16.gmra.mxu0 %v856
    %v6054 = vpop.f32.mrf.mxu0
    %v6055 = vadd.f32 %v6042, %v6054
    %v6056 = vpop.f32.mrf.mxu0
    %6057 = vdwg.mxu0
    %6058 = vmatpush.bf16.msra.mxu0 %v3942
    %6059 = vmatpush.bf16.msra.mxu0 %v3938
    %6060 = vmatpush.bf16.msra.mxu0 %v3934
    %6061 = vmatpush.bf16.msra.mxu0 %v3930
    %6062 = vmatpush.bf16.msra.mxu0 %v3926
    %6063 = vmatpush.bf16.msra.mxu0 %v3922
    %6064 = vmatpush.bf16.msra.mxu0 %v3918
    %6065 = vmatpush.bf16.msra.mxu0 %v3914
    %6066 = vmatmul.bf16.gmra.mxu0 %v857
    %v6067 = vpop.f32.mrf.mxu0
    %v6068 = vadd.f32 %v6055, %v6067
    %v6069 = vpop.f32.mrf.mxu0
    %6070 = vdwg.mxu0
    %6071 = vmatpush.bf16.msra.mxu0 %v3974
    %6072 = vmatpush.bf16.msra.mxu0 %v3970
    %6073 = vmatpush.bf16.msra.mxu0 %v3966
    %6074 = vmatpush.bf16.msra.mxu0 %v3962
    %6075 = vmatpush.bf16.msra.mxu0 %v3958
    %6076 = vmatpush.bf16.msra.mxu0 %v3954
    %6077 = vmatpush.bf16.msra.mxu0 %v3950
    %6078 = vmatpush.bf16.msra.mxu0 %v3946
    %6079 = vmatmul.bf16.gmra.mxu0 %v858
    %v6080 = vpop.f32.mrf.mxu0
    %v6081 = vadd.f32 %v6068, %v6080
    %v6082 = vpop.f32.mrf.mxu0
    %6083 = vdwg.mxu0
    %6084 = vmatpush.bf16.msra.mxu0 %v4006
    %6085 = vmatpush.bf16.msra.mxu0 %v4002
    %6086 = vmatpush.bf16.msra.mxu0 %v3998
    %6087 = vmatpush.bf16.msra.mxu0 %v3994
    %6088 = vmatpush.bf16.msra.mxu0 %v3990
    %6089 = vmatpush.bf16.msra.mxu0 %v3986
    %6090 = vmatpush.bf16.msra.mxu0 %v3982
    %6091 = vmatpush.bf16.msra.mxu0 %v3978
    %6092 = vmatmul.bf16.gmra.mxu0 %v859
    %v6093 = vpop.f32.mrf.mxu0
    %v6094 = vadd.f32 %v6081, %v6093
    %v6095 = vpop.f32.mrf.mxu0
    %6096 = vdwg.mxu0
    %6097 = vmatpush.bf16.msra.mxu0 0
    %6098 = vmatpush.bf16.msra.mxu0 0
    %6099 = vmatpush.bf16.msra.mxu0 0
    %6100 = vmatpush.bf16.msra.mxu0 0
    %6101 = vmatpush.bf16.msra.mxu0 %v4022
    %6102 = vmatpush.bf16.msra.mxu0 %v4018
    %6103 = vmatpush.bf16.msra.mxu0 %v4014
    %6104 = vmatpush.bf16.msra.mxu0 %v4010
    %6105 = vmatmul.bf16.gmra.mxu0 %v4808
    %v6106 = vpop.f32.mrf.mxu0
    %v6107 = vadd.f32 %v6094, %v6106
    %v6108 = vpop.f32.mrf.mxu0
    %6109 = vdwg.mxu0
    %vm6110 = vcmp.gt.f32.partialorder %v5132, 0.0
    %vm6111 = vcmp.gt.f32.partialorder %v5457, 0.0
    %vm6112 = vcmp.gt.f32.partialorder %v5782, 0.0
    %vm6113 = vcmp.gt.f32.partialorder %v6107, 0.0
    %v6114 = vmul.f32 %v5132, 0.01
    %v6115 = vmul.f32 %v5457, 0.01
    %v6116 = vmul.f32 %v5782, 0.01
    %v6117 = vmul.f32 %v6107, 0.01
    %v6118 = vsel %vm6110, %v5132, %v6114
    %v6119 = vsel %vm6111, %v5457, %v6115
    %v6120 = vsel %vm6112, %v5782, %v6116
    %v6121 = vsel %vm6113, %v6107, %v6117
    %v6122 = vpack.c.bf16 %v6118, %v6118
    %v6123 = vpack.c.bf16 %v6119, %v6119
    %v6124 = vpack.c.bf16 %v6120, %v6120
    %v6125 = vpack.c.bf16 %v6121, %v6121
    %v6126 = vld [vmem:[%s3] sm:$0xf]
    %v6127 = vld [vmem:[%s3 + $0x4] sm:$0xf]
    %v6128 = vld [vmem:[%s3 + $0x8] sm:$0xf]
    %v6129 = vld [vmem:[%s3 + $0xc] sm:$0xf]
    %v6130 = vld [vmem:[%s3 + $0x10] sm:$0xf]
    %v6131 = vld [vmem:[%s3 + $0x14] sm:$0xf]
    %v6132 = vld [vmem:[%s3 + $0x18] sm:$0xf]
    %v6133 = vld [vmem:[%s3 + $0x1c] sm:$0xf]
    %v6134 = vld [vmem:[%s3 + $0x20] sm:$0xf]
    %v6135 = vld [vmem:[%s3 + $0x24] sm:$0xf]
    %v6136 = vld [vmem:[%s3 + $0x28] sm:$0xf]
    %v6137 = vld [vmem:[%s3 + $0x2c] sm:$0xf]
    %v6138 = vld [vmem:[%s3 + $0x30] sm:$0xf]
    %v6139 = vld [vmem:[%s3 + $0x34] sm:$0xf]
    %v6140 = vld [vmem:[%s3 + $0x38] sm:$0xf]
    %v6141 = vld [vmem:[%s3 + $0x3c] sm:$0xf]
    %v6142 = vld [vmem:[%s3 + $0x40] sm:$0xf]
    %v6143 = vld [vmem:[%s3 + $0x44] sm:$0xf]
    %v6144 = vld [vmem:[%s3 + $0x48] sm:$0xf]
    %v6145 = vld [vmem:[%s3 + $0x4c] sm:$0xf]
    %v6146 = vld [vmem:[%s3 + $0x50] sm:$0xf]
    %v6147 = vld [vmem:[%s3 + $0x54] sm:$0xf]
    %v6148 = vld [vmem:[%s3 + $0x58] sm:$0xf]
    %v6149 = vld [vmem:[%s3 + $0x5c] sm:$0xf]
    %v6150 = vld [vmem:[%s3 + $0x60] sm:$0xf]
    %v6151 = vld [vmem:[%s3 + $0x64] sm:$0xf]
    %v6152 = vld [vmem:[%s3 + $0x68] sm:$0xf]
    %v6153 = vld [vmem:[%s3 + $0x6c] sm:$0xf]
    %v6154 = vld [vmem:[%s3 + $0x70] sm:$0xf]
    %v6155 = vld [vmem:[%s3 + $0x74] sm:$0xf]
    %v6156 = vld [vmem:[%s3 + $0x78] sm:$0xf]
    %v6157 = vld [vmem:[%s3 + $0x7c] sm:$0xf]
    %v6158 = vld [vmem:[%s3 + $0x80] sm:$0xf]
    %v6159 = vld [vmem:[%s3 + $0x84] sm:$0xf]
    %v6160 = vld [vmem:[%s3 + $0x88] sm:$0xf]
    %v6161 = vld [vmem:[%s3 + $0x8c] sm:$0xf]
    %v6162 = vld [vmem:[%s3 + $0x90] sm:$0xf]
    %v6163 = vld [vmem:[%s3 + $0x94] sm:$0xf]
    %v6164 = vld [vmem:[%s3 + $0x98] sm:$0xf]
    %v6165 = vld [vmem:[%s3 + $0x9c] sm:$0xf]
    %v6166 = vld [vmem:[%s3 + $0xa0] sm:$0xf]
    %v6167 = vld [vmem:[%s3 + $0xa4] sm:$0xf]
    %v6168 = vld [vmem:[%s3 + $0xa8] sm:$0xf]
    %v6169 = vld [vmem:[%s3 + $0xac] sm:$0xf]
    %v6170 = vld [vmem:[%s3 + $0xb0] sm:$0xf]
    %v6171 = vld [vmem:[%s3 + $0xb4] sm:$0xf]
    %v6172 = vld [vmem:[%s3 + $0xb8] sm:$0xf]
    %v6173 = vld [vmem:[%s3 + $0xbc] sm:$0xf]
    %v6174 = vld [vmem:[%s3 + $0xc0] sm:$0xf]
    %v6175 = vld [vmem:[%s3 + $0xc4] sm:$0xf]
    %v6176 = vld [vmem:[%s3 + $0xc8] sm:$0xf]
    %v6177 = vld [vmem:[%s3 + $0xcc] sm:$0xf]
    %v6178 = vld [vmem:[%s3 + $0xd0] sm:$0xf]
    %v6179 = vld [vmem:[%s3 + $0xd4] sm:$0xf]
    %v6180 = vld [vmem:[%s3 + $0xd8] sm:$0xf]
    %v6181 = vld [vmem:[%s3 + $0xdc] sm:$0xf]
    %v6182 = vld [vmem:[%s3 + $0xe0] sm:$0xf]
    %v6183 = vld [vmem:[%s3 + $0xe4] sm:$0xf]
    %v6184 = vld [vmem:[%s3 + $0xe8] sm:$0xf]
    %v6185 = vld [vmem:[%s3 + $0xec] sm:$0xf]
    %v6186 = vld [vmem:[%s3 + $0xf0] sm:$0xf]
    %v6187 = vld [vmem:[%s3 + $0xf4] sm:$0xf]
    %v6188 = vld [vmem:[%s3 + $0xf8] sm:$0xf]
    %v6189 = vld [vmem:[%s3 + $0xfc] sm:$0xf]
    %v6190 = vld [vmem:[%s4] sm:$0x1]
    %v6192 = vperm.slane %v6190, 0
    %v6258 = vunpack.c.l.b16 %v6126
    %v6259 = vunpack.c.l.b16 %v6127
    %v6260 = vunpack.c.l.b16 %v6128
    %v6261 = vunpack.c.l.b16 %v6129
    %v6262 = vunpack.c.l.b16 %v6130
    %v6263 = vunpack.c.l.b16 %v6131
    %v6264 = vunpack.c.l.b16 %v6132
    %v6265 = vunpack.c.l.b16 %v6133
    %v6266 = vunpack.c.l.b16 %v6134
    %v6267 = vunpack.c.l.b16 %v6135
    %v6268 = vunpack.c.l.b16 %v6136
    %v6269 = vunpack.c.l.b16 %v6137
    %v6270 = vunpack.c.l.b16 %v6138
    %v6271 = vunpack.c.l.b16 %v6139
    %v6272 = vunpack.c.l.b16 %v6140
    %v6273 = vunpack.c.l.b16 %v6141
    %v6274 = vunpack.c.l.b16 %v6142
    %v6275 = vunpack.c.l.b16 %v6143
    %v6276 = vunpack.c.l.b16 %v6144
    %v6277 = vunpack.c.l.b16 %v6145
    %v6278 = vunpack.c.l.b16 %v6146
    %v6279 = vunpack.c.l.b16 %v6147
    %v6280 = vunpack.c.l.b16 %v6148
    %v6281 = vunpack.c.l.b16 %v6149
    %v6282 = vunpack.c.l.b16 %v6150
    %v6283 = vunpack.c.l.b16 %v6151
    %v6284 = vunpack.c.l.b16 %v6152
    %v6285 = vunpack.c.l.b16 %v6153
    %v6286 = vunpack.c.l.b16 %v6154
    %v6287 = vunpack.c.l.b16 %v6155
    %v6288 = vunpack.c.l.b16 %v6156
    %v6289 = vunpack.c.l.b16 %v6157
    %v6290 = vunpack.c.l.b16 %v6158
    %v6291 = vunpack.c.l.b16 %v6159
    %v6292 = vunpack.c.l.b16 %v6160
    %v6293 = vunpack.c.l.b16 %v6161
    %v6294 = vunpack.c.l.b16 %v6162
    %v6295 = vunpack.c.l.b16 %v6163
    %v6296 = vunpack.c.l.b16 %v6164
    %v6297 = vunpack.c.l.b16 %v6165
    %v6298 = vunpack.c.l.b16 %v6166
    %v6299 = vunpack.c.l.b16 %v6167
    %v6300 = vunpack.c.l.b16 %v6168
    %v6301 = vunpack.c.l.b16 %v6169
    %v6302 = vunpack.c.l.b16 %v6170
    %v6303 = vunpack.c.l.b16 %v6171
    %v6304 = vunpack.c.l.b16 %v6172
    %v6305 = vunpack.c.l.b16 %v6173
    %v6306 = vunpack.c.l.b16 %v6174
    %v6307 = vunpack.c.l.b16 %v6175
    %v6308 = vunpack.c.l.b16 %v6176
    %v6309 = vunpack.c.l.b16 %v6177
    %v6310 = vunpack.c.l.b16 %v6178
    %v6311 = vunpack.c.l.b16 %v6179
    %v6312 = vunpack.c.l.b16 %v6180
    %v6313 = vunpack.c.l.b16 %v6181
    %v6314 = vunpack.c.l.b16 %v6182
    %v6315 = vunpack.c.l.b16 %v6183
    %v6316 = vunpack.c.l.b16 %v6184
    %v6317 = vunpack.c.l.b16 %v6185
    %v6318 = vunpack.c.l.b16 %v6186
    %v6319 = vunpack.c.l.b16 %v6187
    %v6320 = vunpack.c.l.b16 %v6188
    %v6321 = vunpack.c.l.b16 %v6189
    %v6322 = vpack.c.b16 %v6259, %v6258
    %v6323 = vpack.c.b16 %v6261, %v6260
    %v6324 = vpack.c.b16 %v6263, %v6262
    %v6325 = vpack.c.b16 %v6265, %v6264
    %v6326 = vpack.c.b16 %v6267, %v6266
    %v6327 = vpack.c.b16 %v6269, %v6268
    %v6328 = vpack.c.b16 %v6271, %v6270
    %v6329 = vpack.c.b16 %v6273, %v6272
    %v6330 = vpack.c.b16 %v6275, %v6274
    %v6331 = vpack.c.b16 %v6277, %v6276
    %v6332 = vpack.c.b16 %v6279, %v6278
    %v6333 = vpack.c.b16 %v6281, %v6280
    %v6334 = vpack.c.b16 %v6283, %v6282
    %v6335 = vpack.c.b16 %v6285, %v6284
    %v6336 = vpack.c.b16 %v6287, %v6286
    %v6337 = vpack.c.b16 %v6289, %v6288
    %v6338 = vpack.c.b16 %v6291, %v6290
    %v6339 = vpack.c.b16 %v6293, %v6292
    %v6340 = vpack.c.b16 %v6295, %v6294
    %v6341 = vpack.c.b16 %v6297, %v6296
    %v6342 = vpack.c.b16 %v6299, %v6298
    %v6343 = vpack.c.b16 %v6301, %v6300
    %v6344 = vpack.c.b16 %v6303, %v6302
    %v6345 = vpack.c.b16 %v6305, %v6304
    %v6346 = vpack.c.b16 %v6307, %v6306
    %v6347 = vpack.c.b16 %v6309, %v6308
    %v6348 = vpack.c.b16 %v6311, %v6310
    %v6349 = vpack.c.b16 %v6313, %v6312
    %v6350 = vpack.c.b16 %v6315, %v6314
    %v6351 = vpack.c.b16 %v6317, %v6316
    %v6352 = vpack.c.b16 %v6319, %v6318
    %v6353 = vpack.c.b16 %v6321, %v6320
    %6386 = vmatpush.bf16.msra.mxu0 %v6329
    %6387 = vmatpush.bf16.msra.mxu0 %v6328
    %6388 = vmatpush.bf16.msra.mxu0 %v6327
    %6389 = vmatpush.bf16.msra.mxu0 %v6326
    %6390 = vmatpush.bf16.msra.mxu0 %v6325
    %6391 = vmatpush.bf16.msra.mxu0 %v6324
    %6392 = vmatpush.bf16.msra.mxu0 %v6323
    %6393 = vmatpush.bf16.msra.mxu0 %v6322
    %6394 = vmatmul.bf16.gmra.mxu0 %v6122
    %v6395 = vpop.f32.mrf.mxu0
    %v6396 = vadd.f32 %v6192, %v6395
    %v6397 = vpop.f32.mrf.mxu0
    %6398 = vdwg.mxu0
    %6399 = vmatpush.bf16.msra.mxu0 %v6337
    %6400 = vmatpush.bf16.msra.mxu0 %v6336
    %6401 = vmatpush.bf16.msra.mxu0 %v6335
    %6402 = vmatpush.bf16.msra.mxu0 %v6334
    %6403 = vmatpush.bf16.msra.mxu0 %v6333
    %6404 = vmatpush.bf16.msra.mxu0 %v6332
    %6405 = vmatpush.bf16.msra.mxu0 %v6331
    %6406 = vmatpush.bf16.msra.mxu0 %v6330
    %6407 = vmatmul.bf16.gmra.mxu0 %v6123
    %v6408 = vpop.f32.mrf.mxu0
    %v6409 = vadd.f32 %v6396, %v6408
    %v6410 = vpop.f32.mrf.mxu0
    %6411 = vdwg.mxu0
    %6412 = vmatpush.bf16.msra.mxu0 %v6345
    %6413 = vmatpush.bf16.msra.mxu0 %v6344
    %6414 = vmatpush.bf16.msra.mxu0 %v6343
    %6415 = vmatpush.bf16.msra.mxu0 %v6342
    %6416 = vmatpush.bf16.msra.mxu0 %v6341
    %6417 = vmatpush.bf16.msra.mxu0 %v6340
    %6418 = vmatpush.bf16.msra.mxu0 %v6339
    %6419 = vmatpush.bf16.msra.mxu0 %v6338
    %6420 = vmatmul.bf16.gmra.mxu0 %v6124
    %v6421 = vpop.f32.mrf.mxu0
    %v6422 = vadd.f32 %v6409, %v6421
    %v6423 = vpop.f32.mrf.mxu0
    %6424 = vdwg.mxu0
    %6425 = vmatpush.bf16.msra.mxu0 %v6353
    %6426 = vmatpush.bf16.msra.mxu0 %v6352
    %6427 = vmatpush.bf16.msra.mxu0 %v6351
    %6428 = vmatpush.bf16.msra.mxu0 %v6350
    %6429 = vmatpush.bf16.msra.mxu0 %v6349
    %6430 = vmatpush.bf16.msra.mxu0 %v6348
    %6431 = vmatpush.bf16.msra.mxu0 %v6347
    %6432 = vmatpush.bf16.msra.mxu0 %v6346
    %6433 = vmatmul.bf16.gmra.mxu0 %v6125
    %v6434 = vpop.f32.mrf.mxu0
    %v6435 = vadd.f32 %v6422, %v6434
    %v6436 = vpop.f32.mrf.mxu0
    %6437 = vdwg.mxu0
    %vm6438 = vcmask 41984
    %6439 = vst.msk [vmem:[#allocation3] sm:$0x3] %vm6438, %v6435
    %v6440 = vld [vmem:[%s5] sm:$0xf]
    %v6441 = vld [vmem:[%s5 + $0x4] sm:$0xf]
    %v6442 = vld [vmem:[%s5 + $0x8] sm:$0xf]
    %v6443 = vld [vmem:[%s5 + $0xc] sm:$0xf]
    %v6444 = vld [vmem:[%s5 + $0x10] sm:$0xf]
    %v6445 = vld [vmem:[%s5 + $0x14] sm:$0xf]
    %v6446 = vld [vmem:[%s5 + $0x18] sm:$0xf]
    %v6447 = vld [vmem:[%s5 + $0x1c] sm:$0xf]
    %v6448 = vld [vmem:[%s5 + $0x20] sm:$0xf]
    %v6449 = vld [vmem:[%s5 + $0x24] sm:$0xf]
    %v6450 = vld [vmem:[%s5 + $0x28] sm:$0xf]
    %v6451 = vld [vmem:[%s5 + $0x2c] sm:$0xf]
    %v6452 = vld [vmem:[%s5 + $0x30] sm:$0xf]
    %v6453 = vld [vmem:[%s5 + $0x34] sm:$0xf]
    %v6454 = vld [vmem:[%s5 + $0x38] sm:$0xf]
    %v6455 = vld [vmem:[%s5 + $0x3c] sm:$0xf]
    %v6456 = vld [vmem:[%s5 + $0x40] sm:$0xf]
    %v6457 = vld [vmem:[%s5 + $0x44] sm:$0xf]
    %v6458 = vld [vmem:[%s5 + $0x48] sm:$0xf]
    %v6459 = vld [vmem:[%s5 + $0x4c] sm:$0xf]
    %v6460 = vld [vmem:[%s5 + $0x50] sm:$0xf]
    %v6461 = vld [vmem:[%s5 + $0x54] sm:$0xf]
    %v6462 = vld [vmem:[%s5 + $0x58] sm:$0xf]
    %v6463 = vld [vmem:[%s5 + $0x5c] sm:$0xf]
    %v6464 = vld [vmem:[%s5 + $0x60] sm:$0xf]
    %v6465 = vld [vmem:[%s5 + $0x64] sm:$0xf]
    %v6466 = vld [vmem:[%s5 + $0x68] sm:$0xf]
    %v6467 = vld [vmem:[%s5 + $0x6c] sm:$0xf]
    %v6468 = vld [vmem:[%s5 + $0x70] sm:$0xf]
    %v6469 = vld [vmem:[%s5 + $0x74] sm:$0xf]
    %v6470 = vld [vmem:[%s5 + $0x78] sm:$0xf]
    %v6471 = vld [vmem:[%s5 + $0x7c] sm:$0xf]
    %v6472 = vld [vmem:[%s5 + $0x80] sm:$0xf]
    %v6473 = vld [vmem:[%s5 + $0x84] sm:$0xf]
    %v6474 = vld [vmem:[%s5 + $0x88] sm:$0xf]
    %v6475 = vld [vmem:[%s5 + $0x8c] sm:$0xf]
    %v6476 = vld [vmem:[%s5 + $0x90] sm:$0xf]
    %v6477 = vld [vmem:[%s5 + $0x94] sm:$0xf]
    %v6478 = vld [vmem:[%s5 + $0x98] sm:$0xf]
    %v6479 = vld [vmem:[%s5 + $0x9c] sm:$0xf]
    %v6480 = vld [vmem:[%s5 + $0xa0] sm:$0xf]
    %v6481 = vld [vmem:[%s5 + $0xa4] sm:$0xf]
    %v6482 = vld [vmem:[%s5 + $0xa8] sm:$0xf]
    %v6483 = vld [vmem:[%s5 + $0xac] sm:$0xf]
    %v6484 = vld [vmem:[%s5 + $0xb0] sm:$0xf]
    %v6485 = vld [vmem:[%s5 + $0xb4] sm:$0xf]
    %v6486 = vld [vmem:[%s5 + $0xb8] sm:$0xf]
    %v6487 = vld [vmem:[%s5 + $0xbc] sm:$0xf]
    %v6488 = vld [vmem:[%s5 + $0xc0] sm:$0xf]
    %v6489 = vld [vmem:[%s5 + $0xc4] sm:$0xf]
    %v6490 = vld [vmem:[%s5 + $0xc8] sm:$0xf]
    %v6491 = vld [vmem:[%s5 + $0xcc] sm:$0xf]
    %v6492 = vld [vmem:[%s5 + $0xd0] sm:$0xf]
    %v6493 = vld [vmem:[%s5 + $0xd4] sm:$0xf]
    %v6494 = vld [vmem:[%s5 + $0xd8] sm:$0xf]
    %v6495 = vld [vmem:[%s5 + $0xdc] sm:$0xf]
    %v6496 = vld [vmem:[%s5 + $0xe0] sm:$0xf]
    %v6497 = vld [vmem:[%s5 + $0xe4] sm:$0xf]
    %v6498 = vld [vmem:[%s5 + $0xe8] sm:$0xf]
    %v6499 = vld [vmem:[%s5 + $0xec] sm:$0xf]
    %v6500 = vld [vmem:[%s5 + $0xf0] sm:$0xf]
    %v6501 = vld [vmem:[%s5 + $0xf4] sm:$0xf]
    %v6502 = vld [vmem:[%s5 + $0xf8] sm:$0xf]
    %v6503 = vld [vmem:[%s5 + $0xfc] sm:$0xf]
    %v6504 = vld [vmem:[#allocation2] sm:$0x1]
    %v6506 = vperm.slane %v6504, 0
    %v6572 = vunpack.c.l.b16 %v6440
    %v6573 = vunpack.c.l.b16 %v6441
    %v6574 = vunpack.c.l.b16 %v6442
    %v6575 = vunpack.c.l.b16 %v6443
    %v6576 = vunpack.c.l.b16 %v6444
    %v6577 = vunpack.c.l.b16 %v6445
    %v6578 = vunpack.c.l.b16 %v6446
    %v6579 = vunpack.c.l.b16 %v6447
    %v6580 = vunpack.c.l.b16 %v6448
    %v6581 = vunpack.c.l.b16 %v6449
    %v6582 = vunpack.c.l.b16 %v6450
    %v6583 = vunpack.c.l.b16 %v6451
    %v6584 = vunpack.c.l.b16 %v6452
    %v6585 = vunpack.c.l.b16 %v6453
    %v6586 = vunpack.c.l.b16 %v6454
    %v6587 = vunpack.c.l.b16 %v6455
    %v6588 = vunpack.c.l.b16 %v6456
    %v6589 = vunpack.c.l.b16 %v6457
    %v6590 = vunpack.c.l.b16 %v6458
    %v6591 = vunpack.c.l.b16 %v6459
    %v6592 = vunpack.c.l.b16 %v6460
    %v6593 = vunpack.c.l.b16 %v6461
    %v6594 = vunpack.c.l.b16 %v6462
    %v6595 = vunpack.c.l.b16 %v6463
    %v6596 = vunpack.c.l.b16 %v6464
    %v6597 = vunpack.c.l.b16 %v6465
    %v6598 = vunpack.c.l.b16 %v6466
    %v6599 = vunpack.c.l.b16 %v6467
    %v6600 = vunpack.c.l.b16 %v6468
    %v6601 = vunpack.c.l.b16 %v6469
    %v6602 = vunpack.c.l.b16 %v6470
    %v6603 = vunpack.c.l.b16 %v6471
    %v6604 = vunpack.c.l.b16 %v6472
    %v6605 = vunpack.c.l.b16 %v6473
    %v6606 = vunpack.c.l.b16 %v6474
    %v6607 = vunpack.c.l.b16 %v6475
    %v6608 = vunpack.c.l.b16 %v6476
    %v6609 = vunpack.c.l.b16 %v6477
    %v6610 = vunpack.c.l.b16 %v6478
    %v6611 = vunpack.c.l.b16 %v6479
    %v6612 = vunpack.c.l.b16 %v6480
    %v6613 = vunpack.c.l.b16 %v6481
    %v6614 = vunpack.c.l.b16 %v6482
    %v6615 = vunpack.c.l.b16 %v6483
    %v6616 = vunpack.c.l.b16 %v6484
    %v6617 = vunpack.c.l.b16 %v6485
    %v6618 = vunpack.c.l.b16 %v6486
    %v6619 = vunpack.c.l.b16 %v6487
    %v6620 = vunpack.c.l.b16 %v6488
    %v6621 = vunpack.c.l.b16 %v6489
    %v6622 = vunpack.c.l.b16 %v6490
    %v6623 = vunpack.c.l.b16 %v6491
    %v6624 = vunpack.c.l.b16 %v6492
    %v6625 = vunpack.c.l.b16 %v6493
    %v6626 = vunpack.c.l.b16 %v6494
    %v6627 = vunpack.c.l.b16 %v6495
    %v6628 = vunpack.c.l.b16 %v6496
    %v6629 = vunpack.c.l.b16 %v6497
    %v6630 = vunpack.c.l.b16 %v6498
    %v6631 = vunpack.c.l.b16 %v6499
    %v6632 = vunpack.c.l.b16 %v6500
    %v6633 = vunpack.c.l.b16 %v6501
    %v6634 = vunpack.c.l.b16 %v6502
    %v6635 = vunpack.c.l.b16 %v6503
    %v6636 = vpack.c.b16 %v6573, %v6572
    %v6637 = vpack.c.b16 %v6575, %v6574
    %v6638 = vpack.c.b16 %v6577, %v6576
    %v6639 = vpack.c.b16 %v6579, %v6578
    %v6640 = vpack.c.b16 %v6581, %v6580
    %v6641 = vpack.c.b16 %v6583, %v6582
    %v6642 = vpack.c.b16 %v6585, %v6584
    %v6643 = vpack.c.b16 %v6587, %v6586
    %v6644 = vpack.c.b16 %v6589, %v6588
    %v6645 = vpack.c.b16 %v6591, %v6590
    %v6646 = vpack.c.b16 %v6593, %v6592
    %v6647 = vpack.c.b16 %v6595, %v6594
    %v6648 = vpack.c.b16 %v6597, %v6596
    %v6649 = vpack.c.b16 %v6599, %v6598
    %v6650 = vpack.c.b16 %v6601, %v6600
    %v6651 = vpack.c.b16 %v6603, %v6602
    %v6652 = vpack.c.b16 %v6605, %v6604
    %v6653 = vpack.c.b16 %v6607, %v6606
    %v6654 = vpack.c.b16 %v6609, %v6608
    %v6655 = vpack.c.b16 %v6611, %v6610
    %v6656 = vpack.c.b16 %v6613, %v6612
    %v6657 = vpack.c.b16 %v6615, %v6614
    %v6658 = vpack.c.b16 %v6617, %v6616
    %v6659 = vpack.c.b16 %v6619, %v6618
    %v6660 = vpack.c.b16 %v6621, %v6620
    %v6661 = vpack.c.b16 %v6623, %v6622
    %v6662 = vpack.c.b16 %v6625, %v6624
    %v6663 = vpack.c.b16 %v6627, %v6626
    %v6664 = vpack.c.b16 %v6629, %v6628
    %v6665 = vpack.c.b16 %v6631, %v6630
    %v6666 = vpack.c.b16 %v6633, %v6632
    %v6667 = vpack.c.b16 %v6635, %v6634
    %6700 = vmatpush.bf16.msra.mxu0 %v6643
    %6701 = vmatpush.bf16.msra.mxu0 %v6642
    %6702 = vmatpush.bf16.msra.mxu0 %v6641
    %6703 = vmatpush.bf16.msra.mxu0 %v6640
    %6704 = vmatpush.bf16.msra.mxu0 %v6639
    %6705 = vmatpush.bf16.msra.mxu0 %v6638
    %6706 = vmatpush.bf16.msra.mxu0 %v6637
    %6707 = vmatpush.bf16.msra.mxu0 %v6636
    %6708 = vmatmul.bf16.gmra.mxu0 %v6122
    %v6709 = vpop.f32.mrf.mxu0
    %v6710 = vadd.f32 %v6506, %v6709
    %v6711 = vpop.f32.mrf.mxu0
    %6712 = vdwg.mxu0
    %6713 = vmatpush.bf16.msra.mxu0 %v6651
    %6714 = vmatpush.bf16.msra.mxu0 %v6650
    %6715 = vmatpush.bf16.msra.mxu0 %v6649
    %6716 = vmatpush.bf16.msra.mxu0 %v6648
    %6717 = vmatpush.bf16.msra.mxu0 %v6647
    %6718 = vmatpush.bf16.msra.mxu0 %v6646
    %6719 = vmatpush.bf16.msra.mxu0 %v6645
    %6720 = vmatpush.bf16.msra.mxu0 %v6644
    %6721 = vmatmul.bf16.gmra.mxu0 %v6123
    %v6722 = vpop.f32.mrf.mxu0
    %v6723 = vadd.f32 %v6710, %v6722
    %v6724 = vpop.f32.mrf.mxu0
    %6725 = vdwg.mxu0
    %6726 = vmatpush.bf16.msra.mxu0 %v6659
    %6727 = vmatpush.bf16.msra.mxu0 %v6658
    %6728 = vmatpush.bf16.msra.mxu0 %v6657
    %6729 = vmatpush.bf16.msra.mxu0 %v6656
    %6730 = vmatpush.bf16.msra.mxu0 %v6655
    %6731 = vmatpush.bf16.msra.mxu0 %v6654
    %6732 = vmatpush.bf16.msra.mxu0 %v6653
    %6733 = vmatpush.bf16.msra.mxu0 %v6652
    %6734 = vmatmul.bf16.gmra.mxu0 %v6124
    %v6735 = vpop.f32.mrf.mxu0
    %v6736 = vadd.f32 %v6723, %v6735
    %v6737 = vpop.f32.mrf.mxu0
    %6738 = vdwg.mxu0
    %6739 = vmatpush.bf16.msra.mxu0 %v6667
    %6740 = vmatpush.bf16.msra.mxu0 %v6666
    %6741 = vmatpush.bf16.msra.mxu0 %v6665
    %6742 = vmatpush.bf16.msra.mxu0 %v6664
    %6743 = vmatpush.bf16.msra.mxu0 %v6663
    %6744 = vmatpush.bf16.msra.mxu0 %v6662
    %6745 = vmatpush.bf16.msra.mxu0 %v6661
    %6746 = vmatpush.bf16.msra.mxu0 %v6660
    %6747 = vmatmul.bf16.gmra.mxu0 %v6125
    %v6748 = vpop.f32.mrf.mxu0
    %v6749 = vadd.f32 %v6736, %v6748
    %v6750 = vpop.f32.mrf.mxu0
    %6751 = vdwg.mxu0
    %vm6752 = vcmask 1024
    %6753 = vst.msk [vmem:[%s8] sm:$0x3] %vm6752, %v6749
    // Predicated region
    $region30: #{forward.7} parent=1 // pred_check
      _
    $region31: #{forward.7} parent=1 // pred_check_branch
      %6755 = sbr.rel (0) target = $region33
    $region32: #{forward.7} parent=1 // pred_region
      %6757 = vsyncadd [#allocation4], 0
      %s6759 = sshll.u32 [#allocation3], 4
      %s6760 = int_to_ptr.vmem [resolvable:$true] %s6759
      %s6761 = sshll.u32 %s7, 4
      %s6762 = int_to_ptr.hbm [resolvable:$true] %s6761
      %6764 = dma.vmem_to_hbm [thread:$0]  %s6760, 32, %s6762, [#allocation4]
    $region33: #{forward.7} parent=1 // pred_fallthru
      _
    // Predicated region
    $region34: #{forward.7} parent=1 // pred_check
      _
    $region35: #{forward.7} parent=1 // pred_check_branch
      %6766 = sbr.rel (0) target = $region37
    $region36: #{forward.7} parent=1 // pred_region
      _
    $region37: #{forward.7} parent=1 // pred_fallthru
      _
    // Predicated region
    $region38: #{forward.7} parent=1 // pred_check
      _
    $region39: #{forward.7} parent=1 // pred_check_branch
      %6768 = sbr.rel (0) target = $region41
    $region40: #{forward.7} parent=1 // pred_region
      %6770 = dma.done [#allocation4], 32
    $region41: #{forward.7} parent=1 // pred_fallthru
      _
    // Predicated region
    $region42: #{forward.7} parent=1 // pred_check
      _
    $region43: #{forward.7} parent=1 // pred_check_branch
      %6772 = sbr.rel (0) target = $region45
    $region44: #{forward.7} parent=1 // pred_region
      _
    $region45: #{forward.7} parent=1 // pred_fallthru
      _
    %6773 = vsyncpa [#allocation4], 1

</llo_original>
